<compile_context>
chip_gen: v7x
topology: tpu7x:2x2x1
jax: 0.10.0
libtpu: 0.0.40
codegen_flags: <defaults>
</compile_context>

<pallas_src>
import functools
import math

import jax
import jax.numpy as jnp
from jax import lax
from jax.experimental import pallas as pl
from jax.experimental.pallas import tpu as pltpu

F32 = jnp.float32
BF16 = jnp.bfloat16


# ----------------------------------------------------------------------------
# Small helpers
# ----------------------------------------------------------------------------
def _m_tile(m):
    """Largest row tile (multiple of 8) that divides m; otherwise the full m."""
    for t in (512, 256, 128, 64, 32, 16, 8):
        if m % t == 0:
            return t
    return m


def _u_tile(u):
    """Lane tile for the user axis: a multiple of 128 dividing u (or full u)."""
    if u % 128 != 0:
        return u
    for t in (2048, 1024, 512, 256, 128):
        if u % t == 0:
            return t
    return u


def _mm(a, b):
    """MXU matmul: bf16 operands, f32 accumulation."""
    return jnp.dot(a.astype(BF16), b.astype(BF16), preferred_element_type=F32)


def _mm_t(a, b):
    """a^T @ b (contract leading axes) with bf16 operands — avoids a host transpose."""
    return lax.dot_general(a.astype(BF16), b.astype(BF16),
                           (((0,), (0,)), ((), ())),
                           preferred_element_type=F32)


# ----------------------------------------------------------------------------
# Pallas kernels
# ----------------------------------------------------------------------------
def _linear_kernel(x_ref, w_ref, b_ref, o_ref, *, bf16):
    x = x_ref[...]
    w = w_ref[...]
    if bf16:
        o_ref[...] = _mm(x, w) + b_ref[...]
    else:
        o_ref[...] = jnp.dot(x, w, preferred_element_type=F32) + b_ref[...]


def pallas_linear(x2d, w, b, bf16=True):
    m, k = x2d.shape
    n = w.shape[1]
    tm = _m_tile(m)
    return pl.pallas_call(
        functools.partial(_linear_kernel, bf16=bf16),
        out_shape=jax.ShapeDtypeStruct((m, n), F32),
        grid_spec=pltpu.PrefetchScalarGridSpec(
            num_scalar_prefetch=0, grid=(m // tm,),
            in_specs=[pl.BlockSpec((tm, k), lambda i: (i, 0)),
                      pl.BlockSpec((k, n), lambda i: (0, 0)),
                      pl.BlockSpec((1, n), lambda i: (0, 0))],
            out_specs=pl.BlockSpec((tm, n), lambda i: (i, 0))),
        compiler_params=pltpu.CompilerParams(dimension_semantics=("parallel",)),
    )(x2d.astype(F32), w.astype(F32), b.reshape(1, n).astype(F32))


def _linear_res_ln_kernel(x_ref, r_ref, w_ref, b_ref, g_ref, be_ref, o_ref, *, eps):
    # y = LayerNorm(x @ w + b + residual)
    y = _mm(x_ref[...], w_ref[...]) + b_ref[...] + r_ref[...]
    mu = jnp.mean(y, axis=-1, keepdims=True)
    var = jnp.mean((y - mu) ** 2, axis=-1, keepdims=True)
    o_ref[...] = (y - mu) * lax.rsqrt(var + eps) * g_ref[...] + be_ref[...]


def pallas_linear_res_ln(x2d, res2d, w, b, gamma, beta, eps=1e-12):
    m, k = x2d.shape
    n = w.shape[1]
    tm = _m_tile(m)
    return pl.pallas_call(
        functools.partial(_linear_res_ln_kernel, eps=eps),
        out_shape=jax.ShapeDtypeStruct((m, n), F32),
        grid_spec=pltpu.PrefetchScalarGridSpec(
            num_scalar_prefetch=0, grid=(m // tm,),
            in_specs=[pl.BlockSpec((tm, k), lambda i: (i, 0)),
                      pl.BlockSpec((tm, n), lambda i: (i, 0)),
                      pl.BlockSpec((k, n), lambda i: (0, 0)),
                      pl.BlockSpec((1, n), lambda i: (0, 0)),
                      pl.BlockSpec((1, n), lambda i: (0, 0)),
                      pl.BlockSpec((1, n), lambda i: (0, 0))],
            out_specs=pl.BlockSpec((tm, n), lambda i: (i, 0))),
        compiler_params=pltpu.CompilerParams(dimension_semantics=("parallel",)),
    )(x2d.astype(F32), res2d.astype(F32), w.astype(F32),
      b.reshape(1, n).astype(F32), gamma.reshape(1, n).astype(F32),
      beta.reshape(1, n).astype(F32))


def _ffn_kernel(x_ref, w1_ref, b1_ref, w2_ref, b2_ref, g_ref, be_ref, o_ref, *, eps):
    # Whole FFN block: LN(gelu(x @ w1 + b1) @ w2 + b2 + x)
    x = x_ref[...]
    f = _mm(x, w1_ref[...]) + b1_ref[...]
    f = jax.nn.gelu(f, approximate=True)   # tanh-approx GELU (erf lowering not guaranteed)
    y = _mm(f, w2_ref[...]) + b2_ref[...] + x
    mu = jnp.mean(y, axis=-1, keepdims=True)
    var = jnp.mean((y - mu) ** 2, axis=-1, keepdims=True)
    o_ref[...] = (y - mu) * lax.rsqrt(var + eps) * g_ref[...] + be_ref[...]


def pallas_ffn_ln(x2d, w1, b1, w2, b2, gamma, beta, eps=1e-12):
    m, h = x2d.shape
    inner = w1.shape[1]
    tm = _m_tile(m)
    return pl.pallas_call(
        functools.partial(_ffn_kernel, eps=eps),
        out_shape=jax.ShapeDtypeStruct((m, h), F32),
        grid_spec=pltpu.PrefetchScalarGridSpec(
            num_scalar_prefetch=0, grid=(m // tm,),
            in_specs=[pl.BlockSpec((tm, h), lambda i: (i, 0)),
                      pl.BlockSpec((h, inner), lambda i: (0, 0)),
                      pl.BlockSpec((1, inner), lambda i: (0, 0)),
                      pl.BlockSpec((inner, h), lambda i: (0, 0)),
                      pl.BlockSpec((1, h), lambda i: (0, 0)),
                      pl.BlockSpec((1, h), lambda i: (0, 0)),
                      pl.BlockSpec((1, h), lambda i: (0, 0))],
            out_specs=pl.BlockSpec((tm, h), lambda i: (i, 0))),
        compiler_params=pltpu.CompilerParams(dimension_semantics=("parallel",)),
    )(x2d.astype(F32), w1.astype(F32), b1.reshape(1, inner).astype(F32),
      w2.astype(F32), b2.reshape(1, h).astype(F32),
      gamma.reshape(1, h).astype(F32), beta.reshape(1, h).astype(F32))


def _gcn_bn_kernel(emb_ref, a_ref, w1_ref, b1_ref, w2_ref, b2_ref,
                   g_ref, be_ref, o_ref, *, bn_scale):
    # Dense GCN equivalent of GraphNN: A_hat @ X @ W applied twice, then
    # BatchNorm1d in eval mode with fresh running stats (mean=0, var=1).
    a = a_ref[...]
    h = _mm(a, _mm(emb_ref[...], w1_ref[...])) + b1_ref[...]
    h = _mm(a, _mm(h, w2_ref[...])) + b2_ref[...]
    o_ref[...] = h * (g_ref[...] * bn_scale) + be_ref[...]


def pallas_gcn_bn(emb, a_hat, w1, b1, w2, b2, bn_g, bn_b):
    n = emb.shape[0]
    f_out = w2.shape[1]
    # TODO(synk): for large n_node, tile A_hat / output rows and set
    # vmem_limit_bytes explicitly (v7x has 64 MiB VMEM); single block is fine here.
    return pl.pallas_call(
        functools.partial(_gcn_bn_kernel, bn_scale=1.0 / math.sqrt(1.0 + 1e-5)),
        out_shape=jax.ShapeDtypeStruct((n, f_out), F32),
    )(emb.astype(F32), a_hat.astype(F32),
      w1.astype(F32), b1.reshape(1, -1).astype(F32),
      w2.astype(F32), b2.reshape(1, -1).astype(F32),
      bn_g.reshape(1, -1).astype(F32), bn_b.reshape(1, -1).astype(F32))


def _hgnn_fused_kernel(x_ref, g_ref,
                       w1_ref, u1_ref, b1_ref,
                       w2_ref, u2_ref, b2_ref,
                       w3_ref, u3_ref, b3_ref,
                       bng_ref, bnb_ref,
                       fw1_ref, fb1_ref, fw2_ref, fb2_ref,
                       xo_ref, eo_ref, *, bn_scale):
    # Fused HGNNLayer (hgc1 -> hgc2 -> softmax(dim=1) -> hgc3 -> tanh)
    # + BatchNorm (eval) on node & edge embeddings + Fusion(x, node_bn).
    g = g_ref[...]

    def conv(x, w_ref_, u_ref_, b_ref_):
        x1 = _mm(x, w_ref_[...]) + b_ref_[...]
        e = _mm_t(g, x1)                     # G^T @ x1 without materializing G^T
        e = _mm(e, u_ref_[...])
        return _mm(g, e), e

    x_in = x_ref[...]
    x, e = conv(x_in, w1_ref, u1_ref, b1_ref)
    x, e = conv(x, w2_ref, u2_ref, b2_ref)
    x = jax.nn.softmax(x, axis=1)
    x, e = conv(x, w3_ref, u3_ref, b3_ref)
    node = jnp.tanh(x)                       # F.dropout treated as eval (identity)

    scale = bng_ref[...] * bn_scale
    node_bn = node * scale + bnb_ref[...]
    eo_ref[...] = e * scale + bnb_ref[...]

    # Fusion gate: H->1 score as a VPU lane reduction; EUP approx reciprocal.
    def gate(t):
        z = jnp.tanh(_mm(t, fw1_ref[...]) + fb1_ref[...])
        return jnp.sum(z * fw2_ref[...], axis=-1, keepdims=True) + fb2_ref[...]

    sh = gate(x_in)
    sd = gate(node_bn)
    m = jnp.maximum(sh, sd)
    eh = jnp.exp(sh - m)
    ed = jnp.exp(sd - m)
    inv = pl.reciprocal(eh + ed, approx=True)
    xo_ref[...] = (eh * inv) * x_in + (ed * inv) * node_bn


def pallas_hgnn_fused(x, g, hp, bn_g, bn_b, fus):
    n, h = x.shape
    e = g.shape[1]
    return pl.pallas_call(
        functools.partial(_hgnn_fused_kernel, bn_scale=1.0 / math.sqrt(1.0 + 1e-5)),
        out_shape=(jax.ShapeDtypeStruct((n, h), F32),
                   jax.ShapeDtypeStruct((e, h), F32)),
    )(x.astype(F32), g.astype(F32),
      hp['w1'], hp['u1'], hp['b1'].reshape(1, h),
      hp['w2'], hp['u2'], hp['b2'].reshape(1, h),
      hp['w3'], hp['u3'], hp['b3'].reshape(1, h),
      bn_g.reshape(1, h), bn_b.reshape(1, h),
      fus['w1'], fus['b1'].reshape(1, h),
      fus['w2'].reshape(1, h), fus['b2'].reshape(1, 1))


def _gru_scan_kernel(gi_ref, whh_ref, bhh_ref, o_ref):
    # Full recurrence in one invocation; gi (= X @ Wih + bih) was precomputed.
    L, B, H = o_ref.shape
    whh = whh_ref[...]
    bhh = bhh_ref[...]

    def step(t, h):
        gi = gi_ref[t]                                          # (B, 3H)
        gh = jnp.dot(h, whh, preferred_element_type=F32) + bhh
        r = jax.nn.sigmoid(gi[:, 0:H] + gh[:, 0:H])
        z = jax.nn.sigmoid(gi[:, H:2 * H] + gh[:, H:2 * H])
        n = jnp.tanh(gi[:, 2 * H:3 * H] + r * gh[:, 2 * H:3 * H])
        h_new = (1.0 - z) * n + z * h
        o_ref[t] = h_new
        return h_new

    lax.fori_loop(0, L, step, jnp.zeros((B, H), F32))


def pallas_gru(x_blh, wih, whh, bih, bhh):
    """Single-layer batch_first GRU (PyTorch gate order r,z,n), h0 = 0.
    The input projection is hoisted out of the time loop as one big matmul."""
    B, L, H = x_blh.shape
    gi = pallas_linear(x_blh.reshape(B * L, H), wih, bih, bf16=False)
    gi = jnp.transpose(gi.reshape(B, L, 3 * H), (1, 0, 2))      # (L, B, 3H)
    # TODO(synk): for large B, add a leading parallel grid axis over batch tiles.
    out = pl.pallas_call(
        _gru_scan_kernel,
        out_shape=jax.ShapeDtypeStruct((L, B, H), F32),
    )(gi, whh.astype(F32), bhh.reshape(1, 3 * H).astype(F32))
    return jnp.transpose(out, (1, 0, 2))


def _attn_kernel(qkv_ref, m_ref, o_ref, *, nh, scale):
    L, H = o_ref.shape
    dh = H // nh
    qkv = qkv_ref[...]                      # (L, 3H)
    mask = m_ref[...]                       # (1, L) additive
    ctx = []
    for h in range(nh):                     # static head loop; all heads per grid step
        qh = qkv[:, h * dh:(h + 1) * dh]
        kh = qkv[:, H + h * dh:H + (h + 1) * dh]
        vh = qkv[:, 2 * H + h * dh:2 * H + (h + 1) * dh]
        s = lax.dot_general(qh.astype(BF16), kh.astype(BF16),
                            (((1,), (1,)), ((), ())),
                            preferred_element_type=F32) * scale + mask
        p = jax.nn.softmax(s, axis=-1)
        ctx.append(jnp.dot(p.astype(BF16), vh.astype(BF16),
                           preferred_element_type=F32))
    o_ref[...] = jnp.concatenate(ctx, axis=-1)   # one lane-dense store


def pallas_attention(qkv, mask_b1l, nh):
    # qkv: (B, L, 3H); mask: (B, 1, L) additive — indexed per-b, never repeated per head.
    B, L, H3 = qkv.shape
    H = H3 // 3
    dh = H // nh
    return pl.pallas_call(
        functools.partial(_attn_kernel, nh=nh, scale=1.0 / math.sqrt(dh)),
        out_shape=jax.ShapeDtypeStruct((B, L, H), F32),
        grid_spec=pltpu.PrefetchScalarGridSpec(
            num_scalar_prefetch=0, grid=(B,),
            in_specs=[pl.BlockSpec((None, L, H3), lambda b: (b, 0, 0)),
                      pl.BlockSpec((None, 1, L), lambda b: (b, 0, 0))],
            out_specs=pl.BlockSpec((None, L, H), lambda b: (b, 0, 0))),
        compiler_params=pltpu.CompilerParams(dimension_semantics=("parallel",)),
    )(qkv.astype(F32), mask_b1l.astype(F32))


def _readout_mask_kernel(x_ref, seq_ref, w_ref, b_ref, o_ref, *, tu):
    # readout linear fused with get_previous_user_mask; pred never hits HBM.
    pred = _mm(x_ref[...], w_ref[...]) + b_ref[...]            # (L, tu)
    L = pred.shape[0]
    u0 = pl.program_id(1) * tu
    seq_col = seq_ref[...]                                      # (L, 1) int32
    u_iota = lax.broadcasted_iota(jnp.int32, (L, tu), 1) + u0
    hit = (u_iota == seq_col).astype(F32)
    li = lax.broadcasted_iota(jnp.int32, (L, L), 0)
    lj = lax.broadcasted_iota(jnp.int32, (L, L), 1)
    tril = (li >= lj).astype(F32)                               # inclusive, as torch tril
    count = jnp.dot(tril, hit, preferred_element_type=F32)      # exact f32 counting
    masked = jnp.logical_or(count > 0.0, u_iota == 0)           # PAD scatters into id 0
    o_ref[...] = pred + jnp.where(masked, -1000.0, 0.0)


def pallas_readout_prev_mask(trm_out, seq, w, b):
    B, L, H = trm_out.shape
    U = w.shape[1]
    tu = _u_tile(U)
    seq3 = seq.reshape(B, L, 1).astype(jnp.int32)
    return pl.pallas_call(
        functools.partial(_readout_mask_kernel, tu=tu),
        out_shape=jax.ShapeDtypeStruct((B, L, U), F32),
        grid_spec=pltpu.PrefetchScalarGridSpec(
            num_scalar_prefetch=0, grid=(B, U // tu),
            in_specs=[pl.BlockSpec((None, L, H), lambda bidx, u: (bidx, 0, 0)),
                      pl.BlockSpec((None, L, 1), lambda bidx, u: (bidx, 0, 0)),
                      pl.BlockSpec((H, tu), lambda bidx, u: (0, u)),
                      pl.BlockSpec((1, tu), lambda bidx, u: (0, u))],
            out_specs=pl.BlockSpec((None, L, tu), lambda bidx, u: (bidx, 0, u))),
        compiler_params=pltpu.CompilerParams(
            dimension_semantics=("parallel", "parallel")),
    )(trm_out.astype(F32), seq3, w.astype(F32), b.reshape(1, U).astype(F32))


# ----------------------------------------------------------------------------
# Glue (plain JAX for gather-heavy / control-flow parts)
# ----------------------------------------------------------------------------
def trm_layer(x, mask_b1l, p, nh=2):
    # TODO(synk): TransformerEncoder (multiscale, scales=[5,1e5], RecBole-style) is
    # external; stand-in is one standard bidirectional MHA+FFN layer (timestamps unused).
    B, L, H = x.shape
    x2 = x.reshape(B * L, H)
    qkv = pallas_linear(x2, p['wqkv'], p['bqkv']).reshape(B, L, 3 * H)
    ctx = pallas_attention(qkv, mask_b1l, nh)
    h1 = pallas_linear_res_ln(ctx.reshape(B * L, H), x2, p['wo'], p['bo'],
                              p['ln1_g'], p['ln1_b'])
    h2 = pallas_ffn_ln(h1, p['ffn_w1'], p['ffn_b1'], p['ffn_w2'], p['ffn_b2'],
                       p['ln2_g'], p['ln2_b'])
    return h2.reshape(B, L, H)


def init_params(key, n_node, hidden, inner_size=64):
    # MSHGAT.reset_parameters: every parameter ~ U(-1/sqrt(hidden), 1/sqrt(hidden)).
    stdv = 1.0 / math.sqrt(hidden)
    it = iter(jax.random.split(key, 64))

    def u(*shape):
        return jax.random.uniform(next(it), shape, F32, minval=-stdv, maxval=stdv)

    H = hidden
    return {
        # GraphNN (embedding + 2 GCN convs + BatchNorm)
        'gnn_emb': u(n_node, H),
        'gnn_w1': u(H, 2 * H), 'gnn_b1': u(2 * H),
        'gnn_w2': u(2 * H, H), 'gnn_b2': u(H),
        'gnn_bn_g': u(H), 'gnn_bn_b': u(H),
        # HGNNLayer (3 x HGNN_conv: weight, weight1, bias)
        'hgnn': {'w1': u(H, H), 'u1': u(H, H), 'b1': u(H),
                 'w2': u(H, H), 'u2': u(H, H), 'b2': u(H),
                 'w3': u(H, H), 'u3': u(H, H), 'b3': u(H)},
        'att_bn_g': u(H), 'att_bn_b': u(H),
        # HGNN_ATT.fus1 (Fusion)
        'fus1': {'w1': u(H, H), 'b1': u(H), 'w2': u(H, 1), 'b2': u(1)},
        # readouts
        'get_ht_w': u(n_node, H), 'get_ht_b': u(H),
        'readout_w': u(H, n_node), 'readout_b': u(n_node),
        # gru1
        'gru1': (u(H, 3 * H), u(H, 3 * H), u(3 * H), u(3 * H)),
        # LayerNorm
        'ln_g': u(H), 'ln_b': u(H),
        # transformer stand-in (fused QKV weight)
        'trm': {'wqkv': u(H, 3 * H), 'bqkv': u(3 * H),
                'wo': u(H, H), 'bo': u(H),
                'ln1_g': u(H), 'ln1_b': u(H),
                'ffn_w1': u(H, inner_size), 'ffn_b1': u(inner_size),
                'ffn_w2': u(inner_size, H), 'ffn_b2': u(H),
                'ln2_g': u(H), 'ln2_b': u(H)},
        # DKT stand-in
        'kt_item_emb': u(n_node, H), 'kt_ans_vec': u(H),
        'kt_gru': (u(H, 3 * H), u(H, 3 * H), u(3 * H), u(3 * H)),
        'kt_out_w': u(H, n_node), 'kt_out_b': u(n_node),
    }


def mshgat_forward(params, input_full, input_timestamp, input_idx, ans,
                   a_hat, hypergraphs):
    B, Lp1 = input_full.shape
    L = Lp1 - 1
    H = params['ln_g'].shape[0]
    n_node = params['readout_w'].shape[1]

    inp = input_full[:, :-1]
    ts = input_timestamp[:, :-1]

    # --- GraphNN: hidden = dropout(gnn(graph)); GCN + BatchNorm fused ---
    hidden = pallas_gcn_bn(params['gnn_emb'], a_hat,
                           params['gnn_w1'], params['gnn_b1'],
                           params['gnn_w2'], params['gnn_b2'],
                           params['gnn_bn_g'], params['gnn_bn_b'])

    # --- HGNN_ATT: fused HGNN layer + BatchNorm + Fusion per time key ---
    # (root_emb in the original is computed but unused, so it is skipped.)
    mem = {}
    x = hidden
    for key_t in sorted(hypergraphs.keys()):
        x_new, edge_bn = pallas_hgnn_fused(x, hypergraphs[key_t], params['hgnn'],
                                           params['att_bn_g'], params['att_bn_b'],
                                           params['fus1'])
        mem[key_t] = [x_new, edge_bn, x]
        x = x_new

    # --- difficulty + knowledge tracing ---
    # TODO(synk): generate_dif/load_difficulty_dict read CSV/JSON; constant difficulty used.
    # TODO(synk): DKT definition is external; stand-in = interaction GRU + linear readout.
    inter = (jnp.take(params['kt_item_emb'], inp, axis=0)
             + ans[:, :-1, None].astype(F32) * params['kt_ans_vec'])
    h_kt = pallas_gru(inter, *params['kt_gru'])
    ht = pallas_linear(h_kt.reshape(B * L, H),
                       params['kt_out_w'], params['kt_out_b']).reshape(B, L, n_node)
    pred_res = jax.nn.sigmoid(ht)
    kt_mask = input_full[:, 1:] > 0
    yt = jnp.take_along_axis(pred_res, input_full[:, 1:, None], axis=2)[..., 0]

    # --- dynamic embedding accumulation over time windows (gather-heavy, XLA) ---
    keys_sorted = sorted(mem.keys())
    vals = [mem[k] for k in keys_sorted]
    zero_vec = jnp.zeros_like(inp)
    dyemb = jnp.zeros((B, L, H), F32)
    cas_emb = jnp.zeros((B, L, H), F32)
    sub_input = None
    for ind, time_k in enumerate(keys_sorted):
        if ind == 0:
            sub_input = jnp.where(ts <= time_k, inp, zero_vec)
            sub_emb = jnp.take(hidden, sub_input, axis=0)
            temp = (sub_input == 0)
            sub_cas = sub_emb
        else:
            cur = jnp.where(ts <= time_k, inp, zero_vec) - sub_input
            temp = (cur == 0)
            sub_cas = (~temp).astype(inp.dtype) * input_idx[:, None]
            sub_cas = jnp.take(vals[ind - 1][1], sub_cas, axis=0)
            sub_emb = jnp.take(vals[ind - 1][0], cur, axis=0)
            sub_input = cur + sub_input
        sub_cas = jnp.where(temp[..., None], 0.0, sub_cas)
        sub_emb = jnp.where(temp[..., None], 0.0, sub_emb)
        dyemb = dyemb + sub_emb
        cas_emb = cas_emb + sub_cas
        if ind == len(keys_sorted) - 1:
            sub_input2 = inp - sub_input
            temp = (sub_input2 == 0)
            sub_cas = (~temp).astype(inp.dtype) * input_idx[:, None]
            sub_cas = jnp.take(vals[ind - 1][1], sub_cas, axis=0)
            sub_cas = jnp.where(temp[..., None], 0.0, sub_cas)
            sub_emb = jnp.take(vals[ind][0], sub_input2, axis=0)
            sub_emb = jnp.where(temp[..., None], 0.0, sub_emb)
            # 'all_emb' in the original is computed but never used; skipped.
            dyemb = dyemb + sub_emb
            cas_emb = cas_emb + sub_cas

    # --- sequence model ---
    item_emb = pallas_gru(dyemb, *params['gru1'])
    # get_ht linear + residual add + LayerNorm fused into one kernel
    input_emb = pallas_linear_res_ln(ht.reshape(B * L, n_node),
                                     item_emb.reshape(B * L, H),
                                     params['get_ht_w'], params['get_ht_b'],
                                     params['ln_g'], params['ln_b']).reshape(B, L, H)

    ext_mask = ((1.0 - (inp > 0).astype(F32)) * -10000.0).reshape(B, 1, L)
    trm_out = trm_layer(input_emb, ext_mask, params['trm'])

    # readout linear fused with get_previous_user_mask
    pre = pallas_readout_prev_mask(trm_out, inp,
                                   params['readout_w'],
                                   params['readout_b']).reshape(B * L, n_node)
    return pre, pred_res, kt_mask, yt


# ----------------------------------------------------------------------------
# Main
# ----------------------------------------------------------------------------
if __name__ == "__main__":
    key = jax.random.PRNGKey(0)
    B, Lp1 = 4, 9                      # sequences of length 9 -> model length L = 8
    n_node, hidden_size = 128, 64      # n_node = 128 keeps readout/mask lane-dense
    n_edge = 16

    k1, k2, k3, k4, k5, kp = jax.random.split(key, 6)

    input_full = jax.random.randint(k1, (B, Lp1), 1, n_node).astype(jnp.int32)
    input_full = input_full.at[1, -1].set(0)                    # some padding
    input_timestamp = jnp.tile(jnp.arange(Lp1, dtype=F32), (B, 1))
    input_idx = jnp.arange(1, B + 1, dtype=jnp.int32)           # cascade indices (< n_edge)
    ans = jax.random.randint(k2, (B, Lp1), 0, 2).astype(jnp.int32)

    # friendship graph -> symmetric normalized adjacency
    adj = (jax.random.uniform(k3, (n_node, n_node)) < 0.05).astype(F32)
    adj = jnp.minimum(jnp.maximum(adj, adj.T) + jnp.eye(n_node, dtype=F32), 1.0)
    dinv = 1.0 / jnp.sqrt(jnp.sum(adj, axis=1))
    a_hat = adj * dinv[:, None] * dinv[None, :]

    # hypergraph incidence matrices keyed by timestamp threshold
    G1 = (jax.random.uniform(k4, (n_node, n_edge)) < 0.2).astype(F32)
    G2 = (jax.random.uniform(k5, (n_node, n_edge)) < 0.2).astype(F32)
    hypergraphs = {2.0: G1, 5.0: G2}

    params = init_params(kp, n_node, hidden_size)

    fwd = jax.jit(mshgat_forward)
    pre, pred_res, kt_mask, yt = fwd(params, input_full, input_timestamp,
                                     input_idx, ans, a_hat, hypergraphs)

    jax.block_until_ready(pre)
    jax.block_until_ready(pred_res)
    jax.block_until_ready(yt)
    assert pre.shape == (B * (Lp1 - 1), n_node)
    assert pred_res.shape == (B, Lp1 - 1, n_node)
    print("KERNEL_OK")
</pallas_src>

<mosaic_0001>
module attributes {stable_mosaic.version = 11 : i64} {
  func.func @_hgnn_fused_kernel(%arg0: memref<128x64xf32, #tpu.memory_space<vmem>>, %arg1: memref<128x16xf32, #tpu.memory_space<vmem>>, %arg2: memref<64x64xf32, #tpu.memory_space<vmem>>, %arg3: memref<64x64xf32, #tpu.memory_space<vmem>>, %arg4: memref<1x64xf32, #tpu.memory_space<vmem>>, %arg5: memref<64x64xf32, #tpu.memory_space<vmem>>, %arg6: memref<64x64xf32, #tpu.memory_space<vmem>>, %arg7: memref<1x64xf32, #tpu.memory_space<vmem>>, %arg8: memref<64x64xf32, #tpu.memory_space<vmem>>, %arg9: memref<64x64xf32, #tpu.memory_space<vmem>>, %arg10: memref<1x64xf32, #tpu.memory_space<vmem>>, %arg11: memref<1x64xf32, #tpu.memory_space<vmem>>, %arg12: memref<1x64xf32, #tpu.memory_space<vmem>>, %arg13: memref<64x64xf32, #tpu.memory_space<vmem>>, %arg14: memref<1x64xf32, #tpu.memory_space<vmem>>, %arg15: memref<1x64xf32, #tpu.memory_space<vmem>>, %arg16: memref<1x1xf32, #tpu.memory_space<vmem>>, %arg17: memref<128x64xf32, #tpu.memory_space<vmem>>, %arg18: memref<16x64xf32, #tpu.memory_space<vmem>>) attributes {dimension_semantics = [], scalar_prefetch = 0 : i64, scratch_operands = 0 : i64, tpu.core_type = #tpu.core_type<tc>} {
    %c0 = arith.constant 0 : index
    %c0_0 = arith.constant 0 : index
    %0 = vector.load %arg1[%c0, %c0_0] : memref<128x16xf32, #tpu.memory_space<vmem>>, vector<128x16xf32>
    %c0_1 = arith.constant 0 : index
    %c0_2 = arith.constant 0 : index
    %1 = vector.load %arg0[%c0_1, %c0_2] : memref<128x64xf32, #tpu.memory_space<vmem>>, vector<128x64xf32>
    %c0_3 = arith.constant 0 : index
    %c0_4 = arith.constant 0 : index
    %2 = vector.load %arg2[%c0_3, %c0_4] : memref<64x64xf32, #tpu.memory_space<vmem>>, vector<64x64xf32>
    %3 = arith.truncf %1 : vector<128x64xf32> to vector<128x64xbf16>
    %4 = arith.truncf %2 : vector<64x64xf32> to vector<64x64xbf16>
    %cst = arith.constant dense<0.000000e+00> : vector<128x64xf32>
    %5 = tpu.matmul %3, %4, %cst {dimension_numbers = #tpu.dot_dimension_numbers<[1], [0], [0], [1], [0, 0, 1, 1], [], []>} : vector<128x64xbf16>, vector<64x64xbf16>, vector<128x64xf32> -> vector<128x64xf32>
    %c0_5 = arith.constant 0 : index
    %c0_6 = arith.constant 0 : index
    %6 = vector.load %arg4[%c0_5, %c0_6] : memref<1x64xf32, #tpu.memory_space<vmem>>, vector<1x64xf32>
    %7 = vector.broadcast %6 : vector<1x64xf32> to vector<128x64xf32>
    %8 = arith.addf %5, %7 : vector<128x64xf32>
    %9 = arith.truncf %0 : vector<128x16xf32> to vector<128x16xbf16>
    %10 = arith.truncf %8 : vector<128x64xf32> to vector<128x64xbf16>
    %cst_7 = arith.constant dense<0.000000e+00> : vector<16x64xf32>
    %11 = tpu.matmul %9, %10, %cst_7 {dimension_numbers = #tpu.dot_dimension_numbers<[0], [0], [1], [1], [0, 1, 1, 1], [], []>} : vector<128x16xbf16>, vector<128x64xbf16>, vector<16x64xf32> -> vector<16x64xf32>
    %c0_8 = arith.constant 0 : index
    %c0_9 = arith.constant 0 : index
    %12 = vector.load %arg3[%c0_8, %c0_9] : memref<64x64xf32, #tpu.memory_space<vmem>>, vector<64x64xf32>
    %13 = arith.truncf %11 : vector<16x64xf32> to vector<16x64xbf16>
    %14 = arith.truncf %12 : vector<64x64xf32> to vector<64x64xbf16>
    %cst_10 = arith.constant dense<0.000000e+00> : vector<16x64xf32>
    %15 = tpu.matmul %13, %14, %cst_10 {dimension_numbers = #tpu.dot_dimension_numbers<[1], [0], [0], [1], [0, 0, 1, 1], [], []>} : vector<16x64xbf16>, vector<64x64xbf16>, vector<16x64xf32> -> vector<16x64xf32>
    %16 = arith.truncf %0 : vector<128x16xf32> to vector<128x16xbf16>
    %17 = arith.truncf %15 : vector<16x64xf32> to vector<16x64xbf16>
    %cst_11 = arith.constant dense<0.000000e+00> : vector<128x64xf32>
    %18 = tpu.matmul %16, %17, %cst_11 {dimension_numbers = #tpu.dot_dimension_numbers<[1], [0], [0], [1], [0, 0, 1, 1], [], []>} : vector<128x16xbf16>, vector<16x64xbf16>, vector<128x64xf32> -> vector<128x64xf32>
    %c0_12 = arith.constant 0 : index
    %c0_13 = arith.constant 0 : index
    %19 = vector.load %arg5[%c0_12, %c0_13] : memref<64x64xf32, #tpu.memory_space<vmem>>, vector<64x64xf32>
    %20 = arith.truncf %18 : vector<128x64xf32> to vector<128x64xbf16>
    %21 = arith.truncf %19 : vector<64x64xf32> to vector<64x64xbf16>
    %cst_14 = arith.constant dense<0.000000e+00> : vector<128x64xf32>
    %22 = tpu.matmul %20, %21, %cst_14 {dimension_numbers = #tpu.dot_dimension_numbers<[1], [0], [0], [1], [0, 0, 1, 1], [], []>} : vector<128x64xbf16>, vector<64x64xbf16>, vector<128x64xf32> -> vector<128x64xf32>
    %c0_15 = arith.constant 0 : index
    %c0_16 = arith.constant 0 : index
    %23 = vector.load %arg7[%c0_15, %c0_16] : memref<1x64xf32, #tpu.memory_space<vmem>>, vector<1x64xf32>
    %24 = vector.broadcast %23 : vector<1x64xf32> to vector<128x64xf32>
    %25 = arith.addf %22, %24 : vector<128x64xf32>
    %26 = arith.truncf %0 : vector<128x16xf32> to vector<128x16xbf16>
    %27 = arith.truncf %25 : vector<128x64xf32> to vector<128x64xbf16>
    %cst_17 = arith.constant dense<0.000000e+00> : vector<16x64xf32>
    %28 = tpu.matmul %26, %27, %cst_17 {dimension_numbers = #tpu.dot_dimension_numbers<[0], [0], [1], [1], [0, 1, 1, 1], [], []>} : vector<128x16xbf16>, vector<128x64xbf16>, vector<16x64xf32> -> vector<16x64xf32>
    %c0_18 = arith.constant 0 : index
    %c0_19 = arith.constant 0 : index
    %29 = vector.load %arg6[%c0_18, %c0_19] : memref<64x64xf32, #tpu.memory_space<vmem>>, vector<64x64xf32>
    %30 = arith.truncf %28 : vector<16x64xf32> to vector<16x64xbf16>
    %31 = arith.truncf %29 : vector<64x64xf32> to vector<64x64xbf16>
    %cst_20 = arith.constant dense<0.000000e+00> : vector<16x64xf32>
    %32 = tpu.matmul %30, %31, %cst_20 {dimension_numbers = #tpu.dot_dimension_numbers<[1], [0], [0], [1], [0, 0, 1, 1], [], []>} : vector<16x64xbf16>, vector<64x64xbf16>, vector<16x64xf32> -> vector<16x64xf32>
    %33 = arith.truncf %0 : vector<128x16xf32> to vector<128x16xbf16>
    %34 = arith.truncf %32 : vector<16x64xf32> to vector<16x64xbf16>
    %cst_21 = arith.constant dense<0.000000e+00> : vector<128x64xf32>
    %35 = tpu.matmul %33, %34, %cst_21 {dimension_numbers = #tpu.dot_dimension_numbers<[1], [0], [0], [1], [0, 0, 1, 1], [], []>} : vector<128x16xbf16>, vector<16x64xbf16>, vector<128x64xf32> -> vector<128x64xf32>
    %cst_22 = arith.constant dense<0xFF800000> : vector<128xf32>
    %36 = vector.multi_reduction <maximumf>, %35, %cst_22 [1] : vector<128x64xf32> to vector<128xf32>
    %cst_23 = arith.constant 0xFF800000 : f32
    %37 = vector.broadcast %cst_23 : f32 to vector<128xf32>
    %38 = arith.maximumf %37, %36 : vector<128xf32>
    %39 = vector.shape_cast %38 : vector<128xf32> to vector<128x1xf32>
    %40 = vector.broadcast %39 : vector<128x1xf32> to vector<128x64xf32>
    %41 = arith.subf %35, %40 : vector<128x64xf32>
    %42 = math.exp %41 : vector<128x64xf32>
    %cst_24 = arith.constant dense<0.000000e+00> : vector<128xf32>
    %43 = vector.multi_reduction <add>, %42, %cst_24 [1] : vector<128x64xf32> to vector<128xf32>
    %44 = vector.shape_cast %43 : vector<128xf32> to vector<128x1xf32>
    %45 = vector.broadcast %44 : vector<128x1xf32> to vector<128x64xf32>
    %46 = arith.divf %42, %45 : vector<128x64xf32>
    %c0_25 = arith.constant 0 : index
    %c0_26 = arith.constant 0 : index
    %47 = vector.load %arg8[%c0_25, %c0_26] : memref<64x64xf32, #tpu.memory_space<vmem>>, vector<64x64xf32>
    %48 = arith.truncf %46 : vector<128x64xf32> to vector<128x64xbf16>
    %49 = arith.truncf %47 : vector<64x64xf32> to vector<64x64xbf16>
    %cst_27 = arith.constant dense<0.000000e+00> : vector<128x64xf32>
    %50 = tpu.matmul %48, %49, %cst_27 {dimension_numbers = #tpu.dot_dimension_numbers<[1], [0], [0], [1], [0, 0, 1, 1], [], []>} : vector<128x64xbf16>, vector<64x64xbf16>, vector<128x64xf32> -> vector<128x64xf32>
    %c0_28 = arith.constant 0 : index
    %c0_29 = arith.constant 0 : index
    %51 = vector.load %arg10[%c0_28, %c0_29] : memref<1x64xf32, #tpu.memory_space<vmem>>, vector<1x64xf32>
    %52 = vector.broadcast %51 : vector<1x64xf32> to vector<128x64xf32>
    %53 = arith.addf %50, %52 : vector<128x64xf32>
    %54 = arith.truncf %0 : vector<128x16xf32> to vector<128x16xbf16>
    %55 = arith.truncf %53 : vector<128x64xf32> to vector<128x64xbf16>
    %cst_30 = arith.constant dense<0.000000e+00> : vector<16x64xf32>
    %56 = tpu.matmul %54, %55, %cst_30 {dimension_numbers = #tpu.dot_dimension_numbers<[0], [0], [1], [1], [0, 1, 1, 1], [], []>} : vector<128x16xbf16>, vector<128x64xbf16>, vector<16x64xf32> -> vector<16x64xf32>
    %c0_31 = arith.constant 0 : index
    %c0_32 = arith.constant 0 : index
    %57 = vector.load %arg9[%c0_31, %c0_32] : memref<64x64xf32, #tpu.memory_space<vmem>>, vector<64x64xf32>
    %58 = arith.truncf %56 : vector<16x64xf32> to vector<16x64xbf16>
    %59 = arith.truncf %57 : vector<64x64xf32> to vector<64x64xbf16>
    %cst_33 = arith.constant dense<0.000000e+00> : vector<16x64xf32>
    %60 = tpu.matmul %58, %59, %cst_33 {dimension_numbers = #tpu.dot_dimension_numbers<[1], [0], [0], [1], [0, 0, 1, 1], [], []>} : vector<16x64xbf16>, vector<64x64xbf16>, vector<16x64xf32> -> vector<16x64xf32>
    %61 = arith.truncf %0 : vector<128x16xf32> to vector<128x16xbf16>
    %62 = arith.truncf %60 : vector<16x64xf32> to vector<16x64xbf16>
    %cst_34 = arith.constant dense<0.000000e+00> : vector<128x64xf32>
    %63 = tpu.matmul %61, %62, %cst_34 {dimension_numbers = #tpu.dot_dimension_numbers<[1], [0], [0], [1], [0, 0, 1, 1], [], []>} : vector<128x16xbf16>, vector<16x64xbf16>, vector<128x64xf32> -> vector<128x64xf32>
    %64 = math.tanh %63 : vector<128x64xf32>
    %c0_35 = arith.constant 0 : index
    %c0_36 = arith.constant 0 : index
    %65 = vector.load %arg11[%c0_35, %c0_36] : memref<1x64xf32, #tpu.memory_space<vmem>>, vector<1x64xf32>
    %cst_37 = arith.constant 0.999994993 : f32
    %66 = vector.broadcast %cst_37 : f32 to vector<1x64xf32>
    %67 = arith.mulf %65, %66 : vector<1x64xf32>
    %68 = vector.broadcast %67 : vector<1x64xf32> to vector<128x64xf32>
    %69 = arith.mulf %64, %68 : vector<128x64xf32>
    %c0_38 = arith.constant 0 : index
    %c0_39 = arith.constant 0 : index
    %70 = vector.load %arg12[%c0_38, %c0_39] : memref<1x64xf32, #tpu.memory_space<vmem>>, vector<1x64xf32>
    %71 = vector.broadcast %70 : vector<1x64xf32> to vector<128x64xf32>
    %72 = arith.addf %69, %71 : vector<128x64xf32>
    %73 = vector.broadcast %67 : vector<1x64xf32> to vector<16x64xf32>
    %74 = arith.mulf %60, %73 : vector<16x64xf32>
    %c0_40 = arith.constant 0 : index
    %c0_41 = arith.constant 0 : index
    %75 = vector.load %arg12[%c0_40, %c0_41] : memref<1x64xf32, #tpu.memory_space<vmem>>, vector<1x64xf32>
    %76 = vector.broadcast %75 : vector<1x64xf32> to vector<16x64xf32>
    %77 = arith.addf %74, %76 : vector<16x64xf32>
    %c0_42 = arith.constant 0 : index
    %c0_43 = arith.constant 0 : index
    %78 = vector.load %arg18[%c0_42, %c0_43] : memref<16x64xf32, #tpu.memory_space<vmem>>, vector<16x64xf32>
    tpu.vector_store %arg18[%c0_42, %c0_43], %77 {strides = array<i32>} : memref<16x64xf32, #tpu.memory_space<vmem>>, vector<16x64xf32>,
    %c0_44 = arith.constant 0 : index
    %c0_45 = arith.constant 0 : index
    %79 = vector.load %arg13[%c0_44, %c0_45] : memref<64x64xf32, #tpu.memory_space<vmem>>, vector<64x64xf32>
    %80 = arith.truncf %1 : vector<128x64xf32> to vector<128x64xbf16>
    %81 = arith.truncf %79 : vector<64x64xf32> to vector<64x64xbf16>
    %cst_46 = arith.constant dense<0.000000e+00> : vector<128x64xf32>
    %82 = tpu.matmul %80, %81, %cst_46 {dimension_numbers = #tpu.dot_dimension_numbers<[1], [0], [0], [1], [0, 0, 1, 1], [], []>} : vector<128x64xbf16>, vector<64x64xbf16>, vector<128x64xf32> -> vector<128x64xf32>
    %c0_47 = arith.constant 0 : index
    %c0_48 = arith.constant 0 : index
    %83 = vector.load %arg14[%c0_47, %c0_48] : memref<1x64xf32, #tpu.memory_space<vmem>>, vector<1x64xf32>
    %84 = vector.broadcast %83 : vector<1x64xf32> to vector<128x64xf32>
    %85 = arith.addf %82, %84 : vector<128x64xf32>
    %86 = math.tanh %85 : vector<128x64xf32>
    %c0_49 = arith.constant 0 : index
    %c0_50 = arith.constant 0 : index
    %87 = vector.load %arg15[%c0_49, %c0_50] : memref<1x64xf32, #tpu.memory_space<vmem>>, vector<1x64xf32>
    %88 = vector.broadcast %87 : vector<1x64xf32> to vector<128x64xf32>
    %89 = arith.mulf %86, %88 : vector<128x64xf32>
    %cst_51 = arith.constant dense<0.000000e+00> : vector<128xf32>
    %90 = vector.multi_reduction <add>, %89, %cst_51 [1] : vector<128x64xf32> to vector<128xf32>
    %91 = vector.shape_cast %90 : vector<128xf32> to vector<128x1xf32>
    %c0_52 = arith.constant 0 : index
    %c0_53 = arith.constant 0 : index
    %92 = vector.load %arg16[%c0_52, %c0_53] : memref<1x1xf32, #tpu.memory_space<vmem>>, vector<1x1xf32>
    %93 = vector.broadcast %92 : vector<1x1xf32> to vector<128x1xf32>
    %94 = arith.addf %91, %93 : vector<128x1xf32>
    %c0_54 = arith.constant 0 : index
    %c0_55 = arith.constant 0 : index
    %95 = vector.load %arg13[%c0_54, %c0_55] : memref<64x64xf32, #tpu.memory_space<vmem>>, vector<64x64xf32>
    %96 = arith.truncf %72 : vector<128x64xf32> to vector<128x64xbf16>
    %97 = arith.truncf %95 : vector<64x64xf32> to vector<64x64xbf16>
    %cst_56 = arith.constant dense<0.000000e+00> : vector<128x64xf32>
    %98 = tpu.matmul %96, %97, %cst_56 {dimension_numbers = #tpu.dot_dimension_numbers<[1], [0], [0], [1], [0, 0, 1, 1], [], []>} : vector<128x64xbf16>, vector<64x64xbf16>, vector<128x64xf32> -> vector<128x64xf32>
    %c0_57 = arith.constant 0 : index
    %c0_58 = arith.constant 0 : index
    %99 = vector.load %arg14[%c0_57, %c0_58] : memref<1x64xf32, #tpu.memory_space<vmem>>, vector<1x64xf32>
    %100 = vector.broadcast %99 : vector<1x64xf32> to vector<128x64xf32>
    %101 = arith.addf %98, %100 : vector<128x64xf32>
    %102 = math.tanh %101 : vector<128x64xf32>
    %c0_59 = arith.constant 0 : index
    %c0_60 = arith.constant 0 : index
    %103 = vector.load %arg15[%c0_59, %c0_60] : memref<1x64xf32, #tpu.memory_space<vmem>>, vector<1x64xf32>
    %104 = vector.broadcast %103 : vector<1x64xf32> to vector<128x64xf32>
    %105 = arith.mulf %102, %104 : vector<128x64xf32>
    %cst_61 = arith.constant dense<0.000000e+00> : vector<128xf32>
    %106 = vector.multi_reduction <add>, %105, %cst_61 [1] : vector<128x64xf32> to vector<128xf32>
    %107 = vector.shape_cast %106 : vector<128xf32> to vector<128x1xf32>
    %c0_62 = arith.constant 0 : index
    %c0_63 = arith.constant 0 : index
    %108 = vector.load %arg16[%c0_62, %c0_63] : memref<1x1xf32, #tpu.memory_space<vmem>>, vector<1x1xf32>
    %109 = vector.broadcast %108 : vector<1x1xf32> to vector<128x1xf32>
    %110 = arith.addf %107, %109 : vector<128x1xf32>
    %111 = arith.maximumf %94, %110 : vector<128x1xf32>
    %112 = arith.subf %94, %111 : vector<128x1xf32>
    %113 = math.exp %112 : vector<128x1xf32>
    %114 = arith.subf %110, %111 : vector<128x1xf32>
    %115 = math.exp %114 : vector<128x1xf32>
    %116 = arith.addf %113, %115 : vector<128x1xf32>
    %117 = tpu.reciprocal %116 {approx = true} : vector<128x1xf32> -> vector<128x1xf32>
    %118 = arith.mulf %113, %117 : vector<128x1xf32>
    %119 = vector.broadcast %118 : vector<128x1xf32> to vector<128x64xf32>
    %120 = arith.mulf %119, %1 : vector<128x64xf32>
    %121 = arith.mulf %115, %117 : vector<128x1xf32>
    %122 = vector.broadcast %121 : vector<128x1xf32> to vector<128x64xf32>
    %123 = arith.mulf %122, %72 : vector<128x64xf32>
    %124 = arith.addf %120, %123 : vector<128x64xf32>
    %c0_64 = arith.constant 0 : index
    %c0_65 = arith.constant 0 : index
    %125 = vector.load %arg17[%c0_64, %c0_65] : memref<128x64xf32, #tpu.memory_space<vmem>>, vector<128x64xf32>
    tpu.vector_store %arg17[%c0_64, %c0_65], %124 {strides = array<i32>} : memref<128x64xf32, #tpu.memory_space<vmem>>, vector<128x64xf32>,
    return
  }
}

module attributes {stable_mosaic.version = 11 : i64} {
  func.func @_gcn_bn_kernel(%arg0: memref<128x64xf32, #tpu.memory_space<vmem>>, %arg1: memref<128x128xf32, #tpu.memory_space<vmem>>, %arg2: memref<64x128xf32, #tpu.memory_space<vmem>>, %arg3: memref<1x128xf32, #tpu.memory_space<vmem>>, %arg4: memref<128x64xf32, #tpu.memory_space<vmem>>, %arg5: memref<1x64xf32, #tpu.memory_space<vmem>>, %arg6: memref<1x64xf32, #tpu.memory_space<vmem>>, %arg7: memref<1x64xf32, #tpu.memory_space<vmem>>, %arg8: memref<128x64xf32, #tpu.memory_space<vmem>>) attributes {dimension_semantics = [], scalar_prefetch = 0 : i64, scratch_operands = 0 : i64, tpu.core_type = #tpu.core_type<tc>} {
    %c0 = arith.constant 0 : index
    %c0_0 = arith.constant 0 : index
    %0 = vector.load %arg1[%c0, %c0_0] : memref<128x128xf32, #tpu.memory_space<vmem>>, vector<128x128xf32>
    %c0_1 = arith.constant 0 : index
    %c0_2 = arith.constant 0 : index
    %1 = vector.load %arg0[%c0_1, %c0_2] : memref<128x64xf32, #tpu.memory_space<vmem>>, vector<128x64xf32>
    %c0_3 = arith.constant 0 : index
    %c0_4 = arith.constant 0 : index
    %2 = vector.load %arg2[%c0_3, %c0_4] : memref<64x128xf32, #tpu.memory_space<vmem>>, vector<64x128xf32>
    %3 = arith.truncf %1 : vector<128x64xf32> to vector<128x64xbf16>
    %4 = arith.truncf %2 : vector<64x128xf32> to vector<64x128xbf16>
    %cst = arith.constant dense<0.000000e+00> : vector<128x128xf32>
    %5 = tpu.matmul %3, %4, %cst {dimension_numbers = #tpu.dot_dimension_numbers<[1], [0], [0], [1], [0, 0, 1, 1], [], []>} : vector<128x64xbf16>, vector<64x128xbf16>, vector<128x128xf32> -> vector<128x128xf32>
    %6 = arith.truncf %0 : vector<128x128xf32> to vector<128x128xbf16>
    %7 = arith.truncf %5 : vector<128x128xf32> to vector<128x128xbf16>
    %cst_5 = arith.constant dense<0.000000e+00> : vector<128x128xf32>
    %8 = tpu.matmul %6, %7, %cst_5 {dimension_numbers = #tpu.dot_dimension_numbers<[1], [0], [0], [1], [0, 0, 1, 1], [], []>} : vector<128x128xbf16>, vector<128x128xbf16>, vector<128x128xf32> -> vector<128x128xf32>
    %c0_6 = arith.constant 0 : index
    %c0_7 = arith.constant 0 : index
    %9 = vector.load %arg3[%c0_6, %c0_7] : memref<1x128xf32, #tpu.memory_space<vmem>>, vector<1x128xf32>
    %10 = vector.broadcast %9 : vector<1x128xf32> to vector<128x128xf32>
    %11 = arith.addf %8, %10 : vector<128x128xf32>
    %c0_8 = arith.constant 0 : index
    %c0_9 = arith.constant 0 : index
    %12 = vector.load %arg4[%c0_8, %c0_9] : memref<128x64xf32, #tpu.memory_space<vmem>>, vector<128x64xf32>
    %13 = arith.truncf %11 : vector<128x128xf32> to vector<128x128xbf16>
    %14 = arith.truncf %12 : vector<128x64xf32> to vector<128x64xbf16>
    %cst_10 = arith.constant dense<0.000000e+00> : vector<128x64xf32>
    %15 = tpu.matmul %13, %14, %cst_10 {dimension_numbers = #tpu.dot_dimension_numbers<[1], [0], [0], [1], [0, 0, 1, 1], [], []>} : vector<128x128xbf16>, vector<128x64xbf16>, vector<128x64xf32> -> vector<128x64xf32>
    %16 = arith.truncf %0 : vector<128x128xf32> to vector<128x128xbf16>
    %17 = arith.truncf %15 : vector<128x64xf32> to vector<128x64xbf16>
    %cst_11 = arith.constant dense<0.000000e+00> : vector<128x64xf32>
    %18 = tpu.matmul %16, %17, %cst_11 {dimension_numbers = #tpu.dot_dimension_numbers<[1], [0], [0], [1], [0, 0, 1, 1], [], []>} : vector<128x128xbf16>, vector<128x64xbf16>, vector<128x64xf32> -> vector<128x64xf32>
    %c0_12 = arith.constant 0 : index
    %c0_13 = arith.constant 0 : index
    %19 = vector.load %arg5[%c0_12, %c0_13] : memref<1x64xf32, #tpu.memory_space<vmem>>, vector<1x64xf32>
    %20 = vector.broadcast %19 : vector<1x64xf32> to vector<128x64xf32>
    %21 = arith.addf %18, %20 : vector<128x64xf32>
    %c0_14 = arith.constant 0 : index
    %c0_15 = arith.constant 0 : index
    %22 = vector.load %arg6[%c0_14, %c0_15] : memref<1x64xf32, #tpu.memory_space<vmem>>, vector<1x64xf32>
    %cst_16 = arith.constant 0.999994993 : f32
    %23 = vector.broadcast %cst_16 : f32 to vector<1x64xf32>
    %24 = arith.mulf %22, %23 : vector<1x64xf32>
    %25 = vector.broadcast %24 : vector<1x64xf32> to vector<128x64xf32>
    %26 = arith.mulf %21, %25 : vector<128x64xf32>
    %c0_17 = arith.constant 0 : index
    %c0_18 = arith.constant 0 : index
    %27 = vector.load %arg7[%c0_17, %c0_18] : memref<1x64xf32, #tpu.memory_space<vmem>>, vector<1x64xf32>
    %28 = vector.broadcast %27 : vector<1x64xf32> to vector<128x64xf32>
    %29 = arith.addf %26, %28 : vector<128x64xf32>
    %c0_19 = arith.constant 0 : index
    %c0_20 = arith.constant 0 : index
    %30 = vector.load %arg8[%c0_19, %c0_20] : memref<128x64xf32, #tpu.memory_space<vmem>>, vector<128x64xf32>
    tpu.vector_store %arg8[%c0_19, %c0_20], %29 {strides = array<i32>} : memref<128x64xf32, #tpu.memory_space<vmem>>, vector<128x64xf32>,
    return
  }
}

module attributes {stable_mosaic.version = 11 : i64} {
  func.func @_linear_kernel(%arg0: i32, %arg1: memref<32x64xf32, #tpu.memory_space<vmem>>, %arg2: memref<64x192xf32, #tpu.memory_space<vmem>>, %arg3: memref<1x192xf32, #tpu.memory_space<vmem>>, %arg4: memref<32x192xf32, #tpu.memory_space<vmem>>) attributes {dimension_semantics = [#tpu.dimension_semantics<parallel>], iteration_bounds = array<i64: 1>, scalar_prefetch = 0 : i64, scratch_operands = 0 : i64, tpu.core_type = #tpu.core_type<tc>, window_params = [{transform_indices = @transform_0, window_bounds = array<i64: 32, 64>}, {pipeline_mode = #tpu.pipeline_mode<synchronous>, transform_indices = @transform_1, window_bounds = array<i64: 64, 192>}, {pipeline_mode = #tpu.pipeline_mode<synchronous>, transform_indices = @transform_2, window_bounds = array<i64: 1, 192>}, {transform_indices = @transform_3, window_bounds = array<i64: 32, 192>}]} {
    %c0 = arith.constant 0 : index
    %c0_0 = arith.constant 0 : index
    %0 = vector.load %arg1[%c0, %c0_0] : memref<32x64xf32, #tpu.memory_space<vmem>>, vector<32x64xf32>
    %c0_1 = arith.constant 0 : index
    %c0_2 = arith.constant 0 : index
    %1 = vector.load %arg2[%c0_1, %c0_2] : memref<64x192xf32, #tpu.memory_space<vmem>>, vector<64x192xf32>
    %cst = arith.constant dense<0.000000e+00> : vector<32x192xf32>
    %2 = tpu.matmul %0, %1, %cst {dimension_numbers = #tpu.dot_dimension_numbers<[1], [0], [0], [1], [0, 0, 1, 1], [], []>} : vector<32x64xf32>, vector<64x192xf32>, vector<32x192xf32> -> vector<32x192xf32>
    %c0_3 = arith.constant 0 : index
    %c0_4 = arith.constant 0 : index
    %3 = vector.load %arg3[%c0_3, %c0_4] : memref<1x192xf32, #tpu.memory_space<vmem>>, vector<1x192xf32>
    %4 = vector.broadcast %3 : vector<1x192xf32> to vector<32x192xf32>
    %5 = arith.addf %2, %4 : vector<32x192xf32>
    %c0_5 = arith.constant 0 : index
    %c0_6 = arith.constant 0 : index
    %6 = vector.load %arg4[%c0_5, %c0_6] : memref<32x192xf32, #tpu.memory_space<vmem>>, vector<32x192xf32>
    tpu.vector_store %arg4[%c0_5, %c0_6], %5 {strides = array<i32>} : memref<32x192xf32, #tpu.memory_space<vmem>>, vector<32x192xf32>,
    return
  }
  func.func @transform_0(%arg0: i32) -> (i32, i32) {
    %c0_i32 = arith.constant 0 : i32
    %c0_i32_0 = arith.constant 0 : i32
    return %arg0, %c0_i32 : i32, i32
  }
  func.func @transform_1(%arg0: i32) -> (i32, i32) {
    %c0_i32 = arith.constant 0 : i32
    %c0_i32_0 = arith.constant 0 : i32
    %c0_i32_1 = arith.constant 0 : i32
    return %c0_i32, %c0_i32_0 : i32, i32
  }
  func.func @transform_2(%arg0: i32) -> (i32, i32) {
    %c0_i32 = arith.constant 0 : i32
    %c0_i32_0 = arith.constant 0 : i32
    %c0_i32_1 = arith.constant 0 : i32
    return %c0_i32, %c0_i32_0 : i32, i32
  }
  func.func @transform_3(%arg0: i32) -> (i32, i32) {
    %c0_i32 = arith.constant 0 : i32
    %c0_i32_0 = arith.constant 0 : i32
    return %arg0, %c0_i32 : i32, i32
  }
}

module attributes {stable_mosaic.version = 11 : i64} {
  func.func @_gru_scan_kernel(%arg0: memref<8x4x192xf32, #tpu.memory_space<vmem>>, %arg1: memref<64x192xf32, #tpu.memory_space<vmem>>, %arg2: memref<1x192xf32, #tpu.memory_space<vmem>>, %arg3: memref<8x4x64xf32, #tpu.memory_space<vmem>>) attributes {dimension_semantics = [], scalar_prefetch = 0 : i64, scratch_operands = 0 : i64, tpu.core_type = #tpu.core_type<tc>} {
    %c0 = arith.constant 0 : index
    %c0_0 = arith.constant 0 : index
    %0 = vector.load %arg1[%c0, %c0_0] : memref<64x192xf32, #tpu.memory_space<vmem>>, vector<64x192xf32>
    %c0_1 = arith.constant 0 : index
    %c0_2 = arith.constant 0 : index
    %1 = vector.load %arg2[%c0_1, %c0_2] : memref<1x192xf32, #tpu.memory_space<vmem>>, vector<1x192xf32>
    %cst = arith.constant 0.000000e+00 : f32
    %2 = vector.broadcast %cst : f32 to vector<4x64xf32>
    %c0_i32 = arith.constant 0 : i32
    %c8_i32 = arith.constant 8 : i32
    %3 = arith.addi %c0_i32, %c8_i32 : i32
    %c1_i32 = arith.constant 1 : i32
    %4 = scf.for %arg4 = %c0_i32 to %3 step %c1_i32 iter_args(%arg5 = %2) -> (vector<4x64xf32>)  : i32 {
      %5 = arith.index_cast %arg4 : i32 to index
      %c0_4 = arith.constant 0 : index
      %c0_5 = arith.constant 0 : index
      %6 = vector.load %arg0[%5, %c0_4, %c0_5] : memref<8x4x192xf32, #tpu.memory_space<vmem>>, vector<1x4x192xf32>
      %7 = vector.shape_cast %6 : vector<1x4x192xf32> to vector<4x192xf32>
      %cst_6 = arith.constant dense<0.000000e+00> : vector<4x192xf32>
      %8 = tpu.matmul %arg5, %0, %cst_6 {dimension_numbers = #tpu.dot_dimension_numbers<[1], [0], [0], [1], [0, 0, 1, 1], [], []>} : vector<4x64xf32>, vector<64x192xf32>, vector<4x192xf32> -> vector<4x192xf32>
      %9 = vector.broadcast %1 : vector<1x192xf32> to vector<4x192xf32>
      %10 = arith.addf %8, %9 : vector<4x192xf32>
      %11 = vector.extract_strided_slice %7 {offsets = [0, 0], sizes = [4, 64], strides = [1, 1]} : vector<4x192xf32> to vector<4x64xf32>
      %12 = vector.extract_strided_slice %10 {offsets = [0, 0], sizes = [4, 64], strides = [1, 1]} : vector<4x192xf32> to vector<4x64xf32>
      %13 = arith.addf %11, %12 : vector<4x64xf32>
      %14 = arith.negf %13 : vector<4x64xf32>
      %15 = math.exp %14 : vector<4x64xf32>
      %cst_7 = arith.constant 1.000000e+00 : f32
      %16 = vector.broadcast %cst_7 : f32 to vector<4x64xf32>
      %17 = arith.addf %16, %15 : vector<4x64xf32>
      %18 = arith.divf %16, %17 : vector<4x64xf32>
      %19 = vector.extract_strided_slice %7 {offsets = [0, 64], sizes = [4, 64], strides = [1, 1]} : vector<4x192xf32> to vector<4x64xf32>
      %20 = vector.extract_strided_slice %10 {offsets = [0, 64], sizes = [4, 64], strides = [1, 1]} : vector<4x192xf32> to vector<4x64xf32>
      %21 = arith.addf %19, %20 : vector<4x64xf32>
      %22 = arith.negf %21 : vector<4x64xf32>
      %23 = math.exp %22 : vector<4x64xf32>
      %cst_8 = arith.constant 1.000000e+00 : f32
      %24 = vector.broadcast %cst_8 : f32 to vector<4x64xf32>
      %25 = arith.addf %24, %23 : vector<4x64xf32>
      %26 = arith.divf %24, %25 : vector<4x64xf32>
      %27 = vector.extract_strided_slice %7 {offsets = [0, 128], sizes = [4, 64], strides = [1, 1]} : vector<4x192xf32> to vector<4x64xf32>
      %28 = vector.extract_strided_slice %10 {offsets = [0, 128], sizes = [4, 64], strides = [1, 1]} : vector<4x192xf32> to vector<4x64xf32>
      %29 = arith.mulf %18, %28 : vector<4x64xf32>
      %30 = arith.addf %27, %29 : vector<4x64xf32>
      %31 = math.tanh %30 : vector<4x64xf32>
      %cst_9 = arith.constant 1.000000e+00 : f32
      %32 = vector.broadcast %cst_9 : f32 to vector<4x64xf32>
      %33 = arith.subf %32, %26 : vector<4x64xf32>
      %34 = arith.mulf %33, %31 : vector<4x64xf32>
      %35 = arith.mulf %26, %arg5 : vector<4x64xf32>
      %36 = arith.addf %34, %35 : vector<4x64xf32>
      %37 = arith.index_cast %arg4 : i32 to index
      %c0_10 = arith.constant 0 : index
      %c0_11 = arith.constant 0 : index
      %38 = vector.load %arg3[%37, %c0_10, %c0_11] : memref<8x4x64xf32, #tpu.memory_space<vmem>>, vector<1x4x64xf32>
      %39 = vector.shape_cast %38 : vector<1x4x64xf32> to vector<4x64xf32>
      %40 = vector.shape_cast %36 : vector<4x64xf32> to vector<1x4x64xf32>
      tpu.vector_store %arg3[%37, %c0_10, %c0_11], %40 {strides = array<i32>} : memref<8x4x64xf32, #tpu.memory_space<vmem>>, vector<1x4x64xf32>,
      scf.yield %36 : vector<4x64xf32>
    }
    %c8_i32_3 = arith.constant 8 : i32
    return
  }
}

module attributes {stable_mosaic.version = 11 : i64} {
  func.func @_linear_kernel(%arg0: i32, %arg1: memref<32x64xf32, #tpu.memory_space<vmem>>, %arg2: memref<64x128xf32, #tpu.memory_space<vmem>>, %arg3: memref<1x128xf32, #tpu.memory_space<vmem>>, %arg4: memref<32x128xf32, #tpu.memory_space<vmem>>) attributes {dimension_semantics = [#tpu.dimension_semantics<parallel>], iteration_bounds = array<i64: 1>, scalar_prefetch = 0 : i64, scratch_operands = 0 : i64, tpu.core_type = #tpu.core_type<tc>, window_params = [{transform_indices = @transform_0, window_bounds = array<i64: 32, 64>}, {pipeline_mode = #tpu.pipeline_mode<synchronous>, transform_indices = @transform_1, window_bounds = array<i64: 64, 128>}, {pipeline_mode = #tpu.pipeline_mode<synchronous>, transform_indices = @transform_2, window_bounds = array<i64: 1, 128>}, {transform_indices = @transform_3, window_bounds = array<i64: 32, 128>}]} {
    %c0 = arith.constant 0 : index
    %c0_0 = arith.constant 0 : index
    %0 = vector.load %arg1[%c0, %c0_0] : memref<32x64xf32, #tpu.memory_space<vmem>>, vector<32x64xf32>
    %c0_1 = arith.constant 0 : index
    %c0_2 = arith.constant 0 : index
    %1 = vector.load %arg2[%c0_1, %c0_2] : memref<64x128xf32, #tpu.memory_space<vmem>>, vector<64x128xf32>
    %2 = arith.truncf %0 : vector<32x64xf32> to vector<32x64xbf16>
    %3 = arith.truncf %1 : vector<64x128xf32> to vector<64x128xbf16>
    %cst = arith.constant dense<0.000000e+00> : vector<32x128xf32>
    %4 = tpu.matmul %2, %3, %cst {dimension_numbers = #tpu.dot_dimension_numbers<[1], [0], [0], [1], [0, 0, 1, 1], [], []>} : vector<32x64xbf16>, vector<64x128xbf16>, vector<32x128xf32> -> vector<32x128xf32>
    %c0_3 = arith.constant 0 : index
    %c0_4 = arith.constant 0 : index
    %5 = vector.load %arg3[%c0_3, %c0_4] : memref<1x128xf32, #tpu.memory_space<vmem>>, vector<1x128xf32>
    %6 = vector.broadcast %5 : vector<1x128xf32> to vector<32x128xf32>
    %7 = arith.addf %4, %6 : vector<32x128xf32>
    %c0_5 = arith.constant 0 : index
    %c0_6 = arith.constant 0 : index
    %8 = vector.load %arg4[%c0_5, %c0_6] : memref<32x128xf32, #tpu.memory_space<vmem>>, vector<32x128xf32>
    tpu.vector_store %arg4[%c0_5, %c0_6], %7 {strides = array<i32>} : memref<32x128xf32, #tpu.memory_space<vmem>>, vector<32x128xf32>,
    return
  }
  func.func @transform_0(%arg0: i32) -> (i32, i32) {
    %c0_i32 = arith.constant 0 : i32
    %c0_i32_0 = arith.constant 0 : i32
    return %arg0, %c0_i32 : i32, i32
  }
  func.func @transform_1(%arg0: i32) -> (i32, i32) {
    %c0_i32 = arith.constant 0 : i32
    %c0_i32_0 = arith.constant 0 : i32
    %c0_i32_1 = arith.constant 0 : i32
    return %c0_i32, %c0_i32_0 : i32, i32
  }
  func.func @transform_2(%arg0: i32) -> (i32, i32) {
    %c0_i32 = arith.constant 0 : i32
    %c0_i32_0 = arith.constant 0 : i32
    %c0_i32_1 = arith.constant 0 : i32
    return %c0_i32, %c0_i32_0 : i32, i32
  }
  func.func @transform_3(%arg0: i32) -> (i32, i32) {
    %c0_i32 = arith.constant 0 : i32
    %c0_i32_0 = arith.constant 0 : i32
    return %arg0, %c0_i32 : i32, i32
  }
}

module attributes {stable_mosaic.version = 11 : i64} {
  func.func @_linear_res_ln_kernel(%arg0: i32, %arg1: memref<32x128xf32, #tpu.memory_space<vmem>>, %arg2: memref<32x64xf32, #tpu.memory_space<vmem>>, %arg3: memref<128x64xf32, #tpu.memory_space<vmem>>, %arg4: memref<1x64xf32, #tpu.memory_space<vmem>>, %arg5: memref<1x64xf32, #tpu.memory_space<vmem>>, %arg6: memref<1x64xf32, #tpu.memory_space<vmem>>, %arg7: memref<32x64xf32, #tpu.memory_space<vmem>>) attributes {dimension_semantics = [#tpu.dimension_semantics<parallel>], iteration_bounds = array<i64: 1>, scalar_prefetch = 0 : i64, scratch_operands = 0 : i64, tpu.core_type = #tpu.core_type<tc>, window_params = [{transform_indices = @transform_0, window_bounds = array<i64: 32, 128>}, {transform_indices = @transform_1, window_bounds = array<i64: 32, 64>}, {pipeline_mode = #tpu.pipeline_mode<synchronous>, transform_indices = @transform_2, window_bounds = array<i64: 128, 64>}, {pipeline_mode = #tpu.pipeline_mode<synchronous>, transform_indices = @transform_3, window_bounds = array<i64: 1, 64>}, {pipeline_mode = #tpu.pipeline_mode<synchronous>, transform_indices = @transform_4, window_bounds = array<i64: 1, 64>}, {pipeline_mode = #tpu.pipeline_mode<synchronous>, transform_indices = @transform_5, window_bounds = array<i64: 1, 64>}, {transform_indices = @transform_6, window_bounds = array<i64: 32, 64>}]} {
    %c0 = arith.constant 0 : index
    %c0_0 = arith.constant 0 : index
    %0 = vector.load %arg1[%c0, %c0_0] : memref<32x128xf32, #tpu.memory_space<vmem>>, vector<32x128xf32>
    %c0_1 = arith.constant 0 : index
    %c0_2 = arith.constant 0 : index
    %1 = vector.load %arg3[%c0_1, %c0_2] : memref<128x64xf32, #tpu.memory_space<vmem>>, vector<128x64xf32>
    %2 = arith.truncf %0 : vector<32x128xf32> to vector<32x128xbf16>
    %3 = arith.truncf %1 : vector<128x64xf32> to vector<128x64xbf16>
    %cst = arith.constant dense<0.000000e+00> : vector<32x64xf32>
    %4 = tpu.matmul %2, %3, %cst {dimension_numbers = #tpu.dot_dimension_numbers<[1], [0], [0], [1], [0, 0, 1, 1], [], []>} : vector<32x128xbf16>, vector<128x64xbf16>, vector<32x64xf32> -> vector<32x64xf32>
    %c0_3 = arith.constant 0 : index
    %c0_4 = arith.constant 0 : index
    %5 = vector.load %arg4[%c0_3, %c0_4] : memref<1x64xf32, #tpu.memory_space<vmem>>, vector<1x64xf32>
    %6 = vector.broadcast %5 : vector<1x64xf32> to vector<32x64xf32>
    %7 = arith.addf %4, %6 : vector<32x64xf32>
    %c0_5 = arith.constant 0 : index
    %c0_6 = arith.constant 0 : index
    %8 = vector.load %arg2[%c0_5, %c0_6] : memref<32x64xf32, #tpu.memory_space<vmem>>, vector<32x64xf32>
    %9 = arith.addf %7, %8 : vector<32x64xf32>
    %cst_7 = arith.constant dense<0.000000e+00> : vector<32xf32>
    %10 = vector.multi_reduction <add>, %9, %cst_7 [1] : vector<32x64xf32> to vector<32xf32>
    %11 = vector.shape_cast %10 : vector<32xf32> to vector<32x1xf32>
    %cst_8 = arith.constant 6.400000e+01 : f32
    %12 = vector.broadcast %cst_8 : f32 to vector<32x1xf32>
    %13 = arith.divf %11, %12 : vector<32x1xf32>
    %14 = vector.broadcast %13 : vector<32x1xf32> to vector<32x64xf32>
    %15 = arith.subf %9, %14 : vector<32x64xf32>
    %16 = arith.mulf %15, %15 : vector<32x64xf32>
    %cst_9 = arith.constant dense<0.000000e+00> : vector<32xf32>
    %17 = vector.multi_reduction <add>, %16, %cst_9 [1] : vector<32x64xf32> to vector<32xf32>
    %18 = vector.shape_cast %17 : vector<32xf32> to vector<32x1xf32>
    %cst_10 = arith.constant 6.400000e+01 : f32
    %19 = vector.broadcast %cst_10 : f32 to vector<32x1xf32>
    %20 = arith.divf %18, %19 : vector<32x1xf32>
    %21 = vector.broadcast %13 : vector<32x1xf32> to vector<32x64xf32>
    %22 = arith.subf %9, %21 : vector<32x64xf32>
    %cst_11 = arith.constant 9.99999996E-13 : f32
    %23 = vector.broadcast %cst_11 : f32 to vector<32x1xf32>
    %24 = arith.addf %20, %23 : vector<32x1xf32>
    %25 = math.rsqrt %24 : vector<32x1xf32>
    %26 = vector.broadcast %25 : vector<32x1xf32> to vector<32x64xf32>
    %27 = arith.mulf %22, %26 : vector<32x64xf32>
    %c0_12 = arith.constant 0 : index
    %c0_13 = arith.constant 0 : index
    %28 = vector.load %arg5[%c0_12, %c0_13] : memref<1x64xf32, #tpu.memory_space<vmem>>, vector<1x64xf32>
    %29 = vector.broadcast %28 : vector<1x64xf32> to vector<32x64xf32>
    %30 = arith.mulf %27, %29 : vector<32x64xf32>
    %c0_14 = arith.constant 0 : index
    %c0_15 = arith.constant 0 : index
    %31 = vector.load %arg6[%c0_14, %c0_15] : memref<1x64xf32, #tpu.memory_space<vmem>>, vector<1x64xf32>
    %32 = vector.broadcast %31 : vector<1x64xf32> to vector<32x64xf32>
    %33 = arith.addf %30, %32 : vector<32x64xf32>
    %c0_16 = arith.constant 0 : index
    %c0_17 = arith.constant 0 : index
    %34 = vector.load %arg7[%c0_16, %c0_17] : memref<32x64xf32, #tpu.memory_space<vmem>>, vector<32x64xf32>
    tpu.vector_store %arg7[%c0_16, %c0_17], %33 {strides = array<i32>} : memref<32x64xf32, #tpu.memory_space<vmem>>, vector<32x64xf32>,
    return
  }
  func.func @transform_0(%arg0: i32) -> (i32, i32) {
    %c0_i32 = arith.constant 0 : i32
    %c0_i32_0 = arith.constant 0 : i32
    return %arg0, %c0_i32 : i32, i32
  }
  func.func @transform_1(%arg0: i32) -> (i32, i32) {
    %c0_i32 = arith.constant 0 : i32
    %c0_i32_0 = arith.constant 0 : i32
    return %arg0, %c0_i32 : i32, i32
  }
  func.func @transform_2(%arg0: i32) -> (i32, i32) {
    %c0_i32 = arith.constant 0 : i32
    %c0_i32_0 = arith.constant 0 : i32
    %c0_i32_1 = arith.constant 0 : i32
    return %c0_i32, %c0_i32_0 : i32, i32
  }
  func.func @transform_3(%arg0: i32) -> (i32, i32) {
    %c0_i32 = arith.constant 0 : i32
    %c0_i32_0 = arith.constant 0 : i32
    %c0_i32_1 = arith.constant 0 : i32
    return %c0_i32, %c0_i32_0 : i32, i32
  }
  func.func @transform_4(%arg0: i32) -> (i32, i32) {
    %c0_i32 = arith.constant 0 : i32
    %c0_i32_0 = arith.constant 0 : i32
    %c0_i32_1 = arith.constant 0 : i32
    return %c0_i32, %c0_i32_0 : i32, i32
  }
  func.func @transform_5(%arg0: i32) -> (i32, i32) {
    %c0_i32 = arith.constant 0 : i32
    %c0_i32_0 = arith.constant 0 : i32
    %c0_i32_1 = arith.constant 0 : i32
    return %c0_i32, %c0_i32_0 : i32, i32
  }
  func.func @transform_6(%arg0: i32) -> (i32, i32) {
    %c0_i32 = arith.constant 0 : i32
    %c0_i32_0 = arith.constant 0 : i32
    return %arg0, %c0_i32 : i32, i32
  }
}

module attributes {stable_mosaic.version = 11 : i64} {
  func.func @_linear_kernel(%arg0: i32, %arg1: memref<32x64xf32, #tpu.memory_space<vmem>>, %arg2: memref<64x192xf32, #tpu.memory_space<vmem>>, %arg3: memref<1x192xf32, #tpu.memory_space<vmem>>, %arg4: memref<32x192xf32, #tpu.memory_space<vmem>>) attributes {dimension_semantics = [#tpu.dimension_semantics<parallel>], iteration_bounds = array<i64: 1>, scalar_prefetch = 0 : i64, scratch_operands = 0 : i64, tpu.core_type = #tpu.core_type<tc>, window_params = [{transform_indices = @transform_0, window_bounds = array<i64: 32, 64>}, {pipeline_mode = #tpu.pipeline_mode<synchronous>, transform_indices = @transform_1, window_bounds = array<i64: 64, 192>}, {pipeline_mode = #tpu.pipeline_mode<synchronous>, transform_indices = @transform_2, window_bounds = array<i64: 1, 192>}, {transform_indices = @transform_3, window_bounds = array<i64: 32, 192>}]} {
    %c0 = arith.constant 0 : index
    %c0_0 = arith.constant 0 : index
    %0 = vector.load %arg1[%c0, %c0_0] : memref<32x64xf32, #tpu.memory_space<vmem>>, vector<32x64xf32>
    %c0_1 = arith.constant 0 : index
    %c0_2 = arith.constant 0 : index
    %1 = vector.load %arg2[%c0_1, %c0_2] : memref<64x192xf32, #tpu.memory_space<vmem>>, vector<64x192xf32>
    %2 = arith.truncf %0 : vector<32x64xf32> to vector<32x64xbf16>
    %3 = arith.truncf %1 : vector<64x192xf32> to vector<64x192xbf16>
    %cst = arith.constant dense<0.000000e+00> : vector<32x192xf32>
    %4 = tpu.matmul %2, %3, %cst {dimension_numbers = #tpu.dot_dimension_numbers<[1], [0], [0], [1], [0, 0, 1, 1], [], []>} : vector<32x64xbf16>, vector<64x192xbf16>, vector<32x192xf32> -> vector<32x192xf32>
    %c0_3 = arith.constant 0 : index
    %c0_4 = arith.constant 0 : index
    %5 = vector.load %arg3[%c0_3, %c0_4] : memref<1x192xf32, #tpu.memory_space<vmem>>, vector<1x192xf32>
    %6 = vector.broadcast %5 : vector<1x192xf32> to vector<32x192xf32>
    %7 = arith.addf %4, %6 : vector<32x192xf32>
    %c0_5 = arith.constant 0 : index
    %c0_6 = arith.constant 0 : index
    %8 = vector.load %arg4[%c0_5, %c0_6] : memref<32x192xf32, #tpu.memory_space<vmem>>, vector<32x192xf32>
    tpu.vector_store %arg4[%c0_5, %c0_6], %7 {strides = array<i32>} : memref<32x192xf32, #tpu.memory_space<vmem>>, vector<32x192xf32>,
    return
  }
  func.func @transform_0(%arg0: i32) -> (i32, i32) {
    %c0_i32 = arith.constant 0 : i32
    %c0_i32_0 = arith.constant 0 : i32
    return %arg0, %c0_i32 : i32, i32
  }
  func.func @transform_1(%arg0: i32) -> (i32, i32) {
    %c0_i32 = arith.constant 0 : i32
    %c0_i32_0 = arith.constant 0 : i32
    %c0_i32_1 = arith.constant 0 : i32
    return %c0_i32, %c0_i32_0 : i32, i32
  }
  func.func @transform_2(%arg0: i32) -> (i32, i32) {
    %c0_i32 = arith.constant 0 : i32
    %c0_i32_0 = arith.constant 0 : i32
    %c0_i32_1 = arith.constant 0 : i32
    return %c0_i32, %c0_i32_0 : i32, i32
  }
  func.func @transform_3(%arg0: i32) -> (i32, i32) {
    %c0_i32 = arith.constant 0 : i32
    %c0_i32_0 = arith.constant 0 : i32
    return %arg0, %c0_i32 : i32, i32
  }
}

module attributes {stable_mosaic.version = 11 : i64} {
  func.func @_attn_kernel(%arg0: i32, %arg1: memref<1x8x192xf32, #tpu.memory_space<vmem>>, %arg2: memref<1x1x8xf32, #tpu.memory_space<vmem>>, %arg3: memref<1x8x64xf32, #tpu.memory_space<vmem>>) attributes {dimension_semantics = [#tpu.dimension_semantics<parallel>], iteration_bounds = array<i64: 4>, scalar_prefetch = 0 : i64, scratch_operands = 0 : i64, tpu.core_type = #tpu.core_type<tc>, window_params = [{transform_indices = @transform_0, window_bounds = array<i64: 1, 8, 192>}, {transform_indices = @transform_1, window_bounds = array<i64: 1, 1, 8>}, {transform_indices = @transform_2, window_bounds = array<i64: 1, 8, 64>}]} {
    %c0 = arith.constant 0 : index
    %c0_0 = arith.constant 0 : index
    %c0_1 = arith.constant 0 : index
    %0 = vector.load %arg1[%c0, %c0_0, %c0_1] : memref<1x8x192xf32, #tpu.memory_space<vmem>>, vector<1x8x192xf32>
    %1 = vector.shape_cast %0 : vector<1x8x192xf32> to vector<8x192xf32>
    %c0_2 = arith.constant 0 : index
    %c0_3 = arith.constant 0 : index
    %c0_4 = arith.constant 0 : index
    %2 = vector.load %arg2[%c0_2, %c0_3, %c0_4] : memref<1x1x8xf32, #tpu.memory_space<vmem>>, vector<1x1x8xf32>
    %3 = vector.shape_cast %2 : vector<1x1x8xf32> to vector<1x8xf32>
    %4 = vector.extract_strided_slice %1 {offsets = [0, 0], sizes = [8, 32], strides = [1, 1]} : vector<8x192xf32> to vector<8x32xf32>
    %5 = vector.extract_strided_slice %1 {offsets = [0, 64], sizes = [8, 32], strides = [1, 1]} : vector<8x192xf32> to vector<8x32xf32>
    %6 = vector.extract_strided_slice %1 {offsets = [0, 128], sizes = [8, 32], strides = [1, 1]} : vector<8x192xf32> to vector<8x32xf32>
    %7 = arith.truncf %4 : vector<8x32xf32> to vector<8x32xbf16>
    %8 = arith.truncf %5 : vector<8x32xf32> to vector<8x32xbf16>
    %cst = arith.constant dense<0.000000e+00> : vector<8x8xf32>
    %9 = tpu.matmul %7, %8, %cst {dimension_numbers = #tpu.dot_dimension_numbers<[1], [1], [0], [0], [0, 0, 1, 0], [], []>} : vector<8x32xbf16>, vector<8x32xbf16>, vector<8x8xf32> -> vector<8x8xf32>
    %cst_5 = arith.constant 0.176776692 : f32
    %10 = vector.broadcast %cst_5 : f32 to vector<8x8xf32>
    %11 = arith.mulf %9, %10 : vector<8x8xf32>
    %12 = vector.broadcast %3 : vector<1x8xf32> to vector<8x8xf32>
    %13 = arith.addf %11, %12 : vector<8x8xf32>
    %cst_6 = arith.constant dense<0xFF800000> : vector<8xf32>
    %14 = vector.multi_reduction <maximumf>, %13, %cst_6 [1] : vector<8x8xf32> to vector<8xf32>
    %cst_7 = arith.constant 0xFF800000 : f32
    %15 = vector.broadcast %cst_7 : f32 to vector<8xf32>
    %16 = arith.maximumf %15, %14 : vector<8xf32>
    %17 = vector.shape_cast %16 : vector<8xf32> to vector<8x1xf32>
    %18 = vector.broadcast %17 : vector<8x1xf32> to vector<8x8xf32>
    %19 = arith.subf %13, %18 : vector<8x8xf32>
    %20 = math.exp %19 : vector<8x8xf32>
    %cst_8 = arith.constant dense<0.000000e+00> : vector<8xf32>
    %21 = vector.multi_reduction <add>, %20, %cst_8 [1] : vector<8x8xf32> to vector<8xf32>
    %22 = vector.shape_cast %21 : vector<8xf32> to vector<8x1xf32>
    %23 = vector.broadcast %22 : vector<8x1xf32> to vector<8x8xf32>
    %24 = arith.divf %20, %23 : vector<8x8xf32>
    %25 = arith.truncf %24 : vector<8x8xf32> to vector<8x8xbf16>
    %26 = arith.truncf %6 : vector<8x32xf32> to vector<8x32xbf16>
    %cst_9 = arith.constant dense<0.000000e+00> : vector<8x32xf32>
    %27 = tpu.matmul %25, %26, %cst_9 {dimension_numbers = #tpu.dot_dimension_numbers<[1], [0], [0], [1], [0, 0, 1, 1], [], []>} : vector<8x8xbf16>, vector<8x32xbf16>, vector<8x32xf32> -> vector<8x32xf32>
    %28 = vector.extract_strided_slice %1 {offsets = [0, 32], sizes = [8, 32], strides = [1, 1]} : vector<8x192xf32> to vector<8x32xf32>
    %29 = vector.extract_strided_slice %1 {offsets = [0, 96], sizes = [8, 32], strides = [1, 1]} : vector<8x192xf32> to vector<8x32xf32>
    %30 = vector.extract_strided_slice %1 {offsets = [0, 160], sizes = [8, 32], strides = [1, 1]} : vector<8x192xf32> to vector<8x32xf32>
    %31 = arith.truncf %28 : vector<8x32xf32> to vector<8x32xbf16>
    %32 = arith.truncf %29 : vector<8x32xf32> to vector<8x32xbf16>
    %cst_10 = arith.constant dense<0.000000e+00> : vector<8x8xf32>
    %33 = tpu.matmul %31, %32, %cst_10 {dimension_numbers = #tpu.dot_dimension_numbers<[1], [1], [0], [0], [0, 0, 1, 0], [], []>} : vector<8x32xbf16>, vector<8x32xbf16>, vector<8x8xf32> -> vector<8x8xf32>
    %cst_11 = arith.constant 0.176776692 : f32
    %34 = vector.broadcast %cst_11 : f32 to vector<8x8xf32>
    %35 = arith.mulf %33, %34 : vector<8x8xf32>
    %36 = vector.broadcast %3 : vector<1x8xf32> to vector<8x8xf32>
    %37 = arith.addf %35, %36 : vector<8x8xf32>
    %cst_12 = arith.constant dense<0xFF800000> : vector<8xf32>
    %38 = vector.multi_reduction <maximumf>, %37, %cst_12 [1] : vector<8x8xf32> to vector<8xf32>
    %cst_13 = arith.constant 0xFF800000 : f32
    %39 = vector.broadcast %cst_13 : f32 to vector<8xf32>
    %40 = arith.maximumf %39, %38 : vector<8xf32>
    %41 = vector.shape_cast %40 : vector<8xf32> to vector<8x1xf32>
    %42 = vector.broadcast %41 : vector<8x1xf32> to vector<8x8xf32>
    %43 = arith.subf %37, %42 : vector<8x8xf32>
    %44 = math.exp %43 : vector<8x8xf32>
    %cst_14 = arith.constant dense<0.000000e+00> : vector<8xf32>
    %45 = vector.multi_reduction <add>, %44, %cst_14 [1] : vector<8x8xf32> to vector<8xf32>
    %46 = vector.shape_cast %45 : vector<8xf32> to vector<8x1xf32>
    %47 = vector.broadcast %46 : vector<8x1xf32> to vector<8x8xf32>
    %48 = arith.divf %44, %47 : vector<8x8xf32>
    %49 = arith.truncf %48 : vector<8x8xf32> to vector<8x8xbf16>
    %50 = arith.truncf %30 : vector<8x32xf32> to vector<8x32xbf16>
    %cst_15 = arith.constant dense<0.000000e+00> : vector<8x32xf32>
    %51 = tpu.matmul %49, %50, %cst_15 {dimension_numbers = #tpu.dot_dimension_numbers<[1], [0], [0], [1], [0, 0, 1, 1], [], []>} : vector<8x8xbf16>, vector<8x32xbf16>, vector<8x32xf32> -> vector<8x32xf32>
    %52 = tpu.concatenate %27, %51 in 1 : vector<8x32xf32>, vector<8x32xf32> -> vector<8x64xf32>
    %c0_16 = arith.constant 0 : index
    %c0_17 = arith.constant 0 : index
    %c0_18 = arith.constant 0 : index
    %53 = vector.load %arg3[%c0_16, %c0_17, %c0_18] : memref<1x8x64xf32, #tpu.memory_space<vmem>>, vector<1x8x64xf32>
    %54 = vector.shape_cast %53 : vector<1x8x64xf32> to vector<8x64xf32>
    %55 = vector.shape_cast %52 : vector<8x64xf32> to vector<1x8x64xf32>
    tpu.vector_store %arg3[%c0_16, %c0_17, %c0_18], %55 {strides = array<i32>} : memref<1x8x64xf32, #tpu.memory_space<vmem>>, vector<1x8x64xf32>,
    return
  }
  func.func @transform_0(%arg0: i32) -> (i32, i32, i32) {
    %c0_i32 = arith.constant 0 : i32
    %c0_i32_0 = arith.constant 0 : i32
    %c0_i32_1 = arith.constant 0 : i32
    return %arg0, %c0_i32, %c0_i32_0 : i32, i32, i32
  }
  func.func @transform_1(%arg0: i32) -> (i32, i32, i32) {
    %c0_i32 = arith.constant 0 : i32
    %c0_i32_0 = arith.constant 0 : i32
    %c0_i32_1 = arith.constant 0 : i32
    return %arg0, %c0_i32, %c0_i32_0 : i32, i32, i32
  }
  func.func @transform_2(%arg0: i32) -> (i32, i32, i32) {
    %c0_i32 = arith.constant 0 : i32
    %c0_i32_0 = arith.constant 0 : i32
    %c0_i32_1 = arith.constant 0 : i32
    return %arg0, %c0_i32, %c0_i32_0 : i32, i32, i32
  }
}

module attributes {stable_mosaic.version = 11 : i64} {
  func.func @_linear_res_ln_kernel(%arg0: i32, %arg1: memref<32x64xf32, #tpu.memory_space<vmem>>, %arg2: memref<32x64xf32, #tpu.memory_space<vmem>>, %arg3: memref<64x64xf32, #tpu.memory_space<vmem>>, %arg4: memref<1x64xf32, #tpu.memory_space<vmem>>, %arg5: memref<1x64xf32, #tpu.memory_space<vmem>>, %arg6: memref<1x64xf32, #tpu.memory_space<vmem>>, %arg7: memref<32x64xf32, #tpu.memory_space<vmem>>) attributes {dimension_semantics = [#tpu.dimension_semantics<parallel>], iteration_bounds = array<i64: 1>, scalar_prefetch = 0 : i64, scratch_operands = 0 : i64, tpu.core_type = #tpu.core_type<tc>, window_params = [{transform_indices = @transform_0, window_bounds = array<i64: 32, 64>}, {transform_indices = @transform_1, window_bounds = array<i64: 32, 64>}, {pipeline_mode = #tpu.pipeline_mode<synchronous>, transform_indices = @transform_2, window_bounds = array<i64: 64, 64>}, {pipeline_mode = #tpu.pipeline_mode<synchronous>, transform_indices = @transform_3, window_bounds = array<i64: 1, 64>}, {pipeline_mode = #tpu.pipeline_mode<synchronous>, transform_indices = @transform_4, window_bounds = array<i64: 1, 64>}, {pipeline_mode = #tpu.pipeline_mode<synchronous>, transform_indices = @transform_5, window_bounds = array<i64: 1, 64>}, {transform_indices = @transform_6, window_bounds = array<i64: 32, 64>}]} {
    %c0 = arith.constant 0 : index
    %c0_0 = arith.constant 0 : index
    %0 = vector.load %arg1[%c0, %c0_0] : memref<32x64xf32, #tpu.memory_space<vmem>>, vector<32x64xf32>
    %c0_1 = arith.constant 0 : index
    %c0_2 = arith.constant 0 : index
    %1 = vector.load %arg3[%c0_1, %c0_2] : memref<64x64xf32, #tpu.memory_space<vmem>>, vector<64x64xf32>
    %2 = arith.truncf %0 : vector<32x64xf32> to vector<32x64xbf16>
    %3 = arith.truncf %1 : vector<64x64xf32> to vector<64x64xbf16>
    %cst = arith.constant dense<0.000000e+00> : vector<32x64xf32>
    %4 = tpu.matmul %2, %3, %cst {dimension_numbers = #tpu.dot_dimension_numbers<[1], [0], [0], [1], [0, 0, 1, 1], [], []>} : vector<32x64xbf16>, vector<64x64xbf16>, vector<32x64xf32> -> vector<32x64xf32>
    %c0_3 = arith.constant 0 : index
    %c0_4 = arith.constant 0 : index
    %5 = vector.load %arg4[%c0_3, %c0_4] : memref<1x64xf32, #tpu.memory_space<vmem>>, vector<1x64xf32>
    %6 = vector.broadcast %5 : vector<1x64xf32> to vector<32x64xf32>
    %7 = arith.addf %4, %6 : vector<32x64xf32>
    %c0_5 = arith.constant 0 : index
    %c0_6 = arith.constant 0 : index
    %8 = vector.load %arg2[%c0_5, %c0_6] : memref<32x64xf32, #tpu.memory_space<vmem>>, vector<32x64xf32>
    %9 = arith.addf %7, %8 : vector<32x64xf32>
    %cst_7 = arith.constant dense<0.000000e+00> : vector<32xf32>
    %10 = vector.multi_reduction <add>, %9, %cst_7 [1] : vector<32x64xf32> to vector<32xf32>
    %11 = vector.shape_cast %10 : vector<32xf32> to vector<32x1xf32>
    %cst_8 = arith.constant 6.400000e+01 : f32
    %12 = vector.broadcast %cst_8 : f32 to vector<32x1xf32>
    %13 = arith.divf %11, %12 : vector<32x1xf32>
    %14 = vector.broadcast %13 : vector<32x1xf32> to vector<32x64xf32>
    %15 = arith.subf %9, %14 : vector<32x64xf32>
    %16 = arith.mulf %15, %15 : vector<32x64xf32>
    %cst_9 = arith.constant dense<0.000000e+00> : vector<32xf32>
    %17 = vector.multi_reduction <add>, %16, %cst_9 [1] : vector<32x64xf32> to vector<32xf32>
    %18 = vector.shape_cast %17 : vector<32xf32> to vector<32x1xf32>
    %cst_10 = arith.constant 6.400000e+01 : f32
    %19 = vector.broadcast %cst_10 : f32 to vector<32x1xf32>
    %20 = arith.divf %18, %19 : vector<32x1xf32>
    %21 = vector.broadcast %13 : vector<32x1xf32> to vector<32x64xf32>
    %22 = arith.subf %9, %21 : vector<32x64xf32>
    %cst_11 = arith.constant 9.99999996E-13 : f32
    %23 = vector.broadcast %cst_11 : f32 to vector<32x1xf32>
    %24 = arith.addf %20, %23 : vector<32x1xf32>
    %25 = math.rsqrt %24 : vector<32x1xf32>
    %26 = vector.broadcast %25 : vector<32x1xf32> to vector<32x64xf32>
    %27 = arith.mulf %22, %26 : vector<32x64xf32>
    %c0_12 = arith.constant 0 : index
    %c0_13 = arith.constant 0 : index
    %28 = vector.load %arg5[%c0_12, %c0_13] : memref<1x64xf32, #tpu.memory_space<vmem>>, vector<1x64xf32>
    %29 = vector.broadcast %28 : vector<1x64xf32> to vector<32x64xf32>
    %30 = arith.mulf %27, %29 : vector<32x64xf32>
    %c0_14 = arith.constant 0 : index
    %c0_15 = arith.constant 0 : index
    %31 = vector.load %arg6[%c0_14, %c0_15] : memref<1x64xf32, #tpu.memory_space<vmem>>, vector<1x64xf32>
    %32 = vector.broadcast %31 : vector<1x64xf32> to vector<32x64xf32>
    %33 = arith.addf %30, %32 : vector<32x64xf32>
    %c0_16 = arith.constant 0 : index
    %c0_17 = arith.constant 0 : index
    %34 = vector.load %arg7[%c0_16, %c0_17] : memref<32x64xf32, #tpu.memory_space<vmem>>, vector<32x64xf32>
    tpu.vector_store %arg7[%c0_16, %c0_17], %33 {strides = array<i32>} : memref<32x64xf32, #tpu.memory_space<vmem>>, vector<32x64xf32>,
    return
  }
  func.func @transform_0(%arg0: i32) -> (i32, i32) {
    %c0_i32 = arith.constant 0 : i32
    %c0_i32_0 = arith.constant 0 : i32
    return %arg0, %c0_i32 : i32, i32
  }
  func.func @transform_1(%arg0: i32) -> (i32, i32) {
    %c0_i32 = arith.constant 0 : i32
    %c0_i32_0 = arith.constant 0 : i32
    return %arg0, %c0_i32 : i32, i32
  }
  func.func @transform_2(%arg0: i32) -> (i32, i32) {
    %c0_i32 = arith.constant 0 : i32
    %c0_i32_0 = arith.constant 0 : i32
    %c0_i32_1 = arith.constant 0 : i32
    return %c0_i32, %c0_i32_0 : i32, i32
  }
  func.func @transform_3(%arg0: i32) -> (i32, i32) {
    %c0_i32 = arith.constant 0 : i32
    %c0_i32_0 = arith.constant 0 : i32
    %c0_i32_1 = arith.constant 0 : i32
    return %c0_i32, %c0_i32_0 : i32, i32
  }
  func.func @transform_4(%arg0: i32) -> (i32, i32) {
    %c0_i32 = arith.constant 0 : i32
    %c0_i32_0 = arith.constant 0 : i32
    %c0_i32_1 = arith.constant 0 : i32
    return %c0_i32, %c0_i32_0 : i32, i32
  }
  func.func @transform_5(%arg0: i32) -> (i32, i32) {
    %c0_i32 = arith.constant 0 : i32
    %c0_i32_0 = arith.constant 0 : i32
    %c0_i32_1 = arith.constant 0 : i32
    return %c0_i32, %c0_i32_0 : i32, i32
  }
  func.func @transform_6(%arg0: i32) -> (i32, i32) {
    %c0_i32 = arith.constant 0 : i32
    %c0_i32_0 = arith.constant 0 : i32
    return %arg0, %c0_i32 : i32, i32
  }
}

module attributes {stable_mosaic.version = 11 : i64} {
  func.func @_ffn_kernel(%arg0: i32, %arg1: memref<32x64xf32, #tpu.memory_space<vmem>>, %arg2: memref<64x64xf32, #tpu.memory_space<vmem>>, %arg3: memref<1x64xf32, #tpu.memory_space<vmem>>, %arg4: memref<64x64xf32, #tpu.memory_space<vmem>>, %arg5: memref<1x64xf32, #tpu.memory_space<vmem>>, %arg6: memref<1x64xf32, #tpu.memory_space<vmem>>, %arg7: memref<1x64xf32, #tpu.memory_space<vmem>>, %arg8: memref<32x64xf32, #tpu.memory_space<vmem>>) attributes {dimension_semantics = [#tpu.dimension_semantics<parallel>], iteration_bounds = array<i64: 1>, scalar_prefetch = 0 : i64, scratch_operands = 0 : i64, tpu.core_type = #tpu.core_type<tc>, window_params = [{transform_indices = @transform_0, window_bounds = array<i64: 32, 64>}, {pipeline_mode = #tpu.pipeline_mode<synchronous>, transform_indices = @transform_1, window_bounds = array<i64: 64, 64>}, {pipeline_mode = #tpu.pipeline_mode<synchronous>, transform_indices = @transform_2, window_bounds = array<i64: 1, 64>}, {pipeline_mode = #tpu.pipeline_mode<synchronous>, transform_indices = @transform_3, window_bounds = array<i64: 64, 64>}, {pipeline_mode = #tpu.pipeline_mode<synchronous>, transform_indices = @transform_4, window_bounds = array<i64: 1, 64>}, {pipeline_mode = #tpu.pipeline_mode<synchronous>, transform_indices = @transform_5, window_bounds = array<i64: 1, 64>}, {pipeline_mode = #tpu.pipeline_mode<synchronous>, transform_indices = @transform_6, window_bounds = array<i64: 1, 64>}, {transform_indices = @transform_7, window_bounds = array<i64: 32, 64>}]} {
    %c0 = arith.constant 0 : index
    %c0_0 = arith.constant 0 : index
    %0 = vector.load %arg1[%c0, %c0_0] : memref<32x64xf32, #tpu.memory_space<vmem>>, vector<32x64xf32>
    %c0_1 = arith.constant 0 : index
    %c0_2 = arith.constant 0 : index
    %1 = vector.load %arg2[%c0_1, %c0_2] : memref<64x64xf32, #tpu.memory_space<vmem>>, vector<64x64xf32>
    %2 = arith.truncf %0 : vector<32x64xf32> to vector<32x64xbf16>
    %3 = arith.truncf %1 : vector<64x64xf32> to vector<64x64xbf16>
    %cst = arith.constant dense<0.000000e+00> : vector<32x64xf32>
    %4 = tpu.matmul %2, %3, %cst {dimension_numbers = #tpu.dot_dimension_numbers<[1], [0], [0], [1], [0, 0, 1, 1], [], []>} : vector<32x64xbf16>, vector<64x64xbf16>, vector<32x64xf32> -> vector<32x64xf32>
    %c0_3 = arith.constant 0 : index
    %c0_4 = arith.constant 0 : index
    %5 = vector.load %arg3[%c0_3, %c0_4] : memref<1x64xf32, #tpu.memory_space<vmem>>, vector<1x64xf32>
    %6 = vector.broadcast %5 : vector<1x64xf32> to vector<32x64xf32>
    %7 = arith.addf %4, %6 : vector<32x64xf32>
    %8 = arith.mulf %7, %7 : vector<32x64xf32>
    %9 = arith.mulf %7, %8 : vector<32x64xf32>
    %cst_5 = arith.constant 4.471500e-02 : f32
    %10 = vector.broadcast %cst_5 : f32 to vector<32x64xf32>
    %11 = arith.mulf %10, %9 : vector<32x64xf32>
    %12 = arith.addf %7, %11 : vector<32x64xf32>
    %cst_6 = arith.constant 0.797884583 : f32
    %13 = vector.broadcast %cst_6 : f32 to vector<32x64xf32>
    %14 = arith.mulf %13, %12 : vector<32x64xf32>
    %15 = math.tanh %14 : vector<32x64xf32>
    %cst_7 = arith.constant 1.000000e+00 : f32
    %16 = vector.broadcast %cst_7 : f32 to vector<32x64xf32>
    %17 = arith.addf %16, %15 : vector<32x64xf32>
    %cst_8 = arith.constant 5.000000e-01 : f32
    %18 = vector.broadcast %cst_8 : f32 to vector<32x64xf32>
    %19 = arith.mulf %18, %17 : vector<32x64xf32>
    %20 = arith.mulf %7, %19 : vector<32x64xf32>
    %c0_9 = arith.constant 0 : index
    %c0_10 = arith.constant 0 : index
    %21 = vector.load %arg4[%c0_9, %c0_10] : memref<64x64xf32, #tpu.memory_space<vmem>>, vector<64x64xf32>
    %22 = arith.truncf %20 : vector<32x64xf32> to vector<32x64xbf16>
    %23 = arith.truncf %21 : vector<64x64xf32> to vector<64x64xbf16>
    %cst_11 = arith.constant dense<0.000000e+00> : vector<32x64xf32>
    %24 = tpu.matmul %22, %23, %cst_11 {dimension_numbers = #tpu.dot_dimension_numbers<[1], [0], [0], [1], [0, 0, 1, 1], [], []>} : vector<32x64xbf16>, vector<64x64xbf16>, vector<32x64xf32> -> vector<32x64xf32>
    %c0_12 = arith.constant 0 : index
    %c0_13 = arith.constant 0 : index
    %25 = vector.load %arg5[%c0_12, %c0_13] : memref<1x64xf32, #tpu.memory_space<vmem>>, vector<1x64xf32>
    %26 = vector.broadcast %25 : vector<1x64xf32> to vector<32x64xf32>
    %27 = arith.addf %24, %26 : vector<32x64xf32>
    %28 = arith.addf %27, %0 : vector<32x64xf32>
    %cst_14 = arith.constant dense<0.000000e+00> : vector<32xf32>
    %29 = vector.multi_reduction <add>, %28, %cst_14 [1] : vector<32x64xf32> to vector<32xf32>
    %30 = vector.shape_cast %29 : vector<32xf32> to vector<32x1xf32>
    %cst_15 = arith.constant 6.400000e+01 : f32
    %31 = vector.broadcast %cst_15 : f32 to vector<32x1xf32>
    %32 = arith.divf %30, %31 : vector<32x1xf32>
    %33 = vector.broadcast %32 : vector<32x1xf32> to vector<32x64xf32>
    %34 = arith.subf %28, %33 : vector<32x64xf32>
    %35 = arith.mulf %34, %34 : vector<32x64xf32>
    %cst_16 = arith.constant dense<0.000000e+00> : vector<32xf32>
    %36 = vector.multi_reduction <add>, %35, %cst_16 [1] : vector<32x64xf32> to vector<32xf32>
    %37 = vector.shape_cast %36 : vector<32xf32> to vector<32x1xf32>
    %cst_17 = arith.constant 6.400000e+01 : f32
    %38 = vector.broadcast %cst_17 : f32 to vector<32x1xf32>
    %39 = arith.divf %37, %38 : vector<32x1xf32>
    %40 = vector.broadcast %32 : vector<32x1xf32> to vector<32x64xf32>
    %41 = arith.subf %28, %40 : vector<32x64xf32>
    %cst_18 = arith.constant 9.99999996E-13 : f32
    %42 = vector.broadcast %cst_18 : f32 to vector<32x1xf32>
    %43 = arith.addf %39, %42 : vector<32x1xf32>
    %44 = math.rsqrt %43 : vector<32x1xf32>
    %45 = vector.broadcast %44 : vector<32x1xf32> to vector<32x64xf32>
    %46 = arith.mulf %41, %45 : vector<32x64xf32>
    %c0_19 = arith.constant 0 : index
    %c0_20 = arith.constant 0 : index
    %47 = vector.load %arg6[%c0_19, %c0_20] : memref<1x64xf32, #tpu.memory_space<vmem>>, vector<1x64xf32>
    %48 = vector.broadcast %47 : vector<1x64xf32> to vector<32x64xf32>
    %49 = arith.mulf %46, %48 : vector<32x64xf32>
    %c0_21 = arith.constant 0 : index
    %c0_22 = arith.constant 0 : index
    %50 = vector.load %arg7[%c0_21, %c0_22] : memref<1x64xf32, #tpu.memory_space<vmem>>, vector<1x64xf32>
    %51 = vector.broadcast %50 : vector<1x64xf32> to vector<32x64xf32>
    %52 = arith.addf %49, %51 : vector<32x64xf32>
    %c0_23 = arith.constant 0 : index
    %c0_24 = arith.constant 0 : index
    %53 = vector.load %arg8[%c0_23, %c0_24] : memref<32x64xf32, #tpu.memory_space<vmem>>, vector<32x64xf32>
    tpu.vector_store %arg8[%c0_23, %c0_24], %52 {strides = array<i32>} : memref<32x64xf32, #tpu.memory_space<vmem>>, vector<32x64xf32>,
    return
  }
  func.func @transform_0(%arg0: i32) -> (i32, i32) {
    %c0_i32 = arith.constant 0 : i32
    %c0_i32_0 = arith.constant 0 : i32
    return %arg0, %c0_i32 : i32, i32
  }
  func.func @transform_1(%arg0: i32) -> (i32, i32) {
    %c0_i32 = arith.constant 0 : i32
    %c0_i32_0 = arith.constant 0 : i32
    %c0_i32_1 = arith.constant 0 : i32
    return %c0_i32, %c0_i32_0 : i32, i32
  }
  func.func @transform_2(%arg0: i32) -> (i32, i32) {
    %c0_i32 = arith.constant 0 : i32
    %c0_i32_0 = arith.constant 0 : i32
    %c0_i32_1 = arith.constant 0 : i32
    return %c0_i32, %c0_i32_0 : i32, i32
  }
  func.func @transform_3(%arg0: i32) -> (i32, i32) {
    %c0_i32 = arith.constant 0 : i32
    %c0_i32_0 = arith.constant 0 : i32
    %c0_i32_1 = arith.constant 0 : i32
    return %c0_i32, %c0_i32_0 : i32, i32
  }
  func.func @transform_4(%arg0: i32) -> (i32, i32) {
    %c0_i32 = arith.constant 0 : i32
    %c0_i32_0 = arith.constant 0 : i32
    %c0_i32_1 = arith.constant 0 : i32
    return %c0_i32, %c0_i32_0 : i32, i32
  }
  func.func @transform_5(%arg0: i32) -> (i32, i32) {
    %c0_i32 = arith.constant 0 : i32
    %c0_i32_0 = arith.constant 0 : i32
    %c0_i32_1 = arith.constant 0 : i32
    return %c0_i32, %c0_i32_0 : i32, i32
  }
  func.func @transform_6(%arg0: i32) -> (i32, i32) {
    %c0_i32 = arith.constant 0 : i32
    %c0_i32_0 = arith.constant 0 : i32
    %c0_i32_1 = arith.constant 0 : i32
    return %c0_i32, %c0_i32_0 : i32, i32
  }
  func.func @transform_7(%arg0: i32) -> (i32, i32) {
    %c0_i32 = arith.constant 0 : i32
    %c0_i32_0 = arith.constant 0 : i32
    return %arg0, %c0_i32 : i32, i32
  }
}

module attributes {stable_mosaic.version = 11 : i64} {
  func.func @_readout_mask_kernel(%arg0: i32, %arg1: i32, %arg2: memref<1x8x64xf32, #tpu.memory_space<vmem>>, %arg3: memref<1x8x1xi32, #tpu.memory_space<vmem>>, %arg4: memref<64x128xf32, #tpu.memory_space<vmem>>, %arg5: memref<1x128xf32, #tpu.memory_space<vmem>>, %arg6: memref<1x8x128xf32, #tpu.memory_space<vmem>>) attributes {dimension_semantics = [#tpu.dimension_semantics<parallel>, #tpu.dimension_semantics<parallel>], iteration_bounds = array<i64: 4, 1>, scalar_prefetch = 0 : i64, scratch_operands = 0 : i64, tpu.core_type = #tpu.core_type<tc>, window_params = [{transform_indices = @transform_0, window_bounds = array<i64: 1, 8, 64>}, {transform_indices = @transform_1, window_bounds = array<i64: 1, 8, 1>}, {transform_indices = @transform_2, window_bounds = array<i64: 64, 128>}, {transform_indices = @transform_3, window_bounds = array<i64: 1, 128>}, {transform_indices = @transform_4, window_bounds = array<i64: 1, 8, 128>}]} {
    %c0 = arith.constant 0 : index
    %c0_0 = arith.constant 0 : index
    %c0_1 = arith.constant 0 : index
    %0 = vector.load %arg2[%c0, %c0_0, %c0_1] : memref<1x8x64xf32, #tpu.memory_space<vmem>>, vector<1x8x64xf32>
    %1 = vector.shape_cast %0 : vector<1x8x64xf32> to vector<8x64xf32>
    %c0_2 = arith.constant 0 : index
    %c0_3 = arith.constant 0 : index
    %2 = vector.load %arg4[%c0_2, %c0_3] : memref<64x128xf32, #tpu.memory_space<vmem>>, vector<64x128xf32>
    %3 = arith.truncf %1 : vector<8x64xf32> to vector<8x64xbf16>
    %4 = arith.truncf %2 : vector<64x128xf32> to vector<64x128xbf16>
    %cst = arith.constant dense<0.000000e+00> : vector<8x128xf32>
    %5 = tpu.matmul %3, %4, %cst {dimension_numbers = #tpu.dot_dimension_numbers<[1], [0], [0], [1], [0, 0, 1, 1], [], []>} : vector<8x64xbf16>, vector<64x128xbf16>, vector<8x128xf32> -> vector<8x128xf32>
    %c0_4 = arith.constant 0 : index
    %c0_5 = arith.constant 0 : index
    %6 = vector.load %arg5[%c0_4, %c0_5] : memref<1x128xf32, #tpu.memory_space<vmem>>, vector<1x128xf32>
    %7 = vector.broadcast %6 : vector<1x128xf32> to vector<8x128xf32>
    %8 = arith.addf %5, %7 : vector<8x128xf32>
    %c128_i32 = arith.constant 128 : i32
    %9 = arith.muli %arg1, %c128_i32 : i32
    %c0_6 = arith.constant 0 : index
    %c0_7 = arith.constant 0 : index
    %c0_8 = arith.constant 0 : index
    %10 = vector.load %arg3[%c0_6, %c0_7, %c0_8] : memref<1x8x1xi32, #tpu.memory_space<vmem>>, vector<1x8x1xi32>
    %11 = vector.shape_cast %10 : vector<1x8x1xi32> to vector<8x1xi32>
    %12 = tpu.iota {dimensions = array<i32: 1>} : vector<8x128xi32>
    %13 = vector.broadcast %9 : i32 to vector<8x128xi32>
    %14 = arith.addi %12, %13 : vector<8x128xi32>
    %15 = vector.broadcast %11 : vector<8x1xi32> to vector<8x128xi32>
    %16 = arith.cmpi eq, %14, %15 : vector<8x128xi32>
    %17 = arith.extui %16 : vector<8x128xi1> to vector<8x128xi32>
    %18 = arith.sitofp %17 : vector<8x128xi32> to vector<8x128xf32>
    %19 = tpu.iota {dimensions = array<i32: 0>} : vector<8x8xi32>
    %20 = tpu.iota {dimensions = array<i32: 1>} : vector<8x8xi32>
    %21 = arith.cmpi sge, %19, %20 : vector<8x8xi32>
    %22 = arith.extui %21 : vector<8x8xi1> to vector<8x8xi32>
    %23 = arith.sitofp %22 : vector<8x8xi32> to vector<8x8xf32>
    %cst_9 = arith.constant dense<0.000000e+00> : vector<8x128xf32>
    %24 = tpu.matmul %23, %18, %cst_9 {dimension_numbers = #tpu.dot_dimension_numbers<[1], [0], [0], [1], [0, 0, 1, 1], [], []>} : vector<8x8xf32>, vector<8x128xf32>, vector<8x128xf32> -> vector<8x128xf32>
    %cst_10 = arith.constant 0.000000e+00 : f32
    %25 = vector.broadcast %cst_10 : f32 to vector<8x128xf32>
    %26 = arith.cmpf ogt, %24, %25 : vector<8x128xf32>
    %c0_i32 = arith.constant 0 : i32
    %27 = vector.broadcast %c0_i32 : i32 to vector<8x128xi32>
    %28 = arith.cmpi eq, %14, %27 : vector<8x128xi32>
    %29 = arith.ori %26, %28 : vector<8x128xi1>
    %cst_11 = arith.constant -1.000000e+03 : f32
    %cst_12 = arith.constant 0.000000e+00 : f32
    %30 = vector.broadcast %cst_11 : f32 to vector<8x128xf32>
    %31 = vector.broadcast %cst_12 : f32 to vector<8x128xf32>
    %32 = arith.select %29, %30, %31 : vector<8x128xi1>, vector<8x128xf32>
    %33 = arith.addf %8, %32 : vector<8x128xf32>
    %c0_13 = arith.constant 0 : index
    %c0_14 = arith.constant 0 : index
    %c0_15 = arith.constant 0 : index
    %34 = vector.load %arg6[%c0_13, %c0_14, %c0_15] : memref<1x8x128xf32, #tpu.memory_space<vmem>>, vector<1x8x128xf32>
    %35 = vector.shape_cast %34 : vector<1x8x128xf32> to vector<8x128xf32>
    %36 = vector.shape_cast %33 : vector<8x128xf32> to vector<1x8x128xf32>
    tpu.vector_store %arg6[%c0_13, %c0_14, %c0_15], %36 {strides = array<i32>} : memref<1x8x128xf32, #tpu.memory_space<vmem>>, vector<1x8x128xf32>,
    return
  }
  func.func @transform_0(%arg0: i32, %arg1: i32) -> (i32, i32, i32) {
    %c0_i32 = arith.constant 0 : i32
    %c0_i32_0 = arith.constant 0 : i32
    %c0_i32_1 = arith.constant 0 : i32
    return %arg0, %c0_i32, %c0_i32_0 : i32, i32, i32
  }
  func.func @transform_1(%arg0: i32, %arg1: i32) -> (i32, i32, i32) {
    %c0_i32 = arith.constant 0 : i32
    %c0_i32_0 = arith.constant 0 : i32
    %c0_i32_1 = arith.constant 0 : i32
    return %arg0, %c0_i32, %c0_i32_0 : i32, i32, i32
  }
  func.func @transform_2(%arg0: i32, %arg1: i32) -> (i32, i32) {
    %c0_i32 = arith.constant 0 : i32
    %c0_i32_0 = arith.constant 0 : i32
    return %c0_i32, %arg1 : i32, i32
  }
  func.func @transform_3(%arg0: i32, %arg1: i32) -> (i32, i32) {
    %c0_i32 = arith.constant 0 : i32
    %c0_i32_0 = arith.constant 0 : i32
    return %c0_i32, %arg1 : i32, i32
  }
  func.func @transform_4(%arg0: i32, %arg1: i32) -> (i32, i32, i32) {
    %c0_i32 = arith.constant 0 : i32
    %c0_i32_0 = arith.constant 0 : i32
    return %arg0, %c0_i32, %arg1 : i32, i32, i32
  }
}

</mosaic_0001>

<llo_original>
// kernel: mshgat_forward.14
$region0: #{mshgat_forward.14}
  #allocation0 [shape = 'u32[]', space=smem, size = 0x4, offset = 0x4, fixed_abs, tag = 'smem constant byte address 0x4 - core index']
  #allocation1 [shape = 'u32[144,128]{1,0:T(1,128)}', space=vmem, size = 0x12000, scoped, tag = 'internal scratch']
  %s0 = inlined_call_operand.vmem [shape: f32[128,64], index: 0, kind: input, shape index: {}]
  %s1 = inlined_call_operand.vmem [shape: f32[128,128], index: 1, kind: input, shape index: {}]
  %s2 = inlined_call_operand.vmem [shape: f32[64,128], index: 2, kind: input, shape index: {}]
  %s3 = inlined_call_operand.vmem [shape: f32[1,128], index: 3, kind: input, shape index: {}]
  %s4 = inlined_call_operand.vmem [shape: f32[128,64], index: 4, kind: input, shape index: {}]
  %s5 = inlined_call_operand.vmem [shape: f32[1,64], index: 5, kind: input, shape index: {}]
  %s6 = inlined_call_operand.vmem [shape: f32[1,64], index: 6, kind: input, shape index: {}]
  %s7 = inlined_call_operand.vmem [shape: f32[1,64], index: 7, kind: input, shape index: {}]
  %s8 = inlined_call_operand.vmem [shape: f32[128,64], index: 8, kind: output, shape index: {}]
  %s9 = sld [smem:[#allocation0]]
  $region42: #{mshgat_forward.14} parent=0
    _
  %s11 = ssub.s32 1, %s9
  %s12 = scalar_select 0, %s11, %s9
  // Predicated region
  $region2: #{mshgat_forward.14} parent=0 // pred_check
    _
  $region3: #{mshgat_forward.14} parent=0 // pred_check_branch
    %14 = sbr.rel (0) target = $region5
  $region4: #{mshgat_forward.14} parent=0 // pred_region
    _
  $region5: #{mshgat_forward.14} parent=0 // pred_fallthru
    _
  // Predicated region
  $region6: #{mshgat_forward.14} parent=0 // pred_check
    _
  $region7: #{mshgat_forward.14} parent=0 // pred_check_branch
    %16 = sbr.rel (0) target = $region9
  $region8: #{mshgat_forward.14} parent=0 // pred_region
    _
  $region9: #{mshgat_forward.14} parent=0 // pred_fallthru
    _
  // Predicated region
  $region10: #{mshgat_forward.14} parent=0 // pred_check
    _
  $region11: #{mshgat_forward.14} parent=0 // pred_check_branch
    %18 = sbr.rel (0) target = $region13
  $region12: #{mshgat_forward.14} parent=0 // pred_region
    _
  $region13: #{mshgat_forward.14} parent=0 // pred_fallthru
    _
  // Predicated region
  $region14: #{mshgat_forward.14} parent=0 // pred_check
    _
  $region15: #{mshgat_forward.14} parent=0 // pred_check_branch
    %20 = sbr.rel (0) target = $region17
  $region16: #{mshgat_forward.14} parent=0 // pred_region
    _
  $region17: #{mshgat_forward.14} parent=0 // pred_fallthru
    _
  // Predicated region
  $region18: #{mshgat_forward.14} parent=0 // pred_check
    _
  $region19: #{mshgat_forward.14} parent=0 // pred_check_branch
    %22 = sbr.rel (0) target = $region21
  $region20: #{mshgat_forward.14} parent=0 // pred_region
    _
  $region21: #{mshgat_forward.14} parent=0 // pred_fallthru
    _
  // Predicated region
  $region22: #{mshgat_forward.14} parent=0 // pred_check
    _
  $region23: #{mshgat_forward.14} parent=0 // pred_check_branch
    %24 = sbr.rel (0) target = $region25
  $region24: #{mshgat_forward.14} parent=0 // pred_region
    _
  $region25: #{mshgat_forward.14} parent=0 // pred_fallthru
    _
  // Predicated region
  $region26: #{mshgat_forward.14} parent=0 // pred_check
    _
  $region27: #{mshgat_forward.14} parent=0 // pred_check_branch
    %26 = sbr.rel (0) target = $region29
  $region28: #{mshgat_forward.14} parent=0 // pred_region
    _
  $region29: #{mshgat_forward.14} parent=0 // pred_fallthru
    _
  // Predicated region
  $region30: #{mshgat_forward.14} parent=0 // pred_check
    _
  $region31: #{mshgat_forward.14} parent=0 // pred_check_branch
    %28 = sbr.rel (0) target = $region33
  $region32: #{mshgat_forward.14} parent=0 // pred_region
    _
  $region33: #{mshgat_forward.14} parent=0 // pred_fallthru
    _
  %v30 = vld [vmem:[%s1] sm:$0xff]
  %v31 = vld [vmem:[%s1 + $0x8] sm:$0xff]
  %v32 = vld [vmem:[%s1 + $0x10] sm:$0xff]
  %v33 = vld [vmem:[%s1 + $0x18] sm:$0xff]
  %v34 = vld [vmem:[%s1 + $0x20] sm:$0xff]
  %v35 = vld [vmem:[%s1 + $0x28] sm:$0xff]
  %v36 = vld [vmem:[%s1 + $0x30] sm:$0xff]
  %v37 = vld [vmem:[%s1 + $0x38] sm:$0xff]
  %v38 = vld [vmem:[%s1 + $0x40] sm:$0xff]
  %v39 = vld [vmem:[%s1 + $0x48] sm:$0xff]
  %v40 = vld [vmem:[%s1 + $0x50] sm:$0xff]
  %v41 = vld [vmem:[%s1 + $0x58] sm:$0xff]
  %v42 = vld [vmem:[%s1 + $0x60] sm:$0xff]
  %v43 = vld [vmem:[%s1 + $0x68] sm:$0xff]
  %v44 = vld [vmem:[%s1 + $0x70] sm:$0xff]
  %v45 = vld [vmem:[%s1 + $0x78] sm:$0xff]
  %v46 = vld [vmem:[%s0] sm:$0xff]
  %v47 = vld [vmem:[%s0 + $0x8] sm:$0xff]
  %v48 = vld [vmem:[%s0 + $0x10] sm:$0xff]
  %v49 = vld [vmem:[%s0 + $0x18] sm:$0xff]
  %v50 = vld [vmem:[%s0 + $0x20] sm:$0xff]
  %v51 = vld [vmem:[%s0 + $0x28] sm:$0xff]
  %v52 = vld [vmem:[%s0 + $0x30] sm:$0xff]
  %v53 = vld [vmem:[%s0 + $0x38] sm:$0xff]
  %v54 = vld [vmem:[%s0 + $0x40] sm:$0xff]
  %v55 = vld [vmem:[%s0 + $0x48] sm:$0xff]
  %v56 = vld [vmem:[%s0 + $0x50] sm:$0xff]
  %v57 = vld [vmem:[%s0 + $0x58] sm:$0xff]
  %v58 = vld [vmem:[%s0 + $0x60] sm:$0xff]
  %v59 = vld [vmem:[%s0 + $0x68] sm:$0xff]
  %v60 = vld [vmem:[%s0 + $0x70] sm:$0xff]
  %v61 = vld [vmem:[%s0 + $0x78] sm:$0xff]
  %v62 = vld [vmem:[%s2] sm:$0xff]
  %v63 = vld [vmem:[%s2 + $0x8] sm:$0xff]
  %v64 = vld [vmem:[%s2 + $0x10] sm:$0xff]
  %v65 = vld [vmem:[%s2 + $0x18] sm:$0xff]
  %v66 = vld [vmem:[%s2 + $0x20] sm:$0xff]
  %v67 = vld [vmem:[%s2 + $0x28] sm:$0xff]
  %v68 = vld [vmem:[%s2 + $0x30] sm:$0xff]
  %v69 = vld [vmem:[%s2 + $0x38] sm:$0xff]
  %v70 = vpack.c.bf16 %v47, %v46
  %v71 = vpack.c.bf16 %v49, %v48
  %v72 = vpack.c.bf16 %v51, %v50
  %v73 = vpack.c.bf16 %v53, %v52
  %v74 = vpack.c.bf16 %v55, %v54
  %v75 = vpack.c.bf16 %v57, %v56
  %v76 = vpack.c.bf16 %v59, %v58
  %v77 = vpack.c.bf16 %v61, %v60
  %v78 = vpack.c.bf16 %v63, %v62
  %v79 = vpack.c.bf16 %v65, %v64
  %v80 = vpack.c.bf16 %v67, %v66
  %v81 = vpack.c.bf16 %v69, %v68
  %vm82 = vcmask 523264
  %v84 = vsel %vm82, %v70, 0
  %v87 = vsel %vm82, %v71, 0
  %v90 = vsel %vm82, %v72, 0
  %v93 = vsel %vm82, %v73, 0
  %v96 = vsel %vm82, %v74, 0
  %v99 = vsel %vm82, %v75, 0
  %v102 = vsel %vm82, %v76, 0
  %v105 = vsel %vm82, %v77, 0
  %107 = vmatprep.subr.bf16.mxu0 0
  %108 = vmatpush1.bf16.msra.mxu0 %v78
  %109 = vmatprep.subr.bf16.mxu0 0
  %110 = vmatpush1.bf16.msra.mxu0 %v79
  %111 = vmatprep.subr.bf16.mxu0 0
  %112 = vmatpush1.bf16.msra.mxu0 %v80
  %113 = vmatprep.subr.bf16.mxu0 0
  %114 = vmatpush1.bf16.msra.mxu0 %v81
  %115 = vmatprep.subr.bf16.mxu0 0
  %116 = vmatpush1.bf16.msra.mxu0 0
  %117 = vmatprep.subr.bf16.mxu0 0
  %118 = vmatpush1.bf16.msra.mxu0 0
  %119 = vmatprep.subr.bf16.mxu0 0
  %120 = vmatpush1.bf16.msra.mxu0 0
  %121 = vmatprep.subr.bf16.mxu0 0
  %122 = vmatpush1.bf16.msra.mxu0 0
  %123 = vmatprep.subr.bf16.mxu0 0
  %124 = vmatpush1.bf16.msra.mxu0 0
  %125 = vmatprep.subr.bf16.mxu0 0
  %126 = vmatpush1.bf16.msra.mxu0 0
  %127 = vmatprep.subr.bf16.mxu0 0
  %128 = vmatpush1.bf16.msra.mxu0 0
  %129 = vmatprep.subr.bf16.mxu0 0
  %130 = vmatpush1.bf16.msra.mxu0 0
  %131 = vmatprep.subr.bf16.mxu0 0
  %132 = vmatpush1.bf16.msra.mxu0 0
  %133 = vmatprep.subr.bf16.mxu0 0
  %134 = vmatpush1.bf16.msra.mxu0 0
  %135 = vmatprep.subr.bf16.mxu0 0
  %136 = vmatpush1.bf16.msra.mxu0 0
  %137 = vmatprep.subr.bf16.mxu0 0
  %138 = vmatpush1.bf16.msra.mxu0 0
  %139 = vmatprep.mubr.bf16.mxu0 0
  %140 = vmatmul.mubr.bf16.gmra.mrb[0].mxu0 %v84
  %v141 = vpop.f32.mrb[0].mxu0
  %v142 = vadd.f32 0.0, %v141
  %v143 = vpop.f32.mrb[0].mxu0
  %v144 = vpop.f32.mrb[0].mxu0
  %v145 = vadd.f32 0.0, %v144
  %v146 = vpop.f32.mrb[0].mxu0
  %147 = vmatprep.mubr.bf16.mxu0 0
  %148 = vmatmul.mubr.bf16.gmra.mrb[0].mxu0 %v87
  %v149 = vpop.f32.mrb[0].mxu0
  %v150 = vadd.f32 0.0, %v149
  %v151 = vpop.f32.mrb[0].mxu0
  %v152 = vpop.f32.mrb[0].mxu0
  %v153 = vadd.f32 0.0, %v152
  %v154 = vpop.f32.mrb[0].mxu0
  %155 = vmatprep.mubr.bf16.mxu0 0
  %156 = vmatmul.mubr.bf16.gmra.mrb[0].mxu0 %v90
  %v157 = vpop.f32.mrb[0].mxu0
  %v158 = vadd.f32 0.0, %v157
  %v159 = vpop.f32.mrb[0].mxu0
  %v160 = vpop.f32.mrb[0].mxu0
  %v161 = vadd.f32 0.0, %v160
  %v162 = vpop.f32.mrb[0].mxu0
  %163 = vmatprep.mubr.bf16.mxu0 0
  %164 = vmatmul.mubr.bf16.gmra.mrb[0].mxu0 %v93
  %v165 = vpop.f32.mrb[0].mxu0
  %v166 = vadd.f32 0.0, %v165
  %v167 = vpop.f32.mrb[0].mxu0
  %v168 = vpop.f32.mrb[0].mxu0
  %v169 = vadd.f32 0.0, %v168
  %v170 = vpop.f32.mrb[0].mxu0
  %171 = vmatprep.mubr.bf16.mxu0 0
  %172 = vmatmul.mubr.bf16.gmra.mrb[0].mxu0 %v96
  %v173 = vpop.f32.mrb[0].mxu0
  %v174 = vadd.f32 0.0, %v173
  %v175 = vpop.f32.mrb[0].mxu0
  %v176 = vpop.f32.mrb[0].mxu0
  %v177 = vadd.f32 0.0, %v176
  %v178 = vpop.f32.mrb[0].mxu0
  %179 = vmatprep.mubr.bf16.mxu0 0
  %180 = vmatmul.mubr.bf16.gmra.mrb[0].mxu0 %v99
  %v181 = vpop.f32.mrb[0].mxu0
  %v182 = vadd.f32 0.0, %v181
  %v183 = vpop.f32.mrb[0].mxu0
  %v184 = vpop.f32.mrb[0].mxu0
  %v185 = vadd.f32 0.0, %v184
  %v186 = vpop.f32.mrb[0].mxu0
  %187 = vmatprep.mubr.bf16.mxu0 0
  %188 = vmatmul.mubr.bf16.gmra.mrb[0].mxu0 %v102
  %v189 = vpop.f32.mrb[0].mxu0
  %v190 = vadd.f32 0.0, %v189
  %v191 = vpop.f32.mrb[0].mxu0
  %v192 = vpop.f32.mrb[0].mxu0
  %v193 = vadd.f32 0.0, %v192
  %v194 = vpop.f32.mrb[0].mxu0
  %195 = vmatprep.mubr.bf16.mxu0 0
  %196 = vmatmul.mubr.bf16.gmra.mrb[0].mxu0 %v105
  %v197 = vpop.f32.mrb[0].mxu0
  %v198 = vadd.f32 0.0, %v197
  %v199 = vpop.f32.mrb[0].mxu0
  %v200 = vpop.f32.mrb[0].mxu0
  %v201 = vadd.f32 0.0, %v200
  %v202 = vpop.f32.mrb[0].mxu0
  %203 = vdwg.mxu0
  %v204 = vpack.c.bf16 %v31, %v30
  %v205 = vpack.c.bf16 %v33, %v32
  %v206 = vpack.c.bf16 %v35, %v34
  %v207 = vpack.c.bf16 %v37, %v36
  %v208 = vpack.c.bf16 %v39, %v38
  %v209 = vpack.c.bf16 %v41, %v40
  %v210 = vpack.c.bf16 %v43, %v42
  %v211 = vpack.c.bf16 %v45, %v44
  %v212 = vpack.c.bf16 %v145, %v142
  %v213 = vpack.c.bf16 %v153, %v150
  %v214 = vpack.c.bf16 %v161, %v158
  %v215 = vpack.c.bf16 %v169, %v166
  %v216 = vpack.c.bf16 %v177, %v174
  %v217 = vpack.c.bf16 %v185, %v182
  %v218 = vpack.c.bf16 %v193, %v190
  %v219 = vpack.c.bf16 %v201, %v198
  %v220 = vld [vmem:[%s3] sm:$0x1]
  %v222 = vlaneseq
  %v223 = vshrl.u32 %v222, 7
  %v224 = vsub.s32 0, %v223
  %v225 = vrot.slane %v220, %v224
  %227 = vmatprep.subr.bf16.mxu0 0
  %228 = vmatpush1.bf16.msra.mxu0 %v212
  %229 = vmatprep.subr.bf16.mxu0 0
  %230 = vmatpush1.bf16.msra.mxu0 %v213
  %231 = vmatprep.subr.bf16.mxu0 0
  %232 = vmatpush1.bf16.msra.mxu0 %v214
  %233 = vmatprep.subr.bf16.mxu0 0
  %234 = vmatpush1.bf16.msra.mxu0 %v215
  %235 = vmatprep.subr.bf16.mxu0 0
  %236 = vmatpush1.bf16.msra.mxu0 %v216
  %237 = vmatprep.subr.bf16.mxu0 0
  %238 = vmatpush1.bf16.msra.mxu0 %v217
  %239 = vmatprep.subr.bf16.mxu0 0
  %240 = vmatpush1.bf16.msra.mxu0 %v218
  %241 = vmatprep.subr.bf16.mxu0 0
  %242 = vmatpush1.bf16.msra.mxu0 %v219
  %243 = vmatprep.subr.bf16.mxu0 0
  %244 = vmatpush1.bf16.msra.mxu0 0
  %245 = vmatprep.subr.bf16.mxu0 0
  %246 = vmatpush1.bf16.msra.mxu0 0
  %247 = vmatprep.subr.bf16.mxu0 0
  %248 = vmatpush1.bf16.msra.mxu0 0
  %249 = vmatprep.subr.bf16.mxu0 0
  %250 = vmatpush1.bf16.msra.mxu0 0
  %251 = vmatprep.subr.bf16.mxu0 0
  %252 = vmatpush1.bf16.msra.mxu0 0
  %253 = vmatprep.subr.bf16.mxu0 0
  %254 = vmatpush1.bf16.msra.mxu0 0
  %255 = vmatprep.subr.bf16.mxu0 0
  %256 = vmatpush1.bf16.msra.mxu0 0
  %257 = vmatprep.subr.bf16.mxu0 0
  %258 = vmatpush1.bf16.msra.mxu0 0
  %259 = vmatprep.mubr.bf16.mxu0 0
  %260 = vmatmul.mubr.bf16.gmra.mrb[0].mxu0 %v204
  %v261 = vpop.f32.mrb[0].mxu0
  %v262 = vadd.f32 %v225, %v261
  %v263 = vpop.f32.mrb[0].mxu0
  %v264 = vpop.f32.mrb[0].mxu0
  %v265 = vadd.f32 %v225, %v264
  %v266 = vpop.f32.mrb[0].mxu0
  %267 = vmatprep.mubr.bf16.mxu0 0
  %268 = vmatmul.mubr.bf16.gmra.mrb[0].mxu0 %v205
  %v269 = vpop.f32.mrb[0].mxu0
  %v270 = vadd.f32 %v225, %v269
  %v271 = vpop.f32.mrb[0].mxu0
  %v272 = vpop.f32.mrb[0].mxu0
  %v273 = vadd.f32 %v225, %v272
  %v274 = vpop.f32.mrb[0].mxu0
  %275 = vmatprep.mubr.bf16.mxu0 0
  %276 = vmatmul.mubr.bf16.gmra.mrb[0].mxu0 %v206
  %v277 = vpop.f32.mrb[0].mxu0
  %v278 = vadd.f32 %v225, %v277
  %v279 = vpop.f32.mrb[0].mxu0
  %v280 = vpop.f32.mrb[0].mxu0
  %v281 = vadd.f32 %v225, %v280
  %v282 = vpop.f32.mrb[0].mxu0
  %283 = vmatprep.mubr.bf16.mxu0 0
  %284 = vmatmul.mubr.bf16.gmra.mrb[0].mxu0 %v207
  %v285 = vpop.f32.mrb[0].mxu0
  %v286 = vadd.f32 %v225, %v285
  %v287 = vpop.f32.mrb[0].mxu0
  %v288 = vpop.f32.mrb[0].mxu0
  %v289 = vadd.f32 %v225, %v288
  %v290 = vpop.f32.mrb[0].mxu0
  %291 = vmatprep.mubr.bf16.mxu0 0
  %292 = vmatmul.mubr.bf16.gmra.mrb[0].mxu0 %v208
  %v293 = vpop.f32.mrb[0].mxu0
  %v294 = vadd.f32 %v225, %v293
  %v295 = vpop.f32.mrb[0].mxu0
  %v296 = vpop.f32.mrb[0].mxu0
  %v297 = vadd.f32 %v225, %v296
  %v298 = vpop.f32.mrb[0].mxu0
  %299 = vmatprep.mubr.bf16.mxu0 0
  %300 = vmatmul.mubr.bf16.gmra.mrb[0].mxu0 %v209
  %v301 = vpop.f32.mrb[0].mxu0
  %v302 = vadd.f32 %v225, %v301
  %v303 = vpop.f32.mrb[0].mxu0
  %v304 = vpop.f32.mrb[0].mxu0
  %v305 = vadd.f32 %v225, %v304
  %v306 = vpop.f32.mrb[0].mxu0
  %307 = vmatprep.mubr.bf16.mxu0 0
  %308 = vmatmul.mubr.bf16.gmra.mrb[0].mxu0 %v210
  %v309 = vpop.f32.mrb[0].mxu0
  %v310 = vadd.f32 %v225, %v309
  %v311 = vpop.f32.mrb[0].mxu0
  %v312 = vpop.f32.mrb[0].mxu0
  %v313 = vadd.f32 %v225, %v312
  %v314 = vpop.f32.mrb[0].mxu0
  %315 = vmatprep.mubr.bf16.mxu0 0
  %316 = vmatmul.mubr.bf16.gmra.mrb[0].mxu0 %v211
  %v317 = vpop.f32.mrb[0].mxu0
  %v318 = vadd.f32 %v225, %v317
  %v319 = vpop.f32.mrb[0].mxu0
  %v320 = vpop.f32.mrb[0].mxu0
  %v321 = vadd.f32 %v225, %v320
  %v322 = vpop.f32.mrb[0].mxu0
  %323 = vdwg.mxu0
  %v324 = vld [vmem:[%s4] sm:$0xff]
  %v325 = vld [vmem:[%s4 + $0x8] sm:$0xff]
  %v326 = vld [vmem:[%s4 + $0x10] sm:$0xff]
  %v327 = vld [vmem:[%s4 + $0x18] sm:$0xff]
  %v328 = vld [vmem:[%s4 + $0x20] sm:$0xff]
  %v329 = vld [vmem:[%s4 + $0x28] sm:$0xff]
  %v330 = vld [vmem:[%s4 + $0x30] sm:$0xff]
  %v331 = vld [vmem:[%s4 + $0x38] sm:$0xff]
  %v332 = vld [vmem:[%s4 + $0x40] sm:$0xff]
  %v333 = vld [vmem:[%s4 + $0x48] sm:$0xff]
  %v334 = vld [vmem:[%s4 + $0x50] sm:$0xff]
  %v335 = vld [vmem:[%s4 + $0x58] sm:$0xff]
  %v336 = vld [vmem:[%s4 + $0x60] sm:$0xff]
  %v337 = vld [vmem:[%s4 + $0x68] sm:$0xff]
  %v338 = vld [vmem:[%s4 + $0x70] sm:$0xff]
  %v339 = vld [vmem:[%s4 + $0x78] sm:$0xff]
  %v340 = vpack.c.bf16 %v265, %v262
  %v341 = vpack.c.bf16 %v273, %v270
  %v342 = vpack.c.bf16 %v281, %v278
  %v343 = vpack.c.bf16 %v289, %v286
  %v344 = vpack.c.bf16 %v297, %v294
  %v345 = vpack.c.bf16 %v305, %v302
  %v346 = vpack.c.bf16 %v313, %v310
  %v347 = vpack.c.bf16 %v321, %v318
  %v348 = vpack.c.bf16 %v325, %v324
  %v349 = vpack.c.bf16 %v327, %v326
  %v350 = vpack.c.bf16 %v329, %v328
  %v351 = vpack.c.bf16 %v331, %v330
  %v352 = vpack.c.bf16 %v333, %v332
  %v353 = vpack.c.bf16 %v335, %v334
  %v354 = vpack.c.bf16 %v337, %v336
  %v355 = vpack.c.bf16 %v339, %v338
  %356 = vmatprep.subr.bf16.mxu0 0
  %357 = vmatpush1.bf16.msra.mxu0 %v348
  %358 = vmatprep.subr.bf16.mxu0 0
  %359 = vmatpush1.bf16.msra.mxu0 %v349
  %360 = vmatprep.subr.bf16.mxu0 0
  %361 = vmatpush1.bf16.msra.mxu0 %v350
  %362 = vmatprep.subr.bf16.mxu0 0
  %363 = vmatpush1.bf16.msra.mxu0 %v351
  %364 = vmatprep.subr.bf16.mxu0 0
  %365 = vmatpush1.bf16.msra.mxu0 %v352
  %366 = vmatprep.subr.bf16.mxu0 0
  %367 = vmatpush1.bf16.msra.mxu0 %v353
  %368 = vmatprep.subr.bf16.mxu0 0
  %369 = vmatpush1.bf16.msra.mxu0 %v354
  %370 = vmatprep.subr.bf16.mxu0 0
  %371 = vmatpush1.bf16.msra.mxu0 %v355
  %372 = vmatprep.subr.bf16.mxu0 0
  %373 = vmatpush1.bf16.msra.mxu0 0
  %374 = vmatprep.subr.bf16.mxu0 0
  %375 = vmatpush1.bf16.msra.mxu0 0
  %376 = vmatprep.subr.bf16.mxu0 0
  %377 = vmatpush1.bf16.msra.mxu0 0
  %378 = vmatprep.subr.bf16.mxu0 0
  %379 = vmatpush1.bf16.msra.mxu0 0
  %380 = vmatprep.subr.bf16.mxu0 0
  %381 = vmatpush1.bf16.msra.mxu0 0
  %382 = vmatprep.subr.bf16.mxu0 0
  %383 = vmatpush1.bf16.msra.mxu0 0
  %384 = vmatprep.subr.bf16.mxu0 0
  %385 = vmatpush1.bf16.msra.mxu0 0
  %386 = vmatprep.subr.bf16.mxu0 0
  %387 = vmatpush1.bf16.msra.mxu0 0
  %388 = vmatprep.mubr.bf16.mxu0 0
  %389 = vmatmul.mubr.bf16.gmra.mrb[0].mxu0 %v340
  %v390 = vpop.f32.mrb[0].mxu0
  %v391 = vadd.f32 0.0, %v390
  %v392 = vpop.f32.mrb[0].mxu0
  %v393 = vpop.f32.mrb[0].mxu0
  %v394 = vadd.f32 0.0, %v393
  %v395 = vpop.f32.mrb[0].mxu0
  %396 = vmatprep.mubr.bf16.mxu0 0
  %397 = vmatmul.mubr.bf16.gmra.mrb[0].mxu0 %v341
  %v398 = vpop.f32.mrb[0].mxu0
  %v399 = vadd.f32 0.0, %v398
  %v400 = vpop.f32.mrb[0].mxu0
  %v401 = vpop.f32.mrb[0].mxu0
  %v402 = vadd.f32 0.0, %v401
  %v403 = vpop.f32.mrb[0].mxu0
  %404 = vmatprep.mubr.bf16.mxu0 0
  %405 = vmatmul.mubr.bf16.gmra.mrb[0].mxu0 %v342
  %v406 = vpop.f32.mrb[0].mxu0
  %v407 = vadd.f32 0.0, %v406
  %v408 = vpop.f32.mrb[0].mxu0
  %v409 = vpop.f32.mrb[0].mxu0
  %v410 = vadd.f32 0.0, %v409
  %v411 = vpop.f32.mrb[0].mxu0
  %412 = vmatprep.mubr.bf16.mxu0 0
  %413 = vmatmul.mubr.bf16.gmra.mrb[0].mxu0 %v343
  %v414 = vpop.f32.mrb[0].mxu0
  %v415 = vadd.f32 0.0, %v414
  %v416 = vpop.f32.mrb[0].mxu0
  %v417 = vpop.f32.mrb[0].mxu0
  %v418 = vadd.f32 0.0, %v417
  %v419 = vpop.f32.mrb[0].mxu0
  %420 = vmatprep.mubr.bf16.mxu0 0
  %421 = vmatmul.mubr.bf16.gmra.mrb[0].mxu0 %v344
  %v422 = vpop.f32.mrb[0].mxu0
  %v423 = vadd.f32 0.0, %v422
  %v424 = vpop.f32.mrb[0].mxu0
  %v425 = vpop.f32.mrb[0].mxu0
  %v426 = vadd.f32 0.0, %v425
  %v427 = vpop.f32.mrb[0].mxu0
  %428 = vmatprep.mubr.bf16.mxu0 0
  %429 = vmatmul.mubr.bf16.gmra.mrb[0].mxu0 %v345
  %v430 = vpop.f32.mrb[0].mxu0
  %v431 = vadd.f32 0.0, %v430
  %v432 = vpop.f32.mrb[0].mxu0
  %v433 = vpop.f32.mrb[0].mxu0
  %v434 = vadd.f32 0.0, %v433
  %v435 = vpop.f32.mrb[0].mxu0
  %436 = vmatprep.mubr.bf16.mxu0 0
  %437 = vmatmul.mubr.bf16.gmra.mrb[0].mxu0 %v346
  %v438 = vpop.f32.mrb[0].mxu0
  %v439 = vadd.f32 0.0, %v438
  %v440 = vpop.f32.mrb[0].mxu0
  %v441 = vpop.f32.mrb[0].mxu0
  %v442 = vadd.f32 0.0, %v441
  %v443 = vpop.f32.mrb[0].mxu0
  %444 = vmatprep.mubr.bf16.mxu0 0
  %445 = vmatmul.mubr.bf16.gmra.mrb[0].mxu0 %v347
  %v446 = vpop.f32.mrb[0].mxu0
  %v447 = vadd.f32 0.0, %v446
  %v448 = vpop.f32.mrb[0].mxu0
  %v449 = vpop.f32.mrb[0].mxu0
  %v450 = vadd.f32 0.0, %v449
  %v451 = vpop.f32.mrb[0].mxu0
  %452 = vdwg.mxu0
  %v453 = vpack.c.bf16 %v394, %v391
  %v454 = vpack.c.bf16 %v402, %v399
  %v455 = vpack.c.bf16 %v410, %v407
  %v456 = vpack.c.bf16 %v418, %v415
  %v457 = vpack.c.bf16 %v426, %v423
  %v458 = vpack.c.bf16 %v434, %v431
  %v459 = vpack.c.bf16 %v442, %v439
  %v460 = vpack.c.bf16 %v450, %v447
  %v461 = vld [vmem:[%s5] sm:$0x1]
  %v463 = vlaneseq
  %v464 = vshrl.u32 %v463, 7
  %v465 = vsub.s32 0, %v464
  %v466 = vrot.slane %v461, %v465
  %468 = vmatprep.subr.bf16.mxu0 0
  %469 = vmatpush1.bf16.msra.mxu0 %v453
  %470 = vmatprep.subr.bf16.mxu0 0
  %471 = vmatpush1.bf16.msra.mxu0 %v454
  %472 = vmatprep.subr.bf16.mxu0 0
  %473 = vmatpush1.bf16.msra.mxu0 %v455
  %474 = vmatprep.subr.bf16.mxu0 0
  %475 = vmatpush1.bf16.msra.mxu0 %v456
  %476 = vmatprep.subr.bf16.mxu0 0
  %477 = vmatpush1.bf16.msra.mxu0 %v457
  %478 = vmatprep.subr.bf16.mxu0 0
  %479 = vmatpush1.bf16.msra.mxu0 %v458
  %480 = vmatprep.subr.bf16.mxu0 0
  %481 = vmatpush1.bf16.msra.mxu0 %v459
  %482 = vmatprep.subr.bf16.mxu0 0
  %483 = vmatpush1.bf16.msra.mxu0 %v460
  %484 = vmatprep.subr.bf16.mxu0 0
  %485 = vmatpush1.bf16.msra.mxu0 0
  %486 = vmatprep.subr.bf16.mxu0 0
  %487 = vmatpush1.bf16.msra.mxu0 0
  %488 = vmatprep.subr.bf16.mxu0 0
  %489 = vmatpush1.bf16.msra.mxu0 0
  %490 = vmatprep.subr.bf16.mxu0 0
  %491 = vmatpush1.bf16.msra.mxu0 0
  %492 = vmatprep.subr.bf16.mxu0 0
  %493 = vmatpush1.bf16.msra.mxu0 0
  %494 = vmatprep.subr.bf16.mxu0 0
  %495 = vmatpush1.bf16.msra.mxu0 0
  %496 = vmatprep.subr.bf16.mxu0 0
  %497 = vmatpush1.bf16.msra.mxu0 0
  %498 = vmatprep.subr.bf16.mxu0 0
  %499 = vmatpush1.bf16.msra.mxu0 0
  %500 = vmatprep.mubr.bf16.mxu0 0
  %501 = vmatmul.mubr.bf16.gmra.mrb[0].mxu0 %v204
  %v502 = vpop.f32.mrb[0].mxu0
  %v503 = vadd.f32 %v466, %v502
  %v504 = vpop.f32.mrb[0].mxu0
  %v505 = vpop.f32.mrb[0].mxu0
  %v506 = vadd.f32 %v466, %v505
  %v507 = vpop.f32.mrb[0].mxu0
  %508 = vmatprep.mubr.bf16.mxu0 0
  %509 = vmatmul.mubr.bf16.gmra.mrb[0].mxu0 %v205
  %v510 = vpop.f32.mrb[0].mxu0
  %v511 = vadd.f32 %v466, %v510
  %v512 = vpop.f32.mrb[0].mxu0
  %v513 = vpop.f32.mrb[0].mxu0
  %v514 = vadd.f32 %v466, %v513
  %v515 = vpop.f32.mrb[0].mxu0
  %516 = vmatprep.mubr.bf16.mxu0 0
  %517 = vmatmul.mubr.bf16.gmra.mrb[0].mxu0 %v206
  %v518 = vpop.f32.mrb[0].mxu0
  %v519 = vadd.f32 %v466, %v518
  %v520 = vpop.f32.mrb[0].mxu0
  %v521 = vpop.f32.mrb[0].mxu0
  %v522 = vadd.f32 %v466, %v521
  %v523 = vpop.f32.mrb[0].mxu0
  %524 = vmatprep.mubr.bf16.mxu0 0
  %525 = vmatmul.mubr.bf16.gmra.mrb[0].mxu0 %v207
  %v526 = vpop.f32.mrb[0].mxu0
  %v527 = vadd.f32 %v466, %v526
  %v528 = vpop.f32.mrb[0].mxu0
  %v529 = vpop.f32.mrb[0].mxu0
  %v530 = vadd.f32 %v466, %v529
  %v531 = vpop.f32.mrb[0].mxu0
  %532 = vmatprep.mubr.bf16.mxu0 0
  %533 = vmatmul.mubr.bf16.gmra.mrb[0].mxu0 %v208
  %v534 = vpop.f32.mrb[0].mxu0
  %v535 = vadd.f32 %v466, %v534
  %v536 = vpop.f32.mrb[0].mxu0
  %v537 = vpop.f32.mrb[0].mxu0
  %v538 = vadd.f32 %v466, %v537
  %v539 = vpop.f32.mrb[0].mxu0
  %540 = vmatprep.mubr.bf16.mxu0 0
  %541 = vmatmul.mubr.bf16.gmra.mrb[0].mxu0 %v209
  %v542 = vpop.f32.mrb[0].mxu0
  %v543 = vadd.f32 %v466, %v542
  %v544 = vpop.f32.mrb[0].mxu0
  %v545 = vpop.f32.mrb[0].mxu0
  %v546 = vadd.f32 %v466, %v545
  %v547 = vpop.f32.mrb[0].mxu0
  %548 = vmatprep.mubr.bf16.mxu0 0
  %549 = vmatmul.mubr.bf16.gmra.mrb[0].mxu0 %v210
  %v550 = vpop.f32.mrb[0].mxu0
  %v551 = vadd.f32 %v466, %v550
  %v552 = vpop.f32.mrb[0].mxu0
  %v553 = vpop.f32.mrb[0].mxu0
  %v554 = vadd.f32 %v466, %v553
  %v555 = vpop.f32.mrb[0].mxu0
  %556 = vmatprep.mubr.bf16.mxu0 0
  %557 = vmatmul.mubr.bf16.gmra.mrb[0].mxu0 %v211
  %v558 = vpop.f32.mrb[0].mxu0
  %v559 = vadd.f32 %v466, %v558
  %v560 = vpop.f32.mrb[0].mxu0
  %v561 = vpop.f32.mrb[0].mxu0
  %v562 = vadd.f32 %v466, %v561
  %v563 = vpop.f32.mrb[0].mxu0
  %564 = vdwg.mxu0
  %v565 = vld [vmem:[%s6] sm:$0x1]
  %v566 = vmul.f32 %v565, 0.999995
  %v568 = vlaneseq
  %v569 = vshrl.u32 %v568, 7
  %v570 = vsub.s32 0, %v569
  %v571 = vrot.slane %v566, %v570
  %v573 = vmul.f32 %v503, %v571
  %v574 = vmul.f32 %v506, %v571
  %v575 = vmul.f32 %v511, %v571
  %v576 = vmul.f32 %v514, %v571
  %v577 = vmul.f32 %v519, %v571
  %v578 = vmul.f32 %v522, %v571
  %v579 = vmul.f32 %v527, %v571
  %v580 = vmul.f32 %v530, %v571
  %v581 = vmul.f32 %v535, %v571
  %v582 = vmul.f32 %v538, %v571
  %v583 = vmul.f32 %v543, %v571
  %v584 = vmul.f32 %v546, %v571
  %v585 = vmul.f32 %v551, %v571
  %v586 = vmul.f32 %v554, %v571
  %v587 = vmul.f32 %v559, %v571
  %v588 = vmul.f32 %v562, %v571
  %v589 = vld [vmem:[%s7] sm:$0x1]
  %v591 = vlaneseq
  %v592 = vshrl.u32 %v591, 7
  %v593 = vsub.s32 0, %v592
  %v594 = vrot.slane %v589, %v593
  %v596 = vadd.f32 %v573, %v594
  %v597 = vadd.f32 %v574, %v594
  %v598 = vadd.f32 %v575, %v594
  %v599 = vadd.f32 %v576, %v594
  %v600 = vadd.f32 %v577, %v594
  %v601 = vadd.f32 %v578, %v594
  %v602 = vadd.f32 %v579, %v594
  %v603 = vadd.f32 %v580, %v594
  %v604 = vadd.f32 %v581, %v594
  %v605 = vadd.f32 %v582, %v594
  %v606 = vadd.f32 %v583, %v594
  %v607 = vadd.f32 %v584, %v594
  %v608 = vadd.f32 %v585, %v594
  %v609 = vadd.f32 %v586, %v594
  %v610 = vadd.f32 %v587, %v594
  %v611 = vadd.f32 %v588, %v594
  %612 = vst.msk [vmem:[%s8] sm:$0xff] %vm82, %v596
  %613 = vst.msk [vmem:[%s8 + $0x8] sm:$0xff] %vm82, %v597
  %614 = vst.msk [vmem:[%s8 + $0x10] sm:$0xff] %vm82, %v598
  %615 = vst.msk [vmem:[%s8 + $0x18] sm:$0xff] %vm82, %v599
  %616 = vst.msk [vmem:[%s8 + $0x20] sm:$0xff] %vm82, %v600
  %617 = vst.msk [vmem:[%s8 + $0x28] sm:$0xff] %vm82, %v601
  %618 = vst.msk [vmem:[%s8 + $0x30] sm:$0xff] %vm82, %v602
  %619 = vst.msk [vmem:[%s8 + $0x38] sm:$0xff] %vm82, %v603
  %620 = vst.msk [vmem:[%s8 + $0x40] sm:$0xff] %vm82, %v604
  %621 = vst.msk [vmem:[%s8 + $0x48] sm:$0xff] %vm82, %v605
  %622 = vst.msk [vmem:[%s8 + $0x50] sm:$0xff] %vm82, %v606
  %623 = vst.msk [vmem:[%s8 + $0x58] sm:$0xff] %vm82, %v607
  %624 = vst.msk [vmem:[%s8 + $0x60] sm:$0xff] %vm82, %v608
  %625 = vst.msk [vmem:[%s8 + $0x68] sm:$0xff] %vm82, %v609
  %626 = vst.msk [vmem:[%s8 + $0x70] sm:$0xff] %vm82, %v610
  %627 = vst.msk [vmem:[%s8 + $0x78] sm:$0xff] %vm82, %v611
  // Predicated region
  $region34: #{mshgat_forward.14} parent=0 // pred_check
    _
  $region35: #{mshgat_forward.14} parent=0 // pred_check_branch
    %629 = sbr.rel (0) target = $region37
  $region36: #{mshgat_forward.14} parent=0 // pred_region
    _
  $region37: #{mshgat_forward.14} parent=0 // pred_fallthru
    _
  // Predicated region
  $region38: #{mshgat_forward.14} parent=0 // pred_check
    _
  $region39: #{mshgat_forward.14} parent=0 // pred_check_branch
    %631 = sbr.rel (0) target = $region41
  $region40: #{mshgat_forward.14} parent=0 // pred_region
    _
  $region41: #{mshgat_forward.14} parent=0 // pred_fallthru
    _

// kernel: mshgat_forward.20
$region0: #{mshgat_forward.20}
  #allocation0 [shape = 'u32[]', space=smem, size = 0x4, offset = 0x4, fixed_abs, tag = 'smem constant byte address 0x4 - core index']
  #allocation1 [shape = 'u32[144,128]{1,0:T(1,128)}', space=vmem, size = 0x12000, scoped, tag = 'internal scratch']
  %s0 = inlined_call_operand.vmem [shape: f32[32,64], index: 0, kind: input, shape index: {}]
  %s1 = inlined_call_operand.vmem [shape: f32[64,192], index: 1, kind: input, shape index: {}]
  %s2 = inlined_call_operand.vmem [shape: f32[1,192], index: 2, kind: input, shape index: {}]
  %s3 = inlined_call_operand.vmem [shape: f32[32,192], index: 3, kind: output, shape index: {}]
  %s4 = sld [smem:[#allocation0]]
  $region22: #{mshgat_forward.20} parent=0
    _
  %s6 = ssub.s32 1, %s4
  %s7 = scalar_select 0, %s6, %s4
  // Predicated region
  $region2: #{mshgat_forward.20} parent=0 // pred_check
    _
  $region3: #{mshgat_forward.20} parent=0 // pred_check_branch
    %9 = sbr.rel (0) target = $region5
  $region4: #{mshgat_forward.20} parent=0 // pred_region
    _
  $region5: #{mshgat_forward.20} parent=0 // pred_fallthru
    _
  // Predicated region
  $region6: #{mshgat_forward.20} parent=0 // pred_check
    _
  $region7: #{mshgat_forward.20} parent=0 // pred_check_branch
    %11 = sbr.rel (0) target = $region9
  $region8: #{mshgat_forward.20} parent=0 // pred_region
    _
  $region9: #{mshgat_forward.20} parent=0 // pred_fallthru
    _
  // Predicated region
  $region10: #{mshgat_forward.20} parent=0 // pred_check
    _
  $region11: #{mshgat_forward.20} parent=0 // pred_check_branch
    %13 = sbr.rel (0) target = $region13
  $region12: #{mshgat_forward.20} parent=0 // pred_region
    _
  $region13: #{mshgat_forward.20} parent=0 // pred_fallthru
    _
  %v14 = vld [vmem:[%s0] sm:$0xff]
  %v15 = vld [vmem:[%s0 + $0x8] sm:$0xff]
  %v16 = vld [vmem:[%s0 + $0x10] sm:$0xff]
  %v17 = vld [vmem:[%s0 + $0x18] sm:$0xff]
  %v18 = vld [vmem:[%s1] sm:$0xff]
  %v19 = vld [vmem:[%s1 + $0x8] sm:$0xff]
  %v20 = vld [vmem:[%s1 + $0x10] sm:$0xff]
  %v21 = vld [vmem:[%s1 + $0x18] sm:$0xff]
  %v22 = vld [vmem:[%s1 + $0x20] sm:$0xff]
  %v23 = vld [vmem:[%s1 + $0x28] sm:$0xff]
  %v24 = vld [vmem:[%s1 + $0x30] sm:$0xff]
  %v25 = vld [vmem:[%s1 + $0x38] sm:$0xff]
  %v26 = vld [vmem:[%s1 + $0x40] sm:$0xff]
  %v27 = vld [vmem:[%s1 + $0x48] sm:$0xff]
  %v28 = vld [vmem:[%s1 + $0x50] sm:$0xff]
  %v29 = vld [vmem:[%s1 + $0x58] sm:$0xff]
  %v30 = vld [vmem:[%s1 + $0x60] sm:$0xff]
  %v31 = vld [vmem:[%s1 + $0x68] sm:$0xff]
  %v32 = vld [vmem:[%s1 + $0x70] sm:$0xff]
  %v33 = vld [vmem:[%s1 + $0x78] sm:$0xff]
  %v34 = vld [vmem:[%s2] sm:$0x3]
  %v36 = vlaneseq
  %v37 = vshrl.u32 %v36, 7
  %v38 = vsub.s32 0, %v37
  %v39 = vrot.slane %v34, %v38
  %v40 = vlaneseq
  %v41 = vshrl.u32 %v40, 7
  %v42 = vsub.s32 1, %v41
  %v43 = vrot.slane %v34, %v42
  %vm46 = vcmask 523264
  %v48 = vsel %vm46, %v14, 0
  %v51 = vsel %vm46, %v15, 0
  %v54 = vsel %vm46, %v16, 0
  %v57 = vsel %vm46, %v17, 0
  %59 = vmatprep.subr.mxu0 %v19
  %60 = vmatpush1.msra.mxu0 %v18
  %61 = vmatprep.subr.mxu0 %v21
  %62 = vmatpush1.msra.mxu0 %v20
  %63 = vmatprep.subr.mxu0 %v23
  %64 = vmatpush1.msra.mxu0 %v22
  %65 = vmatprep.subr.mxu0 %v25
  %66 = vmatpush1.msra.mxu0 %v24
  %67 = vmatprep.subr.mxu0 %v27
  %68 = vmatpush1.msra.mxu0 %v26
  %69 = vmatprep.subr.mxu0 %v29
  %70 = vmatpush1.msra.mxu0 %v28
  %71 = vmatprep.subr.mxu0 %v31
  %72 = vmatpush1.msra.mxu0 %v30
  %73 = vmatprep.subr.mxu0 %v33
  %74 = vmatpush1.msra.mxu0 %v32
  %75 = vmatprep.subr.mxu0 0.0
  %76 = vmatpush1.msra.mxu0 0.0
  %77 = vmatprep.subr.mxu0 0.0
  %78 = vmatpush1.msra.mxu0 0.0
  %79 = vmatprep.subr.mxu0 0.0
  %80 = vmatpush1.msra.mxu0 0.0
  %81 = vmatprep.subr.mxu0 0.0
  %82 = vmatpush1.msra.mxu0 0.0
  %83 = vmatprep.subr.mxu0 0.0
  %84 = vmatpush1.msra.mxu0 0.0
  %85 = vmatprep.subr.mxu0 0.0
  %86 = vmatpush1.msra.mxu0 0.0
  %87 = vmatprep.subr.mxu0 0.0
  %88 = vmatpush1.msra.mxu0 0.0
  %89 = vmatprep.subr.mxu0 0.0
  %90 = vmatpush1.msra.mxu0 0.0
  %91 = vmatprep.subr.mxu0 0.0
  %92 = vmatpush1.msra.mxu0 0.0
  %93 = vmatprep.subr.mxu0 0.0
  %94 = vmatpush1.msra.mxu0 0.0
  %95 = vmatprep.subr.mxu0 0.0
  %96 = vmatpush1.msra.mxu0 0.0
  %97 = vmatprep.subr.mxu0 0.0
  %98 = vmatpush1.msra.mxu0 0.0
  %99 = vmatprep.subr.mxu0 0.0
  %100 = vmatpush1.msra.mxu0 0.0
  %101 = vmatprep.subr.mxu0 0.0
  %102 = vmatpush1.msra.mxu0 0.0
  %103 = vmatprep.subr.mxu0 0.0
  %104 = vmatpush1.msra.mxu0 0.0
  %105 = vmatprep.subr.mxu0 0.0
  %106 = vmatpush1.msra.mxu0 0.0
  %107 = vmatprep.subr.mxu0 0.0
  %108 = vmatpush1.msra.mxu0 0.0
  %109 = vmatprep.subr.mxu0 0.0
  %110 = vmatpush1.msra.mxu0 0.0
  %111 = vmatprep.subr.mxu0 0.0
  %112 = vmatpush1.msra.mxu0 0.0
  %113 = vmatprep.subr.mxu0 0.0
  %114 = vmatpush1.msra.mxu0 0.0
  %115 = vmatprep.subr.mxu0 0.0
  %116 = vmatpush1.msra.mxu0 0.0
  %117 = vmatprep.subr.mxu0 0.0
  %118 = vmatpush1.msra.mxu0 0.0
  %119 = vmatprep.subr.mxu0 0.0
  %120 = vmatpush1.msra.mxu0 0.0
  %121 = vmatprep.subr.mxu0 0.0
  %122 = vmatpush1.msra.mxu0 0.0
  %123 = vmatprep.mubr.f32.mxu0 0.0
  %124 = vmatmul.mubr.f32.gmra.mrb[0].mxu0 %v48
  %v125 = vpop.f32.mrb[0].mxu0
  %v126 = vadd.f32 %v39, %v125
  %v127 = vpop.f32.mrb[0].mxu0
  %v128 = vadd.f32 %v43, %v127
  %129 = vmatprep.mubr.f32.mxu0 0.0
  %130 = vmatmul.mubr.f32.gmra.mrb[0].mxu0 %v51
  %v131 = vpop.f32.mrb[0].mxu0
  %v132 = vadd.f32 %v39, %v131
  %v133 = vpop.f32.mrb[0].mxu0
  %v134 = vadd.f32 %v43, %v133
  %135 = vmatprep.mubr.f32.mxu0 0.0
  %136 = vmatmul.mubr.f32.gmra.mrb[0].mxu0 %v54
  %v137 = vpop.f32.mrb[0].mxu0
  %v138 = vadd.f32 %v39, %v137
  %v139 = vpop.f32.mrb[0].mxu0
  %v140 = vadd.f32 %v43, %v139
  %141 = vmatprep.mubr.f32.mxu0 0.0
  %142 = vmatmul.mubr.f32.gmra.mrb[0].mxu0 %v57
  %v143 = vpop.f32.mrb[0].mxu0
  %v144 = vadd.f32 %v39, %v143
  %v145 = vpop.f32.mrb[0].mxu0
  %v146 = vadd.f32 %v43, %v145
  %147 = vdwg.mxu0
  %148 = vst [vmem:[%s3] sm:$0xff] %v126
  %149 = vst.msk [vmem:[%s3 + $0x8] sm:$0xff] %vm46, %v128
  %150 = vst [vmem:[%s3 + $0x10] sm:$0xff] %v132
  %151 = vst.msk [vmem:[%s3 + $0x18] sm:$0xff] %vm46, %v134
  %152 = vst [vmem:[%s3 + $0x20] sm:$0xff] %v138
  %153 = vst.msk [vmem:[%s3 + $0x28] sm:$0xff] %vm46, %v140
  %154 = vst [vmem:[%s3 + $0x30] sm:$0xff] %v144
  %155 = vst.msk [vmem:[%s3 + $0x38] sm:$0xff] %vm46, %v146
  // Predicated region
  $region14: #{mshgat_forward.20} parent=0 // pred_check
    _
  $region15: #{mshgat_forward.20} parent=0 // pred_check_branch
    %157 = sbr.rel (0) target = $region17
  $region16: #{mshgat_forward.20} parent=0 // pred_region
    _
  $region17: #{mshgat_forward.20} parent=0 // pred_fallthru
    _
  // Predicated region
  $region18: #{mshgat_forward.20} parent=0 // pred_check
    _
  $region19: #{mshgat_forward.20} parent=0 // pred_check_branch
    %159 = sbr.rel (0) target = $region21
  $region20: #{mshgat_forward.20} parent=0 // pred_region
    _
  $region21: #{mshgat_forward.20} parent=0 // pred_fallthru
    _

// kernel: mshgat_forward.15
$region0: #{mshgat_forward.15}
  #allocation0 [shape = 'u32[]', space=smem, size = 0x4, offset = 0x4, fixed_abs, tag = 'smem constant byte address 0x4 - core index']
  #allocation1 [shape = 'u32[144,128]{1,0:T(1,128)}', space=vmem, size = 0x12000, scoped, tag = 'internal scratch']
  #allocation2 [shape = 'f32[1,1]{1,0:T(1,128)S(1)}', space=vmem, size = 0x200, scoped, tag = 'scoped memory for mshgat_forward.15']
  %s0 = inlined_call_operand.vmem [shape: f32[128,64], index: 0, kind: input, shape index: {}]
  %s1 = inlined_call_operand.vmem [shape: f32[128,16], index: 1, kind: input, shape index: {}]
  %s2 = inlined_call_operand.vmem [shape: f32[64,64], index: 2, kind: input, shape index: {}]
  %s3 = inlined_call_operand.vmem [shape: f32[64,64], index: 3, kind: input, shape index: {}]
  %s4 = inlined_call_operand.vmem [shape: f32[1,64], index: 4, kind: input, shape index: {}]
  %s5 = inlined_call_operand.vmem [shape: f32[64,64], index: 5, kind: input, shape index: {}]
  %s6 = inlined_call_operand.vmem [shape: f32[64,64], index: 6, kind: input, shape index: {}]
  %s7 = inlined_call_operand.vmem [shape: f32[1,64], index: 7, kind: input, shape index: {}]
  %s8 = inlined_call_operand.vmem [shape: f32[64,64], index: 8, kind: input, shape index: {}]
  %s9 = inlined_call_operand.vmem [shape: f32[64,64], index: 9, kind: input, shape index: {}]
  %s10 = inlined_call_operand.vmem [shape: f32[1,64], index: 10, kind: input, shape index: {}]
  %s11 = inlined_call_operand.vmem [shape: f32[1,64], index: 11, kind: input, shape index: {}]
  %s12 = inlined_call_operand.vmem [shape: f32[1,64], index: 12, kind: input, shape index: {}]
  %s13 = inlined_call_operand.vmem [shape: f32[64,64], index: 13, kind: input, shape index: {}]
  %s14 = inlined_call_operand.vmem [shape: f32[1,64], index: 14, kind: input, shape index: {}]
  %s15 = inlined_call_operand.vmem [shape: f32[1,64], index: 15, kind: input, shape index: {}]
  %s16 = inlined_call_operand.<no memory space> [shape: f32[1,1], index: 16, kind: input, shape index: {}]
  %s17 = inlined_call_operand.vmem [shape: f32[128,64], index: 17, kind: output, shape index: {0}]
  %s18 = inlined_call_operand.hbm [shape: f32[16,64], index: 18, kind: output, shape index: {1}]
  %19 = xla_tuple %s17, %s18
  %s20 = sld [smem:[#allocation0]]
  $region86: #{mshgat_forward.15} parent=0
    _
  %s22 = ssub.s32 1, %s20
  %s23 = scalar_select 0, %s22, %s20
  %v24 = vstv %s16
  %25 = vst [vmem:[#allocation2] sm:$0x1] %v24
  $region1: #{mshgat_forward.15} parent=0
    #allocation3 [shape = 'u8[8192]{0}', space=vmem, size = 0x2000, scoped, tag = 'output window, operand 1, single buffered']
    #allocation4 [shape = 's32[1]{0}', space=sflag, size = 0x4, scoped, tag = 'scoped memory for mshgat_forward.15']
    %26 = vsyncpa [#allocation4], 0
    // Predicated region
    $region2: #{mshgat_forward.15} parent=1 // pred_check
      _
    $region3: #{mshgat_forward.15} parent=1 // pred_check_branch
      %28 = sbr.rel (0) target = $region5
    $region4: #{mshgat_forward.15} parent=1 // pred_region
      _
    $region5: #{mshgat_forward.15} parent=1 // pred_fallthru
      _
    // Predicated region
    $region6: #{mshgat_forward.15} parent=1 // pred_check
      _
    $region7: #{mshgat_forward.15} parent=1 // pred_check_branch
      %30 = sbr.rel (0) target = $region9
    $region8: #{mshgat_forward.15} parent=1 // pred_region
      _
    $region9: #{mshgat_forward.15} parent=1 // pred_fallthru
      _
    // Predicated region
    $region10: #{mshgat_forward.15} parent=1 // pred_check
      _
    $region11: #{mshgat_forward.15} parent=1 // pred_check_branch
      %32 = sbr.rel (0) target = $region13
    $region12: #{mshgat_forward.15} parent=1 // pred_region
      _
    $region13: #{mshgat_forward.15} parent=1 // pred_fallthru
      _
    // Predicated region
    $region14: #{mshgat_forward.15} parent=1 // pred_check
      _
    $region15: #{mshgat_forward.15} parent=1 // pred_check_branch
      %34 = sbr.rel (0) target = $region17
    $region16: #{mshgat_forward.15} parent=1 // pred_region
      _
    $region17: #{mshgat_forward.15} parent=1 // pred_fallthru
      _
    // Predicated region
    $region18: #{mshgat_forward.15} parent=1 // pred_check
      _
    $region19: #{mshgat_forward.15} parent=1 // pred_check_branch
      %36 = sbr.rel (0) target = $region21
    $region20: #{mshgat_forward.15} parent=1 // pred_region
      _
    $region21: #{mshgat_forward.15} parent=1 // pred_fallthru
      _
    // Predicated region
    $region22: #{mshgat_forward.15} parent=1 // pred_check
      _
    $region23: #{mshgat_forward.15} parent=1 // pred_check_branch
      %38 = sbr.rel (0) target = $region25
    $region24: #{mshgat_forward.15} parent=1 // pred_region
      _
    $region25: #{mshgat_forward.15} parent=1 // pred_fallthru
      _
    // Predicated region
    $region26: #{mshgat_forward.15} parent=1 // pred_check
      _
    $region27: #{mshgat_forward.15} parent=1 // pred_check_branch
      %40 = sbr.rel (0) target = $region29
    $region28: #{mshgat_forward.15} parent=1 // pred_region
      _
    $region29: #{mshgat_forward.15} parent=1 // pred_fallthru
      _
    // Predicated region
    $region30: #{mshgat_forward.15} parent=1 // pred_check
      _
    $region31: #{mshgat_forward.15} parent=1 // pred_check_branch
      %42 = sbr.rel (0) target = $region33
    $region32: #{mshgat_forward.15} parent=1 // pred_region
      _
    $region33: #{mshgat_forward.15} parent=1 // pred_fallthru
      _
    // Predicated region
    $region34: #{mshgat_forward.15} parent=1 // pred_check
      _
    $region35: #{mshgat_forward.15} parent=1 // pred_check_branch
      %44 = sbr.rel (0) target = $region37
    $region36: #{mshgat_forward.15} parent=1 // pred_region
      _
    $region37: #{mshgat_forward.15} parent=1 // pred_fallthru
      _
    // Predicated region
    $region38: #{mshgat_forward.15} parent=1 // pred_check
      _
    $region39: #{mshgat_forward.15} parent=1 // pred_check_branch
      %46 = sbr.rel (0) target = $region41
    $region40: #{mshgat_forward.15} parent=1 // pred_region
      _
    $region41: #{mshgat_forward.15} parent=1 // pred_fallthru
      _
    // Predicated region
    $region42: #{mshgat_forward.15} parent=1 // pred_check
      _
    $region43: #{mshgat_forward.15} parent=1 // pred_check_branch
      %48 = sbr.rel (0) target = $region45
    $region44: #{mshgat_forward.15} parent=1 // pred_region
      _
    $region45: #{mshgat_forward.15} parent=1 // pred_fallthru
      _
    // Predicated region
    $region46: #{mshgat_forward.15} parent=1 // pred_check
      _
    $region47: #{mshgat_forward.15} parent=1 // pred_check_branch
      %50 = sbr.rel (0) target = $region49
    $region48: #{mshgat_forward.15} parent=1 // pred_region
      _
    $region49: #{mshgat_forward.15} parent=1 // pred_fallthru
      _
    // Predicated region
    $region50: #{mshgat_forward.15} parent=1 // pred_check
      _
    $region51: #{mshgat_forward.15} parent=1 // pred_check_branch
      %52 = sbr.rel (0) target = $region53
    $region52: #{mshgat_forward.15} parent=1 // pred_region
      _
    $region53: #{mshgat_forward.15} parent=1 // pred_fallthru
      _
    // Predicated region
    $region54: #{mshgat_forward.15} parent=1 // pred_check
      _
    $region55: #{mshgat_forward.15} parent=1 // pred_check_branch
      %54 = sbr.rel (0) target = $region57
    $region56: #{mshgat_forward.15} parent=1 // pred_region
      _
    $region57: #{mshgat_forward.15} parent=1 // pred_fallthru
      _
    // Predicated region
    $region58: #{mshgat_forward.15} parent=1 // pred_check
      _
    $region59: #{mshgat_forward.15} parent=1 // pred_check_branch
      %56 = sbr.rel (0) target = $region61
    $region60: #{mshgat_forward.15} parent=1 // pred_region
      _
    $region61: #{mshgat_forward.15} parent=1 // pred_fallthru
      _
    // Predicated region
    $region62: #{mshgat_forward.15} parent=1 // pred_check
      _
    $region63: #{mshgat_forward.15} parent=1 // pred_check_branch
      %58 = sbr.rel (0) target = $region65
    $region64: #{mshgat_forward.15} parent=1 // pred_region
      _
    $region65: #{mshgat_forward.15} parent=1 // pred_fallthru
      _
    // Predicated region
    $region66: #{mshgat_forward.15} parent=1 // pred_check
      _
    $region67: #{mshgat_forward.15} parent=1 // pred_check_branch
      %60 = sbr.rel (0) target = $region69
    $region68: #{mshgat_forward.15} parent=1 // pred_region
      _
    $region69: #{mshgat_forward.15} parent=1 // pred_fallthru
      _
    %v62 = vld [vmem:[%s1] sm:$0xff]
    %v63 = vld [vmem:[%s1 + $0x8] sm:$0xff]
    %v64 = vld [vmem:[%s1 + $0x10] sm:$0xff]
    %v65 = vld [vmem:[%s1 + $0x18] sm:$0xff]
    %v66 = vld [vmem:[%s1 + $0x20] sm:$0xff]
    %v67 = vld [vmem:[%s1 + $0x28] sm:$0xff]
    %v68 = vld [vmem:[%s1 + $0x30] sm:$0xff]
    %v69 = vld [vmem:[%s1 + $0x38] sm:$0xff]
    %v70 = vld [vmem:[%s1 + $0x40] sm:$0xff]
    %v71 = vld [vmem:[%s1 + $0x48] sm:$0xff]
    %v72 = vld [vmem:[%s1 + $0x50] sm:$0xff]
    %v73 = vld [vmem:[%s1 + $0x58] sm:$0xff]
    %v74 = vld [vmem:[%s1 + $0x60] sm:$0xff]
    %v75 = vld [vmem:[%s1 + $0x68] sm:$0xff]
    %v76 = vld [vmem:[%s1 + $0x70] sm:$0xff]
    %v77 = vld [vmem:[%s1 + $0x78] sm:$0xff]
    %v78 = vld [vmem:[%s0] sm:$0xff]
    %v79 = vld [vmem:[%s0 + $0x8] sm:$0xff]
    %v80 = vld [vmem:[%s0 + $0x10] sm:$0xff]
    %v81 = vld [vmem:[%s0 + $0x18] sm:$0xff]
    %v82 = vld [vmem:[%s0 + $0x20] sm:$0xff]
    %v83 = vld [vmem:[%s0 + $0x28] sm:$0xff]
    %v84 = vld [vmem:[%s0 + $0x30] sm:$0xff]
    %v85 = vld [vmem:[%s0 + $0x38] sm:$0xff]
    %v86 = vld [vmem:[%s0 + $0x40] sm:$0xff]
    %v87 = vld [vmem:[%s0 + $0x48] sm:$0xff]
    %v88 = vld [vmem:[%s0 + $0x50] sm:$0xff]
    %v89 = vld [vmem:[%s0 + $0x58] sm:$0xff]
    %v90 = vld [vmem:[%s0 + $0x60] sm:$0xff]
    %v91 = vld [vmem:[%s0 + $0x68] sm:$0xff]
    %v92 = vld [vmem:[%s0 + $0x70] sm:$0xff]
    %v93 = vld [vmem:[%s0 + $0x78] sm:$0xff]
    %v94 = vld [vmem:[%s2] sm:$0xff]
    %v95 = vld [vmem:[%s2 + $0x8] sm:$0xff]
    %v96 = vld [vmem:[%s2 + $0x10] sm:$0xff]
    %v97 = vld [vmem:[%s2 + $0x18] sm:$0xff]
    %v98 = vld [vmem:[%s2 + $0x20] sm:$0xff]
    %v99 = vld [vmem:[%s2 + $0x28] sm:$0xff]
    %v100 = vld [vmem:[%s2 + $0x30] sm:$0xff]
    %v101 = vld [vmem:[%s2 + $0x38] sm:$0xff]
    %v102 = vpack.c.bf16 %v79, %v78
    %v103 = vpack.c.bf16 %v81, %v80
    %v104 = vpack.c.bf16 %v83, %v82
    %v105 = vpack.c.bf16 %v85, %v84
    %v106 = vpack.c.bf16 %v87, %v86
    %v107 = vpack.c.bf16 %v89, %v88
    %v108 = vpack.c.bf16 %v91, %v90
    %v109 = vpack.c.bf16 %v93, %v92
    %v110 = vpack.c.bf16 %v95, %v94
    %v111 = vpack.c.bf16 %v97, %v96
    %v112 = vpack.c.bf16 %v99, %v98
    %v113 = vpack.c.bf16 %v101, %v100
    %v114 = vld [vmem:[%s4] sm:$0x1]
    %v116 = vlaneseq
    %v117 = vshrl.u32 %v116, 7
    %v118 = vsub.s32 0, %v117
    %v119 = vrot.slane %v114, %v118
    %vm121 = vcmask 523264
    %v123 = vsel %vm121, %v102, 0
    %v126 = vsel %vm121, %v103, 0
    %v129 = vsel %vm121, %v104, 0
    %v132 = vsel %vm121, %v105, 0
    %v135 = vsel %vm121, %v106, 0
    %v138 = vsel %vm121, %v107, 0
    %v141 = vsel %vm121, %v108, 0
    %v144 = vsel %vm121, %v109, 0
    %146 = vmatprep.subr.bf16.mxu0 0
    %147 = vmatpush1.bf16.msra.mxu0 %v110
    %148 = vmatprep.subr.bf16.mxu0 0
    %149 = vmatpush1.bf16.msra.mxu0 %v111
    %150 = vmatprep.subr.bf16.mxu0 0
    %151 = vmatpush1.bf16.msra.mxu0 %v112
    %152 = vmatprep.subr.bf16.mxu0 0
    %153 = vmatpush1.bf16.msra.mxu0 %v113
    %154 = vmatprep.subr.bf16.mxu0 0
    %155 = vmatpush1.bf16.msra.mxu0 0
    %156 = vmatprep.subr.bf16.mxu0 0
    %157 = vmatpush1.bf16.msra.mxu0 0
    %158 = vmatprep.subr.bf16.mxu0 0
    %159 = vmatpush1.bf16.msra.mxu0 0
    %160 = vmatprep.subr.bf16.mxu0 0
    %161 = vmatpush1.bf16.msra.mxu0 0
    %162 = vmatprep.subr.bf16.mxu0 0
    %163 = vmatpush1.bf16.msra.mxu0 0
    %164 = vmatprep.subr.bf16.mxu0 0
    %165 = vmatpush1.bf16.msra.mxu0 0
    %166 = vmatprep.subr.bf16.mxu0 0
    %167 = vmatpush1.bf16.msra.mxu0 0
    %168 = vmatprep.subr.bf16.mxu0 0
    %169 = vmatpush1.bf16.msra.mxu0 0
    %170 = vmatprep.subr.bf16.mxu0 0
    %171 = vmatpush1.bf16.msra.mxu0 0
    %172 = vmatprep.subr.bf16.mxu0 0
    %173 = vmatpush1.bf16.msra.mxu0 0
    %174 = vmatprep.subr.bf16.mxu0 0
    %175 = vmatpush1.bf16.msra.mxu0 0
    %176 = vmatprep.subr.bf16.mxu0 0
    %177 = vmatpush1.bf16.msra.mxu0 0
    %178 = vmatprep.mubr.bf16.mxu0 0
    %179 = vmatmul.mubr.bf16.gmra.mrb[0].mxu0 %v123
    %v180 = vpop.f32.mrb[0].mxu0
    %v181 = vadd.f32 %v119, %v180
    %v182 = vpop.f32.mrb[0].mxu0
    %v183 = vpop.f32.mrb[0].mxu0
    %v184 = vadd.f32 %v119, %v183
    %v185 = vpop.f32.mrb[0].mxu0
    %186 = vmatprep.mubr.bf16.mxu0 0
    %187 = vmatmul.mubr.bf16.gmra.mrb[0].mxu0 %v126
    %v188 = vpop.f32.mrb[0].mxu0
    %v189 = vadd.f32 %v119, %v188
    %v190 = vpop.f32.mrb[0].mxu0
    %v191 = vpop.f32.mrb[0].mxu0
    %v192 = vadd.f32 %v119, %v191
    %v193 = vpop.f32.mrb[0].mxu0
    %194 = vmatprep.mubr.bf16.mxu0 0
    %195 = vmatmul.mubr.bf16.gmra.mrb[0].mxu0 %v129
    %v196 = vpop.f32.mrb[0].mxu0
    %v197 = vadd.f32 %v119, %v196
    %v198 = vpop.f32.mrb[0].mxu0
    %v199 = vpop.f32.mrb[0].mxu0
    %v200 = vadd.f32 %v119, %v199
    %v201 = vpop.f32.mrb[0].mxu0
    %202 = vmatprep.mubr.bf16.mxu0 0
    %203 = vmatmul.mubr.bf16.gmra.mrb[0].mxu0 %v132
    %v204 = vpop.f32.mrb[0].mxu0
    %v205 = vadd.f32 %v119, %v204
    %v206 = vpop.f32.mrb[0].mxu0
    %v207 = vpop.f32.mrb[0].mxu0
    %v208 = vadd.f32 %v119, %v207
    %v209 = vpop.f32.mrb[0].mxu0
    %210 = vmatprep.mubr.bf16.mxu0 0
    %211 = vmatmul.mubr.bf16.gmra.mrb[0].mxu0 %v135
    %v212 = vpop.f32.mrb[0].mxu0
    %v213 = vadd.f32 %v119, %v212
    %v214 = vpop.f32.mrb[0].mxu0
    %v215 = vpop.f32.mrb[0].mxu0
    %v216 = vadd.f32 %v119, %v215
    %v217 = vpop.f32.mrb[0].mxu0
    %218 = vmatprep.mubr.bf16.mxu0 0
    %219 = vmatmul.mubr.bf16.gmra.mrb[0].mxu0 %v138
    %v220 = vpop.f32.mrb[0].mxu0
    %v221 = vadd.f32 %v119, %v220
    %v222 = vpop.f32.mrb[0].mxu0
    %v223 = vpop.f32.mrb[0].mxu0
    %v224 = vadd.f32 %v119, %v223
    %v225 = vpop.f32.mrb[0].mxu0
    %226 = vmatprep.mubr.bf16.mxu0 0
    %227 = vmatmul.mubr.bf16.gmra.mrb[0].mxu0 %v141
    %v228 = vpop.f32.mrb[0].mxu0
    %v229 = vadd.f32 %v119, %v228
    %v230 = vpop.f32.mrb[0].mxu0
    %v231 = vpop.f32.mrb[0].mxu0
    %v232 = vadd.f32 %v119, %v231
    %v233 = vpop.f32.mrb[0].mxu0
    %234 = vmatprep.mubr.bf16.mxu0 0
    %235 = vmatmul.mubr.bf16.gmra.mrb[0].mxu0 %v144
    %v236 = vpop.f32.mrb[0].mxu0
    %v237 = vadd.f32 %v119, %v236
    %v238 = vpop.f32.mrb[0].mxu0
    %v239 = vpop.f32.mrb[0].mxu0
    %v240 = vadd.f32 %v119, %v239
    %v241 = vpop.f32.mrb[0].mxu0
    %242 = vdwg.mxu0
    %v243 = vpack.c.bf16 %v63, %v62
    %v244 = vpack.c.bf16 %v65, %v64
    %v245 = vpack.c.bf16 %v67, %v66
    %v246 = vpack.c.bf16 %v69, %v68
    %v247 = vpack.c.bf16 %v71, %v70
    %v248 = vpack.c.bf16 %v73, %v72
    %v249 = vpack.c.bf16 %v75, %v74
    %v250 = vpack.c.bf16 %v77, %v76
    %v251 = vpack.c.bf16 %v184, %v181
    %v252 = vpack.c.bf16 %v192, %v189
    %v253 = vpack.c.bf16 %v200, %v197
    %v254 = vpack.c.bf16 %v208, %v205
    %v255 = vpack.c.bf16 %v216, %v213
    %v256 = vpack.c.bf16 %v224, %v221
    %v257 = vpack.c.bf16 %v232, %v229
    %v258 = vpack.c.bf16 %v240, %v237
    %259 = vxpose.xlu0.c.b16.start [1/8] %v243, 128
    %260 = vxpose.xlu0.c.b16.cont [2/8] %v244, 128
    %261 = vxpose.xlu0.c.b16.cont [3/8] %v245, 128
    %262 = vxpose.xlu0.c.b16.cont [4/8] %v246, 128
    %263 = vxpose.xlu0.c.b16.cont [5/8] %v247, 128
    %264 = vxpose.xlu0.c.b16.cont [6/8] %v248, 128
    %265 = vxpose.xlu0.c.b16.cont [7/8] %v249, 128
    %266 = vxpose.xlu0.c.b16.end [8/8] %v250, 128
    %v267 = vpop.trf.xlu0
    %v268 = vpop.trf.xlu0
    %v269 = vpop.trf.xlu0
    %v270 = vpop.trf.xlu0
    %v271 = vpop.trf.xlu0
    %v272 = vpop.trf.xlu0
    %v273 = vpop.trf.xlu0
    %v274 = vpop.trf.xlu0
    %275 = vmatprep.subr.bf16.mxu0 0
    %276 = vmatpush1.bf16.msra.mxu0 %v251
    %277 = vmatprep.subr.bf16.mxu0 0
    %278 = vmatpush1.bf16.msra.mxu0 %v252
    %279 = vmatprep.subr.bf16.mxu0 0
    %280 = vmatpush1.bf16.msra.mxu0 %v253
    %281 = vmatprep.subr.bf16.mxu0 0
    %282 = vmatpush1.bf16.msra.mxu0 %v254
    %283 = vmatprep.subr.bf16.mxu0 0
    %284 = vmatpush1.bf16.msra.mxu0 %v255
    %285 = vmatprep.subr.bf16.mxu0 0
    %286 = vmatpush1.bf16.msra.mxu0 %v256
    %287 = vmatprep.subr.bf16.mxu0 0
    %288 = vmatpush1.bf16.msra.mxu0 %v257
    %289 = vmatprep.subr.bf16.mxu0 0
    %290 = vmatpush1.bf16.msra.mxu0 %v258
    %291 = vmatprep.subr.bf16.mxu0 0
    %292 = vmatpush1.bf16.msra.mxu0 0
    %293 = vmatprep.subr.bf16.mxu0 0
    %294 = vmatpush1.bf16.msra.mxu0 0
    %295 = vmatprep.subr.bf16.mxu0 0
    %296 = vmatpush1.bf16.msra.mxu0 0
    %297 = vmatprep.subr.bf16.mxu0 0
    %298 = vmatpush1.bf16.msra.mxu0 0
    %299 = vmatprep.subr.bf16.mxu0 0
    %300 = vmatpush1.bf16.msra.mxu0 0
    %301 = vmatprep.subr.bf16.mxu0 0
    %302 = vmatpush1.bf16.msra.mxu0 0
    %303 = vmatprep.subr.bf16.mxu0 0
    %304 = vmatpush1.bf16.msra.mxu0 0
    %305 = vmatprep.subr.bf16.mxu0 0
    %306 = vmatpush1.bf16.msra.mxu0 0
    %307 = vmatprep.mubr.bf16.mxu0 0
    %308 = vmatmul.mubr.bf16.gmra.mrb[0].mxu0 %v267
    %v309 = vpop.f32.mrb[0].mxu0
    %v310 = vadd.f32 0.0, %v309
    %v311 = vpop.f32.mrb[0].mxu0
    %v312 = vpop.f32.mrb[0].mxu0
    %v313 = vadd.f32 0.0, %v312
    %v314 = vpop.f32.mrb[0].mxu0
    %315 = vdwg.mxu0
    %v316 = vld [vmem:[%s3] sm:$0xff]
    %v317 = vld [vmem:[%s3 + $0x8] sm:$0xff]
    %v318 = vld [vmem:[%s3 + $0x10] sm:$0xff]
    %v319 = vld [vmem:[%s3 + $0x18] sm:$0xff]
    %v320 = vld [vmem:[%s3 + $0x20] sm:$0xff]
    %v321 = vld [vmem:[%s3 + $0x28] sm:$0xff]
    %v322 = vld [vmem:[%s3 + $0x30] sm:$0xff]
    %v323 = vld [vmem:[%s3 + $0x38] sm:$0xff]
    %v324 = vpack.c.bf16 %v313, %v310
    %v325 = vpack.c.bf16 %v317, %v316
    %v326 = vpack.c.bf16 %v319, %v318
    %v327 = vpack.c.bf16 %v321, %v320
    %v328 = vpack.c.bf16 %v323, %v322
    %v330 = vsel %vm121, %v324, 0
    %332 = vmatprep.subr.bf16.mxu0 0
    %333 = vmatpush1.bf16.msra.mxu0 %v325
    %334 = vmatprep.subr.bf16.mxu0 0
    %335 = vmatpush1.bf16.msra.mxu0 %v326
    %336 = vmatprep.subr.bf16.mxu0 0
    %337 = vmatpush1.bf16.msra.mxu0 %v327
    %338 = vmatprep.subr.bf16.mxu0 0
    %339 = vmatpush1.bf16.msra.mxu0 %v328
    %340 = vmatprep.subr.bf16.mxu0 0
    %341 = vmatpush1.bf16.msra.mxu0 0
    %342 = vmatprep.subr.bf16.mxu0 0
    %343 = vmatpush1.bf16.msra.mxu0 0
    %344 = vmatprep.subr.bf16.mxu0 0
    %345 = vmatpush1.bf16.msra.mxu0 0
    %346 = vmatprep.subr.bf16.mxu0 0
    %347 = vmatpush1.bf16.msra.mxu0 0
    %348 = vmatprep.subr.bf16.mxu0 0
    %349 = vmatpush1.bf16.msra.mxu0 0
    %350 = vmatprep.subr.bf16.mxu0 0
    %351 = vmatpush1.bf16.msra.mxu0 0
    %352 = vmatprep.subr.bf16.mxu0 0
    %353 = vmatpush1.bf16.msra.mxu0 0
    %354 = vmatprep.subr.bf16.mxu0 0
    %355 = vmatpush1.bf16.msra.mxu0 0
    %356 = vmatprep.subr.bf16.mxu0 0
    %357 = vmatpush1.bf16.msra.mxu0 0
    %358 = vmatprep.subr.bf16.mxu0 0
    %359 = vmatpush1.bf16.msra.mxu0 0
    %360 = vmatprep.subr.bf16.mxu0 0
    %361 = vmatpush1.bf16.msra.mxu0 0
    %362 = vmatprep.subr.bf16.mxu0 0
    %363 = vmatpush1.bf16.msra.mxu0 0
    %364 = vmatprep.mubr.bf16.mxu0 0
    %365 = vmatmul.mubr.bf16.gmra.mrb[0].mxu0 %v330
    %v366 = vpop.f32.mrb[0].mxu0
    %v367 = vadd.f32 0.0, %v366
    %v368 = vpop.f32.mrb[0].mxu0
    %v369 = vpop.f32.mrb[0].mxu0
    %v370 = vadd.f32 0.0, %v369
    %v371 = vpop.f32.mrb[0].mxu0
    %372 = vdwg.mxu0
    %v373 = vpack.c.bf16 %v370, %v367
    %vm374 = vcmask 130048
    %v376 = vsel %vm374, %v243, 0
    %v379 = vsel %vm374, %v244, 0
    %v382 = vsel %vm374, %v245, 0
    %v385 = vsel %vm374, %v246, 0
    %v388 = vsel %vm374, %v247, 0
    %v391 = vsel %vm374, %v248, 0
    %v394 = vsel %vm374, %v249, 0
    %v397 = vsel %vm374, %v250, 0
    %399 = vmatprep.subr.bf16.mxu0 0
    %400 = vmatpush1.bf16.msra.mxu0 %v373
    %401 = vmatprep.subr.bf16.mxu0 0
    %402 = vmatpush1.bf16.msra.mxu0 0
    %403 = vmatprep.subr.bf16.mxu0 0
    %404 = vmatpush1.bf16.msra.mxu0 0
    %405 = vmatprep.subr.bf16.mxu0 0
    %406 = vmatpush1.bf16.msra.mxu0 0
    %407 = vmatprep.subr.bf16.mxu0 0
    %408 = vmatpush1.bf16.msra.mxu0 0
    %409 = vmatprep.subr.bf16.mxu0 0
    %410 = vmatpush1.bf16.msra.mxu0 0
    %411 = vmatprep.subr.bf16.mxu0 0
    %412 = vmatpush1.bf16.msra.mxu0 0
    %413 = vmatprep.subr.bf16.mxu0 0
    %414 = vmatpush1.bf16.msra.mxu0 0
    %415 = vmatprep.subr.bf16.mxu0 0
    %416 = vmatpush1.bf16.msra.mxu0 0
    %417 = vmatprep.subr.bf16.mxu0 0
    %418 = vmatpush1.bf16.msra.mxu0 0
    %419 = vmatprep.subr.bf16.mxu0 0
    %420 = vmatpush1.bf16.msra.mxu0 0
    %421 = vmatprep.subr.bf16.mxu0 0
    %422 = vmatpush1.bf16.msra.mxu0 0
    %423 = vmatprep.subr.bf16.mxu0 0
    %424 = vmatpush1.bf16.msra.mxu0 0
    %425 = vmatprep.subr.bf16.mxu0 0
    %426 = vmatpush1.bf16.msra.mxu0 0
    %427 = vmatprep.subr.bf16.mxu0 0
    %428 = vmatpush1.bf16.msra.mxu0 0
    %429 = vmatprep.subr.bf16.mxu0 0
    %430 = vmatpush1.bf16.msra.mxu0 0
    %431 = vmatprep.mubr.bf16.mxu0 0
    %432 = vmatmul.mubr.bf16.gmra.mrb[0].mxu0 %v376
    %v433 = vpop.f32.mrb[0].mxu0
    %v434 = vadd.f32 0.0, %v433
    %v435 = vpop.f32.mrb[0].mxu0
    %v436 = vpop.f32.mrb[0].mxu0
    %v437 = vadd.f32 0.0, %v436
    %v438 = vpop.f32.mrb[0].mxu0
    %439 = vmatprep.mubr.bf16.mxu0 0
    %440 = vmatmul.mubr.bf16.gmra.mrb[0].mxu0 %v379
    %v441 = vpop.f32.mrb[0].mxu0
    %v442 = vadd.f32 0.0, %v441
    %v443 = vpop.f32.mrb[0].mxu0
    %v444 = vpop.f32.mrb[0].mxu0
    %v445 = vadd.f32 0.0, %v444
    %v446 = vpop.f32.mrb[0].mxu0
    %447 = vmatprep.mubr.bf16.mxu0 0
    %448 = vmatmul.mubr.bf16.gmra.mrb[0].mxu0 %v382
    %v449 = vpop.f32.mrb[0].mxu0
    %v450 = vadd.f32 0.0, %v449
    %v451 = vpop.f32.mrb[0].mxu0
    %v452 = vpop.f32.mrb[0].mxu0
    %v453 = vadd.f32 0.0, %v452
    %v454 = vpop.f32.mrb[0].mxu0
    %455 = vmatprep.mubr.bf16.mxu0 0
    %456 = vmatmul.mubr.bf16.gmra.mrb[0].mxu0 %v385
    %v457 = vpop.f32.mrb[0].mxu0
    %v458 = vadd.f32 0.0, %v457
    %v459 = vpop.f32.mrb[0].mxu0
    %v460 = vpop.f32.mrb[0].mxu0
    %v461 = vadd.f32 0.0, %v460
    %v462 = vpop.f32.mrb[0].mxu0
    %463 = vmatprep.mubr.bf16.mxu0 0
    %464 = vmatmul.mubr.bf16.gmra.mrb[0].mxu0 %v388
    %v465 = vpop.f32.mrb[0].mxu0
    %v466 = vadd.f32 0.0, %v465
    %v467 = vpop.f32.mrb[0].mxu0
    %v468 = vpop.f32.mrb[0].mxu0
    %v469 = vadd.f32 0.0, %v468
    %v470 = vpop.f32.mrb[0].mxu0
    %471 = vmatprep.mubr.bf16.mxu0 0
    %472 = vmatmul.mubr.bf16.gmra.mrb[0].mxu0 %v391
    %v473 = vpop.f32.mrb[0].mxu0
    %v474 = vadd.f32 0.0, %v473
    %v475 = vpop.f32.mrb[0].mxu0
    %v476 = vpop.f32.mrb[0].mxu0
    %v477 = vadd.f32 0.0, %v476
    %v478 = vpop.f32.mrb[0].mxu0
    %479 = vmatprep.mubr.bf16.mxu0 0
    %480 = vmatmul.mubr.bf16.gmra.mrb[0].mxu0 %v394
    %v481 = vpop.f32.mrb[0].mxu0
    %v482 = vadd.f32 0.0, %v481
    %v483 = vpop.f32.mrb[0].mxu0
    %v484 = vpop.f32.mrb[0].mxu0
    %v485 = vadd.f32 0.0, %v484
    %v486 = vpop.f32.mrb[0].mxu0
    %487 = vmatprep.mubr.bf16.mxu0 0
    %488 = vmatmul.mubr.bf16.gmra.mrb[0].mxu0 %v397
    %v489 = vpop.f32.mrb[0].mxu0
    %v490 = vadd.f32 0.0, %v489
    %v491 = vpop.f32.mrb[0].mxu0
    %v492 = vpop.f32.mrb[0].mxu0
    %v493 = vadd.f32 0.0, %v492
    %v494 = vpop.f32.mrb[0].mxu0
    %495 = vdwg.mxu0
    %v496 = vld [vmem:[%s5] sm:$0xff]
    %v497 = vld [vmem:[%s5 + $0x8] sm:$0xff]
    %v498 = vld [vmem:[%s5 + $0x10] sm:$0xff]
    %v499 = vld [vmem:[%s5 + $0x18] sm:$0xff]
    %v500 = vld [vmem:[%s5 + $0x20] sm:$0xff]
    %v501 = vld [vmem:[%s5 + $0x28] sm:$0xff]
    %v502 = vld [vmem:[%s5 + $0x30] sm:$0xff]
    %v503 = vld [vmem:[%s5 + $0x38] sm:$0xff]
    %v504 = vpack.c.bf16 %v437, %v434
    %v505 = vpack.c.bf16 %v445, %v442
    %v506 = vpack.c.bf16 %v453, %v450
    %v507 = vpack.c.bf16 %v461, %v458
    %v508 = vpack.c.bf16 %v469, %v466
    %v509 = vpack.c.bf16 %v477, %v474
    %v510 = vpack.c.bf16 %v485, %v482
    %v511 = vpack.c.bf16 %v493, %v490
    %v512 = vpack.c.bf16 %v497, %v496
    %v513 = vpack.c.bf16 %v499, %v498
    %v514 = vpack.c.bf16 %v501, %v500
    %v515 = vpack.c.bf16 %v503, %v502
    %v516 = vld [vmem:[%s7] sm:$0x1]
    %v518 = vlaneseq
    %v519 = vshrl.u32 %v518, 7
    %v520 = vsub.s32 0, %v519
    %v521 = vrot.slane %v516, %v520
    %v524 = vsel %vm121, %v504, 0
    %v527 = vsel %vm121, %v505, 0
    %v530 = vsel %vm121, %v506, 0
    %v533 = vsel %vm121, %v507, 0
    %v536 = vsel %vm121, %v508, 0
    %v539 = vsel %vm121, %v509, 0
    %v542 = vsel %vm121, %v510, 0
    %v545 = vsel %vm121, %v511, 0
    %547 = vmatprep.subr.bf16.mxu0 0
    %548 = vmatpush1.bf16.msra.mxu0 %v512
    %549 = vmatprep.subr.bf16.mxu0 0
    %550 = vmatpush1.bf16.msra.mxu0 %v513
    %551 = vmatprep.subr.bf16.mxu0 0
    %552 = vmatpush1.bf16.msra.mxu0 %v514
    %553 = vmatprep.subr.bf16.mxu0 0
    %554 = vmatpush1.bf16.msra.mxu0 %v515
    %555 = vmatprep.subr.bf16.mxu0 0
    %556 = vmatpush1.bf16.msra.mxu0 0
    %557 = vmatprep.subr.bf16.mxu0 0
    %558 = vmatpush1.bf16.msra.mxu0 0
    %559 = vmatprep.subr.bf16.mxu0 0
    %560 = vmatpush1.bf16.msra.mxu0 0
    %561 = vmatprep.subr.bf16.mxu0 0
    %562 = vmatpush1.bf16.msra.mxu0 0
    %563 = vmatprep.subr.bf16.mxu0 0
    %564 = vmatpush1.bf16.msra.mxu0 0
    %565 = vmatprep.subr.bf16.mxu0 0
    %566 = vmatpush1.bf16.msra.mxu0 0
    %567 = vmatprep.subr.bf16.mxu0 0
    %568 = vmatpush1.bf16.msra.mxu0 0
    %569 = vmatprep.subr.bf16.mxu0 0
    %570 = vmatpush1.bf16.msra.mxu0 0
    %571 = vmatprep.subr.bf16.mxu0 0
    %572 = vmatpush1.bf16.msra.mxu0 0
    %573 = vmatprep.subr.bf16.mxu0 0
    %574 = vmatpush1.bf16.msra.mxu0 0
    %575 = vmatprep.subr.bf16.mxu0 0
    %576 = vmatpush1.bf16.msra.mxu0 0
    %577 = vmatprep.subr.bf16.mxu0 0
    %578 = vmatpush1.bf16.msra.mxu0 0
    %579 = vmatprep.mubr.bf16.mxu0 0
    %580 = vmatmul.mubr.bf16.gmra.mrb[0].mxu0 %v524
    %v581 = vpop.f32.mrb[0].mxu0
    %v582 = vadd.f32 %v521, %v581
    %v583 = vpop.f32.mrb[0].mxu0
    %v584 = vpop.f32.mrb[0].mxu0
    %v585 = vadd.f32 %v521, %v584
    %v586 = vpop.f32.mrb[0].mxu0
    %587 = vmatprep.mubr.bf16.mxu0 0
    %588 = vmatmul.mubr.bf16.gmra.mrb[0].mxu0 %v527
    %v589 = vpop.f32.mrb[0].mxu0
    %v590 = vadd.f32 %v521, %v589
    %v591 = vpop.f32.mrb[0].mxu0
    %v592 = vpop.f32.mrb[0].mxu0
    %v593 = vadd.f32 %v521, %v592
    %v594 = vpop.f32.mrb[0].mxu0
    %595 = vmatprep.mubr.bf16.mxu0 0
    %596 = vmatmul.mubr.bf16.gmra.mrb[0].mxu0 %v530
    %v597 = vpop.f32.mrb[0].mxu0
    %v598 = vadd.f32 %v521, %v597
    %v599 = vpop.f32.mrb[0].mxu0
    %v600 = vpop.f32.mrb[0].mxu0
    %v601 = vadd.f32 %v521, %v600
    %v602 = vpop.f32.mrb[0].mxu0
    %603 = vmatprep.mubr.bf16.mxu0 0
    %604 = vmatmul.mubr.bf16.gmra.mrb[0].mxu0 %v533
    %v605 = vpop.f32.mrb[0].mxu0
    %v606 = vadd.f32 %v521, %v605
    %v607 = vpop.f32.mrb[0].mxu0
    %v608 = vpop.f32.mrb[0].mxu0
    %v609 = vadd.f32 %v521, %v608
    %v610 = vpop.f32.mrb[0].mxu0
    %611 = vmatprep.mubr.bf16.mxu0 0
    %612 = vmatmul.mubr.bf16.gmra.mrb[0].mxu0 %v536
    %v613 = vpop.f32.mrb[0].mxu0
    %v614 = vadd.f32 %v521, %v613
    %v615 = vpop.f32.mrb[0].mxu0
    %v616 = vpop.f32.mrb[0].mxu0
    %v617 = vadd.f32 %v521, %v616
    %v618 = vpop.f32.mrb[0].mxu0
    %619 = vmatprep.mubr.bf16.mxu0 0
    %620 = vmatmul.mubr.bf16.gmra.mrb[0].mxu0 %v539
    %v621 = vpop.f32.mrb[0].mxu0
    %v622 = vadd.f32 %v521, %v621
    %v623 = vpop.f32.mrb[0].mxu0
    %v624 = vpop.f32.mrb[0].mxu0
    %v625 = vadd.f32 %v521, %v624
    %v626 = vpop.f32.mrb[0].mxu0
    %627 = vmatprep.mubr.bf16.mxu0 0
    %628 = vmatmul.mubr.bf16.gmra.mrb[0].mxu0 %v542
    %v629 = vpop.f32.mrb[0].mxu0
    %v630 = vadd.f32 %v521, %v629
    %v631 = vpop.f32.mrb[0].mxu0
    %v632 = vpop.f32.mrb[0].mxu0
    %v633 = vadd.f32 %v521, %v632
    %v634 = vpop.f32.mrb[0].mxu0
    %635 = vmatprep.mubr.bf16.mxu0 0
    %636 = vmatmul.mubr.bf16.gmra.mrb[0].mxu0 %v545
    %v637 = vpop.f32.mrb[0].mxu0
    %v638 = vadd.f32 %v521, %v637
    %v639 = vpop.f32.mrb[0].mxu0
    %v640 = vpop.f32.mrb[0].mxu0
    %v641 = vadd.f32 %v521, %v640
    %v642 = vpop.f32.mrb[0].mxu0
    %643 = vdwg.mxu0
    %v644 = vpack.c.bf16 %v585, %v582
    %v645 = vpack.c.bf16 %v593, %v590
    %v646 = vpack.c.bf16 %v601, %v598
    %v647 = vpack.c.bf16 %v609, %v606
    %v648 = vpack.c.bf16 %v617, %v614
    %v649 = vpack.c.bf16 %v625, %v622
    %v650 = vpack.c.bf16 %v633, %v630
    %v651 = vpack.c.bf16 %v641, %v638
    %652 = vmatprep.subr.bf16.mxu0 0
    %653 = vmatpush1.bf16.msra.mxu0 %v644
    %654 = vmatprep.subr.bf16.mxu0 0
    %655 = vmatpush1.bf16.msra.mxu0 %v645
    %656 = vmatprep.subr.bf16.mxu0 0
    %657 = vmatpush1.bf16.msra.mxu0 %v646
    %658 = vmatprep.subr.bf16.mxu0 0
    %659 = vmatpush1.bf16.msra.mxu0 %v647
    %660 = vmatprep.subr.bf16.mxu0 0
    %661 = vmatpush1.bf16.msra.mxu0 %v648
    %662 = vmatprep.subr.bf16.mxu0 0
    %663 = vmatpush1.bf16.msra.mxu0 %v649
    %664 = vmatprep.subr.bf16.mxu0 0
    %665 = vmatpush1.bf16.msra.mxu0 %v650
    %666 = vmatprep.subr.bf16.mxu0 0
    %667 = vmatpush1.bf16.msra.mxu0 %v651
    %668 = vmatprep.subr.bf16.mxu0 0
    %669 = vmatpush1.bf16.msra.mxu0 0
    %670 = vmatprep.subr.bf16.mxu0 0
    %671 = vmatpush1.bf16.msra.mxu0 0
    %672 = vmatprep.subr.bf16.mxu0 0
    %673 = vmatpush1.bf16.msra.mxu0 0
    %674 = vmatprep.subr.bf16.mxu0 0
    %675 = vmatpush1.bf16.msra.mxu0 0
    %676 = vmatprep.subr.bf16.mxu0 0
    %677 = vmatpush1.bf16.msra.mxu0 0
    %678 = vmatprep.subr.bf16.mxu0 0
    %679 = vmatpush1.bf16.msra.mxu0 0
    %680 = vmatprep.subr.bf16.mxu0 0
    %681 = vmatpush1.bf16.msra.mxu0 0
    %682 = vmatprep.subr.bf16.mxu0 0
    %683 = vmatpush1.bf16.msra.mxu0 0
    %684 = vmatprep.mubr.bf16.mxu0 0
    %685 = vmatmul.mubr.bf16.gmra.mrb[0].mxu0 %v267
    %v686 = vpop.f32.mrb[0].mxu0
    %v687 = vadd.f32 0.0, %v686
    %v688 = vpop.f32.mrb[0].mxu0
    %v689 = vpop.f32.mrb[0].mxu0
    %v690 = vadd.f32 0.0, %v689
    %v691 = vpop.f32.mrb[0].mxu0
    %692 = vdwg.mxu0
    %v693 = vld [vmem:[%s6] sm:$0xff]
    %v694 = vld [vmem:[%s6 + $0x8] sm:$0xff]
    %v695 = vld [vmem:[%s6 + $0x10] sm:$0xff]
    %v696 = vld [vmem:[%s6 + $0x18] sm:$0xff]
    %v697 = vld [vmem:[%s6 + $0x20] sm:$0xff]
    %v698 = vld [vmem:[%s6 + $0x28] sm:$0xff]
    %v699 = vld [vmem:[%s6 + $0x30] sm:$0xff]
    %v700 = vld [vmem:[%s6 + $0x38] sm:$0xff]
    %v701 = vpack.c.bf16 %v690, %v687
    %v702 = vpack.c.bf16 %v694, %v693
    %v703 = vpack.c.bf16 %v696, %v695
    %v704 = vpack.c.bf16 %v698, %v697
    %v705 = vpack.c.bf16 %v700, %v699
    %v707 = vsel %vm121, %v701, 0
    %709 = vmatprep.subr.bf16.mxu0 0
    %710 = vmatpush1.bf16.msra.mxu0 %v702
    %711 = vmatprep.subr.bf16.mxu0 0
    %712 = vmatpush1.bf16.msra.mxu0 %v703
    %713 = vmatprep.subr.bf16.mxu0 0
    %714 = vmatpush1.bf16.msra.mxu0 %v704
    %715 = vmatprep.subr.bf16.mxu0 0
    %716 = vmatpush1.bf16.msra.mxu0 %v705
    %717 = vmatprep.subr.bf16.mxu0 0
    %718 = vmatpush1.bf16.msra.mxu0 0
    %719 = vmatprep.subr.bf16.mxu0 0
    %720 = vmatpush1.bf16.msra.mxu0 0
    %721 = vmatprep.subr.bf16.mxu0 0
    %722 = vmatpush1.bf16.msra.mxu0 0
    %723 = vmatprep.subr.bf16.mxu0 0
    %724 = vmatpush1.bf16.msra.mxu0 0
    %725 = vmatprep.subr.bf16.mxu0 0
    %726 = vmatpush1.bf16.msra.mxu0 0
    %727 = vmatprep.subr.bf16.mxu0 0
    %728 = vmatpush1.bf16.msra.mxu0 0
    %729 = vmatprep.subr.bf16.mxu0 0
    %730 = vmatpush1.bf16.msra.mxu0 0
    %731 = vmatprep.subr.bf16.mxu0 0
    %732 = vmatpush1.bf16.msra.mxu0 0
    %733 = vmatprep.subr.bf16.mxu0 0
    %734 = vmatpush1.bf16.msra.mxu0 0
    %735 = vmatprep.subr.bf16.mxu0 0
    %736 = vmatpush1.bf16.msra.mxu0 0
    %737 = vmatprep.subr.bf16.mxu0 0
    %738 = vmatpush1.bf16.msra.mxu0 0
    %739 = vmatprep.subr.bf16.mxu0 0
    %740 = vmatpush1.bf16.msra.mxu0 0
    %741 = vmatprep.mubr.bf16.mxu0 0
    %742 = vmatmul.mubr.bf16.gmra.mrb[0].mxu0 %v707
    %v743 = vpop.f32.mrb[0].mxu0
    %v744 = vadd.f32 0.0, %v743
    %v745 = vpop.f32.mrb[0].mxu0
    %v746 = vpop.f32.mrb[0].mxu0
    %v747 = vadd.f32 0.0, %v746
    %v748 = vpop.f32.mrb[0].mxu0
    %749 = vdwg.mxu0
    %v750 = vpack.c.bf16 %v747, %v744
    %751 = vmatprep.subr.bf16.mxu0 0
    %752 = vmatpush1.bf16.msra.mxu0 %v750
    %753 = vmatprep.subr.bf16.mxu0 0
    %754 = vmatpush1.bf16.msra.mxu0 0
    %755 = vmatprep.subr.bf16.mxu0 0
    %756 = vmatpush1.bf16.msra.mxu0 0
    %757 = vmatprep.subr.bf16.mxu0 0
    %758 = vmatpush1.bf16.msra.mxu0 0
    %759 = vmatprep.subr.bf16.mxu0 0
    %760 = vmatpush1.bf16.msra.mxu0 0
    %761 = vmatprep.subr.bf16.mxu0 0
    %762 = vmatpush1.bf16.msra.mxu0 0
    %763 = vmatprep.subr.bf16.mxu0 0
    %764 = vmatpush1.bf16.msra.mxu0 0
    %765 = vmatprep.subr.bf16.mxu0 0
    %766 = vmatpush1.bf16.msra.mxu0 0
    %767 = vmatprep.subr.bf16.mxu0 0
    %768 = vmatpush1.bf16.msra.mxu0 0
    %769 = vmatprep.subr.bf16.mxu0 0
    %770 = vmatpush1.bf16.msra.mxu0 0
    %771 = vmatprep.subr.bf16.mxu0 0
    %772 = vmatpush1.bf16.msra.mxu0 0
    %773 = vmatprep.subr.bf16.mxu0 0
    %774 = vmatpush1.bf16.msra.mxu0 0
    %775 = vmatprep.subr.bf16.mxu0 0
    %776 = vmatpush1.bf16.msra.mxu0 0
    %777 = vmatprep.subr.bf16.mxu0 0
    %778 = vmatpush1.bf16.msra.mxu0 0
    %779 = vmatprep.subr.bf16.mxu0 0
    %780 = vmatpush1.bf16.msra.mxu0 0
    %781 = vmatprep.subr.bf16.mxu0 0
    %782 = vmatpush1.bf16.msra.mxu0 0
    %783 = vmatprep.mubr.bf16.mxu0 0
    %784 = vmatmul.mubr.bf16.gmra.mrb[0].mxu0 %v376
    %v785 = vpop.f32.mrb[0].mxu0
    %v786 = vadd.f32 0.0, %v785
    %v787 = vpop.f32.mrb[0].mxu0
    %v788 = vpop.f32.mrb[0].mxu0
    %v789 = vadd.f32 0.0, %v788
    %v790 = vpop.f32.mrb[0].mxu0
    %791 = vmatprep.mubr.bf16.mxu0 0
    %792 = vmatmul.mubr.bf16.gmra.mrb[0].mxu0 %v379
    %v793 = vpop.f32.mrb[0].mxu0
    %v794 = vadd.f32 0.0, %v793
    %v795 = vpop.f32.mrb[0].mxu0
    %v796 = vpop.f32.mrb[0].mxu0
    %v797 = vadd.f32 0.0, %v796
    %v798 = vpop.f32.mrb[0].mxu0
    %799 = vmatprep.mubr.bf16.mxu0 0
    %800 = vmatmul.mubr.bf16.gmra.mrb[0].mxu0 %v382
    %v801 = vpop.f32.mrb[0].mxu0
    %v802 = vadd.f32 0.0, %v801
    %v803 = vpop.f32.mrb[0].mxu0
    %v804 = vpop.f32.mrb[0].mxu0
    %v805 = vadd.f32 0.0, %v804
    %v806 = vpop.f32.mrb[0].mxu0
    %807 = vmatprep.mubr.bf16.mxu0 0
    %808 = vmatmul.mubr.bf16.gmra.mrb[0].mxu0 %v385
    %v809 = vpop.f32.mrb[0].mxu0
    %v810 = vadd.f32 0.0, %v809
    %v811 = vpop.f32.mrb[0].mxu0
    %v812 = vpop.f32.mrb[0].mxu0
    %v813 = vadd.f32 0.0, %v812
    %v814 = vpop.f32.mrb[0].mxu0
    %815 = vmatprep.mubr.bf16.mxu0 0
    %816 = vmatmul.mubr.bf16.gmra.mrb[0].mxu0 %v388
    %v817 = vpop.f32.mrb[0].mxu0
    %v818 = vadd.f32 0.0, %v817
    %v819 = vpop.f32.mrb[0].mxu0
    %v820 = vpop.f32.mrb[0].mxu0
    %v821 = vadd.f32 0.0, %v820
    %v822 = vpop.f32.mrb[0].mxu0
    %823 = vmatprep.mubr.bf16.mxu0 0
    %824 = vmatmul.mubr.bf16.gmra.mrb[0].mxu0 %v391
    %v825 = vpop.f32.mrb[0].mxu0
    %v826 = vadd.f32 0.0, %v825
    %v827 = vpop.f32.mrb[0].mxu0
    %v828 = vpop.f32.mrb[0].mxu0
    %v829 = vadd.f32 0.0, %v828
    %v830 = vpop.f32.mrb[0].mxu0
    %831 = vmatprep.mubr.bf16.mxu0 0
    %832 = vmatmul.mubr.bf16.gmra.mrb[0].mxu0 %v394
    %v833 = vpop.f32.mrb[0].mxu0
    %v834 = vadd.f32 0.0, %v833
    %v835 = vpop.f32.mrb[0].mxu0
    %v836 = vpop.f32.mrb[0].mxu0
    %v837 = vadd.f32 0.0, %v836
    %v838 = vpop.f32.mrb[0].mxu0
    %839 = vmatprep.mubr.bf16.mxu0 0
    %840 = vmatmul.mubr.bf16.gmra.mrb[0].mxu0 %v397
    %v841 = vpop.f32.mrb[0].mxu0
    %v842 = vadd.f32 0.0, %v841
    %v843 = vpop.f32.mrb[0].mxu0
    %v844 = vpop.f32.mrb[0].mxu0
    %v845 = vadd.f32 0.0, %v844
    %v846 = vpop.f32.mrb[0].mxu0
    %847 = vdwg.mxu0
    %v848 = vsel %vm121, %v786, -inf
    %849 = vmax.xlane.f32.xlu0 %v848
    %v850 = vpop.xlane.xlu0 %849
    %v851 = vsel %vm121, %v789, -inf
    %852 = vmax.xlane.f32.xlu0 %v851
    %v853 = vpop.xlane.xlu0 %852
    %v854 = vsel %vm121, %v794, -inf
    %855 = vmax.xlane.f32.xlu0 %v854
    %v856 = vpop.xlane.xlu0 %855
    %v857 = vsel %vm121, %v797, -inf
    %858 = vmax.xlane.f32.xlu0 %v857
    %v859 = vpop.xlane.xlu0 %858
    %v860 = vsel %vm121, %v802, -inf
    %861 = vmax.xlane.f32.xlu0 %v860
    %v862 = vpop.xlane.xlu0 %861
    %v863 = vsel %vm121, %v805, -inf
    %864 = vmax.xlane.f32.xlu0 %v863
    %v865 = vpop.xlane.xlu0 %864
    %v866 = vsel %vm121, %v810, -inf
    %867 = vmax.xlane.f32.xlu0 %v866
    %v868 = vpop.xlane.xlu0 %867
    %v869 = vsel %vm121, %v813, -inf
    %870 = vmax.xlane.f32.xlu0 %v869
    %v871 = vpop.xlane.xlu0 %870
    %v872 = vsel %vm121, %v818, -inf
    %873 = vmax.xlane.f32.xlu0 %v872
    %v874 = vpop.xlane.xlu0 %873
    %v875 = vsel %vm121, %v821, -inf
    %876 = vmax.xlane.f32.xlu0 %v875
    %v877 = vpop.xlane.xlu0 %876
    %v878 = vsel %vm121, %v826, -inf
    %879 = vmax.xlane.f32.xlu0 %v878
    %v880 = vpop.xlane.xlu0 %879
    %v881 = vsel %vm121, %v829, -inf
    %882 = vmax.xlane.f32.xlu0 %v881
    %v883 = vpop.xlane.xlu0 %882
    %v884 = vsel %vm121, %v834, -inf
    %885 = vmax.xlane.f32.xlu0 %v884
    %v886 = vpop.xlane.xlu0 %885
    %v887 = vsel %vm121, %v837, -inf
    %888 = vmax.xlane.f32.xlu0 %v887
    %v889 = vpop.xlane.xlu0 %888
    %v890 = vsel %vm121, %v842, -inf
    %891 = vmax.xlane.f32.xlu0 %v890
    %v892 = vpop.xlane.xlu0 %891
    %v893 = vsel %vm121, %v845, -inf
    %894 = vmax.xlane.f32.xlu0 %v893
    %v895 = vpop.xlane.xlu0 %894
    %v896 = vsub.f32 %v786, %v850
    %v897 = vsub.f32 %v789, %v853
    %v898 = vsub.f32 %v794, %v856
    %v899 = vsub.f32 %v797, %v859
    %v900 = vsub.f32 %v802, %v862
    %v901 = vsub.f32 %v805, %v865
    %v902 = vsub.f32 %v810, %v868
    %v903 = vsub.f32 %v813, %v871
    %v904 = vsub.f32 %v818, %v874
    %v905 = vsub.f32 %v821, %v877
    %v906 = vsub.f32 %v826, %v880
    %v907 = vsub.f32 %v829, %v883
    %v908 = vsub.f32 %v834, %v886
    %v909 = vsub.f32 %v837, %v889
    %v910 = vsub.f32 %v842, %v892
    %v911 = vsub.f32 %v845, %v895
    %v912 = vmul.f32 %v896, 1.442695
    %v913 = vpow.pop %v912
    %v914 = vmul.f32 %v897, 1.442695
    %v915 = vpow.pop %v914
    %v916 = vmul.f32 %v898, 1.442695
    %v917 = vpow.pop %v916
    %v918 = vmul.f32 %v899, 1.442695
    %v919 = vpow.pop %v918
    %v920 = vmul.f32 %v900, 1.442695
    %v921 = vpow.pop %v920
    %v922 = vmul.f32 %v901, 1.442695
    %v923 = vpow.pop %v922
    %v924 = vmul.f32 %v902, 1.442695
    %v925 = vpow.pop %v924
    %v926 = vmul.f32 %v903, 1.442695
    %v927 = vpow.pop %v926
    %v928 = vmul.f32 %v904, 1.442695
    %v929 = vpow.pop %v928
    %v930 = vmul.f32 %v905, 1.442695
    %v931 = vpow.pop %v930
    %v932 = vmul.f32 %v906, 1.442695
    %v933 = vpow.pop %v932
    %v934 = vmul.f32 %v907, 1.442695
    %v935 = vpow.pop %v934
    %v936 = vmul.f32 %v908, 1.442695
    %v937 = vpow.pop %v936
    %v938 = vmul.f32 %v909, 1.442695
    %v939 = vpow.pop %v938
    %v940 = vmul.f32 %v910, 1.442695
    %v941 = vpow.pop %v940
    %v942 = vmul.f32 %v911, 1.442695
    %v943 = vpow.pop %v942
    %v944 = vsel %vm121, %v913, 0.0
    %945 = vadd.xlane.f32.xlu0 %v944
    %v946 = vpop.xlane.xlu0 %945
    %v947 = vsel %vm121, %v915, 0.0
    %948 = vadd.xlane.f32.xlu0 %v947
    %v949 = vpop.xlane.xlu0 %948
    %v950 = vsel %vm121, %v917, 0.0
    %951 = vadd.xlane.f32.xlu0 %v950
    %v952 = vpop.xlane.xlu0 %951
    %v953 = vsel %vm121, %v919, 0.0
    %954 = vadd.xlane.f32.xlu0 %v953
    %v955 = vpop.xlane.xlu0 %954
    %v956 = vsel %vm121, %v921, 0.0
    %957 = vadd.xlane.f32.xlu0 %v956
    %v958 = vpop.xlane.xlu0 %957
    %v959 = vsel %vm121, %v923, 0.0
    %960 = vadd.xlane.f32.xlu0 %v959
    %v961 = vpop.xlane.xlu0 %960
    %v962 = vsel %vm121, %v925, 0.0
    %963 = vadd.xlane.f32.xlu0 %v962
    %v964 = vpop.xlane.xlu0 %963
    %v965 = vsel %vm121, %v927, 0.0
    %966 = vadd.xlane.f32.xlu0 %v965
    %v967 = vpop.xlane.xlu0 %966
    %v968 = vsel %vm121, %v929, 0.0
    %969 = vadd.xlane.f32.xlu0 %v968
    %v970 = vpop.xlane.xlu0 %969
    %v971 = vsel %vm121, %v931, 0.0
    %972 = vadd.xlane.f32.xlu0 %v971
    %v973 = vpop.xlane.xlu0 %972
    %v974 = vsel %vm121, %v933, 0.0
    %975 = vadd.xlane.f32.xlu0 %v974
    %v976 = vpop.xlane.xlu0 %975
    %v977 = vsel %vm121, %v935, 0.0
    %978 = vadd.xlane.f32.xlu0 %v977
    %v979 = vpop.xlane.xlu0 %978
    %v980 = vsel %vm121, %v937, 0.0
    %981 = vadd.xlane.f32.xlu0 %v980
    %v982 = vpop.xlane.xlu0 %981
    %v983 = vsel %vm121, %v939, 0.0
    %984 = vadd.xlane.f32.xlu0 %v983
    %v985 = vpop.xlane.xlu0 %984
    %v986 = vsel %vm121, %v941, 0.0
    %987 = vadd.xlane.f32.xlu0 %v986
    %v988 = vpop.xlane.xlu0 %987
    %v989 = vsel %vm121, %v943, 0.0
    %990 = vadd.xlane.f32.xlu0 %v989
    %v991 = vpop.xlane.xlu0 %990
    %v992 = vrcp.pop %v946
    %v993 = vmul.f32 %v913, %v992
    %v994 = vrcp.pop %v949
    %v995 = vmul.f32 %v915, %v994
    %v996 = vrcp.pop %v952
    %v997 = vmul.f32 %v917, %v996
    %v998 = vrcp.pop %v955
    %v999 = vmul.f32 %v919, %v998
    %v1000 = vrcp.pop %v958
    %v1001 = vmul.f32 %v921, %v1000
    %v1002 = vrcp.pop %v961
    %v1003 = vmul.f32 %v923, %v1002
    %v1004 = vrcp.pop %v964
    %v1005 = vmul.f32 %v925, %v1004
    %v1006 = vrcp.pop %v967
    %v1007 = vmul.f32 %v927, %v1006
    %v1008 = vrcp.pop %v970
    %v1009 = vmul.f32 %v929, %v1008
    %v1010 = vrcp.pop %v973
    %v1011 = vmul.f32 %v931, %v1010
    %v1012 = vrcp.pop %v976
    %v1013 = vmul.f32 %v933, %v1012
    %v1014 = vrcp.pop %v979
    %v1015 = vmul.f32 %v935, %v1014
    %v1016 = vrcp.pop %v982
    %v1017 = vmul.f32 %v937, %v1016
    %v1018 = vrcp.pop %v985
    %v1019 = vmul.f32 %v939, %v1018
    %v1020 = vrcp.pop %v988
    %v1021 = vmul.f32 %v941, %v1020
    %v1022 = vrcp.pop %v991
    %v1023 = vmul.f32 %v943, %v1022
    %v1024 = vld [vmem:[%s8] sm:$0xff]
    %v1025 = vld [vmem:[%s8 + $0x8] sm:$0xff]
    %v1026 = vld [vmem:[%s8 + $0x10] sm:$0xff]
    %v1027 = vld [vmem:[%s8 + $0x18] sm:$0xff]
    %v1028 = vld [vmem:[%s8 + $0x20] sm:$0xff]
    %v1029 = vld [vmem:[%s8 + $0x28] sm:$0xff]
    %v1030 = vld [vmem:[%s8 + $0x30] sm:$0xff]
    %v1031 = vld [vmem:[%s8 + $0x38] sm:$0xff]
    %v1032 = vpack.c.bf16 %v995, %v993
    %v1033 = vpack.c.bf16 %v999, %v997
    %v1034 = vpack.c.bf16 %v1003, %v1001
    %v1035 = vpack.c.bf16 %v1007, %v1005
    %v1036 = vpack.c.bf16 %v1011, %v1009
    %v1037 = vpack.c.bf16 %v1015, %v1013
    %v1038 = vpack.c.bf16 %v1019, %v1017
    %v1039 = vpack.c.bf16 %v1023, %v1021
    %v1040 = vpack.c.bf16 %v1025, %v1024
    %v1041 = vpack.c.bf16 %v1027, %v1026
    %v1042 = vpack.c.bf16 %v1029, %v1028
    %v1043 = vpack.c.bf16 %v1031, %v1030
    %v1044 = vld [vmem:[%s10] sm:$0x1]
    %v1046 = vlaneseq
    %v1047 = vshrl.u32 %v1046, 7
    %v1048 = vsub.s32 0, %v1047
    %v1049 = vrot.slane %v1044, %v1048
    %v1052 = vsel %vm121, %v1032, 0
    %v1055 = vsel %vm121, %v1033, 0
    %v1058 = vsel %vm121, %v1034, 0
    %v1061 = vsel %vm121, %v1035, 0
    %v1064 = vsel %vm121, %v1036, 0
    %v1067 = vsel %vm121, %v1037, 0
    %v1070 = vsel %vm121, %v1038, 0
    %v1073 = vsel %vm121, %v1039, 0
    %1075 = vmatprep.subr.bf16.mxu0 0
    %1076 = vmatpush1.bf16.msra.mxu0 %v1040
    %1077 = vmatprep.subr.bf16.mxu0 0
    %1078 = vmatpush1.bf16.msra.mxu0 %v1041
    %1079 = vmatprep.subr.bf16.mxu0 0
    %1080 = vmatpush1.bf16.msra.mxu0 %v1042
    %1081 = vmatprep.subr.bf16.mxu0 0
    %1082 = vmatpush1.bf16.msra.mxu0 %v1043
    %1083 = vmatprep.subr.bf16.mxu0 0
    %1084 = vmatpush1.bf16.msra.mxu0 0
    %1085 = vmatprep.subr.bf16.mxu0 0
    %1086 = vmatpush1.bf16.msra.mxu0 0
    %1087 = vmatprep.subr.bf16.mxu0 0
    %1088 = vmatpush1.bf16.msra.mxu0 0
    %1089 = vmatprep.subr.bf16.mxu0 0
    %1090 = vmatpush1.bf16.msra.mxu0 0
    %1091 = vmatprep.subr.bf16.mxu0 0
    %1092 = vmatpush1.bf16.msra.mxu0 0
    %1093 = vmatprep.subr.bf16.mxu0 0
    %1094 = vmatpush1.bf16.msra.mxu0 0
    %1095 = vmatprep.subr.bf16.mxu0 0
    %1096 = vmatpush1.bf16.msra.mxu0 0
    %1097 = vmatprep.subr.bf16.mxu0 0
    %1098 = vmatpush1.bf16.msra.mxu0 0
    %1099 = vmatprep.subr.bf16.mxu0 0
    %1100 = vmatpush1.bf16.msra.mxu0 0
    %1101 = vmatprep.subr.bf16.mxu0 0
    %1102 = vmatpush1.bf16.msra.mxu0 0
    %1103 = vmatprep.subr.bf16.mxu0 0
    %1104 = vmatpush1.bf16.msra.mxu0 0
    %1105 = vmatprep.subr.bf16.mxu0 0
    %1106 = vmatpush1.bf16.msra.mxu0 0
    %1107 = vmatprep.mubr.bf16.mxu0 0
    %1108 = vmatmul.mubr.bf16.gmra.mrb[0].mxu0 %v1052
    %v1109 = vpop.f32.mrb[0].mxu0
    %v1110 = vadd.f32 %v1049, %v1109
    %v1111 = vpop.f32.mrb[0].mxu0
    %v1112 = vpop.f32.mrb[0].mxu0
    %v1113 = vadd.f32 %v1049, %v1112
    %v1114 = vpop.f32.mrb[0].mxu0
    %1115 = vmatprep.mubr.bf16.mxu0 0
    %1116 = vmatmul.mubr.bf16.gmra.mrb[0].mxu0 %v1055
    %v1117 = vpop.f32.mrb[0].mxu0
    %v1118 = vadd.f32 %v1049, %v1117
    %v1119 = vpop.f32.mrb[0].mxu0
    %v1120 = vpop.f32.mrb[0].mxu0
    %v1121 = vadd.f32 %v1049, %v1120
    %v1122 = vpop.f32.mrb[0].mxu0
    %1123 = vmatprep.mubr.bf16.mxu0 0
    %1124 = vmatmul.mubr.bf16.gmra.mrb[0].mxu0 %v1058
    %v1125 = vpop.f32.mrb[0].mxu0
    %v1126 = vadd.f32 %v1049, %v1125
    %v1127 = vpop.f32.mrb[0].mxu0
    %v1128 = vpop.f32.mrb[0].mxu0
    %v1129 = vadd.f32 %v1049, %v1128
    %v1130 = vpop.f32.mrb[0].mxu0
    %1131 = vmatprep.mubr.bf16.mxu0 0
    %1132 = vmatmul.mubr.bf16.gmra.mrb[0].mxu0 %v1061
    %v1133 = vpop.f32.mrb[0].mxu0
    %v1134 = vadd.f32 %v1049, %v1133
    %v1135 = vpop.f32.mrb[0].mxu0
    %v1136 = vpop.f32.mrb[0].mxu0
    %v1137 = vadd.f32 %v1049, %v1136
    %v1138 = vpop.f32.mrb[0].mxu0
    %1139 = vmatprep.mubr.bf16.mxu0 0
    %1140 = vmatmul.mubr.bf16.gmra.mrb[0].mxu0 %v1064
    %v1141 = vpop.f32.mrb[0].mxu0
    %v1142 = vadd.f32 %v1049, %v1141
    %v1143 = vpop.f32.mrb[0].mxu0
    %v1144 = vpop.f32.mrb[0].mxu0
    %v1145 = vadd.f32 %v1049, %v1144
    %v1146 = vpop.f32.mrb[0].mxu0
    %1147 = vmatprep.mubr.bf16.mxu0 0
    %1148 = vmatmul.mubr.bf16.gmra.mrb[0].mxu0 %v1067
    %v1149 = vpop.f32.mrb[0].mxu0
    %v1150 = vadd.f32 %v1049, %v1149
    %v1151 = vpop.f32.mrb[0].mxu0
    %v1152 = vpop.f32.mrb[0].mxu0
    %v1153 = vadd.f32 %v1049, %v1152
    %v1154 = vpop.f32.mrb[0].mxu0
    %1155 = vmatprep.mubr.bf16.mxu0 0
    %1156 = vmatmul.mubr.bf16.gmra.mrb[0].mxu0 %v1070
    %v1157 = vpop.f32.mrb[0].mxu0
    %v1158 = vadd.f32 %v1049, %v1157
    %v1159 = vpop.f32.mrb[0].mxu0
    %v1160 = vpop.f32.mrb[0].mxu0
    %v1161 = vadd.f32 %v1049, %v1160
    %v1162 = vpop.f32.mrb[0].mxu0
    %1163 = vmatprep.mubr.bf16.mxu0 0
    %1164 = vmatmul.mubr.bf16.gmra.mrb[0].mxu0 %v1073
    %v1165 = vpop.f32.mrb[0].mxu0
    %v1166 = vadd.f32 %v1049, %v1165
    %v1167 = vpop.f32.mrb[0].mxu0
    %v1168 = vpop.f32.mrb[0].mxu0
    %v1169 = vadd.f32 %v1049, %v1168
    %v1170 = vpop.f32.mrb[0].mxu0
    %1171 = vdwg.mxu0
    %v1172 = vpack.c.bf16 %v1113, %v1110
    %v1173 = vpack.c.bf16 %v1121, %v1118
    %v1174 = vpack.c.bf16 %v1129, %v1126
    %v1175 = vpack.c.bf16 %v1137, %v1134
    %v1176 = vpack.c.bf16 %v1145, %v1142
    %v1177 = vpack.c.bf16 %v1153, %v1150
    %v1178 = vpack.c.bf16 %v1161, %v1158
    %v1179 = vpack.c.bf16 %v1169, %v1166
    %1180 = vmatprep.subr.bf16.mxu0 0
    %1181 = vmatpush1.bf16.msra.mxu0 %v1172
    %1182 = vmatprep.subr.bf16.mxu0 0
    %1183 = vmatpush1.bf16.msra.mxu0 %v1173
    %1184 = vmatprep.subr.bf16.mxu0 0
    %1185 = vmatpush1.bf16.msra.mxu0 %v1174
    %1186 = vmatprep.subr.bf16.mxu0 0
    %1187 = vmatpush1.bf16.msra.mxu0 %v1175
    %1188 = vmatprep.subr.bf16.mxu0 0
    %1189 = vmatpush1.bf16.msra.mxu0 %v1176
    %1190 = vmatprep.subr.bf16.mxu0 0
    %1191 = vmatpush1.bf16.msra.mxu0 %v1177
    %1192 = vmatprep.subr.bf16.mxu0 0
    %1193 = vmatpush1.bf16.msra.mxu0 %v1178
    %1194 = vmatprep.subr.bf16.mxu0 0
    %1195 = vmatpush1.bf16.msra.mxu0 %v1179
    %1196 = vmatprep.subr.bf16.mxu0 0
    %1197 = vmatpush1.bf16.msra.mxu0 0
    %1198 = vmatprep.subr.bf16.mxu0 0
    %1199 = vmatpush1.bf16.msra.mxu0 0
    %1200 = vmatprep.subr.bf16.mxu0 0
    %1201 = vmatpush1.bf16.msra.mxu0 0
    %1202 = vmatprep.subr.bf16.mxu0 0
    %1203 = vmatpush1.bf16.msra.mxu0 0
    %1204 = vmatprep.subr.bf16.mxu0 0
    %1205 = vmatpush1.bf16.msra.mxu0 0
    %1206 = vmatprep.subr.bf16.mxu0 0
    %1207 = vmatpush1.bf16.msra.mxu0 0
    %1208 = vmatprep.subr.bf16.mxu0 0
    %1209 = vmatpush1.bf16.msra.mxu0 0
    %1210 = vmatprep.subr.bf16.mxu0 0
    %1211 = vmatpush1.bf16.msra.mxu0 0
    %1212 = vmatprep.mubr.bf16.mxu0 0
    %1213 = vmatmul.mubr.bf16.gmra.mrb[0].mxu0 %v267
    %v1214 = vpop.f32.mrb[0].mxu0
    %v1215 = vadd.f32 0.0, %v1214
    %v1216 = vpop.f32.mrb[0].mxu0
    %v1217 = vpop.f32.mrb[0].mxu0
    %v1218 = vadd.f32 0.0, %v1217
    %v1219 = vpop.f32.mrb[0].mxu0
    %1220 = vdwg.mxu0
    %v1221 = vld [vmem:[%s9] sm:$0xff]
    %v1222 = vld [vmem:[%s9 + $0x8] sm:$0xff]
    %v1223 = vld [vmem:[%s9 + $0x10] sm:$0xff]
    %v1224 = vld [vmem:[%s9 + $0x18] sm:$0xff]
    %v1225 = vld [vmem:[%s9 + $0x20] sm:$0xff]
    %v1226 = vld [vmem:[%s9 + $0x28] sm:$0xff]
    %v1227 = vld [vmem:[%s9 + $0x30] sm:$0xff]
    %v1228 = vld [vmem:[%s9 + $0x38] sm:$0xff]
    %v1229 = vpack.c.bf16 %v1218, %v1215
    %v1230 = vpack.c.bf16 %v1222, %v1221
    %v1231 = vpack.c.bf16 %v1224, %v1223
    %v1232 = vpack.c.bf16 %v1226, %v1225
    %v1233 = vpack.c.bf16 %v1228, %v1227
    %v1235 = vsel %vm121, %v1229, 0
    %1237 = vmatprep.subr.bf16.mxu0 0
    %1238 = vmatpush1.bf16.msra.mxu0 %v1230
    %1239 = vmatprep.subr.bf16.mxu0 0
    %1240 = vmatpush1.bf16.msra.mxu0 %v1231
    %1241 = vmatprep.subr.bf16.mxu0 0
    %1242 = vmatpush1.bf16.msra.mxu0 %v1232
    %1243 = vmatprep.subr.bf16.mxu0 0
    %1244 = vmatpush1.bf16.msra.mxu0 %v1233
    %1245 = vmatprep.subr.bf16.mxu0 0
    %1246 = vmatpush1.bf16.msra.mxu0 0
    %1247 = vmatprep.subr.bf16.mxu0 0
    %1248 = vmatpush1.bf16.msra.mxu0 0
    %1249 = vmatprep.subr.bf16.mxu0 0
    %1250 = vmatpush1.bf16.msra.mxu0 0
    %1251 = vmatprep.subr.bf16.mxu0 0
    %1252 = vmatpush1.bf16.msra.mxu0 0
    %1253 = vmatprep.subr.bf16.mxu0 0
    %1254 = vmatpush1.bf16.msra.mxu0 0
    %1255 = vmatprep.subr.bf16.mxu0 0
    %1256 = vmatpush1.bf16.msra.mxu0 0
    %1257 = vmatprep.subr.bf16.mxu0 0
    %1258 = vmatpush1.bf16.msra.mxu0 0
    %1259 = vmatprep.subr.bf16.mxu0 0
    %1260 = vmatpush1.bf16.msra.mxu0 0
    %1261 = vmatprep.subr.bf16.mxu0 0
    %1262 = vmatpush1.bf16.msra.mxu0 0
    %1263 = vmatprep.subr.bf16.mxu0 0
    %1264 = vmatpush1.bf16.msra.mxu0 0
    %1265 = vmatprep.subr.bf16.mxu0 0
    %1266 = vmatpush1.bf16.msra.mxu0 0
    %1267 = vmatprep.subr.bf16.mxu0 0
    %1268 = vmatpush1.bf16.msra.mxu0 0
    %1269 = vmatprep.mubr.bf16.mxu0 0
    %1270 = vmatmul.mubr.bf16.gmra.mrb[0].mxu0 %v1235
    %v1271 = vpop.f32.mrb[0].mxu0
    %v1272 = vadd.f32 0.0, %v1271
    %v1273 = vpop.f32.mrb[0].mxu0
    %v1274 = vpop.f32.mrb[0].mxu0
    %v1275 = vadd.f32 0.0, %v1274
    %v1276 = vpop.f32.mrb[0].mxu0
    %1277 = vdwg.mxu0
    %v1278 = vpack.c.bf16 %v1275, %v1272
    %1279 = vmatprep.subr.bf16.mxu0 0
    %1280 = vmatpush1.bf16.msra.mxu0 %v1278
    %1281 = vmatprep.subr.bf16.mxu0 0
    %1282 = vmatpush1.bf16.msra.mxu0 0
    %1283 = vmatprep.subr.bf16.mxu0 0
    %1284 = vmatpush1.bf16.msra.mxu0 0
    %1285 = vmatprep.subr.bf16.mxu0 0
    %1286 = vmatpush1.bf16.msra.mxu0 0
    %1287 = vmatprep.subr.bf16.mxu0 0
    %1288 = vmatpush1.bf16.msra.mxu0 0
    %1289 = vmatprep.subr.bf16.mxu0 0
    %1290 = vmatpush1.bf16.msra.mxu0 0
    %1291 = vmatprep.subr.bf16.mxu0 0
    %1292 = vmatpush1.bf16.msra.mxu0 0
    %1293 = vmatprep.subr.bf16.mxu0 0
    %1294 = vmatpush1.bf16.msra.mxu0 0
    %1295 = vmatprep.subr.bf16.mxu0 0
    %1296 = vmatpush1.bf16.msra.mxu0 0
    %1297 = vmatprep.subr.bf16.mxu0 0
    %1298 = vmatpush1.bf16.msra.mxu0 0
    %1299 = vmatprep.subr.bf16.mxu0 0
    %1300 = vmatpush1.bf16.msra.mxu0 0
    %1301 = vmatprep.subr.bf16.mxu0 0
    %1302 = vmatpush1.bf16.msra.mxu0 0
    %1303 = vmatprep.subr.bf16.mxu0 0
    %1304 = vmatpush1.bf16.msra.mxu0 0
    %1305 = vmatprep.subr.bf16.mxu0 0
    %1306 = vmatpush1.bf16.msra.mxu0 0
    %1307 = vmatprep.subr.bf16.mxu0 0
    %1308 = vmatpush1.bf16.msra.mxu0 0
    %1309 = vmatprep.subr.bf16.mxu0 0
    %1310 = vmatpush1.bf16.msra.mxu0 0
    %1311 = vmatprep.mubr.bf16.mxu0 0
    %1312 = vmatmul.mubr.bf16.gmra.mrb[0].mxu0 %v376
    %v1313 = vpop.f32.mrb[0].mxu0
    %v1314 = vadd.f32 0.0, %v1313
    %v1315 = vpop.f32.mrb[0].mxu0
    %v1316 = vpop.f32.mrb[0].mxu0
    %v1317 = vadd.f32 0.0, %v1316
    %v1318 = vpop.f32.mrb[0].mxu0
    %1319 = vmatprep.mubr.bf16.mxu0 0
    %1320 = vmatmul.mubr.bf16.gmra.mrb[0].mxu0 %v379
    %v1321 = vpop.f32.mrb[0].mxu0
    %v1322 = vadd.f32 0.0, %v1321
    %v1323 = vpop.f32.mrb[0].mxu0
    %v1324 = vpop.f32.mrb[0].mxu0
    %v1325 = vadd.f32 0.0, %v1324
    %v1326 = vpop.f32.mrb[0].mxu0
    %1327 = vmatprep.mubr.bf16.mxu0 0
    %1328 = vmatmul.mubr.bf16.gmra.mrb[0].mxu0 %v382
    %v1329 = vpop.f32.mrb[0].mxu0
    %v1330 = vadd.f32 0.0, %v1329
    %v1331 = vpop.f32.mrb[0].mxu0
    %v1332 = vpop.f32.mrb[0].mxu0
    %v1333 = vadd.f32 0.0, %v1332
    %v1334 = vpop.f32.mrb[0].mxu0
    %1335 = vmatprep.mubr.bf16.mxu0 0
    %1336 = vmatmul.mubr.bf16.gmra.mrb[0].mxu0 %v385
    %v1337 = vpop.f32.mrb[0].mxu0
    %v1338 = vadd.f32 0.0, %v1337
    %v1339 = vpop.f32.mrb[0].mxu0
    %v1340 = vpop.f32.mrb[0].mxu0
    %v1341 = vadd.f32 0.0, %v1340
    %v1342 = vpop.f32.mrb[0].mxu0
    %1343 = vmatprep.mubr.bf16.mxu0 0
    %1344 = vmatmul.mubr.bf16.gmra.mrb[0].mxu0 %v388
    %v1345 = vpop.f32.mrb[0].mxu0
    %v1346 = vadd.f32 0.0, %v1345
    %v1347 = vpop.f32.mrb[0].mxu0
    %v1348 = vpop.f32.mrb[0].mxu0
    %v1349 = vadd.f32 0.0, %v1348
    %v1350 = vpop.f32.mrb[0].mxu0
    %1351 = vmatprep.mubr.bf16.mxu0 0
    %1352 = vmatmul.mubr.bf16.gmra.mrb[0].mxu0 %v391
    %v1353 = vpop.f32.mrb[0].mxu0
    %v1354 = vadd.f32 0.0, %v1353
    %v1355 = vpop.f32.mrb[0].mxu0
    %v1356 = vpop.f32.mrb[0].mxu0
    %v1357 = vadd.f32 0.0, %v1356
    %v1358 = vpop.f32.mrb[0].mxu0
    %1359 = vmatprep.mubr.bf16.mxu0 0
    %1360 = vmatmul.mubr.bf16.gmra.mrb[0].mxu0 %v394
    %v1361 = vpop.f32.mrb[0].mxu0
    %v1362 = vadd.f32 0.0, %v1361
    %v1363 = vpop.f32.mrb[0].mxu0
    %v1364 = vpop.f32.mrb[0].mxu0
    %v1365 = vadd.f32 0.0, %v1364
    %v1366 = vpop.f32.mrb[0].mxu0
    %1367 = vmatprep.mubr.bf16.mxu0 0
    %1368 = vmatmul.mubr.bf16.gmra.mrb[0].mxu0 %v397
    %v1369 = vpop.f32.mrb[0].mxu0
    %v1370 = vadd.f32 0.0, %v1369
    %v1371 = vpop.f32.mrb[0].mxu0
    %v1372 = vpop.f32.mrb[0].mxu0
    %v1373 = vadd.f32 0.0, %v1372
    %v1374 = vpop.f32.mrb[0].mxu0
    %1375 = vdwg.mxu0
    %v1376 = vtanh.pop %v1314
    %v1377 = vtanh.pop %v1317
    %v1378 = vtanh.pop %v1322
    %v1379 = vtanh.pop %v1325
    %v1380 = vtanh.pop %v1330
    %v1381 = vtanh.pop %v1333
    %v1382 = vtanh.pop %v1338
    %v1383 = vtanh.pop %v1341
    %v1384 = vtanh.pop %v1346
    %v1385 = vtanh.pop %v1349
    %v1386 = vtanh.pop %v1354
    %v1387 = vtanh.pop %v1357
    %v1388 = vtanh.pop %v1362
    %v1389 = vtanh.pop %v1365
    %v1390 = vtanh.pop %v1370
    %v1391 = vtanh.pop %v1373
    %v1392 = vld [vmem:[%s11] sm:$0x1]
    %v1393 = vmul.f32 %v1392, 0.999995
    %v1395 = vlaneseq
    %v1396 = vshrl.u32 %v1395, 7
    %v1397 = vsub.s32 0, %v1396
    %v1398 = vrot.slane %v1393, %v1397
    %v1400 = vmul.f32 %v1376, %v1398
    %v1401 = vmul.f32 %v1377, %v1398
    %v1402 = vmul.f32 %v1378, %v1398
    %v1403 = vmul.f32 %v1379, %v1398
    %v1404 = vmul.f32 %v1380, %v1398
    %v1405 = vmul.f32 %v1381, %v1398
    %v1406 = vmul.f32 %v1382, %v1398
    %v1407 = vmul.f32 %v1383, %v1398
    %v1408 = vmul.f32 %v1384, %v1398
    %v1409 = vmul.f32 %v1385, %v1398
    %v1410 = vmul.f32 %v1386, %v1398
    %v1411 = vmul.f32 %v1387, %v1398
    %v1412 = vmul.f32 %v1388, %v1398
    %v1413 = vmul.f32 %v1389, %v1398
    %v1414 = vmul.f32 %v1390, %v1398
    %v1415 = vmul.f32 %v1391, %v1398
    %v1416 = vld [vmem:[%s12] sm:$0x1]
    %v1418 = vlaneseq
    %v1419 = vshrl.u32 %v1418, 7
    %v1420 = vsub.s32 0, %v1419
    %v1421 = vrot.slane %v1416, %v1420
    %v1423 = vadd.f32 %v1400, %v1421
    %v1424 = vadd.f32 %v1401, %v1421
    %v1425 = vadd.f32 %v1402, %v1421
    %v1426 = vadd.f32 %v1403, %v1421
    %v1427 = vadd.f32 %v1404, %v1421
    %v1428 = vadd.f32 %v1405, %v1421
    %v1429 = vadd.f32 %v1406, %v1421
    %v1430 = vadd.f32 %v1407, %v1421
    %v1431 = vadd.f32 %v1408, %v1421
    %v1432 = vadd.f32 %v1409, %v1421
    %v1433 = vadd.f32 %v1410, %v1421
    %v1434 = vadd.f32 %v1411, %v1421
    %v1435 = vadd.f32 %v1412, %v1421
    %v1436 = vadd.f32 %v1413, %v1421
    %v1437 = vadd.f32 %v1414, %v1421
    %v1438 = vadd.f32 %v1415, %v1421
    %v1439 = vmul.f32 %v1272, %v1398
    %v1440 = vmul.f32 %v1275, %v1398
    %v1441 = vadd.f32 %v1439, %v1421
    %v1442 = vadd.f32 %v1440, %v1421
    %1443 = vst.msk [vmem:[#allocation3] sm:$0xff] %vm121, %v1441
    %1444 = vst.msk [vmem:[#allocation3 + $0x8] sm:$0xff] %vm121, %v1442
    %v1445 = vld [vmem:[%s13] sm:$0xff]
    %v1446 = vld [vmem:[%s13 + $0x8] sm:$0xff]
    %v1447 = vld [vmem:[%s13 + $0x10] sm:$0xff]
    %v1448 = vld [vmem:[%s13 + $0x18] sm:$0xff]
    %v1449 = vld [vmem:[%s13 + $0x20] sm:$0xff]
    %v1450 = vld [vmem:[%s13 + $0x28] sm:$0xff]
    %v1451 = vld [vmem:[%s13 + $0x30] sm:$0xff]
    %v1452 = vld [vmem:[%s13 + $0x38] sm:$0xff]
    %v1453 = vpack.c.bf16 %v1446, %v1445
    %v1454 = vpack.c.bf16 %v1448, %v1447
    %v1455 = vpack.c.bf16 %v1450, %v1449
    %v1456 = vpack.c.bf16 %v1452, %v1451
    %v1457 = vld [vmem:[%s14] sm:$0x1]
    %v1459 = vlaneseq
    %v1460 = vshrl.u32 %v1459, 7
    %v1461 = vsub.s32 0, %v1460
    %v1462 = vrot.slane %v1457, %v1461
    %1464 = vmatprep.subr.bf16.mxu0 0
    %1465 = vmatpush1.bf16.msra.mxu0 %v1453
    %1466 = vmatprep.subr.bf16.mxu0 0
    %1467 = vmatpush1.bf16.msra.mxu0 %v1454
    %1468 = vmatprep.subr.bf16.mxu0 0
    %1469 = vmatpush1.bf16.msra.mxu0 %v1455
    %1470 = vmatprep.subr.bf16.mxu0 0
    %1471 = vmatpush1.bf16.msra.mxu0 %v1456
    %1472 = vmatprep.subr.bf16.mxu0 0
    %1473 = vmatpush1.bf16.msra.mxu0 0
    %1474 = vmatprep.subr.bf16.mxu0 0
    %1475 = vmatpush1.bf16.msra.mxu0 0
    %1476 = vmatprep.subr.bf16.mxu0 0
    %1477 = vmatpush1.bf16.msra.mxu0 0
    %1478 = vmatprep.subr.bf16.mxu0 0
    %1479 = vmatpush1.bf16.msra.mxu0 0
    %1480 = vmatprep.subr.bf16.mxu0 0
    %1481 = vmatpush1.bf16.msra.mxu0 0
    %1482 = vmatprep.subr.bf16.mxu0 0
    %1483 = vmatpush1.bf16.msra.mxu0 0
    %1484 = vmatprep.subr.bf16.mxu0 0
    %1485 = vmatpush1.bf16.msra.mxu0 0
    %1486 = vmatprep.subr.bf16.mxu0 0
    %1487 = vmatpush1.bf16.msra.mxu0 0
    %1488 = vmatprep.subr.bf16.mxu0 0
    %1489 = vmatpush1.bf16.msra.mxu0 0
    %1490 = vmatprep.subr.bf16.mxu0 0
    %1491 = vmatpush1.bf16.msra.mxu0 0
    %1492 = vmatprep.subr.bf16.mxu0 0
    %1493 = vmatpush1.bf16.msra.mxu0 0
    %1494 = vmatprep.subr.bf16.mxu0 0
    %1495 = vmatpush1.bf16.msra.mxu0 0
    %1496 = vmatprep.mubr.bf16.mxu0 0
    %1497 = vmatmul.mubr.bf16.gmra.mrb[0].mxu0 %v123
    %v1498 = vpop.f32.mrb[0].mxu0
    %v1499 = vadd.f32 %v1462, %v1498
    %v1500 = vpop.f32.mrb[0].mxu0
    %v1501 = vpop.f32.mrb[0].mxu0
    %v1502 = vadd.f32 %v1462, %v1501
    %v1503 = vpop.f32.mrb[0].mxu0
    %1504 = vmatprep.mubr.bf16.mxu0 0
    %1505 = vmatmul.mubr.bf16.gmra.mrb[0].mxu0 %v126
    %v1506 = vpop.f32.mrb[0].mxu0
    %v1507 = vadd.f32 %v1462, %v1506
    %v1508 = vpop.f32.mrb[0].mxu0
    %v1509 = vpop.f32.mrb[0].mxu0
    %v1510 = vadd.f32 %v1462, %v1509
    %v1511 = vpop.f32.mrb[0].mxu0
    %1512 = vmatprep.mubr.bf16.mxu0 0
    %1513 = vmatmul.mubr.bf16.gmra.mrb[0].mxu0 %v129
    %v1514 = vpop.f32.mrb[0].mxu0
    %v1515 = vadd.f32 %v1462, %v1514
    %v1516 = vpop.f32.mrb[0].mxu0
    %v1517 = vpop.f32.mrb[0].mxu0
    %v1518 = vadd.f32 %v1462, %v1517
    %v1519 = vpop.f32.mrb[0].mxu0
    %1520 = vmatprep.mubr.bf16.mxu0 0
    %1521 = vmatmul.mubr.bf16.gmra.mrb[0].mxu0 %v132
    %v1522 = vpop.f32.mrb[0].mxu0
    %v1523 = vadd.f32 %v1462, %v1522
    %v1524 = vpop.f32.mrb[0].mxu0
    %v1525 = vpop.f32.mrb[0].mxu0
    %v1526 = vadd.f32 %v1462, %v1525
    %v1527 = vpop.f32.mrb[0].mxu0
    %1528 = vmatprep.mubr.bf16.mxu0 0
    %1529 = vmatmul.mubr.bf16.gmra.mrb[0].mxu0 %v135
    %v1530 = vpop.f32.mrb[0].mxu0
    %v1531 = vadd.f32 %v1462, %v1530
    %v1532 = vpop.f32.mrb[0].mxu0
    %v1533 = vpop.f32.mrb[0].mxu0
    %v1534 = vadd.f32 %v1462, %v1533
    %v1535 = vpop.f32.mrb[0].mxu0
    %1536 = vmatprep.mubr.bf16.mxu0 0
    %1537 = vmatmul.mubr.bf16.gmra.mrb[0].mxu0 %v138
    %v1538 = vpop.f32.mrb[0].mxu0
    %v1539 = vadd.f32 %v1462, %v1538
    %v1540 = vpop.f32.mrb[0].mxu0
    %v1541 = vpop.f32.mrb[0].mxu0
    %v1542 = vadd.f32 %v1462, %v1541
    %v1543 = vpop.f32.mrb[0].mxu0
    %1544 = vmatprep.mubr.bf16.mxu0 0
    %1545 = vmatmul.mubr.bf16.gmra.mrb[0].mxu0 %v141
    %v1546 = vpop.f32.mrb[0].mxu0
    %v1547 = vadd.f32 %v1462, %v1546
    %v1548 = vpop.f32.mrb[0].mxu0
    %v1549 = vpop.f32.mrb[0].mxu0
    %v1550 = vadd.f32 %v1462, %v1549
    %v1551 = vpop.f32.mrb[0].mxu0
    %1552 = vmatprep.mubr.bf16.mxu0 0
    %1553 = vmatmul.mubr.bf16.gmra.mrb[0].mxu0 %v144
    %v1554 = vpop.f32.mrb[0].mxu0
    %v1555 = vadd.f32 %v1462, %v1554
    %v1556 = vpop.f32.mrb[0].mxu0
    %v1557 = vpop.f32.mrb[0].mxu0
    %v1558 = vadd.f32 %v1462, %v1557
    %v1559 = vpop.f32.mrb[0].mxu0
    %1560 = vdwg.mxu0
    %v1561 = vtanh.pop %v1499
    %v1562 = vtanh.pop %v1502
    %v1563 = vtanh.pop %v1507
    %v1564 = vtanh.pop %v1510
    %v1565 = vtanh.pop %v1515
    %v1566 = vtanh.pop %v1518
    %v1567 = vtanh.pop %v1523
    %v1568 = vtanh.pop %v1526
    %v1569 = vtanh.pop %v1531
    %v1570 = vtanh.pop %v1534
    %v1571 = vtanh.pop %v1539
    %v1572 = vtanh.pop %v1542
    %v1573 = vtanh.pop %v1547
    %v1574 = vtanh.pop %v1550
    %v1575 = vtanh.pop %v1555
    %v1576 = vtanh.pop %v1558
    %v1577 = vld [vmem:[%s15] sm:$0x1]
    %v1579 = vlaneseq
    %v1580 = vshrl.u32 %v1579, 7
    %v1581 = vsub.s32 0, %v1580
    %v1582 = vrot.slane %v1577, %v1581
    %v1584 = vmul.f32 %v1561, %v1582
    %v1585 = vmul.f32 %v1562, %v1582
    %v1586 = vmul.f32 %v1563, %v1582
    %v1587 = vmul.f32 %v1564, %v1582
    %v1588 = vmul.f32 %v1565, %v1582
    %v1589 = vmul.f32 %v1566, %v1582
    %v1590 = vmul.f32 %v1567, %v1582
    %v1591 = vmul.f32 %v1568, %v1582
    %v1592 = vmul.f32 %v1569, %v1582
    %v1593 = vmul.f32 %v1570, %v1582
    %v1594 = vmul.f32 %v1571, %v1582
    %v1595 = vmul.f32 %v1572, %v1582
    %v1596 = vmul.f32 %v1573, %v1582
    %v1597 = vmul.f32 %v1574, %v1582
    %v1598 = vmul.f32 %v1575, %v1582
    %v1599 = vmul.f32 %v1576, %v1582
    %v1600 = vsel %vm121, %v1584, 0.0
    %1601 = vadd.xlane.f32.xlu0 %v1600
    %v1602 = vpop.xlane.xlu0 %1601
    %v1603 = vsel %vm121, %v1585, 0.0
    %1604 = vadd.xlane.f32.xlu0 %v1603
    %v1605 = vpop.xlane.xlu0 %1604
    %v1606 = vsel %vm121, %v1586, 0.0
    %1607 = vadd.xlane.f32.xlu0 %v1606
    %v1608 = vpop.xlane.xlu0 %1607
    %v1609 = vsel %vm121, %v1587, 0.0
    %1610 = vadd.xlane.f32.xlu0 %v1609
    %v1611 = vpop.xlane.xlu0 %1610
    %v1612 = vsel %vm121, %v1588, 0.0
    %1613 = vadd.xlane.f32.xlu0 %v1612
    %v1614 = vpop.xlane.xlu0 %1613
    %v1615 = vsel %vm121, %v1589, 0.0
    %1616 = vadd.xlane.f32.xlu0 %v1615
    %v1617 = vpop.xlane.xlu0 %1616
    %v1618 = vsel %vm121, %v1590, 0.0
    %1619 = vadd.xlane.f32.xlu0 %v1618
    %v1620 = vpop.xlane.xlu0 %1619
    %v1621 = vsel %vm121, %v1591, 0.0
    %1622 = vadd.xlane.f32.xlu0 %v1621
    %v1623 = vpop.xlane.xlu0 %1622
    %v1624 = vsel %vm121, %v1592, 0.0
    %1625 = vadd.xlane.f32.xlu0 %v1624
    %v1626 = vpop.xlane.xlu0 %1625
    %v1627 = vsel %vm121, %v1593, 0.0
    %1628 = vadd.xlane.f32.xlu0 %v1627
    %v1629 = vpop.xlane.xlu0 %1628
    %v1630 = vsel %vm121, %v1594, 0.0
    %1631 = vadd.xlane.f32.xlu0 %v1630
    %v1632 = vpop.xlane.xlu0 %1631
    %v1633 = vsel %vm121, %v1595, 0.0
    %1634 = vadd.xlane.f32.xlu0 %v1633
    %v1635 = vpop.xlane.xlu0 %1634
    %v1636 = vsel %vm121, %v1596, 0.0
    %1637 = vadd.xlane.f32.xlu0 %v1636
    %v1638 = vpop.xlane.xlu0 %1637
    %v1639 = vsel %vm121, %v1597, 0.0
    %1640 = vadd.xlane.f32.xlu0 %v1639
    %v1641 = vpop.xlane.xlu0 %1640
    %v1642 = vsel %vm121, %v1598, 0.0
    %1643 = vadd.xlane.f32.xlu0 %v1642
    %v1644 = vpop.xlane.xlu0 %1643
    %v1645 = vsel %vm121, %v1599, 0.0
    %1646 = vadd.xlane.f32.xlu0 %v1645
    %v1647 = vpop.xlane.xlu0 %1646
    %v1648 = vld [vmem:[#allocation2] sm:$0x1]
    %v1650 = vlaneseq
    %v1651 = vshrl.u32 %v1650, 7
    %v1652 = vsub.s32 0, %v1651
    %v1653 = vrot.slane %v1648, %v1652
    %v1655 = vadd.f32 %v1602, %v1653
    %v1656 = vadd.f32 %v1605, %v1653
    %v1657 = vadd.f32 %v1608, %v1653
    %v1658 = vadd.f32 %v1611, %v1653
    %v1659 = vadd.f32 %v1614, %v1653
    %v1660 = vadd.f32 %v1617, %v1653
    %v1661 = vadd.f32 %v1620, %v1653
    %v1662 = vadd.f32 %v1623, %v1653
    %v1663 = vadd.f32 %v1626, %v1653
    %v1664 = vadd.f32 %v1629, %v1653
    %v1665 = vadd.f32 %v1632, %v1653
    %v1666 = vadd.f32 %v1635, %v1653
    %v1667 = vadd.f32 %v1638, %v1653
    %v1668 = vadd.f32 %v1641, %v1653
    %v1669 = vadd.f32 %v1644, %v1653
    %v1670 = vadd.f32 %v1647, %v1653
    %v1671 = vpack.c.bf16 %v1424, %v1423
    %v1672 = vpack.c.bf16 %v1426, %v1425
    %v1673 = vpack.c.bf16 %v1428, %v1427
    %v1674 = vpack.c.bf16 %v1430, %v1429
    %v1675 = vpack.c.bf16 %v1432, %v1431
    %v1676 = vpack.c.bf16 %v1434, %v1433
    %v1677 = vpack.c.bf16 %v1436, %v1435
    %v1678 = vpack.c.bf16 %v1438, %v1437
    %v1680 = vsel %vm121, %v1671, 0
    %v1683 = vsel %vm121, %v1672, 0
    %v1686 = vsel %vm121, %v1673, 0
    %v1689 = vsel %vm121, %v1674, 0
    %v1692 = vsel %vm121, %v1675, 0
    %v1695 = vsel %vm121, %v1676, 0
    %v1698 = vsel %vm121, %v1677, 0
    %v1701 = vsel %vm121, %v1678, 0
    %1703 = vmatprep.subr.bf16.mxu0 0
    %1704 = vmatpush1.bf16.msra.mxu0 %v1453
    %1705 = vmatprep.subr.bf16.mxu0 0
    %1706 = vmatpush1.bf16.msra.mxu0 %v1454
    %1707 = vmatprep.subr.bf16.mxu0 0
    %1708 = vmatpush1.bf16.msra.mxu0 %v1455
    %1709 = vmatprep.subr.bf16.mxu0 0
    %1710 = vmatpush1.bf16.msra.mxu0 %v1456
    %1711 = vmatprep.subr.bf16.mxu0 0
    %1712 = vmatpush1.bf16.msra.mxu0 0
    %1713 = vmatprep.subr.bf16.mxu0 0
    %1714 = vmatpush1.bf16.msra.mxu0 0
    %1715 = vmatprep.subr.bf16.mxu0 0
    %1716 = vmatpush1.bf16.msra.mxu0 0
    %1717 = vmatprep.subr.bf16.mxu0 0
    %1718 = vmatpush1.bf16.msra.mxu0 0
    %1719 = vmatprep.subr.bf16.mxu0 0
    %1720 = vmatpush1.bf16.msra.mxu0 0
    %1721 = vmatprep.subr.bf16.mxu0 0
    %1722 = vmatpush1.bf16.msra.mxu0 0
    %1723 = vmatprep.subr.bf16.mxu0 0
    %1724 = vmatpush1.bf16.msra.mxu0 0
    %1725 = vmatprep.subr.bf16.mxu0 0
    %1726 = vmatpush1.bf16.msra.mxu0 0
    %1727 = vmatprep.subr.bf16.mxu0 0
    %1728 = vmatpush1.bf16.msra.mxu0 0
    %1729 = vmatprep.subr.bf16.mxu0 0
    %1730 = vmatpush1.bf16.msra.mxu0 0
    %1731 = vmatprep.subr.bf16.mxu0 0
    %1732 = vmatpush1.bf16.msra.mxu0 0
    %1733 = vmatprep.subr.bf16.mxu0 0
    %1734 = vmatpush1.bf16.msra.mxu0 0
    %1735 = vmatprep.mubr.bf16.mxu0 0
    %1736 = vmatmul.mubr.bf16.gmra.mrb[0].mxu0 %v1680
    %v1737 = vpop.f32.mrb[0].mxu0
    %v1738 = vadd.f32 %v1462, %v1737
    %v1739 = vpop.f32.mrb[0].mxu0
    %v1740 = vpop.f32.mrb[0].mxu0
    %v1741 = vadd.f32 %v1462, %v1740
    %v1742 = vpop.f32.mrb[0].mxu0
    %1743 = vmatprep.mubr.bf16.mxu0 0
    %1744 = vmatmul.mubr.bf16.gmra.mrb[0].mxu0 %v1683
    %v1745 = vpop.f32.mrb[0].mxu0
    %v1746 = vadd.f32 %v1462, %v1745
    %v1747 = vpop.f32.mrb[0].mxu0
    %v1748 = vpop.f32.mrb[0].mxu0
    %v1749 = vadd.f32 %v1462, %v1748
    %v1750 = vpop.f32.mrb[0].mxu0
    %1751 = vmatprep.mubr.bf16.mxu0 0
    %1752 = vmatmul.mubr.bf16.gmra.mrb[0].mxu0 %v1686
    %v1753 = vpop.f32.mrb[0].mxu0
    %v1754 = vadd.f32 %v1462, %v1753
    %v1755 = vpop.f32.mrb[0].mxu0
    %v1756 = vpop.f32.mrb[0].mxu0
    %v1757 = vadd.f32 %v1462, %v1756
    %v1758 = vpop.f32.mrb[0].mxu0
    %1759 = vmatprep.mubr.bf16.mxu0 0
    %1760 = vmatmul.mubr.bf16.gmra.mrb[0].mxu0 %v1689
    %v1761 = vpop.f32.mrb[0].mxu0
    %v1762 = vadd.f32 %v1462, %v1761
    %v1763 = vpop.f32.mrb[0].mxu0
    %v1764 = vpop.f32.mrb[0].mxu0
    %v1765 = vadd.f32 %v1462, %v1764
    %v1766 = vpop.f32.mrb[0].mxu0
    %1767 = vmatprep.mubr.bf16.mxu0 0
    %1768 = vmatmul.mubr.bf16.gmra.mrb[0].mxu0 %v1692
    %v1769 = vpop.f32.mrb[0].mxu0
    %v1770 = vadd.f32 %v1462, %v1769
    %v1771 = vpop.f32.mrb[0].mxu0
    %v1772 = vpop.f32.mrb[0].mxu0
    %v1773 = vadd.f32 %v1462, %v1772
    %v1774 = vpop.f32.mrb[0].mxu0
    %1775 = vmatprep.mubr.bf16.mxu0 0
    %1776 = vmatmul.mubr.bf16.gmra.mrb[0].mxu0 %v1695
    %v1777 = vpop.f32.mrb[0].mxu0
    %v1778 = vadd.f32 %v1462, %v1777
    %v1779 = vpop.f32.mrb[0].mxu0
    %v1780 = vpop.f32.mrb[0].mxu0
    %v1781 = vadd.f32 %v1462, %v1780
    %v1782 = vpop.f32.mrb[0].mxu0
    %1783 = vmatprep.mubr.bf16.mxu0 0
    %1784 = vmatmul.mubr.bf16.gmra.mrb[0].mxu0 %v1698
    %v1785 = vpop.f32.mrb[0].mxu0
    %v1786 = vadd.f32 %v1462, %v1785
    %v1787 = vpop.f32.mrb[0].mxu0
    %v1788 = vpop.f32.mrb[0].mxu0
    %v1789 = vadd.f32 %v1462, %v1788
    %v1790 = vpop.f32.mrb[0].mxu0
    %1791 = vmatprep.mubr.bf16.mxu0 0
    %1792 = vmatmul.mubr.bf16.gmra.mrb[0].mxu0 %v1701
    %v1793 = vpop.f32.mrb[0].mxu0
    %v1794 = vadd.f32 %v1462, %v1793
    %v1795 = vpop.f32.mrb[0].mxu0
    %v1796 = vpop.f32.mrb[0].mxu0
    %v1797 = vadd.f32 %v1462, %v1796
    %v1798 = vpop.f32.mrb[0].mxu0
    %1799 = vdwg.mxu0
    %v1800 = vtanh.pop %v1738
    %v1801 = vtanh.pop %v1741
    %v1802 = vtanh.pop %v1746
    %v1803 = vtanh.pop %v1749
    %v1804 = vtanh.pop %v1754
    %v1805 = vtanh.pop %v1757
    %v1806 = vtanh.pop %v1762
    %v1807 = vtanh.pop %v1765
    %v1808 = vtanh.pop %v1770
    %v1809 = vtanh.pop %v1773
    %v1810 = vtanh.pop %v1778
    %v1811 = vtanh.pop %v1781
    %v1812 = vtanh.pop %v1786
    %v1813 = vtanh.pop %v1789
    %v1814 = vtanh.pop %v1794
    %v1815 = vtanh.pop %v1797
    %v1816 = vmul.f32 %v1800, %v1582
    %v1817 = vmul.f32 %v1801, %v1582
    %v1818 = vmul.f32 %v1802, %v1582
    %v1819 = vmul.f32 %v1803, %v1582
    %v1820 = vmul.f32 %v1804, %v1582
    %v1821 = vmul.f32 %v1805, %v1582
    %v1822 = vmul.f32 %v1806, %v1582
    %v1823 = vmul.f32 %v1807, %v1582
    %v1824 = vmul.f32 %v1808, %v1582
    %v1825 = vmul.f32 %v1809, %v1582
    %v1826 = vmul.f32 %v1810, %v1582
    %v1827 = vmul.f32 %v1811, %v1582
    %v1828 = vmul.f32 %v1812, %v1582
    %v1829 = vmul.f32 %v1813, %v1582
    %v1830 = vmul.f32 %v1814, %v1582
    %v1831 = vmul.f32 %v1815, %v1582
    %v1832 = vsel %vm121, %v1816, 0.0
    %1833 = vadd.xlane.f32.xlu0 %v1832
    %v1834 = vpop.xlane.xlu0 %1833
    %v1835 = vsel %vm121, %v1817, 0.0
    %1836 = vadd.xlane.f32.xlu0 %v1835
    %v1837 = vpop.xlane.xlu0 %1836
    %v1838 = vsel %vm121, %v1818, 0.0
    %1839 = vadd.xlane.f32.xlu0 %v1838
    %v1840 = vpop.xlane.xlu0 %1839
    %v1841 = vsel %vm121, %v1819, 0.0
    %1842 = vadd.xlane.f32.xlu0 %v1841
    %v1843 = vpop.xlane.xlu0 %1842
    %v1844 = vsel %vm121, %v1820, 0.0
    %1845 = vadd.xlane.f32.xlu0 %v1844
    %v1846 = vpop.xlane.xlu0 %1845
    %v1847 = vsel %vm121, %v1821, 0.0
    %1848 = vadd.xlane.f32.xlu0 %v1847
    %v1849 = vpop.xlane.xlu0 %1848
    %v1850 = vsel %vm121, %v1822, 0.0
    %1851 = vadd.xlane.f32.xlu0 %v1850
    %v1852 = vpop.xlane.xlu0 %1851
    %v1853 = vsel %vm121, %v1823, 0.0
    %1854 = vadd.xlane.f32.xlu0 %v1853
    %v1855 = vpop.xlane.xlu0 %1854
    %v1856 = vsel %vm121, %v1824, 0.0
    %1857 = vadd.xlane.f32.xlu0 %v1856
    %v1858 = vpop.xlane.xlu0 %1857
    %v1859 = vsel %vm121, %v1825, 0.0
    %1860 = vadd.xlane.f32.xlu0 %v1859
    %v1861 = vpop.xlane.xlu0 %1860
    %v1862 = vsel %vm121, %v1826, 0.0
    %1863 = vadd.xlane.f32.xlu0 %v1862
    %v1864 = vpop.xlane.xlu0 %1863
    %v1865 = vsel %vm121, %v1827, 0.0
    %1866 = vadd.xlane.f32.xlu0 %v1865
    %v1867 = vpop.xlane.xlu0 %1866
    %v1868 = vsel %vm121, %v1828, 0.0
    %1869 = vadd.xlane.f32.xlu0 %v1868
    %v1870 = vpop.xlane.xlu0 %1869
    %v1871 = vsel %vm121, %v1829, 0.0
    %1872 = vadd.xlane.f32.xlu0 %v1871
    %v1873 = vpop.xlane.xlu0 %1872
    %v1874 = vsel %vm121, %v1830, 0.0
    %1875 = vadd.xlane.f32.xlu0 %v1874
    %v1876 = vpop.xlane.xlu0 %1875
    %v1877 = vsel %vm121, %v1831, 0.0
    %1878 = vadd.xlane.f32.xlu0 %v1877
    %v1879 = vpop.xlane.xlu0 %1878
    %v1880 = vadd.f32 %v1834, %v1653
    %v1881 = vadd.f32 %v1837, %v1653
    %v1882 = vadd.f32 %v1840, %v1653
    %v1883 = vadd.f32 %v1843, %v1653
    %v1884 = vadd.f32 %v1846, %v1653
    %v1885 = vadd.f32 %v1849, %v1653
    %v1886 = vadd.f32 %v1852, %v1653
    %v1887 = vadd.f32 %v1855, %v1653
    %v1888 = vadd.f32 %v1858, %v1653
    %v1889 = vadd.f32 %v1861, %v1653
    %v1890 = vadd.f32 %v1864, %v1653
    %v1891 = vadd.f32 %v1867, %v1653
    %v1892 = vadd.f32 %v1870, %v1653
    %v1893 = vadd.f32 %v1873, %v1653
    %v1894 = vadd.f32 %v1876, %v1653
    %v1895 = vadd.f32 %v1879, %v1653
    %v1896 = vmax.f32 %v1655, %v1880
    %v1897 = vmax.f32 %v1656, %v1881
    %v1898 = vmax.f32 %v1657, %v1882
    %v1899 = vmax.f32 %v1658, %v1883
    %v1900 = vmax.f32 %v1659, %v1884
    %v1901 = vmax.f32 %v1660, %v1885
    %v1902 = vmax.f32 %v1661, %v1886
    %v1903 = vmax.f32 %v1662, %v1887
    %v1904 = vmax.f32 %v1663, %v1888
    %v1905 = vmax.f32 %v1664, %v1889
    %v1906 = vmax.f32 %v1665, %v1890
    %v1907 = vmax.f32 %v1666, %v1891
    %v1908 = vmax.f32 %v1667, %v1892
    %v1909 = vmax.f32 %v1668, %v1893
    %v1910 = vmax.f32 %v1669, %v1894
    %v1911 = vmax.f32 %v1670, %v1895
    %v1912 = vsub.f32 %v1655, %v1896
    %v1913 = vsub.f32 %v1656, %v1897
    %v1914 = vsub.f32 %v1657, %v1898
    %v1915 = vsub.f32 %v1658, %v1899
    %v1916 = vsub.f32 %v1659, %v1900
    %v1917 = vsub.f32 %v1660, %v1901
    %v1918 = vsub.f32 %v1661, %v1902
    %v1919 = vsub.f32 %v1662, %v1903
    %v1920 = vsub.f32 %v1663, %v1904
    %v1921 = vsub.f32 %v1664, %v1905
    %v1922 = vsub.f32 %v1665, %v1906
    %v1923 = vsub.f32 %v1666, %v1907
    %v1924 = vsub.f32 %v1667, %v1908
    %v1925 = vsub.f32 %v1668, %v1909
    %v1926 = vsub.f32 %v1669, %v1910
    %v1927 = vsub.f32 %v1670, %v1911
    %v1928 = vmul.f32 %v1912, 1.442695
    %v1929 = vpow.pop %v1928
    %v1930 = vmul.f32 %v1913, 1.442695
    %v1931 = vpow.pop %v1930
    %v1932 = vmul.f32 %v1914, 1.442695
    %v1933 = vpow.pop %v1932
    %v1934 = vmul.f32 %v1915, 1.442695
    %v1935 = vpow.pop %v1934
    %v1936 = vmul.f32 %v1916, 1.442695
    %v1937 = vpow.pop %v1936
    %v1938 = vmul.f32 %v1917, 1.442695
    %v1939 = vpow.pop %v1938
    %v1940 = vmul.f32 %v1918, 1.442695
    %v1941 = vpow.pop %v1940
    %v1942 = vmul.f32 %v1919, 1.442695
    %v1943 = vpow.pop %v1942
    %v1944 = vmul.f32 %v1920, 1.442695
    %v1945 = vpow.pop %v1944
    %v1946 = vmul.f32 %v1921, 1.442695
    %v1947 = vpow.pop %v1946
    %v1948 = vmul.f32 %v1922, 1.442695
    %v1949 = vpow.pop %v1948
    %v1950 = vmul.f32 %v1923, 1.442695
    %v1951 = vpow.pop %v1950
    %v1952 = vmul.f32 %v1924, 1.442695
    %v1953 = vpow.pop %v1952
    %v1954 = vmul.f32 %v1925, 1.442695
    %v1955 = vpow.pop %v1954
    %v1956 = vmul.f32 %v1926, 1.442695
    %v1957 = vpow.pop %v1956
    %v1958 = vmul.f32 %v1927, 1.442695
    %v1959 = vpow.pop %v1958
    %v1960 = vsub.f32 %v1880, %v1896
    %v1961 = vsub.f32 %v1881, %v1897
    %v1962 = vsub.f32 %v1882, %v1898
    %v1963 = vsub.f32 %v1883, %v1899
    %v1964 = vsub.f32 %v1884, %v1900
    %v1965 = vsub.f32 %v1885, %v1901
    %v1966 = vsub.f32 %v1886, %v1902
    %v1967 = vsub.f32 %v1887, %v1903
    %v1968 = vsub.f32 %v1888, %v1904
    %v1969 = vsub.f32 %v1889, %v1905
    %v1970 = vsub.f32 %v1890, %v1906
    %v1971 = vsub.f32 %v1891, %v1907
    %v1972 = vsub.f32 %v1892, %v1908
    %v1973 = vsub.f32 %v1893, %v1909
    %v1974 = vsub.f32 %v1894, %v1910
    %v1975 = vsub.f32 %v1895, %v1911
    %v1976 = vmul.f32 %v1960, 1.442695
    %v1977 = vpow.pop %v1976
    %v1978 = vmul.f32 %v1961, 1.442695
    %v1979 = vpow.pop %v1978
    %v1980 = vmul.f32 %v1962, 1.442695
    %v1981 = vpow.pop %v1980
    %v1982 = vmul.f32 %v1963, 1.442695
    %v1983 = vpow.pop %v1982
    %v1984 = vmul.f32 %v1964, 1.442695
    %v1985 = vpow.pop %v1984
    %v1986 = vmul.f32 %v1965, 1.442695
    %v1987 = vpow.pop %v1986
    %v1988 = vmul.f32 %v1966, 1.442695
    %v1989 = vpow.pop %v1988
    %v1990 = vmul.f32 %v1967, 1.442695
    %v1991 = vpow.pop %v1990
    %v1992 = vmul.f32 %v1968, 1.442695
    %v1993 = vpow.pop %v1992
    %v1994 = vmul.f32 %v1969, 1.442695
    %v1995 = vpow.pop %v1994
    %v1996 = vmul.f32 %v1970, 1.442695
    %v1997 = vpow.pop %v1996
    %v1998 = vmul.f32 %v1971, 1.442695
    %v1999 = vpow.pop %v1998
    %v2000 = vmul.f32 %v1972, 1.442695
    %v2001 = vpow.pop %v2000
    %v2002 = vmul.f32 %v1973, 1.442695
    %v2003 = vpow.pop %v2002
    %v2004 = vmul.f32 %v1974, 1.442695
    %v2005 = vpow.pop %v2004
    %v2006 = vmul.f32 %v1975, 1.442695
    %v2007 = vpow.pop %v2006
    %v2008 = vadd.f32 %v1929, %v1977
    %v2009 = vadd.f32 %v1931, %v1979
    %v2010 = vadd.f32 %v1933, %v1981
    %v2011 = vadd.f32 %v1935, %v1983
    %v2012 = vadd.f32 %v1937, %v1985
    %v2013 = vadd.f32 %v1939, %v1987
    %v2014 = vadd.f32 %v1941, %v1989
    %v2015 = vadd.f32 %v1943, %v1991
    %v2016 = vadd.f32 %v1945, %v1993
    %v2017 = vadd.f32 %v1947, %v1995
    %v2018 = vadd.f32 %v1949, %v1997
    %v2019 = vadd.f32 %v1951, %v1999
    %v2020 = vadd.f32 %v1953, %v2001
    %v2021 = vadd.f32 %v1955, %v2003
    %v2022 = vadd.f32 %v1957, %v2005
    %v2023 = vadd.f32 %v1959, %v2007
    %v2024 = vrcp.pop %v2008
    %v2025 = vrcp.pop %v2009
    %v2026 = vrcp.pop %v2010
    %v2027 = vrcp.pop %v2011
    %v2028 = vrcp.pop %v2012
    %v2029 = vrcp.pop %v2013
    %v2030 = vrcp.pop %v2014
    %v2031 = vrcp.pop %v2015
    %v2032 = vrcp.pop %v2016
    %v2033 = vrcp.pop %v2017
    %v2034 = vrcp.pop %v2018
    %v2035 = vrcp.pop %v2019
    %v2036 = vrcp.pop %v2020
    %v2037 = vrcp.pop %v2021
    %v2038 = vrcp.pop %v2022
    %v2039 = vrcp.pop %v2023
    %v2040 = vmul.f32 %v1929, %v2024
    %v2041 = vmul.f32 %v1931, %v2025
    %v2042 = vmul.f32 %v1933, %v2026
    %v2043 = vmul.f32 %v1935, %v2027
    %v2044 = vmul.f32 %v1937, %v2028
    %v2045 = vmul.f32 %v1939, %v2029
    %v2046 = vmul.f32 %v1941, %v2030
    %v2047 = vmul.f32 %v1943, %v2031
    %v2048 = vmul.f32 %v1945, %v2032
    %v2049 = vmul.f32 %v1947, %v2033
    %v2050 = vmul.f32 %v1949, %v2034
    %v2051 = vmul.f32 %v1951, %v2035
    %v2052 = vmul.f32 %v1953, %v2036
    %v2053 = vmul.f32 %v1955, %v2037
    %v2054 = vmul.f32 %v1957, %v2038
    %v2055 = vmul.f32 %v1959, %v2039
    %2057 = vset.pattern.permute.xlu0 0
    %2058 = vperm.xlu0 %2057, %v2040
    %v2059 = vpop.permute.xlu0 %2058
    %2062 = vset.pattern.permute.xlu0 0
    %2063 = vperm.xlu0 %2062, %v2041
    %v2064 = vpop.permute.xlu0 %2063
    %2067 = vset.pattern.permute.xlu0 0
    %2068 = vperm.xlu0 %2067, %v2042
    %v2069 = vpop.permute.xlu0 %2068
    %2072 = vset.pattern.permute.xlu0 0
    %2073 = vperm.xlu0 %2072, %v2043
    %v2074 = vpop.permute.xlu0 %2073
    %2077 = vset.pattern.permute.xlu0 0
    %2078 = vperm.xlu0 %2077, %v2044
    %v2079 = vpop.permute.xlu0 %2078
    %2082 = vset.pattern.permute.xlu0 0
    %2083 = vperm.xlu0 %2082, %v2045
    %v2084 = vpop.permute.xlu0 %2083
    %2087 = vset.pattern.permute.xlu0 0
    %2088 = vperm.xlu0 %2087, %v2046
    %v2089 = vpop.permute.xlu0 %2088
    %2092 = vset.pattern.permute.xlu0 0
    %2093 = vperm.xlu0 %2092, %v2047
    %v2094 = vpop.permute.xlu0 %2093
    %2097 = vset.pattern.permute.xlu0 0
    %2098 = vperm.xlu0 %2097, %v2048
    %v2099 = vpop.permute.xlu0 %2098
    %2102 = vset.pattern.permute.xlu0 0
    %2103 = vperm.xlu0 %2102, %v2049
    %v2104 = vpop.permute.xlu0 %2103
    %2107 = vset.pattern.permute.xlu0 0
    %2108 = vperm.xlu0 %2107, %v2050
    %v2109 = vpop.permute.xlu0 %2108
    %2112 = vset.pattern.permute.xlu0 0
    %2113 = vperm.xlu0 %2112, %v2051
    %v2114 = vpop.permute.xlu0 %2113
    %2117 = vset.pattern.permute.xlu0 0
    %2118 = vperm.xlu0 %2117, %v2052
    %v2119 = vpop.permute.xlu0 %2118
    %2122 = vset.pattern.permute.xlu0 0
    %2123 = vperm.xlu0 %2122, %v2053
    %v2124 = vpop.permute.xlu0 %2123
    %2127 = vset.pattern.permute.xlu0 0
    %2128 = vperm.xlu0 %2127, %v2054
    %v2129 = vpop.permute.xlu0 %2128
    %2132 = vset.pattern.permute.xlu0 0
    %2133 = vperm.xlu0 %2132, %v2055
    %v2134 = vpop.permute.xlu0 %2133
    %v2136 = vmul.f32 %v2059, %v78
    %v2137 = vmul.f32 %v2064, %v79
    %v2138 = vmul.f32 %v2069, %v80
    %v2139 = vmul.f32 %v2074, %v81
    %v2140 = vmul.f32 %v2079, %v82
    %v2141 = vmul.f32 %v2084, %v83
    %v2142 = vmul.f32 %v2089, %v84
    %v2143 = vmul.f32 %v2094, %v85
    %v2144 = vmul.f32 %v2099, %v86
    %v2145 = vmul.f32 %v2104, %v87
    %v2146 = vmul.f32 %v2109, %v88
    %v2147 = vmul.f32 %v2114, %v89
    %v2148 = vmul.f32 %v2119, %v90
    %v2149 = vmul.f32 %v2124, %v91
    %v2150 = vmul.f32 %v2129, %v92
    %v2151 = vmul.f32 %v2134, %v93
    %v2152 = vmul.f32 %v1977, %v2024
    %v2153 = vmul.f32 %v1979, %v2025
    %v2154 = vmul.f32 %v1981, %v2026
    %v2155 = vmul.f32 %v1983, %v2027
    %v2156 = vmul.f32 %v1985, %v2028
    %v2157 = vmul.f32 %v1987, %v2029
    %v2158 = vmul.f32 %v1989, %v2030
    %v2159 = vmul.f32 %v1991, %v2031
    %v2160 = vmul.f32 %v1993, %v2032
    %v2161 = vmul.f32 %v1995, %v2033
    %v2162 = vmul.f32 %v1997, %v2034
    %v2163 = vmul.f32 %v1999, %v2035
    %v2164 = vmul.f32 %v2001, %v2036
    %v2165 = vmul.f32 %v2003, %v2037
    %v2166 = vmul.f32 %v2005, %v2038
    %v2167 = vmul.f32 %v2007, %v2039
    %2169 = vset.pattern.permute.xlu0 0
    %2170 = vperm.xlu0 %2169, %v2152
    %v2171 = vpop.permute.xlu0 %2170
    %2174 = vset.pattern.permute.xlu0 0
    %2175 = vperm.xlu0 %2174, %v2153
    %v2176 = vpop.permute.xlu0 %2175
    %2179 = vset.pattern.permute.xlu0 0
    %2180 = vperm.xlu0 %2179, %v2154
    %v2181 = vpop.permute.xlu0 %2180
    %2184 = vset.pattern.permute.xlu0 0
    %2185 = vperm.xlu0 %2184, %v2155
    %v2186 = vpop.permute.xlu0 %2185
    %2189 = vset.pattern.permute.xlu0 0
    %2190 = vperm.xlu0 %2189, %v2156
    %v2191 = vpop.permute.xlu0 %2190
    %2194 = vset.pattern.permute.xlu0 0
    %2195 = vperm.xlu0 %2194, %v2157
    %v2196 = vpop.permute.xlu0 %2195
    %2199 = vset.pattern.permute.xlu0 0
    %2200 = vperm.xlu0 %2199, %v2158
    %v2201 = vpop.permute.xlu0 %2200
    %2204 = vset.pattern.permute.xlu0 0
    %2205 = vperm.xlu0 %2204, %v2159
    %v2206 = vpop.permute.xlu0 %2205
    %2209 = vset.pattern.permute.xlu0 0
    %2210 = vperm.xlu0 %2209, %v2160
    %v2211 = vpop.permute.xlu0 %2210
    %2214 = vset.pattern.permute.xlu0 0
    %2215 = vperm.xlu0 %2214, %v2161
    %v2216 = vpop.permute.xlu0 %2215
    %2219 = vset.pattern.permute.xlu0 0
    %2220 = vperm.xlu0 %2219, %v2162
    %v2221 = vpop.permute.xlu0 %2220
    %2224 = vset.pattern.permute.xlu0 0
    %2225 = vperm.xlu0 %2224, %v2163
    %v2226 = vpop.permute.xlu0 %2225
    %2229 = vset.pattern.permute.xlu0 0
    %2230 = vperm.xlu0 %2229, %v2164
    %v2231 = vpop.permute.xlu0 %2230
    %2234 = vset.pattern.permute.xlu0 0
    %2235 = vperm.xlu0 %2234, %v2165
    %v2236 = vpop.permute.xlu0 %2235
    %2239 = vset.pattern.permute.xlu0 0
    %2240 = vperm.xlu0 %2239, %v2166
    %v2241 = vpop.permute.xlu0 %2240
    %2244 = vset.pattern.permute.xlu0 0
    %2245 = vperm.xlu0 %2244, %v2167
    %v2246 = vpop.permute.xlu0 %2245
    %v2248 = vmul.f32 %v2171, %v1423
    %v2249 = vmul.f32 %v2176, %v1424
    %v2250 = vmul.f32 %v2181, %v1425
    %v2251 = vmul.f32 %v2186, %v1426
    %v2252 = vmul.f32 %v2191, %v1427
    %v2253 = vmul.f32 %v2196, %v1428
    %v2254 = vmul.f32 %v2201, %v1429
    %v2255 = vmul.f32 %v2206, %v1430
    %v2256 = vmul.f32 %v2211, %v1431
    %v2257 = vmul.f32 %v2216, %v1432
    %v2258 = vmul.f32 %v2221, %v1433
    %v2259 = vmul.f32 %v2226, %v1434
    %v2260 = vmul.f32 %v2231, %v1435
    %v2261 = vmul.f32 %v2236, %v1436
    %v2262 = vmul.f32 %v2241, %v1437
    %v2263 = vmul.f32 %v2246, %v1438
    %v2264 = vadd.f32 %v2136, %v2248
    %v2265 = vadd.f32 %v2137, %v2249
    %v2266 = vadd.f32 %v2138, %v2250
    %v2267 = vadd.f32 %v2139, %v2251
    %v2268 = vadd.f32 %v2140, %v2252
    %v2269 = vadd.f32 %v2141, %v2253
    %v2270 = vadd.f32 %v2142, %v2254
    %v2271 = vadd.f32 %v2143, %v2255
    %v2272 = vadd.f32 %v2144, %v2256
    %v2273 = vadd.f32 %v2145, %v2257
    %v2274 = vadd.f32 %v2146, %v2258
    %v2275 = vadd.f32 %v2147, %v2259
    %v2276 = vadd.f32 %v2148, %v2260
    %v2277 = vadd.f32 %v2149, %v2261
    %v2278 = vadd.f32 %v2150, %v2262
    %v2279 = vadd.f32 %v2151, %v2263
    %2280 = vst.msk [vmem:[%s17] sm:$0xff] %vm121, %v2264
    %2281 = vst.msk [vmem:[%s17 + $0x8] sm:$0xff] %vm121, %v2265
    %2282 = vst.msk [vmem:[%s17 + $0x10] sm:$0xff] %vm121, %v2266
    %2283 = vst.msk [vmem:[%s17 + $0x18] sm:$0xff] %vm121, %v2267
    %2284 = vst.msk [vmem:[%s17 + $0x20] sm:$0xff] %vm121, %v2268
    %2285 = vst.msk [vmem:[%s17 + $0x28] sm:$0xff] %vm121, %v2269
    %2286 = vst.msk [vmem:[%s17 + $0x30] sm:$0xff] %vm121, %v2270
    %2287 = vst.msk [vmem:[%s17 + $0x38] sm:$0xff] %vm121, %v2271
    %2288 = vst.msk [vmem:[%s17 + $0x40] sm:$0xff] %vm121, %v2272
    %2289 = vst.msk [vmem:[%s17 + $0x48] sm:$0xff] %vm121, %v2273
    %2290 = vst.msk [vmem:[%s17 + $0x50] sm:$0xff] %vm121, %v2274
    %2291 = vst.msk [vmem:[%s17 + $0x58] sm:$0xff] %vm121, %v2275
    %2292 = vst.msk [vmem:[%s17 + $0x60] sm:$0xff] %vm121, %v2276
    %2293 = vst.msk [vmem:[%s17 + $0x68] sm:$0xff] %vm121, %v2277
    %2294 = vst.msk [vmem:[%s17 + $0x70] sm:$0xff] %vm121, %v2278
    %2295 = vst.msk [vmem:[%s17 + $0x78] sm:$0xff] %vm121, %v2279
    // Predicated region
    $region70: #{mshgat_forward.15} parent=1 // pred_check
      _
    $region71: #{mshgat_forward.15} parent=1 // pred_check_branch
      %2297 = sbr.rel (0) target = $region73
    $region72: #{mshgat_forward.15} parent=1 // pred_region
      _
    $region73: #{mshgat_forward.15} parent=1 // pred_fallthru
      _
    // Predicated region
    $region74: #{mshgat_forward.15} parent=1 // pred_check
      _
    $region75: #{mshgat_forward.15} parent=1 // pred_check_branch
      %2299 = sbr.rel (0) target = $region77
    $region76: #{mshgat_forward.15} parent=1 // pred_region
      %s2301 = ssub.s32 256, 256
      %2302 = vsyncadd [#allocation4], %s2301
      %s2303 = sshll.u32 [#allocation3], 4
      %s2304 = int_to_ptr.vmem [resolvable:$true] %s2303
      %2309 = dma.vmem_to_hbm [thread:$0]  %s2304, 256, %s18, [#allocation4], 128, 128, 8
    $region77: #{mshgat_forward.15} parent=1 // pred_fallthru
      _
    // Predicated region
    $region78: #{mshgat_forward.15} parent=1 // pred_check
      _
    $region79: #{mshgat_forward.15} parent=1 // pred_check_branch
      %2311 = sbr.rel (0) target = $region81
    $region80: #{mshgat_forward.15} parent=1 // pred_region
      _
    $region81: #{mshgat_forward.15} parent=1 // pred_fallthru
      _
    // Predicated region
    $region82: #{mshgat_forward.15} parent=1 // pred_check
      _
    $region83: #{mshgat_forward.15} parent=1 // pred_check_branch
      %2313 = sbr.rel (0) target = $region85
    $region84: #{mshgat_forward.15} parent=1 // pred_region
      %2314 = dma.done [#allocation4], 256
    $region85: #{mshgat_forward.15} parent=1 // pred_fallthru
      _
    %2315 = vsyncpa [#allocation4], 1

// kernel: mshgat_forward.21
$region0: #{mshgat_forward.21}
  #allocation0 [shape = 'u32[]', space=smem, size = 0x4, offset = 0x4, fixed_abs, tag = 'smem constant byte address 0x4 - core index']
  #allocation1 [shape = 'u32[144,128]{1,0:T(1,128)}', space=vmem, size = 0x12000, scoped, tag = 'internal scratch']
  %s0 = inlined_call_operand.vmem [shape: f32[8,4,192], index: 0, kind: input, shape index: {}]
  %s1 = inlined_call_operand.vmem [shape: f32[64,192], index: 1, kind: input, shape index: {}]
  %s2 = inlined_call_operand.vmem [shape: f32[1,192], index: 2, kind: input, shape index: {}]
  %s3 = inlined_call_operand.vmem [shape: f32[8,4,64], index: 3, kind: output, shape index: {}]
  %s4 = sld [smem:[#allocation0]]
  $region29: #{mshgat_forward.21} parent=0
    _
  %s6 = ssub.s32 1, %s4
  %s7 = scalar_select 0, %s6, %s4
  // Predicated region
  $region2: #{mshgat_forward.21} parent=0 // pred_check
    _
  $region3: #{mshgat_forward.21} parent=0 // pred_check_branch
    %9 = sbr.rel (0) target = $region5
  $region4: #{mshgat_forward.21} parent=0 // pred_region
    _
  $region5: #{mshgat_forward.21} parent=0 // pred_fallthru
    _
  // Predicated region
  $region6: #{mshgat_forward.21} parent=0 // pred_check
    _
  $region7: #{mshgat_forward.21} parent=0 // pred_check_branch
    %11 = sbr.rel (0) target = $region9
  $region8: #{mshgat_forward.21} parent=0 // pred_region
    _
  $region9: #{mshgat_forward.21} parent=0 // pred_fallthru
    _
  // Predicated region
  $region10: #{mshgat_forward.21} parent=0 // pred_check
    _
  $region11: #{mshgat_forward.21} parent=0 // pred_check_branch
    %13 = sbr.rel (0) target = $region13
  $region12: #{mshgat_forward.21} parent=0 // pred_region
    _
  $region13: #{mshgat_forward.21} parent=0 // pred_fallthru
    _
  %v14 = vld [vmem:[%s1] sm:$0xff]
  %v15 = vld [vmem:[%s1 + $0x8] sm:$0xff]
  %v16 = vld [vmem:[%s1 + $0x10] sm:$0xff]
  %v17 = vld [vmem:[%s1 + $0x18] sm:$0xff]
  %v18 = vld [vmem:[%s1 + $0x20] sm:$0xff]
  %v19 = vld [vmem:[%s1 + $0x28] sm:$0xff]
  %v20 = vld [vmem:[%s1 + $0x30] sm:$0xff]
  %v21 = vld [vmem:[%s1 + $0x38] sm:$0xff]
  %v22 = vld [vmem:[%s1 + $0x40] sm:$0xff]
  %v23 = vld [vmem:[%s1 + $0x48] sm:$0xff]
  %v24 = vld [vmem:[%s1 + $0x50] sm:$0xff]
  %v25 = vld [vmem:[%s1 + $0x58] sm:$0xff]
  %v26 = vld [vmem:[%s1 + $0x60] sm:$0xff]
  %v27 = vld [vmem:[%s1 + $0x68] sm:$0xff]
  %v28 = vld [vmem:[%s1 + $0x70] sm:$0xff]
  %v29 = vld [vmem:[%s1 + $0x78] sm:$0xff]
  %v30 = vld [vmem:[%s2] sm:$0x3]
  loop: start=0, step=1, limit=8
  $region14: #{mshgat_forward.21} parent=0 // loop_pre_header
    _
  $region15: #{mshgat_forward.21} parent=0 // loop_header
    %s32 = sphi 0, %s36
    %p33 = scmp.ge.s32.totalorder %s32, 8
    %v37 = vphi 0.0, %v150
  $region16: #{mshgat_forward.21} parent=0 // loop_header_branch
    %35 = sbr.rel (%p33) target = $region20
  $region17: #{mshgat_forward.21} parent=0 // loop_body
    %s38 = smul.u32 %s32, 2
    %s39 = smul.addr %s38, 4
    %s40 = scalar_lea.vmem %s0, %s39
    %v41 = vld [vmem:[%s40] sm:$0xff]
    %v43 = vlaneseq
    %v44 = vshrl.u32 %v43, 7
    %v45 = vsub.s32 0, %v44
    %v46 = vrot.slane %v30, %v45
    %v47 = vlaneseq
    %v48 = vshrl.u32 %v47, 7
    %v49 = vsub.s32 1, %v48
    %v50 = vrot.slane %v30, %v49
    %54 = vrot.lane.b32.xlu0 %v37, 64
    %v55 = vpop.permute.xlu0 %54
    %vm56 = vcmask 523264
    %v57 = vsel %vm56, %v55, 0
    %59 = vmatprep.subr.mxu0 %v15
    %60 = vmatpush1.msra.mxu0 %v14
    %61 = vmatprep.subr.mxu0 %v17
    %62 = vmatpush1.msra.mxu0 %v16
    %63 = vmatprep.subr.mxu0 %v19
    %64 = vmatpush1.msra.mxu0 %v18
    %65 = vmatprep.subr.mxu0 %v21
    %66 = vmatpush1.msra.mxu0 %v20
    %67 = vmatprep.subr.mxu0 %v23
    %68 = vmatpush1.msra.mxu0 %v22
    %69 = vmatprep.subr.mxu0 %v25
    %70 = vmatpush1.msra.mxu0 %v24
    %71 = vmatprep.subr.mxu0 %v27
    %72 = vmatpush1.msra.mxu0 %v26
    %73 = vmatprep.subr.mxu0 %v29
    %74 = vmatpush1.msra.mxu0 %v28
    %75 = vmatprep.subr.mxu0 0.0
    %76 = vmatpush1.msra.mxu0 0.0
    %77 = vmatprep.subr.mxu0 0.0
    %78 = vmatpush1.msra.mxu0 0.0
    %79 = vmatprep.subr.mxu0 0.0
    %80 = vmatpush1.msra.mxu0 0.0
    %81 = vmatprep.subr.mxu0 0.0
    %82 = vmatpush1.msra.mxu0 0.0
    %83 = vmatprep.subr.mxu0 0.0
    %84 = vmatpush1.msra.mxu0 0.0
    %85 = vmatprep.subr.mxu0 0.0
    %86 = vmatpush1.msra.mxu0 0.0
    %87 = vmatprep.subr.mxu0 0.0
    %88 = vmatpush1.msra.mxu0 0.0
    %89 = vmatprep.subr.mxu0 0.0
    %90 = vmatpush1.msra.mxu0 0.0
    %91 = vmatprep.subr.mxu0 0.0
    %92 = vmatpush1.msra.mxu0 0.0
    %93 = vmatprep.subr.mxu0 0.0
    %94 = vmatpush1.msra.mxu0 0.0
    %95 = vmatprep.subr.mxu0 0.0
    %96 = vmatpush1.msra.mxu0 0.0
    %97 = vmatprep.subr.mxu0 0.0
    %98 = vmatpush1.msra.mxu0 0.0
    %99 = vmatprep.subr.mxu0 0.0
    %100 = vmatpush1.msra.mxu0 0.0
    %101 = vmatprep.subr.mxu0 0.0
    %102 = vmatpush1.msra.mxu0 0.0
    %103 = vmatprep.subr.mxu0 0.0
    %104 = vmatpush1.msra.mxu0 0.0
    %105 = vmatprep.subr.mxu0 0.0
    %106 = vmatpush1.msra.mxu0 0.0
    %107 = vmatprep.subr.mxu0 0.0
    %108 = vmatpush1.msra.mxu0 0.0
    %109 = vmatprep.subr.mxu0 0.0
    %110 = vmatpush1.msra.mxu0 0.0
    %111 = vmatprep.subr.mxu0 0.0
    %112 = vmatpush1.msra.mxu0 0.0
    %113 = vmatprep.subr.mxu0 0.0
    %114 = vmatpush1.msra.mxu0 0.0
    %115 = vmatprep.subr.mxu0 0.0
    %116 = vmatpush1.msra.mxu0 0.0
    %117 = vmatprep.subr.mxu0 0.0
    %118 = vmatpush1.msra.mxu0 0.0
    %119 = vmatprep.subr.mxu0 0.0
    %120 = vmatpush1.msra.mxu0 0.0
    %121 = vmatprep.subr.mxu0 0.0
    %122 = vmatpush1.msra.mxu0 0.0
    %123 = vmatprep.mubr.f32.mxu0 0.0
    %124 = vmatmul.mubr.f32.gmra.mrb[0].mxu0 %v57
    %v125 = vpop.f32.mrb[0].mxu0
    %v126 = vadd.f32 %v46, %v125
    %v127 = vpop.f32.mrb[0].mxu0
    %v128 = vadd.f32 %v50, %v127
    %129 = vdwg.mxu0
    %v130 = vadd.f32 %v41, %v126
    %v131 = vxor.u32 %v130, 2147483648
    %v132 = vmul.f32 %v131, 1.442695
    %v133 = vpow.pop %v132
    %v134 = vadd.f32 %v133, 1.0
    %v135 = vrcp.pop %v134
    %v136 = vmul.f32 1.0, %v135
    %v137 = vmul.f32 %v136, %v128
    %v139 = vrot.slane %v41, 4
    %v141 = vadd.f32 %v139, %v137
    %v142 = vtanh.pop %v141
    %v143 = vsub.f32 1.0, %v136
    %145 = vrot.lane.b32.xlu0 %v142, 64
    %v146 = vpop.permute.xlu0 %145
    %v148 = vmul.f32 %v143, %v146
    %v149 = vmul.f32 %v136, %v37
    %v150 = vadd.f32 %v148, %v149
    %152 = vrot.lane.b32.xlu0 %v150, 64
    %v153 = vpop.permute.xlu0 %152
    %s155 = smul.u32 %s32, 4
    %s156 = scalar_lea.vmem %s3, %s155
    %vm157 = vcmask 519168
    %158 = vst.msk [vmem:[%s156] sm:$0xf] %vm157, %v153
  $region18: #{mshgat_forward.21} parent=0 // loop_footer
    %s36 = sadd.s32 1, %s32
  $region19: #{mshgat_forward.21} parent=0 // loop_footer_branch
    %31 = sbr.rel target = $region15
  $region20: #{mshgat_forward.21} parent=0 // loop_exit
    _
  // Predicated region
  $region21: #{mshgat_forward.21} parent=0 // pred_check
    _
  $region22: #{mshgat_forward.21} parent=0 // pred_check_branch
    %160 = sbr.rel (0) target = $region24
  $region23: #{mshgat_forward.21} parent=0 // pred_region
    _
  $region24: #{mshgat_forward.21} parent=0 // pred_fallthru
    _
  // Predicated region
  $region25: #{mshgat_forward.21} parent=0 // pred_check
    _
  $region26: #{mshgat_forward.21} parent=0 // pred_check_branch
    %162 = sbr.rel (0) target = $region28
  $region27: #{mshgat_forward.21} parent=0 // pred_region
    _
  $region28: #{mshgat_forward.21} parent=0 // pred_fallthru
    _

// kernel: mshgat_forward.19
$region0: #{mshgat_forward.19}
  #allocation0 [shape = 'u32[]', space=smem, size = 0x4, offset = 0x4, fixed_abs, tag = 'smem constant byte address 0x4 - core index']
  #allocation1 [shape = 'u32[144,128]{1,0:T(1,128)}', space=vmem, size = 0x12000, scoped, tag = 'internal scratch']
  %s0 = inlined_call_operand.vmem [shape: f32[32,64], index: 0, kind: input, shape index: {}]
  %s1 = inlined_call_operand.vmem [shape: f32[64,128], index: 1, kind: input, shape index: {}]
  %s2 = inlined_call_operand.vmem [shape: f32[1,128], index: 2, kind: input, shape index: {}]
  %s3 = inlined_call_operand.vmem [shape: f32[32,128], index: 3, kind: output, shape index: {}]
  %s4 = sld [smem:[#allocation0]]
  $region22: #{mshgat_forward.19} parent=0
    _
  %s6 = ssub.s32 1, %s4
  %s7 = scalar_select 0, %s6, %s4
  // Predicated region
  $region2: #{mshgat_forward.19} parent=0 // pred_check
    _
  $region3: #{mshgat_forward.19} parent=0 // pred_check_branch
    %9 = sbr.rel (0) target = $region5
  $region4: #{mshgat_forward.19} parent=0 // pred_region
    _
  $region5: #{mshgat_forward.19} parent=0 // pred_fallthru
    _
  // Predicated region
  $region6: #{mshgat_forward.19} parent=0 // pred_check
    _
  $region7: #{mshgat_forward.19} parent=0 // pred_check_branch
    %11 = sbr.rel (0) target = $region9
  $region8: #{mshgat_forward.19} parent=0 // pred_region
    _
  $region9: #{mshgat_forward.19} parent=0 // pred_fallthru
    _
  // Predicated region
  $region10: #{mshgat_forward.19} parent=0 // pred_check
    _
  $region11: #{mshgat_forward.19} parent=0 // pred_check_branch
    %13 = sbr.rel (0) target = $region13
  $region12: #{mshgat_forward.19} parent=0 // pred_region
    _
  $region13: #{mshgat_forward.19} parent=0 // pred_fallthru
    _
  %v15 = vld [vmem:[%s0] sm:$0xff]
  %v16 = vld [vmem:[%s0 + $0x8] sm:$0xff]
  %v17 = vld [vmem:[%s0 + $0x10] sm:$0xff]
  %v18 = vld [vmem:[%s0 + $0x18] sm:$0xff]
  %v19 = vld [vmem:[%s1] sm:$0xff]
  %v20 = vld [vmem:[%s1 + $0x8] sm:$0xff]
  %v21 = vld [vmem:[%s1 + $0x10] sm:$0xff]
  %v22 = vld [vmem:[%s1 + $0x18] sm:$0xff]
  %v23 = vld [vmem:[%s1 + $0x20] sm:$0xff]
  %v24 = vld [vmem:[%s1 + $0x28] sm:$0xff]
  %v25 = vld [vmem:[%s1 + $0x30] sm:$0xff]
  %v26 = vld [vmem:[%s1 + $0x38] sm:$0xff]
  %v27 = vpack.c.bf16 %v16, %v15
  %v28 = vpack.c.bf16 %v18, %v17
  %v29 = vpack.c.bf16 %v20, %v19
  %v30 = vpack.c.bf16 %v22, %v21
  %v31 = vpack.c.bf16 %v24, %v23
  %v32 = vpack.c.bf16 %v26, %v25
  %v33 = vld [vmem:[%s2] sm:$0x1]
  %v35 = vlaneseq
  %v36 = vshrl.u32 %v35, 7
  %v37 = vsub.s32 0, %v36
  %v38 = vrot.slane %v33, %v37
  %vm40 = vcmask 523264
  %v42 = vsel %vm40, %v27, 0
  %v45 = vsel %vm40, %v28, 0
  %47 = vmatprep.subr.bf16.mxu0 0
  %48 = vmatpush1.bf16.msra.mxu0 %v29
  %49 = vmatprep.subr.bf16.mxu0 0
  %50 = vmatpush1.bf16.msra.mxu0 %v30
  %51 = vmatprep.subr.bf16.mxu0 0
  %52 = vmatpush1.bf16.msra.mxu0 %v31
  %53 = vmatprep.subr.bf16.mxu0 0
  %54 = vmatpush1.bf16.msra.mxu0 %v32
  %55 = vmatprep.subr.bf16.mxu0 0
  %56 = vmatpush1.bf16.msra.mxu0 0
  %57 = vmatprep.subr.bf16.mxu0 0
  %58 = vmatpush1.bf16.msra.mxu0 0
  %59 = vmatprep.subr.bf16.mxu0 0
  %60 = vmatpush1.bf16.msra.mxu0 0
  %61 = vmatprep.subr.bf16.mxu0 0
  %62 = vmatpush1.bf16.msra.mxu0 0
  %63 = vmatprep.subr.bf16.mxu0 0
  %64 = vmatpush1.bf16.msra.mxu0 0
  %65 = vmatprep.subr.bf16.mxu0 0
  %66 = vmatpush1.bf16.msra.mxu0 0
  %67 = vmatprep.subr.bf16.mxu0 0
  %68 = vmatpush1.bf16.msra.mxu0 0
  %69 = vmatprep.subr.bf16.mxu0 0
  %70 = vmatpush1.bf16.msra.mxu0 0
  %71 = vmatprep.subr.bf16.mxu0 0
  %72 = vmatpush1.bf16.msra.mxu0 0
  %73 = vmatprep.subr.bf16.mxu0 0
  %74 = vmatpush1.bf16.msra.mxu0 0
  %75 = vmatprep.subr.bf16.mxu0 0
  %76 = vmatpush1.bf16.msra.mxu0 0
  %77 = vmatprep.subr.bf16.mxu0 0
  %78 = vmatpush1.bf16.msra.mxu0 0
  %79 = vmatprep.mubr.bf16.mxu0 0
  %80 = vmatmul.mubr.bf16.gmra.mrb[0].mxu0 %v42
  %v81 = vpop.f32.mrb[0].mxu0
  %v82 = vadd.f32 %v38, %v81
  %v83 = vpop.f32.mrb[0].mxu0
  %v84 = vpop.f32.mrb[0].mxu0
  %v85 = vadd.f32 %v38, %v84
  %v86 = vpop.f32.mrb[0].mxu0
  %87 = vmatprep.mubr.bf16.mxu0 0
  %88 = vmatmul.mubr.bf16.gmra.mrb[0].mxu0 %v45
  %v89 = vpop.f32.mrb[0].mxu0
  %v90 = vadd.f32 %v38, %v89
  %v91 = vpop.f32.mrb[0].mxu0
  %v92 = vpop.f32.mrb[0].mxu0
  %v93 = vadd.f32 %v38, %v92
  %v94 = vpop.f32.mrb[0].mxu0
  %95 = vdwg.mxu0
  %96 = vst [vmem:[%s3] sm:$0xff] %v82
  %97 = vst [vmem:[%s3 + $0x8] sm:$0xff] %v85
  %98 = vst [vmem:[%s3 + $0x10] sm:$0xff] %v90
  %99 = vst [vmem:[%s3 + $0x18] sm:$0xff] %v93
  // Predicated region
  $region14: #{mshgat_forward.19} parent=0 // pred_check
    _
  $region15: #{mshgat_forward.19} parent=0 // pred_check_branch
    %101 = sbr.rel (0) target = $region17
  $region16: #{mshgat_forward.19} parent=0 // pred_region
    _
  $region17: #{mshgat_forward.19} parent=0 // pred_fallthru
    _
  // Predicated region
  $region18: #{mshgat_forward.19} parent=0 // pred_check
    _
  $region19: #{mshgat_forward.19} parent=0 // pred_check_branch
    %103 = sbr.rel (0) target = $region21
  $region20: #{mshgat_forward.19} parent=0 // pred_region
    _
  $region21: #{mshgat_forward.19} parent=0 // pred_fallthru
    _

// kernel: mshgat_forward.23
$region0: #{mshgat_forward.23}
  #allocation0 [shape = 'u32[]', space=smem, size = 0x4, offset = 0x4, fixed_abs, tag = 'smem constant byte address 0x4 - core index']
  #allocation1 [shape = 'u32[144,128]{1,0:T(1,128)}', space=vmem, size = 0x12000, scoped, tag = 'internal scratch']
  %s0 = inlined_call_operand.vmem [shape: f32[32,64], index: 0, kind: input, shape index: {}]
  %s1 = inlined_call_operand.vmem [shape: f32[64,192], index: 1, kind: input, shape index: {}]
  %s2 = inlined_call_operand.vmem [shape: f32[1,192], index: 2, kind: input, shape index: {}]
  %s3 = inlined_call_operand.vmem [shape: f32[32,192], index: 3, kind: output, shape index: {}]
  %s4 = sld [smem:[#allocation0]]
  $region22: #{mshgat_forward.23} parent=0
    _
  %s6 = ssub.s32 1, %s4
  %s7 = scalar_select 0, %s6, %s4
  // Predicated region
  $region2: #{mshgat_forward.23} parent=0 // pred_check
    _
  $region3: #{mshgat_forward.23} parent=0 // pred_check_branch
    %9 = sbr.rel (0) target = $region5
  $region4: #{mshgat_forward.23} parent=0 // pred_region
    _
  $region5: #{mshgat_forward.23} parent=0 // pred_fallthru
    _
  // Predicated region
  $region6: #{mshgat_forward.23} parent=0 // pred_check
    _
  $region7: #{mshgat_forward.23} parent=0 // pred_check_branch
    %11 = sbr.rel (0) target = $region9
  $region8: #{mshgat_forward.23} parent=0 // pred_region
    _
  $region9: #{mshgat_forward.23} parent=0 // pred_fallthru
    _
  // Predicated region
  $region10: #{mshgat_forward.23} parent=0 // pred_check
    _
  $region11: #{mshgat_forward.23} parent=0 // pred_check_branch
    %13 = sbr.rel (0) target = $region13
  $region12: #{mshgat_forward.23} parent=0 // pred_region
    _
  $region13: #{mshgat_forward.23} parent=0 // pred_fallthru
    _
  %v15 = vld [vmem:[%s0] sm:$0xff]
  %v16 = vld [vmem:[%s0 + $0x8] sm:$0xff]
  %v17 = vld [vmem:[%s0 + $0x10] sm:$0xff]
  %v18 = vld [vmem:[%s0 + $0x18] sm:$0xff]
  %v19 = vld [vmem:[%s1] sm:$0xff]
  %v20 = vld [vmem:[%s1 + $0x8] sm:$0xff]
  %v21 = vld [vmem:[%s1 + $0x10] sm:$0xff]
  %v22 = vld [vmem:[%s1 + $0x18] sm:$0xff]
  %v23 = vld [vmem:[%s1 + $0x20] sm:$0xff]
  %v24 = vld [vmem:[%s1 + $0x28] sm:$0xff]
  %v25 = vld [vmem:[%s1 + $0x30] sm:$0xff]
  %v26 = vld [vmem:[%s1 + $0x38] sm:$0xff]
  %v27 = vld [vmem:[%s1 + $0x40] sm:$0xff]
  %v28 = vld [vmem:[%s1 + $0x48] sm:$0xff]
  %v29 = vld [vmem:[%s1 + $0x50] sm:$0xff]
  %v30 = vld [vmem:[%s1 + $0x58] sm:$0xff]
  %v31 = vld [vmem:[%s1 + $0x60] sm:$0xff]
  %v32 = vld [vmem:[%s1 + $0x68] sm:$0xff]
  %v33 = vld [vmem:[%s1 + $0x70] sm:$0xff]
  %v34 = vld [vmem:[%s1 + $0x78] sm:$0xff]
  %v35 = vpack.c.bf16 %v16, %v15
  %v36 = vpack.c.bf16 %v18, %v17
  %v37 = vpack.c.bf16 %v21, %v19
  %v38 = vpack.c.bf16 %v22, %v20
  %v39 = vpack.c.bf16 %v25, %v23
  %v40 = vpack.c.bf16 %v26, %v24
  %v41 = vpack.c.bf16 %v29, %v27
  %v42 = vpack.c.bf16 %v30, %v28
  %v43 = vpack.c.bf16 %v33, %v31
  %v44 = vpack.c.bf16 %v34, %v32
  %v45 = vld [vmem:[%s2] sm:$0x3]
  %v47 = vlaneseq
  %v48 = vshrl.u32 %v47, 7
  %v49 = vsub.s32 0, %v48
  %v50 = vrot.slane %v45, %v49
  %v51 = vlaneseq
  %v52 = vshrl.u32 %v51, 7
  %v53 = vsub.s32 1, %v52
  %v54 = vrot.slane %v45, %v53
  %vm57 = vcmask 523264
  %v59 = vsel %vm57, %v35, 0
  %v62 = vsel %vm57, %v36, 0
  %64 = vmatprep.subr.bf16.mxu0 %v38
  %65 = vmatpush1.bf16.msra.mxu0 %v37
  %66 = vmatprep.subr.bf16.mxu0 %v40
  %67 = vmatpush1.bf16.msra.mxu0 %v39
  %68 = vmatprep.subr.bf16.mxu0 %v42
  %69 = vmatpush1.bf16.msra.mxu0 %v41
  %70 = vmatprep.subr.bf16.mxu0 %v44
  %71 = vmatpush1.bf16.msra.mxu0 %v43
  %72 = vmatprep.subr.bf16.mxu0 0
  %73 = vmatpush1.bf16.msra.mxu0 0
  %74 = vmatprep.subr.bf16.mxu0 0
  %75 = vmatpush1.bf16.msra.mxu0 0
  %76 = vmatprep.subr.bf16.mxu0 0
  %77 = vmatpush1.bf16.msra.mxu0 0
  %78 = vmatprep.subr.bf16.mxu0 0
  %79 = vmatpush1.bf16.msra.mxu0 0
  %80 = vmatprep.subr.bf16.mxu0 0
  %81 = vmatpush1.bf16.msra.mxu0 0
  %82 = vmatprep.subr.bf16.mxu0 0
  %83 = vmatpush1.bf16.msra.mxu0 0
  %84 = vmatprep.subr.bf16.mxu0 0
  %85 = vmatpush1.bf16.msra.mxu0 0
  %86 = vmatprep.subr.bf16.mxu0 0
  %87 = vmatpush1.bf16.msra.mxu0 0
  %88 = vmatprep.subr.bf16.mxu0 0
  %89 = vmatpush1.bf16.msra.mxu0 0
  %90 = vmatprep.subr.bf16.mxu0 0
  %91 = vmatpush1.bf16.msra.mxu0 0
  %92 = vmatprep.subr.bf16.mxu0 0
  %93 = vmatpush1.bf16.msra.mxu0 0
  %94 = vmatprep.subr.bf16.mxu0 0
  %95 = vmatpush1.bf16.msra.mxu0 0
  %96 = vmatprep.mubr.bf16.mxu0 0
  %97 = vmatmul.mubr.bf16.gmra.mrb[0].mxu0 %v59
  %v98 = vpop.f32.mrb[0].mxu0
  %v99 = vadd.f32 %v50, %v98
  %v100 = vpop.f32.mrb[0].mxu0
  %v101 = vadd.f32 %v54, %v100
  %v102 = vpop.f32.mrb[0].mxu0
  %v103 = vadd.f32 %v50, %v102
  %v104 = vpop.f32.mrb[0].mxu0
  %v105 = vadd.f32 %v54, %v104
  %106 = vmatprep.mubr.bf16.mxu0 0
  %107 = vmatmul.mubr.bf16.gmra.mrb[0].mxu0 %v62
  %v108 = vpop.f32.mrb[0].mxu0
  %v109 = vadd.f32 %v50, %v108
  %v110 = vpop.f32.mrb[0].mxu0
  %v111 = vadd.f32 %v54, %v110
  %v112 = vpop.f32.mrb[0].mxu0
  %v113 = vadd.f32 %v50, %v112
  %v114 = vpop.f32.mrb[0].mxu0
  %v115 = vadd.f32 %v54, %v114
  %116 = vdwg.mxu0
  %117 = vst [vmem:[%s3] sm:$0xff] %v99
  %118 = vst.msk [vmem:[%s3 + $0x8] sm:$0xff] %vm57, %v101
  %119 = vst [vmem:[%s3 + $0x10] sm:$0xff] %v103
  %120 = vst.msk [vmem:[%s3 + $0x18] sm:$0xff] %vm57, %v105
  %121 = vst [vmem:[%s3 + $0x20] sm:$0xff] %v109
  %122 = vst.msk [vmem:[%s3 + $0x28] sm:$0xff] %vm57, %v111
  %123 = vst [vmem:[%s3 + $0x30] sm:$0xff] %v113
  %124 = vst.msk [vmem:[%s3 + $0x38] sm:$0xff] %vm57, %v115
  // Predicated region
  $region14: #{mshgat_forward.23} parent=0 // pred_check
    _
  $region15: #{mshgat_forward.23} parent=0 // pred_check_branch
    %126 = sbr.rel (0) target = $region17
  $region16: #{mshgat_forward.23} parent=0 // pred_region
    _
  $region17: #{mshgat_forward.23} parent=0 // pred_fallthru
    _
  // Predicated region
  $region18: #{mshgat_forward.23} parent=0 // pred_check
    _
  $region19: #{mshgat_forward.23} parent=0 // pred_check_branch
    %128 = sbr.rel (0) target = $region21
  $region20: #{mshgat_forward.23} parent=0 // pred_region
    _
  $region21: #{mshgat_forward.23} parent=0 // pred_fallthru
    _

// kernel: mshgat_forward.22
$region0: #{mshgat_forward.22}
  #allocation0 [shape = 'u32[]', space=smem, size = 0x4, offset = 0x4, fixed_abs, tag = 'smem constant byte address 0x4 - core index']
  #allocation1 [shape = 'u32[144,128]{1,0:T(1,128)}', space=vmem, size = 0x12000, scoped, tag = 'internal scratch']
  %s0 = inlined_call_operand.vmem [shape: f32[32,128], index: 0, kind: input, shape index: {}]
  %s1 = inlined_call_operand.vmem [shape: f32[32,64], index: 1, kind: input, shape index: {}]
  %s2 = inlined_call_operand.vmem [shape: f32[128,64], index: 2, kind: input, shape index: {}]
  %s3 = inlined_call_operand.vmem [shape: f32[1,64], index: 3, kind: input, shape index: {}]
  %s4 = inlined_call_operand.vmem [shape: f32[1,64], index: 4, kind: input, shape index: {}]
  %s5 = inlined_call_operand.vmem [shape: f32[1,64], index: 5, kind: input, shape index: {}]
  %s6 = inlined_call_operand.vmem [shape: f32[32,64], index: 6, kind: output, shape index: {}]
  %s7 = sld [smem:[#allocation0]]
  $region34: #{mshgat_forward.22} parent=0
    _
  %s9 = ssub.s32 1, %s7
  %s10 = scalar_select 0, %s9, %s7
  // Predicated region
  $region2: #{mshgat_forward.22} parent=0 // pred_check
    _
  $region3: #{mshgat_forward.22} parent=0 // pred_check_branch
    %12 = sbr.rel (0) target = $region5
  $region4: #{mshgat_forward.22} parent=0 // pred_region
    _
  $region5: #{mshgat_forward.22} parent=0 // pred_fallthru
    _
  // Predicated region
  $region6: #{mshgat_forward.22} parent=0 // pred_check
    _
  $region7: #{mshgat_forward.22} parent=0 // pred_check_branch
    %14 = sbr.rel (0) target = $region9
  $region8: #{mshgat_forward.22} parent=0 // pred_region
    _
  $region9: #{mshgat_forward.22} parent=0 // pred_fallthru
    _
  // Predicated region
  $region10: #{mshgat_forward.22} parent=0 // pred_check
    _
  $region11: #{mshgat_forward.22} parent=0 // pred_check_branch
    %16 = sbr.rel (0) target = $region13
  $region12: #{mshgat_forward.22} parent=0 // pred_region
    _
  $region13: #{mshgat_forward.22} parent=0 // pred_fallthru
    _
  // Predicated region
  $region14: #{mshgat_forward.22} parent=0 // pred_check
    _
  $region15: #{mshgat_forward.22} parent=0 // pred_check_branch
    %18 = sbr.rel (0) target = $region17
  $region16: #{mshgat_forward.22} parent=0 // pred_region
    _
  $region17: #{mshgat_forward.22} parent=0 // pred_fallthru
    _
  // Predicated region
  $region18: #{mshgat_forward.22} parent=0 // pred_check
    _
  $region19: #{mshgat_forward.22} parent=0 // pred_check_branch
    %20 = sbr.rel (0) target = $region21
  $region20: #{mshgat_forward.22} parent=0 // pred_region
    _
  $region21: #{mshgat_forward.22} parent=0 // pred_fallthru
    _
  // Predicated region
  $region22: #{mshgat_forward.22} parent=0 // pred_check
    _
  $region23: #{mshgat_forward.22} parent=0 // pred_check_branch
    %22 = sbr.rel (0) target = $region25
  $region24: #{mshgat_forward.22} parent=0 // pred_region
    _
  $region25: #{mshgat_forward.22} parent=0 // pred_fallthru
    _
  %v24 = vld [vmem:[%s0] sm:$0xff]
  %v25 = vld [vmem:[%s0 + $0x8] sm:$0xff]
  %v26 = vld [vmem:[%s0 + $0x10] sm:$0xff]
  %v27 = vld [vmem:[%s0 + $0x18] sm:$0xff]
  %v28 = vld [vmem:[%s2] sm:$0xff]
  %v29 = vld [vmem:[%s2 + $0x8] sm:$0xff]
  %v30 = vld [vmem:[%s2 + $0x10] sm:$0xff]
  %v31 = vld [vmem:[%s2 + $0x18] sm:$0xff]
  %v32 = vld [vmem:[%s2 + $0x20] sm:$0xff]
  %v33 = vld [vmem:[%s2 + $0x28] sm:$0xff]
  %v34 = vld [vmem:[%s2 + $0x30] sm:$0xff]
  %v35 = vld [vmem:[%s2 + $0x38] sm:$0xff]
  %v36 = vld [vmem:[%s2 + $0x40] sm:$0xff]
  %v37 = vld [vmem:[%s2 + $0x48] sm:$0xff]
  %v38 = vld [vmem:[%s2 + $0x50] sm:$0xff]
  %v39 = vld [vmem:[%s2 + $0x58] sm:$0xff]
  %v40 = vld [vmem:[%s2 + $0x60] sm:$0xff]
  %v41 = vld [vmem:[%s2 + $0x68] sm:$0xff]
  %v42 = vld [vmem:[%s2 + $0x70] sm:$0xff]
  %v43 = vld [vmem:[%s2 + $0x78] sm:$0xff]
  %v44 = vpack.c.bf16 %v25, %v24
  %v45 = vpack.c.bf16 %v27, %v26
  %v46 = vpack.c.bf16 %v29, %v28
  %v47 = vpack.c.bf16 %v31, %v30
  %v48 = vpack.c.bf16 %v33, %v32
  %v49 = vpack.c.bf16 %v35, %v34
  %v50 = vpack.c.bf16 %v37, %v36
  %v51 = vpack.c.bf16 %v39, %v38
  %v52 = vpack.c.bf16 %v41, %v40
  %v53 = vpack.c.bf16 %v43, %v42
  %v54 = vld [vmem:[%s3] sm:$0x1]
  %v56 = vlaneseq
  %v57 = vshrl.u32 %v56, 7
  %v58 = vsub.s32 0, %v57
  %v59 = vrot.slane %v54, %v58
  %61 = vmatprep.subr.bf16.mxu0 0
  %62 = vmatpush1.bf16.msra.mxu0 %v46
  %63 = vmatprep.subr.bf16.mxu0 0
  %64 = vmatpush1.bf16.msra.mxu0 %v47
  %65 = vmatprep.subr.bf16.mxu0 0
  %66 = vmatpush1.bf16.msra.mxu0 %v48
  %67 = vmatprep.subr.bf16.mxu0 0
  %68 = vmatpush1.bf16.msra.mxu0 %v49
  %69 = vmatprep.subr.bf16.mxu0 0
  %70 = vmatpush1.bf16.msra.mxu0 %v50
  %71 = vmatprep.subr.bf16.mxu0 0
  %72 = vmatpush1.bf16.msra.mxu0 %v51
  %73 = vmatprep.subr.bf16.mxu0 0
  %74 = vmatpush1.bf16.msra.mxu0 %v52
  %75 = vmatprep.subr.bf16.mxu0 0
  %76 = vmatpush1.bf16.msra.mxu0 %v53
  %77 = vmatprep.subr.bf16.mxu0 0
  %78 = vmatpush1.bf16.msra.mxu0 0
  %79 = vmatprep.subr.bf16.mxu0 0
  %80 = vmatpush1.bf16.msra.mxu0 0
  %81 = vmatprep.subr.bf16.mxu0 0
  %82 = vmatpush1.bf16.msra.mxu0 0
  %83 = vmatprep.subr.bf16.mxu0 0
  %84 = vmatpush1.bf16.msra.mxu0 0
  %85 = vmatprep.subr.bf16.mxu0 0
  %86 = vmatpush1.bf16.msra.mxu0 0
  %87 = vmatprep.subr.bf16.mxu0 0
  %88 = vmatpush1.bf16.msra.mxu0 0
  %89 = vmatprep.subr.bf16.mxu0 0
  %90 = vmatpush1.bf16.msra.mxu0 0
  %91 = vmatprep.subr.bf16.mxu0 0
  %92 = vmatpush1.bf16.msra.mxu0 0
  %93 = vmatprep.mubr.bf16.mxu0 0
  %94 = vmatmul.mubr.bf16.gmra.mrb[0].mxu0 %v44
  %v95 = vpop.f32.mrb[0].mxu0
  %v96 = vadd.f32 %v59, %v95
  %v97 = vpop.f32.mrb[0].mxu0
  %v98 = vpop.f32.mrb[0].mxu0
  %v99 = vadd.f32 %v59, %v98
  %v100 = vpop.f32.mrb[0].mxu0
  %101 = vmatprep.mubr.bf16.mxu0 0
  %102 = vmatmul.mubr.bf16.gmra.mrb[0].mxu0 %v45
  %v103 = vpop.f32.mrb[0].mxu0
  %v104 = vadd.f32 %v59, %v103
  %v105 = vpop.f32.mrb[0].mxu0
  %v106 = vpop.f32.mrb[0].mxu0
  %v107 = vadd.f32 %v59, %v106
  %v108 = vpop.f32.mrb[0].mxu0
  %109 = vdwg.mxu0
  %v110 = vld [vmem:[%s1] sm:$0xff]
  %v111 = vld [vmem:[%s1 + $0x8] sm:$0xff]
  %v112 = vld [vmem:[%s1 + $0x10] sm:$0xff]
  %v113 = vld [vmem:[%s1 + $0x18] sm:$0xff]
  %v114 = vadd.f32 %v96, %v110
  %v115 = vadd.f32 %v99, %v111
  %v116 = vadd.f32 %v104, %v112
  %v117 = vadd.f32 %v107, %v113
  %vm118 = vcmask 523264
  %v119 = vsel %vm118, %v114, 0.0
  %120 = vadd.xlane.f32.xlu0 %v119
  %v121 = vpop.xlane.xlu0 %120
  %v122 = vsel %vm118, %v115, 0.0
  %123 = vadd.xlane.f32.xlu0 %v122
  %v124 = vpop.xlane.xlu0 %123
  %v125 = vsel %vm118, %v116, 0.0
  %126 = vadd.xlane.f32.xlu0 %v125
  %v127 = vpop.xlane.xlu0 %126
  %v128 = vsel %vm118, %v117, 0.0
  %129 = vadd.xlane.f32.xlu0 %v128
  %v130 = vpop.xlane.xlu0 %129
  %v131 = vrcp.pop 64.0
  %v132 = vmul.f32 %v121, %v131
  %v133 = vmul.f32 %v124, %v131
  %v134 = vmul.f32 %v127, %v131
  %v135 = vmul.f32 %v130, %v131
  %v136 = vsub.f32 %v114, %v132
  %v137 = vsub.f32 %v115, %v133
  %v138 = vsub.f32 %v116, %v134
  %v139 = vsub.f32 %v117, %v135
  %v140 = vmul.f32 %v136, %v136
  %v141 = vmul.f32 %v137, %v137
  %v142 = vmul.f32 %v138, %v138
  %v143 = vmul.f32 %v139, %v139
  %v144 = vsel %vm118, %v140, 0.0
  %145 = vadd.xlane.f32.xlu0 %v144
  %v146 = vpop.xlane.xlu0 %145
  %v147 = vsel %vm118, %v141, 0.0
  %148 = vadd.xlane.f32.xlu0 %v147
  %v149 = vpop.xlane.xlu0 %148
  %v150 = vsel %vm118, %v142, 0.0
  %151 = vadd.xlane.f32.xlu0 %v150
  %v152 = vpop.xlane.xlu0 %151
  %v153 = vsel %vm118, %v143, 0.0
  %154 = vadd.xlane.f32.xlu0 %v153
  %v155 = vpop.xlane.xlu0 %154
  %v156 = vmul.f32 %v146, %v131
  %v157 = vmul.f32 %v149, %v131
  %v158 = vmul.f32 %v152, %v131
  %v159 = vmul.f32 %v155, %v131
  %v160 = vadd.f32 %v156, 1e-12
  %v161 = vadd.f32 %v157, 1e-12
  %v162 = vadd.f32 %v158, 1e-12
  %v163 = vadd.f32 %v159, 1e-12
  %v164 = vrsqrt.pop %v160
  %v165 = vrsqrt.pop %v161
  %v166 = vrsqrt.pop %v162
  %v167 = vrsqrt.pop %v163
  %v168 = vmul.f32 %v136, %v164
  %v169 = vmul.f32 %v137, %v165
  %v170 = vmul.f32 %v138, %v166
  %v171 = vmul.f32 %v139, %v167
  %v172 = vld [vmem:[%s4] sm:$0x1]
  %v174 = vlaneseq
  %v175 = vshrl.u32 %v174, 7
  %v176 = vsub.s32 0, %v175
  %v177 = vrot.slane %v172, %v176
  %v179 = vmul.f32 %v168, %v177
  %v180 = vmul.f32 %v169, %v177
  %v181 = vmul.f32 %v170, %v177
  %v182 = vmul.f32 %v171, %v177
  %v183 = vld [vmem:[%s5] sm:$0x1]
  %v185 = vlaneseq
  %v186 = vshrl.u32 %v185, 7
  %v187 = vsub.s32 0, %v186
  %v188 = vrot.slane %v183, %v187
  %v190 = vadd.f32 %v179, %v188
  %v191 = vadd.f32 %v180, %v188
  %v192 = vadd.f32 %v181, %v188
  %v193 = vadd.f32 %v182, %v188
  %194 = vst.msk [vmem:[%s6] sm:$0xff] %vm118, %v190
  %195 = vst.msk [vmem:[%s6 + $0x8] sm:$0xff] %vm118, %v191
  %196 = vst.msk [vmem:[%s6 + $0x10] sm:$0xff] %vm118, %v192
  %197 = vst.msk [vmem:[%s6 + $0x18] sm:$0xff] %vm118, %v193
  // Predicated region
  $region26: #{mshgat_forward.22} parent=0 // pred_check
    _
  $region27: #{mshgat_forward.22} parent=0 // pred_check_branch
    %199 = sbr.rel (0) target = $region29
  $region28: #{mshgat_forward.22} parent=0 // pred_region
    _
  $region29: #{mshgat_forward.22} parent=0 // pred_fallthru
    _
  // Predicated region
  $region30: #{mshgat_forward.22} parent=0 // pred_check
    _
  $region31: #{mshgat_forward.22} parent=0 // pred_check_branch
    %201 = sbr.rel (0) target = $region33
  $region32: #{mshgat_forward.22} parent=0 // pred_region
    _
  $region33: #{mshgat_forward.22} parent=0 // pred_fallthru
    _

// kernel: mshgat_forward.24
$region0: #{mshgat_forward.24}
  #allocation0 [shape = 'u32[]', space=smem, size = 0x4, offset = 0x4, fixed_abs, tag = 'smem constant byte address 0x4 - core index']
  #allocation1 [shape = 'u32[144,128]{1,0:T(1,128)}', space=vmem, size = 0x12000, scoped, tag = 'internal scratch']
  %s0 = inlined_call_operand.vmem [shape: f32[4,8,192], index: 0, kind: input, shape index: {}]
  %s1 = inlined_call_operand.vmem [shape: f32[4,1,8], index: 1, kind: input, shape index: {}]
  %s2 = inlined_call_operand.vmem [shape: f32[4,8,64], index: 2, kind: output, shape index: {}]
  %s3 = sld [smem:[#allocation0]]
  $region41: #{mshgat_forward.24} parent=0
    _
  %s5 = ssub.s32 1, %s3
  %s6 = scalar_select 0, %s5, %s3
  loop: start=0, step=1, limit=6
  $region2: #{mshgat_forward.24} parent=0 // loop_pre_header
    _
  $region3: #{mshgat_forward.24} parent=0 // loop_header
    %s8 = sphi 0, %s12
    %p9 = scmp.ge.s32.totalorder %s8, 6
    %s18 = sphi 0, %s20
    %s21 = sphi 0, %s18
    %s22 = sphi 0, %s21
    %s38 = sphi 0, %s22
    %s44 = sphi 0, %s46
    %s47 = sphi 0, %s44
    %s48 = sphi 0, %s47
    %s64 = sphi 0, %s48
    %s70 = sphi 0, %s72
    %s73 = sphi 0, %s70
    %s74 = sphi 0, %s73
    %s90 = sphi 0, %s74
  $region4: #{mshgat_forward.24} parent=0 // loop_header_branch
    %11 = sbr.rel (%p9) target = $region8
  $region5: #{mshgat_forward.24} parent=0 // loop_body
    %s13 = ssub.s32 %s8, 1
    %s14 = ssub.s32 %s8, 2
    %s15 = sadd.s32 %s8, 1
    %s16 = ssub.s32 %s8, %s15
    %p17 = scmp.eq.s32.totalorder %s16, 0
    %s19 = sadd.s32 %s18, 1
    %s20 = scalar_select %p17, %s18, %s19
    %p23 = pneg %p17
    %p24 = scmp.eq.s32.totalorder %s8, 3
    %p25 = por %p23, %p24
    %p26 = scmp.ne.s32.totalorder %s18, %s21
    %p27 = scmp.eq.s32.totalorder %s8, 0
    %p28 = por %p26, %p27
    %p29 = scmp.ne.s32.totalorder %s18, %s21
    %p30 = scmp.eq.s32.totalorder %s13, 3
    %p31 = por %p29, %p30
    %p32 = scmp.ne.s32.totalorder %s21, %s22
    %p33 = scmp.eq.s32.totalorder %s13, 0
    %p34 = por %p32, %p33
    %p35 = scmp.ne.s32.totalorder %s21, %s22
    %p36 = scmp.eq.s32.totalorder %s14, 3
    %p37 = por %p35, %p36
    %p39 = scmp.ne.s32.totalorder %s22, %s38
    %p40 = scmp.eq.s32.totalorder %s14, 0
    %p41 = por %p39, %p40
    %s42 = ssub.s32 %s8, %s15
    %p43 = scmp.eq.s32.totalorder %s42, 0
    %s45 = sadd.s32 %s44, 1
    %s46 = scalar_select %p43, %s44, %s45
    %p49 = pneg %p43
    %p50 = scmp.eq.s32.totalorder %s8, 3
    %p51 = por %p49, %p50
    %p52 = scmp.ne.s32.totalorder %s44, %s47
    %p53 = scmp.eq.s32.totalorder %s8, 0
    %p54 = por %p52, %p53
    %p55 = scmp.ne.s32.totalorder %s44, %s47
    %p56 = scmp.eq.s32.totalorder %s13, 3
    %p57 = por %p55, %p56
    %p58 = scmp.ne.s32.totalorder %s47, %s48
    %p59 = scmp.eq.s32.totalorder %s13, 0
    %p60 = por %p58, %p59
    %p61 = scmp.ne.s32.totalorder %s47, %s48
    %p62 = scmp.eq.s32.totalorder %s14, 3
    %p63 = por %p61, %p62
    %p65 = scmp.ne.s32.totalorder %s48, %s64
    %p66 = scmp.eq.s32.totalorder %s14, 0
    %p67 = por %p65, %p66
    %s68 = ssub.s32 %s8, %s15
    %p69 = scmp.eq.s32.totalorder %s68, 0
    %s71 = sadd.s32 %s70, 1
    %s72 = scalar_select %p69, %s70, %s71
    %p75 = pneg %p69
    %p76 = scmp.eq.s32.totalorder %s8, 3
    %p77 = por %p75, %p76
    %p78 = scmp.ne.s32.totalorder %s70, %s73
    %p79 = scmp.eq.s32.totalorder %s8, 0
    %p80 = por %p78, %p79
    %p81 = scmp.ne.s32.totalorder %s70, %s73
    %p82 = scmp.eq.s32.totalorder %s13, 3
    %p83 = por %p81, %p82
    %p84 = scmp.ne.s32.totalorder %s73, %s74
    %p85 = scmp.eq.s32.totalorder %s13, 0
    %p86 = por %p84, %p85
    %p87 = scmp.ne.s32.totalorder %s73, %s74
    %p88 = scmp.eq.s32.totalorder %s14, 3
    %p89 = por %p87, %p88
    %p91 = scmp.ne.s32.totalorder %s74, %s90
    %p92 = scmp.eq.s32.totalorder %s14, 0
    %p93 = por %p91, %p92
    %p94 = scmp.le.s32.totalorder 1, %s8
    %p95 = scmp.lt.s32.totalorder %s8, 5
    %p96 = pnand %p94, %p95
    %p97 = pneg %p96
    // Predicated region
    $region9: #{mshgat_forward.24} parent=5 // pred_check
      _
    $region10: #{mshgat_forward.24} parent=5 // pred_check_branch
      %99 = sbr.rel (%p96) target = $region12
    $region11: #{mshgat_forward.24} parent=5 // pred_region
      %s100 = ssub.s32 %s8, 1
    $region12: #{mshgat_forward.24} parent=5 // pred_fallthru
      _
    %p101 = scmp.lt.s32.totalorder %s8, 4
    // Predicated region
    $region13: #{mshgat_forward.24} parent=5 // pred_check
      %p102 = pneg %p101
    $region14: #{mshgat_forward.24} parent=5 // pred_check_branch
      %104 = sbr.rel (%p102) target = $region16
    $region15: #{mshgat_forward.24} parent=5 // pred_region
      // Predicated region
      $region17: #{mshgat_forward.24} parent=15 // pred_check
        %p105 = pneg %p28
      $region18: #{mshgat_forward.24} parent=15 // pred_check_branch
        %107 = sbr.rel (%p105) target = $region20
      $region19: #{mshgat_forward.24} parent=15 // pred_region
        %p108 = scmp.lt.s32.totalorder %s8, 3
        %s109 = scalar_select %p108, %s8, 3
        %s110 = smul.addr %s109, 2
        %s111 = smul.addr %s110, 8
        %s112 = scalar_lea.vmem %s0, %s111
      $region20: #{mshgat_forward.24} parent=15 // pred_fallthru
        _
      // Predicated region
      $region21: #{mshgat_forward.24} parent=15 // pred_check
        %p113 = pneg %p54
      $region22: #{mshgat_forward.24} parent=15 // pred_check_branch
        %115 = sbr.rel (%p113) target = $region24
      $region23: #{mshgat_forward.24} parent=15 // pred_region
        %p116 = scmp.lt.s32.totalorder %s8, 3
        %s117 = scalar_select %p116, %s8, 3
        %s118 = scalar_lea.vmem %s1, %s117
      $region24: #{mshgat_forward.24} parent=15 // pred_fallthru
        _
    $region16: #{mshgat_forward.24} parent=5 // pred_fallthru
      _
    %p119 = scmp.le.s32.totalorder 1, %s8
    %p120 = scmp.lt.s32.totalorder %s8, 5
    %p121 = pnand %p119, %p120
    %p122 = pneg %p121
    // Predicated region
    $region25: #{mshgat_forward.24} parent=5 // pred_check
      _
    $region26: #{mshgat_forward.24} parent=5 // pred_check_branch
      %124 = sbr.rel (%p121) target = $region28
    $region27: #{mshgat_forward.24} parent=5 // pred_region
      %s125 = ssub.s32 %s8, 1
      %p126 = scmp.lt.s32.totalorder %s13, 3
      %s127 = scalar_select %p126, %s13, 3
      %s128 = smul.addr %s127, 2
      %s129 = smul.addr %s128, 8
      %s130 = scalar_lea.vmem %s0, %s129
      %p131 = pneg %p34
      %p132 = pneg %p31
      %p133 = scmp.lt.s32.totalorder %s13, 3
      %s134 = scalar_select %p133, %s13, 3
      %s135 = scalar_lea.vmem %s1, %s134
      %p136 = pneg %p60
      %p137 = pneg %p57
      %p138 = pneg %p86
      %p139 = pneg %p83
      %p140 = scmp.lt.s32.totalorder %s13, 3
      %s141 = scalar_select %p140, %s13, 3
      %s142 = smul.addr %s141, 8
      %s143 = scalar_lea.vmem %s2, %s142
      %p144 = scmp.lt.s32.totalorder %s13, 3
      %s145 = scalar_select %p144, %s13, 3
      %s146 = smul.addr %s145, 2
      %s147 = smul.addr %s146, 8
      %s148 = scalar_lea.vmem %s0, %s147
      %p149 = scmp.lt.s32.totalorder %s13, 3
      %s150 = scalar_select %p149, %s13, 3
      %s151 = scalar_lea.vmem %s1, %s150
      %p152 = scmp.lt.s32.totalorder %s13, 3
      %s153 = scalar_select %p152, %s13, 3
      %s154 = smul.addr %s153, 8
      %s155 = scalar_lea.vmem %s2, %s154
      %v157 = vld [vmem:[%s148] sm:$0xff]
      %v158 = vld [vmem:[%s148 + $0x8] sm:$0xff]
      %v159 = vld [vmem:[%s151] sm:$0x1]
      %v160 = vpack.c.bf16 %v157, %v157
      %162 = vrot.lane.b32.xlu0 %v160, 64
      %v163 = vpop.permute.xlu0 %162
      %vm164 = vcmask 261120
      %v166 = vsel %vm164, %v160, 0
      %v169 = vsel %vm164, %v163, 0
      %171 = vmatprep.subr.bf16.mxu0 0
      %172 = vmatpush1.bf16.xpose.msra.mxu0 %v169
      %173 = vmatprep.subr.bf16.mxu0 0
      %174 = vmatpush1.bf16.xpose.msra.mxu0 0
      %175 = vmatprep.subr.bf16.mxu0 0
      %176 = vmatpush1.bf16.xpose.msra.mxu0 0
      %177 = vmatprep.subr.bf16.mxu0 0
      %178 = vmatpush1.bf16.xpose.msra.mxu0 0
      %179 = vmatprep.subr.bf16.mxu0 0
      %180 = vmatpush1.bf16.xpose.msra.mxu0 0
      %181 = vmatprep.subr.bf16.mxu0 0
      %182 = vmatpush1.bf16.xpose.msra.mxu0 0
      %183 = vmatprep.subr.bf16.mxu0 0
      %184 = vmatpush1.bf16.xpose.msra.mxu0 0
      %185 = vmatprep.subr.bf16.mxu0 0
      %186 = vmatpush1.bf16.xpose.msra.mxu0 0
      %187 = vmatprep.subr.bf16.mxu0 0
      %188 = vmatpush1.bf16.xpose.msra.mxu0 0
      %189 = vmatprep.subr.bf16.mxu0 0
      %190 = vmatpush1.bf16.xpose.msra.mxu0 0
      %191 = vmatprep.subr.bf16.mxu0 0
      %192 = vmatpush1.bf16.xpose.msra.mxu0 0
      %193 = vmatprep.subr.bf16.mxu0 0
      %194 = vmatpush1.bf16.xpose.msra.mxu0 0
      %195 = vmatprep.subr.bf16.mxu0 0
      %196 = vmatpush1.bf16.xpose.msra.mxu0 0
      %197 = vmatprep.subr.bf16.mxu0 0
      %198 = vmatpush1.bf16.xpose.msra.mxu0 0
      %199 = vmatprep.subr.bf16.mxu0 0
      %200 = vmatpush1.bf16.xpose.msra.mxu0 0
      %201 = vmatprep.subr.bf16.mxu0 0
      %202 = vmatpush1.bf16.xpose.msra.mxu0 0
      %203 = vmatprep.mubr.bf16.mxu0 0
      %204 = vmatmul.mubr.bf16.gmra.mrb[0].mxu0 %v166
      %v205 = vpop.f32.mrb[0].mxu0
      %v206 = vadd.f32 0.0, %v205
      %v207 = vpop.f32.mrb[0].mxu0
      %v208 = vpop.f32.mrb[0].mxu0
      %v209 = vpop.f32.mrb[0].mxu0
      %210 = vdwg.mxu0
      %v211 = vmul.f32 %v206, 0.17677669
      %v213 = vlaneseq
      %v214 = vshrl.u32 %v213, 7
      %v215 = vsub.s32 0, %v214
      %v216 = vrot.slane %v159, %v215
      %v218 = vadd.f32 %v211, %v216
      %vm219 = vcmask 64512
      %v220 = vsel %vm219, %v218, -inf
      %221 = vmax.xlane.f32.xlu0 %v220
      %v222 = vpop.xlane.xlu0 %221
      %v223 = vsub.f32 %v218, %v222
      %v224 = vmul.f32 %v223, 1.442695
      %v225 = vpow.pop %v224
      %v226 = vsel %vm219, %v225, 0.0
      %227 = vadd.xlane.f32.xlu0 %v226
      %v228 = vpop.xlane.xlu0 %227
      %v229 = vrcp.pop %v228
      %v230 = vmul.f32 %v225, %v229
      %v231 = vpack.c.bf16 %v230, %v230
      %v232 = vpack.c.bf16 %v158, %v158
      %v234 = vsel %vm219, %v231, 0
      %vm236 = vcmask 1043456
      %v238 = vsel %vm236, %v232, 0
      %240 = vmatprep.subr.bf16.mxu0 0
      %241 = vmatpush1.bf16.msra.mxu0 %v238
      %242 = vmatprep.subr.bf16.mxu0 0
      %243 = vmatpush1.bf16.msra.mxu0 0
      %244 = vmatprep.subr.bf16.mxu0 0
      %245 = vmatpush1.bf16.msra.mxu0 0
      %246 = vmatprep.subr.bf16.mxu0 0
      %247 = vmatpush1.bf16.msra.mxu0 0
      %248 = vmatprep.subr.bf16.mxu0 0
      %249 = vmatpush1.bf16.msra.mxu0 0
      %250 = vmatprep.subr.bf16.mxu0 0
      %251 = vmatpush1.bf16.msra.mxu0 0
      %252 = vmatprep.subr.bf16.mxu0 0
      %253 = vmatpush1.bf16.msra.mxu0 0
      %254 = vmatprep.subr.bf16.mxu0 0
      %255 = vmatpush1.bf16.msra.mxu0 0
      %256 = vmatprep.subr.bf16.mxu0 0
      %257 = vmatpush1.bf16.msra.mxu0 0
      %258 = vmatprep.subr.bf16.mxu0 0
      %259 = vmatpush1.bf16.msra.mxu0 0
      %260 = vmatprep.subr.bf16.mxu0 0
      %261 = vmatpush1.bf16.msra.mxu0 0
      %262 = vmatprep.subr.bf16.mxu0 0
      %263 = vmatpush1.bf16.msra.mxu0 0
      %264 = vmatprep.subr.bf16.mxu0 0
      %265 = vmatpush1.bf16.msra.mxu0 0
      %266 = vmatprep.subr.bf16.mxu0 0
      %267 = vmatpush1.bf16.msra.mxu0 0
      %268 = vmatprep.subr.bf16.mxu0 0
      %269 = vmatpush1.bf16.msra.mxu0 0
      %270 = vmatprep.subr.bf16.mxu0 0
      %271 = vmatpush1.bf16.msra.mxu0 0
      %272 = vmatprep.mubr.bf16.mxu0 0
      %273 = vmatmul.mubr.bf16.gmra.mrb[0].mxu0 %v234
      %v274 = vpop.f32.mrb[0].mxu0
      %v275 = vadd.f32 0.0, %v274
      %v276 = vpop.f32.mrb[0].mxu0
      %v277 = vpop.f32.mrb[0].mxu0
      %v278 = vpop.f32.mrb[0].mxu0
      %279 = vdwg.mxu0
      %280 = vrot.lane.b32.xlu0 %v160, 96
      %v281 = vpop.permute.xlu0 %280
      %282 = vrot.lane.b32.xlu0 %v160, 32
      %v283 = vpop.permute.xlu0 %282
      %v285 = vsel %vm164, %v281, 0
      %v288 = vsel %vm164, %v283, 0
      %290 = vmatprep.subr.bf16.mxu0 0
      %291 = vmatpush1.bf16.xpose.msra.mxu0 %v288
      %292 = vmatprep.subr.bf16.mxu0 0
      %293 = vmatpush1.bf16.xpose.msra.mxu0 0
      %294 = vmatprep.subr.bf16.mxu0 0
      %295 = vmatpush1.bf16.xpose.msra.mxu0 0
      %296 = vmatprep.subr.bf16.mxu0 0
      %297 = vmatpush1.bf16.xpose.msra.mxu0 0
      %298 = vmatprep.subr.bf16.mxu0 0
      %299 = vmatpush1.bf16.xpose.msra.mxu0 0
      %300 = vmatprep.subr.bf16.mxu0 0
      %301 = vmatpush1.bf16.xpose.msra.mxu0 0
      %302 = vmatprep.subr.bf16.mxu0 0
      %303 = vmatpush1.bf16.xpose.msra.mxu0 0
      %304 = vmatprep.subr.bf16.mxu0 0
      %305 = vmatpush1.bf16.xpose.msra.mxu0 0
      %306 = vmatprep.subr.bf16.mxu0 0
      %307 = vmatpush1.bf16.xpose.msra.mxu0 0
      %308 = vmatprep.subr.bf16.mxu0 0
      %309 = vmatpush1.bf16.xpose.msra.mxu0 0
      %310 = vmatprep.subr.bf16.mxu0 0
      %311 = vmatpush1.bf16.xpose.msra.mxu0 0
      %312 = vmatprep.subr.bf16.mxu0 0
      %313 = vmatpush1.bf16.xpose.msra.mxu0 0
      %314 = vmatprep.subr.bf16.mxu0 0
      %315 = vmatpush1.bf16.xpose.msra.mxu0 0
      %316 = vmatprep.subr.bf16.mxu0 0
      %317 = vmatpush1.bf16.xpose.msra.mxu0 0
      %318 = vmatprep.subr.bf16.mxu0 0
      %319 = vmatpush1.bf16.xpose.msra.mxu0 0
      %320 = vmatprep.subr.bf16.mxu0 0
      %321 = vmatpush1.bf16.xpose.msra.mxu0 0
      %322 = vmatprep.mubr.bf16.mxu0 0
      %323 = vmatmul.mubr.bf16.gmra.mrb[0].mxu0 %v285
      %v324 = vpop.f32.mrb[0].mxu0
      %v325 = vadd.f32 0.0, %v324
      %v326 = vpop.f32.mrb[0].mxu0
      %v327 = vpop.f32.mrb[0].mxu0
      %v328 = vpop.f32.mrb[0].mxu0
      %329 = vdwg.mxu0
      %v330 = vmul.f32 %v325, 0.17677669
      %v331 = vadd.f32 %v330, %v216
      %v332 = vsel %vm219, %v331, -inf
      %333 = vmax.xlane.f32.xlu0 %v332
      %v334 = vpop.xlane.xlu0 %333
      %v335 = vsub.f32 %v331, %v334
      %v336 = vmul.f32 %v335, 1.442695
      %v337 = vpow.pop %v336
      %v338 = vsel %vm219, %v337, 0.0
      %339 = vadd.xlane.f32.xlu0 %v338
      %v340 = vpop.xlane.xlu0 %339
      %v341 = vrcp.pop %v340
      %v342 = vmul.f32 %v337, %v341
      %v343 = vpack.c.bf16 %v342, %v342
      %345 = vrot.lane.b32.xlu0 %v232, 96
      %v346 = vpop.permute.xlu0 %345
      %v348 = vsel %vm219, %v343, 0
      %v351 = vsel %vm236, %v346, 0
      %353 = vmatprep.subr.bf16.mxu0 0
      %354 = vmatpush1.bf16.msra.mxu0 %v351
      %355 = vmatprep.subr.bf16.mxu0 0
      %356 = vmatpush1.bf16.msra.mxu0 0
      %357 = vmatprep.subr.bf16.mxu0 0
      %358 = vmatpush1.bf16.msra.mxu0 0
      %359 = vmatprep.subr.bf16.mxu0 0
      %360 = vmatpush1.bf16.msra.mxu0 0
      %361 = vmatprep.subr.bf16.mxu0 0
      %362 = vmatpush1.bf16.msra.mxu0 0
      %363 = vmatprep.subr.bf16.mxu0 0
      %364 = vmatpush1.bf16.msra.mxu0 0
      %365 = vmatprep.subr.bf16.mxu0 0
      %366 = vmatpush1.bf16.msra.mxu0 0
      %367 = vmatprep.subr.bf16.mxu0 0
      %368 = vmatpush1.bf16.msra.mxu0 0
      %369 = vmatprep.subr.bf16.mxu0 0
      %370 = vmatpush1.bf16.msra.mxu0 0
      %371 = vmatprep.subr.bf16.mxu0 0
      %372 = vmatpush1.bf16.msra.mxu0 0
      %373 = vmatprep.subr.bf16.mxu0 0
      %374 = vmatpush1.bf16.msra.mxu0 0
      %375 = vmatprep.subr.bf16.mxu0 0
      %376 = vmatpush1.bf16.msra.mxu0 0
      %377 = vmatprep.subr.bf16.mxu0 0
      %378 = vmatpush1.bf16.msra.mxu0 0
      %379 = vmatprep.subr.bf16.mxu0 0
      %380 = vmatpush1.bf16.msra.mxu0 0
      %381 = vmatprep.subr.bf16.mxu0 0
      %382 = vmatpush1.bf16.msra.mxu0 0
      %383 = vmatprep.subr.bf16.mxu0 0
      %384 = vmatpush1.bf16.msra.mxu0 0
      %385 = vmatprep.mubr.bf16.mxu0 0
      %386 = vmatmul.mubr.bf16.gmra.mrb[0].mxu0 %v348
      %v387 = vpop.f32.mrb[0].mxu0
      %v388 = vadd.f32 0.0, %v387
      %v389 = vpop.f32.mrb[0].mxu0
      %v390 = vpop.f32.mrb[0].mxu0
      %v391 = vpop.f32.mrb[0].mxu0
      %392 = vdwg.mxu0
      %394 = vrot.lane.b32.xlu0 %v388, 32
      %v395 = vpop.permute.xlu0 %394
      %v397 = vsel %vm164, %v275, %v395
      %vm398 = vcmask 523264
      %399 = vst.msk [vmem:[%s155] sm:$0xff] %vm398, %v397
      %p400 = scmp.lt.s32.totalorder %s13, 3
      %s401 = scalar_select %p400, %s13, 3
      %s402 = smul.addr %s401, 8
      %s403 = scalar_lea.vmem %s2, %s402
      // Predicated region
      $region29: #{mshgat_forward.24} parent=27 // pred_check
        %p404 = pneg %p83
      $region30: #{mshgat_forward.24} parent=27 // pred_check_branch
        %406 = sbr.rel (%p404) target = $region32
      $region31: #{mshgat_forward.24} parent=27 // pred_region
        _
      $region32: #{mshgat_forward.24} parent=27 // pred_fallthru
        _
    $region28: #{mshgat_forward.24} parent=5 // pred_fallthru
      _
    %p407 = scmp.le.s32.totalorder 2, %s8
    // Predicated region
    $region33: #{mshgat_forward.24} parent=5 // pred_check
      %p408 = pneg %p407
    $region34: #{mshgat_forward.24} parent=5 // pred_check_branch
      %410 = sbr.rel (%p408) target = $region36
    $region35: #{mshgat_forward.24} parent=5 // pred_region
      %s411 = ssub.s32 %s8, 2
      // Predicated region
      $region37: #{mshgat_forward.24} parent=35 // pred_check
        %p412 = pneg %p89
      $region38: #{mshgat_forward.24} parent=35 // pred_check_branch
        %414 = sbr.rel (%p412) target = $region40
      $region39: #{mshgat_forward.24} parent=35 // pred_region
        %p415 = scmp.lt.s32.totalorder %s14, 3
        %s416 = scalar_select %p415, %s14, 3
        %s417 = smul.addr %s416, 8
        %s418 = scalar_lea.vmem %s2, %s417
      $region40: #{mshgat_forward.24} parent=35 // pred_fallthru
        _
    $region36: #{mshgat_forward.24} parent=5 // pred_fallthru
      _
  $region6: #{mshgat_forward.24} parent=0 // loop_footer
    %s12 = sadd.s32 1, %s8
  $region7: #{mshgat_forward.24} parent=0 // loop_footer_branch
    %7 = sbr.rel target = $region3
  $region8: #{mshgat_forward.24} parent=0 // loop_exit
    _

// kernel: mshgat_forward.25
$region0: #{mshgat_forward.25}
  #allocation0 [shape = 'u32[]', space=smem, size = 0x4, offset = 0x4, fixed_abs, tag = 'smem constant byte address 0x4 - core index']
  #allocation1 [shape = 'u32[144,128]{1,0:T(1,128)}', space=vmem, size = 0x12000, scoped, tag = 'internal scratch']
  %s0 = inlined_call_operand.vmem [shape: f32[32,64], index: 0, kind: input, shape index: {}]
  %s1 = inlined_call_operand.vmem [shape: f32[32,64], index: 1, kind: input, shape index: {}]
  %s2 = inlined_call_operand.vmem [shape: f32[64,64], index: 2, kind: input, shape index: {}]
  %s3 = inlined_call_operand.vmem [shape: f32[1,64], index: 3, kind: input, shape index: {}]
  %s4 = inlined_call_operand.vmem [shape: f32[1,64], index: 4, kind: input, shape index: {}]
  %s5 = inlined_call_operand.vmem [shape: f32[1,64], index: 5, kind: input, shape index: {}]
  %s6 = inlined_call_operand.vmem [shape: f32[32,64], index: 6, kind: output, shape index: {}]
  %s7 = sld [smem:[#allocation0]]
  $region34: #{mshgat_forward.25} parent=0
    _
  %s9 = ssub.s32 1, %s7
  %s10 = scalar_select 0, %s9, %s7
  // Predicated region
  $region2: #{mshgat_forward.25} parent=0 // pred_check
    _
  $region3: #{mshgat_forward.25} parent=0 // pred_check_branch
    %12 = sbr.rel (0) target = $region5
  $region4: #{mshgat_forward.25} parent=0 // pred_region
    _
  $region5: #{mshgat_forward.25} parent=0 // pred_fallthru
    _
  // Predicated region
  $region6: #{mshgat_forward.25} parent=0 // pred_check
    _
  $region7: #{mshgat_forward.25} parent=0 // pred_check_branch
    %14 = sbr.rel (0) target = $region9
  $region8: #{mshgat_forward.25} parent=0 // pred_region
    _
  $region9: #{mshgat_forward.25} parent=0 // pred_fallthru
    _
  // Predicated region
  $region10: #{mshgat_forward.25} parent=0 // pred_check
    _
  $region11: #{mshgat_forward.25} parent=0 // pred_check_branch
    %16 = sbr.rel (0) target = $region13
  $region12: #{mshgat_forward.25} parent=0 // pred_region
    _
  $region13: #{mshgat_forward.25} parent=0 // pred_fallthru
    _
  // Predicated region
  $region14: #{mshgat_forward.25} parent=0 // pred_check
    _
  $region15: #{mshgat_forward.25} parent=0 // pred_check_branch
    %18 = sbr.rel (0) target = $region17
  $region16: #{mshgat_forward.25} parent=0 // pred_region
    _
  $region17: #{mshgat_forward.25} parent=0 // pred_fallthru
    _
  // Predicated region
  $region18: #{mshgat_forward.25} parent=0 // pred_check
    _
  $region19: #{mshgat_forward.25} parent=0 // pred_check_branch
    %20 = sbr.rel (0) target = $region21
  $region20: #{mshgat_forward.25} parent=0 // pred_region
    _
  $region21: #{mshgat_forward.25} parent=0 // pred_fallthru
    _
  // Predicated region
  $region22: #{mshgat_forward.25} parent=0 // pred_check
    _
  $region23: #{mshgat_forward.25} parent=0 // pred_check_branch
    %22 = sbr.rel (0) target = $region25
  $region24: #{mshgat_forward.25} parent=0 // pred_region
    _
  $region25: #{mshgat_forward.25} parent=0 // pred_fallthru
    _
  %v24 = vld [vmem:[%s0] sm:$0xff]
  %v25 = vld [vmem:[%s0 + $0x8] sm:$0xff]
  %v26 = vld [vmem:[%s0 + $0x10] sm:$0xff]
  %v27 = vld [vmem:[%s0 + $0x18] sm:$0xff]
  %v28 = vld [vmem:[%s2] sm:$0xff]
  %v29 = vld [vmem:[%s2 + $0x8] sm:$0xff]
  %v30 = vld [vmem:[%s2 + $0x10] sm:$0xff]
  %v31 = vld [vmem:[%s2 + $0x18] sm:$0xff]
  %v32 = vld [vmem:[%s2 + $0x20] sm:$0xff]
  %v33 = vld [vmem:[%s2 + $0x28] sm:$0xff]
  %v34 = vld [vmem:[%s2 + $0x30] sm:$0xff]
  %v35 = vld [vmem:[%s2 + $0x38] sm:$0xff]
  %v36 = vpack.c.bf16 %v25, %v24
  %v37 = vpack.c.bf16 %v27, %v26
  %v38 = vpack.c.bf16 %v29, %v28
  %v39 = vpack.c.bf16 %v31, %v30
  %v40 = vpack.c.bf16 %v33, %v32
  %v41 = vpack.c.bf16 %v35, %v34
  %v42 = vld [vmem:[%s3] sm:$0x1]
  %v44 = vlaneseq
  %v45 = vshrl.u32 %v44, 7
  %v46 = vsub.s32 0, %v45
  %v47 = vrot.slane %v42, %v46
  %vm49 = vcmask 523264
  %v51 = vsel %vm49, %v36, 0
  %v54 = vsel %vm49, %v37, 0
  %56 = vmatprep.subr.bf16.mxu0 0
  %57 = vmatpush1.bf16.msra.mxu0 %v38
  %58 = vmatprep.subr.bf16.mxu0 0
  %59 = vmatpush1.bf16.msra.mxu0 %v39
  %60 = vmatprep.subr.bf16.mxu0 0
  %61 = vmatpush1.bf16.msra.mxu0 %v40
  %62 = vmatprep.subr.bf16.mxu0 0
  %63 = vmatpush1.bf16.msra.mxu0 %v41
  %64 = vmatprep.subr.bf16.mxu0 0
  %65 = vmatpush1.bf16.msra.mxu0 0
  %66 = vmatprep.subr.bf16.mxu0 0
  %67 = vmatpush1.bf16.msra.mxu0 0
  %68 = vmatprep.subr.bf16.mxu0 0
  %69 = vmatpush1.bf16.msra.mxu0 0
  %70 = vmatprep.subr.bf16.mxu0 0
  %71 = vmatpush1.bf16.msra.mxu0 0
  %72 = vmatprep.subr.bf16.mxu0 0
  %73 = vmatpush1.bf16.msra.mxu0 0
  %74 = vmatprep.subr.bf16.mxu0 0
  %75 = vmatpush1.bf16.msra.mxu0 0
  %76 = vmatprep.subr.bf16.mxu0 0
  %77 = vmatpush1.bf16.msra.mxu0 0
  %78 = vmatprep.subr.bf16.mxu0 0
  %79 = vmatpush1.bf16.msra.mxu0 0
  %80 = vmatprep.subr.bf16.mxu0 0
  %81 = vmatpush1.bf16.msra.mxu0 0
  %82 = vmatprep.subr.bf16.mxu0 0
  %83 = vmatpush1.bf16.msra.mxu0 0
  %84 = vmatprep.subr.bf16.mxu0 0
  %85 = vmatpush1.bf16.msra.mxu0 0
  %86 = vmatprep.subr.bf16.mxu0 0
  %87 = vmatpush1.bf16.msra.mxu0 0
  %88 = vmatprep.mubr.bf16.mxu0 0
  %89 = vmatmul.mubr.bf16.gmra.mrb[0].mxu0 %v51
  %v90 = vpop.f32.mrb[0].mxu0
  %v91 = vadd.f32 %v47, %v90
  %v92 = vpop.f32.mrb[0].mxu0
  %v93 = vpop.f32.mrb[0].mxu0
  %v94 = vadd.f32 %v47, %v93
  %v95 = vpop.f32.mrb[0].mxu0
  %96 = vmatprep.mubr.bf16.mxu0 0
  %97 = vmatmul.mubr.bf16.gmra.mrb[0].mxu0 %v54
  %v98 = vpop.f32.mrb[0].mxu0
  %v99 = vadd.f32 %v47, %v98
  %v100 = vpop.f32.mrb[0].mxu0
  %v101 = vpop.f32.mrb[0].mxu0
  %v102 = vadd.f32 %v47, %v101
  %v103 = vpop.f32.mrb[0].mxu0
  %104 = vdwg.mxu0
  %v105 = vld [vmem:[%s1] sm:$0xff]
  %v106 = vld [vmem:[%s1 + $0x8] sm:$0xff]
  %v107 = vld [vmem:[%s1 + $0x10] sm:$0xff]
  %v108 = vld [vmem:[%s1 + $0x18] sm:$0xff]
  %v109 = vadd.f32 %v91, %v105
  %v110 = vadd.f32 %v94, %v106
  %v111 = vadd.f32 %v99, %v107
  %v112 = vadd.f32 %v102, %v108
  %v113 = vsel %vm49, %v109, 0.0
  %114 = vadd.xlane.f32.xlu0 %v113
  %v115 = vpop.xlane.xlu0 %114
  %v116 = vsel %vm49, %v110, 0.0
  %117 = vadd.xlane.f32.xlu0 %v116
  %v118 = vpop.xlane.xlu0 %117
  %v119 = vsel %vm49, %v111, 0.0
  %120 = vadd.xlane.f32.xlu0 %v119
  %v121 = vpop.xlane.xlu0 %120
  %v122 = vsel %vm49, %v112, 0.0
  %123 = vadd.xlane.f32.xlu0 %v122
  %v124 = vpop.xlane.xlu0 %123
  %v125 = vrcp.pop 64.0
  %v126 = vmul.f32 %v115, %v125
  %v127 = vmul.f32 %v118, %v125
  %v128 = vmul.f32 %v121, %v125
  %v129 = vmul.f32 %v124, %v125
  %v130 = vsub.f32 %v109, %v126
  %v131 = vsub.f32 %v110, %v127
  %v132 = vsub.f32 %v111, %v128
  %v133 = vsub.f32 %v112, %v129
  %v134 = vmul.f32 %v130, %v130
  %v135 = vmul.f32 %v131, %v131
  %v136 = vmul.f32 %v132, %v132
  %v137 = vmul.f32 %v133, %v133
  %v138 = vsel %vm49, %v134, 0.0
  %139 = vadd.xlane.f32.xlu0 %v138
  %v140 = vpop.xlane.xlu0 %139
  %v141 = vsel %vm49, %v135, 0.0
  %142 = vadd.xlane.f32.xlu0 %v141
  %v143 = vpop.xlane.xlu0 %142
  %v144 = vsel %vm49, %v136, 0.0
  %145 = vadd.xlane.f32.xlu0 %v144
  %v146 = vpop.xlane.xlu0 %145
  %v147 = vsel %vm49, %v137, 0.0
  %148 = vadd.xlane.f32.xlu0 %v147
  %v149 = vpop.xlane.xlu0 %148
  %v150 = vmul.f32 %v140, %v125
  %v151 = vmul.f32 %v143, %v125
  %v152 = vmul.f32 %v146, %v125
  %v153 = vmul.f32 %v149, %v125
  %v154 = vadd.f32 %v150, 1e-12
  %v155 = vadd.f32 %v151, 1e-12
  %v156 = vadd.f32 %v152, 1e-12
  %v157 = vadd.f32 %v153, 1e-12
  %v158 = vrsqrt.pop %v154
  %v159 = vrsqrt.pop %v155
  %v160 = vrsqrt.pop %v156
  %v161 = vrsqrt.pop %v157
  %v162 = vmul.f32 %v130, %v158
  %v163 = vmul.f32 %v131, %v159
  %v164 = vmul.f32 %v132, %v160
  %v165 = vmul.f32 %v133, %v161
  %v166 = vld [vmem:[%s4] sm:$0x1]
  %v168 = vlaneseq
  %v169 = vshrl.u32 %v168, 7
  %v170 = vsub.s32 0, %v169
  %v171 = vrot.slane %v166, %v170
  %v173 = vmul.f32 %v162, %v171
  %v174 = vmul.f32 %v163, %v171
  %v175 = vmul.f32 %v164, %v171
  %v176 = vmul.f32 %v165, %v171
  %v177 = vld [vmem:[%s5] sm:$0x1]
  %v179 = vlaneseq
  %v180 = vshrl.u32 %v179, 7
  %v181 = vsub.s32 0, %v180
  %v182 = vrot.slane %v177, %v181
  %v184 = vadd.f32 %v173, %v182
  %v185 = vadd.f32 %v174, %v182
  %v186 = vadd.f32 %v175, %v182
  %v187 = vadd.f32 %v176, %v182
  %188 = vst.msk [vmem:[%s6] sm:$0xff] %vm49, %v184
  %189 = vst.msk [vmem:[%s6 + $0x8] sm:$0xff] %vm49, %v185
  %190 = vst.msk [vmem:[%s6 + $0x10] sm:$0xff] %vm49, %v186
  %191 = vst.msk [vmem:[%s6 + $0x18] sm:$0xff] %vm49, %v187
  // Predicated region
  $region26: #{mshgat_forward.25} parent=0 // pred_check
    _
  $region27: #{mshgat_forward.25} parent=0 // pred_check_branch
    %193 = sbr.rel (0) target = $region29
  $region28: #{mshgat_forward.25} parent=0 // pred_region
    _
  $region29: #{mshgat_forward.25} parent=0 // pred_fallthru
    _
  // Predicated region
  $region30: #{mshgat_forward.25} parent=0 // pred_check
    _
  $region31: #{mshgat_forward.25} parent=0 // pred_check_branch
    %195 = sbr.rel (0) target = $region33
  $region32: #{mshgat_forward.25} parent=0 // pred_region
    _
  $region33: #{mshgat_forward.25} parent=0 // pred_fallthru
    _

// kernel: mshgat_forward.26
$region0: #{mshgat_forward.26}
  #allocation0 [shape = 'u32[]', space=smem, size = 0x4, offset = 0x4, fixed_abs, tag = 'smem constant byte address 0x4 - core index']
  #allocation1 [shape = 'u32[144,128]{1,0:T(1,128)}', space=vmem, size = 0x12000, scoped, tag = 'internal scratch']
  %s0 = inlined_call_operand.vmem [shape: f32[32,64], index: 0, kind: input, shape index: {}]
  %s1 = inlined_call_operand.vmem [shape: f32[64,64], index: 1, kind: input, shape index: {}]
  %s2 = inlined_call_operand.vmem [shape: f32[1,64], index: 2, kind: input, shape index: {}]
  %s3 = inlined_call_operand.vmem [shape: f32[64,64], index: 3, kind: input, shape index: {}]
  %s4 = inlined_call_operand.vmem [shape: f32[1,64], index: 4, kind: input, shape index: {}]
  %s5 = inlined_call_operand.vmem [shape: f32[1,64], index: 5, kind: input, shape index: {}]
  %s6 = inlined_call_operand.vmem [shape: f32[1,64], index: 6, kind: input, shape index: {}]
  %s7 = inlined_call_operand.vmem [shape: f32[32,64], index: 7, kind: output, shape index: {}]
  %s8 = sld [smem:[#allocation0]]
  $region38: #{mshgat_forward.26} parent=0
    _
  %s10 = ssub.s32 1, %s8
  %s11 = scalar_select 0, %s10, %s8
  // Predicated region
  $region2: #{mshgat_forward.26} parent=0 // pred_check
    _
  $region3: #{mshgat_forward.26} parent=0 // pred_check_branch
    %13 = sbr.rel (0) target = $region5
  $region4: #{mshgat_forward.26} parent=0 // pred_region
    _
  $region5: #{mshgat_forward.26} parent=0 // pred_fallthru
    _
  // Predicated region
  $region6: #{mshgat_forward.26} parent=0 // pred_check
    _
  $region7: #{mshgat_forward.26} parent=0 // pred_check_branch
    %15 = sbr.rel (0) target = $region9
  $region8: #{mshgat_forward.26} parent=0 // pred_region
    _
  $region9: #{mshgat_forward.26} parent=0 // pred_fallthru
    _
  // Predicated region
  $region10: #{mshgat_forward.26} parent=0 // pred_check
    _
  $region11: #{mshgat_forward.26} parent=0 // pred_check_branch
    %17 = sbr.rel (0) target = $region13
  $region12: #{mshgat_forward.26} parent=0 // pred_region
    _
  $region13: #{mshgat_forward.26} parent=0 // pred_fallthru
    _
  // Predicated region
  $region14: #{mshgat_forward.26} parent=0 // pred_check
    _
  $region15: #{mshgat_forward.26} parent=0 // pred_check_branch
    %19 = sbr.rel (0) target = $region17
  $region16: #{mshgat_forward.26} parent=0 // pred_region
    _
  $region17: #{mshgat_forward.26} parent=0 // pred_fallthru
    _
  // Predicated region
  $region18: #{mshgat_forward.26} parent=0 // pred_check
    _
  $region19: #{mshgat_forward.26} parent=0 // pred_check_branch
    %21 = sbr.rel (0) target = $region21
  $region20: #{mshgat_forward.26} parent=0 // pred_region
    _
  $region21: #{mshgat_forward.26} parent=0 // pred_fallthru
    _
  // Predicated region
  $region22: #{mshgat_forward.26} parent=0 // pred_check
    _
  $region23: #{mshgat_forward.26} parent=0 // pred_check_branch
    %23 = sbr.rel (0) target = $region25
  $region24: #{mshgat_forward.26} parent=0 // pred_region
    _
  $region25: #{mshgat_forward.26} parent=0 // pred_fallthru
    _
  // Predicated region
  $region26: #{mshgat_forward.26} parent=0 // pred_check
    _
  $region27: #{mshgat_forward.26} parent=0 // pred_check_branch
    %25 = sbr.rel (0) target = $region29
  $region28: #{mshgat_forward.26} parent=0 // pred_region
    _
  $region29: #{mshgat_forward.26} parent=0 // pred_fallthru
    _
  %v27 = vld [vmem:[%s0] sm:$0xff]
  %v28 = vld [vmem:[%s0 + $0x8] sm:$0xff]
  %v29 = vld [vmem:[%s0 + $0x10] sm:$0xff]
  %v30 = vld [vmem:[%s0 + $0x18] sm:$0xff]
  %v31 = vld [vmem:[%s1] sm:$0xff]
  %v32 = vld [vmem:[%s1 + $0x8] sm:$0xff]
  %v33 = vld [vmem:[%s1 + $0x10] sm:$0xff]
  %v34 = vld [vmem:[%s1 + $0x18] sm:$0xff]
  %v35 = vld [vmem:[%s1 + $0x20] sm:$0xff]
  %v36 = vld [vmem:[%s1 + $0x28] sm:$0xff]
  %v37 = vld [vmem:[%s1 + $0x30] sm:$0xff]
  %v38 = vld [vmem:[%s1 + $0x38] sm:$0xff]
  %v39 = vpack.c.bf16 %v28, %v27
  %v40 = vpack.c.bf16 %v30, %v29
  %v41 = vpack.c.bf16 %v32, %v31
  %v42 = vpack.c.bf16 %v34, %v33
  %v43 = vpack.c.bf16 %v36, %v35
  %v44 = vpack.c.bf16 %v38, %v37
  %v45 = vld [vmem:[%s2] sm:$0x1]
  %v47 = vlaneseq
  %v48 = vshrl.u32 %v47, 7
  %v49 = vsub.s32 0, %v48
  %v50 = vrot.slane %v45, %v49
  %vm52 = vcmask 523264
  %v54 = vsel %vm52, %v39, 0
  %v57 = vsel %vm52, %v40, 0
  %59 = vmatprep.subr.bf16.mxu0 0
  %60 = vmatpush1.bf16.msra.mxu0 %v41
  %61 = vmatprep.subr.bf16.mxu0 0
  %62 = vmatpush1.bf16.msra.mxu0 %v42
  %63 = vmatprep.subr.bf16.mxu0 0
  %64 = vmatpush1.bf16.msra.mxu0 %v43
  %65 = vmatprep.subr.bf16.mxu0 0
  %66 = vmatpush1.bf16.msra.mxu0 %v44
  %67 = vmatprep.subr.bf16.mxu0 0
  %68 = vmatpush1.bf16.msra.mxu0 0
  %69 = vmatprep.subr.bf16.mxu0 0
  %70 = vmatpush1.bf16.msra.mxu0 0
  %71 = vmatprep.subr.bf16.mxu0 0
  %72 = vmatpush1.bf16.msra.mxu0 0
  %73 = vmatprep.subr.bf16.mxu0 0
  %74 = vmatpush1.bf16.msra.mxu0 0
  %75 = vmatprep.subr.bf16.mxu0 0
  %76 = vmatpush1.bf16.msra.mxu0 0
  %77 = vmatprep.subr.bf16.mxu0 0
  %78 = vmatpush1.bf16.msra.mxu0 0
  %79 = vmatprep.subr.bf16.mxu0 0
  %80 = vmatpush1.bf16.msra.mxu0 0
  %81 = vmatprep.subr.bf16.mxu0 0
  %82 = vmatpush1.bf16.msra.mxu0 0
  %83 = vmatprep.subr.bf16.mxu0 0
  %84 = vmatpush1.bf16.msra.mxu0 0
  %85 = vmatprep.subr.bf16.mxu0 0
  %86 = vmatpush1.bf16.msra.mxu0 0
  %87 = vmatprep.subr.bf16.mxu0 0
  %88 = vmatpush1.bf16.msra.mxu0 0
  %89 = vmatprep.subr.bf16.mxu0 0
  %90 = vmatpush1.bf16.msra.mxu0 0
  %91 = vmatprep.mubr.bf16.mxu0 0
  %92 = vmatmul.mubr.bf16.gmra.mrb[0].mxu0 %v54
  %v93 = vpop.f32.mrb[0].mxu0
  %v94 = vadd.f32 %v50, %v93
  %v95 = vpop.f32.mrb[0].mxu0
  %v96 = vpop.f32.mrb[0].mxu0
  %v97 = vadd.f32 %v50, %v96
  %v98 = vpop.f32.mrb[0].mxu0
  %99 = vmatprep.mubr.bf16.mxu0 0
  %100 = vmatmul.mubr.bf16.gmra.mrb[0].mxu0 %v57
  %v101 = vpop.f32.mrb[0].mxu0
  %v102 = vadd.f32 %v50, %v101
  %v103 = vpop.f32.mrb[0].mxu0
  %v104 = vpop.f32.mrb[0].mxu0
  %v105 = vadd.f32 %v50, %v104
  %v106 = vpop.f32.mrb[0].mxu0
  %107 = vdwg.mxu0
  %v108 = vmul.f32 %v94, %v94
  %v109 = vmul.f32 %v97, %v97
  %v110 = vmul.f32 %v102, %v102
  %v111 = vmul.f32 %v105, %v105
  %v112 = vmul.f32 %v94, %v108
  %v113 = vmul.f32 %v97, %v109
  %v114 = vmul.f32 %v102, %v110
  %v115 = vmul.f32 %v105, %v111
  %v116 = vmul.f32 %v112, 0.044715
  %v117 = vmul.f32 %v113, 0.044715
  %v118 = vmul.f32 %v114, 0.044715
  %v119 = vmul.f32 %v115, 0.044715
  %v120 = vadd.f32 %v94, %v116
  %v121 = vadd.f32 %v97, %v117
  %v122 = vadd.f32 %v102, %v118
  %v123 = vadd.f32 %v105, %v119
  %v124 = vmul.f32 %v120, 0.7978846
  %v125 = vmul.f32 %v121, 0.7978846
  %v126 = vmul.f32 %v122, 0.7978846
  %v127 = vmul.f32 %v123, 0.7978846
  %v128 = vtanh.pop %v124
  %v129 = vtanh.pop %v125
  %v130 = vtanh.pop %v126
  %v131 = vtanh.pop %v127
  %v132 = vadd.f32 %v128, 1.0
  %v133 = vadd.f32 %v129, 1.0
  %v134 = vadd.f32 %v130, 1.0
  %v135 = vadd.f32 %v131, 1.0
  %v136 = vmul.f32 %v132, 0.5
  %v137 = vmul.f32 %v133, 0.5
  %v138 = vmul.f32 %v134, 0.5
  %v139 = vmul.f32 %v135, 0.5
  %v140 = vmul.f32 %v94, %v136
  %v141 = vmul.f32 %v97, %v137
  %v142 = vmul.f32 %v102, %v138
  %v143 = vmul.f32 %v105, %v139
  %v144 = vld [vmem:[%s3] sm:$0xff]
  %v145 = vld [vmem:[%s3 + $0x8] sm:$0xff]
  %v146 = vld [vmem:[%s3 + $0x10] sm:$0xff]
  %v147 = vld [vmem:[%s3 + $0x18] sm:$0xff]
  %v148 = vld [vmem:[%s3 + $0x20] sm:$0xff]
  %v149 = vld [vmem:[%s3 + $0x28] sm:$0xff]
  %v150 = vld [vmem:[%s3 + $0x30] sm:$0xff]
  %v151 = vld [vmem:[%s3 + $0x38] sm:$0xff]
  %v152 = vpack.c.bf16 %v141, %v140
  %v153 = vpack.c.bf16 %v143, %v142
  %v154 = vpack.c.bf16 %v145, %v144
  %v155 = vpack.c.bf16 %v147, %v146
  %v156 = vpack.c.bf16 %v149, %v148
  %v157 = vpack.c.bf16 %v151, %v150
  %v158 = vld [vmem:[%s4] sm:$0x1]
  %v160 = vlaneseq
  %v161 = vshrl.u32 %v160, 7
  %v162 = vsub.s32 0, %v161
  %v163 = vrot.slane %v158, %v162
  %v166 = vsel %vm52, %v152, 0
  %v169 = vsel %vm52, %v153, 0
  %171 = vmatprep.subr.bf16.mxu0 0
  %172 = vmatpush1.bf16.msra.mxu0 %v154
  %173 = vmatprep.subr.bf16.mxu0 0
  %174 = vmatpush1.bf16.msra.mxu0 %v155
  %175 = vmatprep.subr.bf16.mxu0 0
  %176 = vmatpush1.bf16.msra.mxu0 %v156
  %177 = vmatprep.subr.bf16.mxu0 0
  %178 = vmatpush1.bf16.msra.mxu0 %v157
  %179 = vmatprep.subr.bf16.mxu0 0
  %180 = vmatpush1.bf16.msra.mxu0 0
  %181 = vmatprep.subr.bf16.mxu0 0
  %182 = vmatpush1.bf16.msra.mxu0 0
  %183 = vmatprep.subr.bf16.mxu0 0
  %184 = vmatpush1.bf16.msra.mxu0 0
  %185 = vmatprep.subr.bf16.mxu0 0
  %186 = vmatpush1.bf16.msra.mxu0 0
  %187 = vmatprep.subr.bf16.mxu0 0
  %188 = vmatpush1.bf16.msra.mxu0 0
  %189 = vmatprep.subr.bf16.mxu0 0
  %190 = vmatpush1.bf16.msra.mxu0 0
  %191 = vmatprep.subr.bf16.mxu0 0
  %192 = vmatpush1.bf16.msra.mxu0 0
  %193 = vmatprep.subr.bf16.mxu0 0
  %194 = vmatpush1.bf16.msra.mxu0 0
  %195 = vmatprep.subr.bf16.mxu0 0
  %196 = vmatpush1.bf16.msra.mxu0 0
  %197 = vmatprep.subr.bf16.mxu0 0
  %198 = vmatpush1.bf16.msra.mxu0 0
  %199 = vmatprep.subr.bf16.mxu0 0
  %200 = vmatpush1.bf16.msra.mxu0 0
  %201 = vmatprep.subr.bf16.mxu0 0
  %202 = vmatpush1.bf16.msra.mxu0 0
  %203 = vmatprep.mubr.bf16.mxu0 0
  %204 = vmatmul.mubr.bf16.gmra.mrb[0].mxu0 %v166
  %v205 = vpop.f32.mrb[0].mxu0
  %v206 = vadd.f32 %v163, %v205
  %v207 = vpop.f32.mrb[0].mxu0
  %v208 = vpop.f32.mrb[0].mxu0
  %v209 = vadd.f32 %v163, %v208
  %v210 = vpop.f32.mrb[0].mxu0
  %211 = vmatprep.mubr.bf16.mxu0 0
  %212 = vmatmul.mubr.bf16.gmra.mrb[0].mxu0 %v169
  %v213 = vpop.f32.mrb[0].mxu0
  %v214 = vadd.f32 %v163, %v213
  %v215 = vpop.f32.mrb[0].mxu0
  %v216 = vpop.f32.mrb[0].mxu0
  %v217 = vadd.f32 %v163, %v216
  %v218 = vpop.f32.mrb[0].mxu0
  %219 = vdwg.mxu0
  %v220 = vadd.f32 %v206, %v27
  %v221 = vadd.f32 %v209, %v28
  %v222 = vadd.f32 %v214, %v29
  %v223 = vadd.f32 %v217, %v30
  %v224 = vsel %vm52, %v220, 0.0
  %225 = vadd.xlane.f32.xlu0 %v224
  %v226 = vpop.xlane.xlu0 %225
  %v227 = vsel %vm52, %v221, 0.0
  %228 = vadd.xlane.f32.xlu0 %v227
  %v229 = vpop.xlane.xlu0 %228
  %v230 = vsel %vm52, %v222, 0.0
  %231 = vadd.xlane.f32.xlu0 %v230
  %v232 = vpop.xlane.xlu0 %231
  %v233 = vsel %vm52, %v223, 0.0
  %234 = vadd.xlane.f32.xlu0 %v233
  %v235 = vpop.xlane.xlu0 %234
  %v236 = vrcp.pop 64.0
  %v237 = vmul.f32 %v226, %v236
  %v238 = vmul.f32 %v229, %v236
  %v239 = vmul.f32 %v232, %v236
  %v240 = vmul.f32 %v235, %v236
  %v241 = vsub.f32 %v220, %v237
  %v242 = vsub.f32 %v221, %v238
  %v243 = vsub.f32 %v222, %v239
  %v244 = vsub.f32 %v223, %v240
  %v245 = vmul.f32 %v241, %v241
  %v246 = vmul.f32 %v242, %v242
  %v247 = vmul.f32 %v243, %v243
  %v248 = vmul.f32 %v244, %v244
  %v249 = vsel %vm52, %v245, 0.0
  %250 = vadd.xlane.f32.xlu0 %v249
  %v251 = vpop.xlane.xlu0 %250
  %v252 = vsel %vm52, %v246, 0.0
  %253 = vadd.xlane.f32.xlu0 %v252
  %v254 = vpop.xlane.xlu0 %253
  %v255 = vsel %vm52, %v247, 0.0
  %256 = vadd.xlane.f32.xlu0 %v255
  %v257 = vpop.xlane.xlu0 %256
  %v258 = vsel %vm52, %v248, 0.0
  %259 = vadd.xlane.f32.xlu0 %v258
  %v260 = vpop.xlane.xlu0 %259
  %v261 = vmul.f32 %v251, %v236
  %v262 = vmul.f32 %v254, %v236
  %v263 = vmul.f32 %v257, %v236
  %v264 = vmul.f32 %v260, %v236
  %v265 = vadd.f32 %v261, 1e-12
  %v266 = vadd.f32 %v262, 1e-12
  %v267 = vadd.f32 %v263, 1e-12
  %v268 = vadd.f32 %v264, 1e-12
  %v269 = vrsqrt.pop %v265
  %v270 = vrsqrt.pop %v266
  %v271 = vrsqrt.pop %v267
  %v272 = vrsqrt.pop %v268
  %v273 = vmul.f32 %v241, %v269
  %v274 = vmul.f32 %v242, %v270
  %v275 = vmul.f32 %v243, %v271
  %v276 = vmul.f32 %v244, %v272
  %v277 = vld [vmem:[%s5] sm:$0x1]
  %v279 = vlaneseq
  %v280 = vshrl.u32 %v279, 7
  %v281 = vsub.s32 0, %v280
  %v282 = vrot.slane %v277, %v281
  %v284 = vmul.f32 %v273, %v282
  %v285 = vmul.f32 %v274, %v282
  %v286 = vmul.f32 %v275, %v282
  %v287 = vmul.f32 %v276, %v282
  %v288 = vld [vmem:[%s6] sm:$0x1]
  %v290 = vlaneseq
  %v291 = vshrl.u32 %v290, 7
  %v292 = vsub.s32 0, %v291
  %v293 = vrot.slane %v288, %v292
  %v295 = vadd.f32 %v284, %v293
  %v296 = vadd.f32 %v285, %v293
  %v297 = vadd.f32 %v286, %v293
  %v298 = vadd.f32 %v287, %v293
  %299 = vst.msk [vmem:[%s7] sm:$0xff] %vm52, %v295
  %300 = vst.msk [vmem:[%s7 + $0x8] sm:$0xff] %vm52, %v296
  %301 = vst.msk [vmem:[%s7 + $0x10] sm:$0xff] %vm52, %v297
  %302 = vst.msk [vmem:[%s7 + $0x18] sm:$0xff] %vm52, %v298
  // Predicated region
  $region30: #{mshgat_forward.26} parent=0 // pred_check
    _
  $region31: #{mshgat_forward.26} parent=0 // pred_check_branch
    %304 = sbr.rel (0) target = $region33
  $region32: #{mshgat_forward.26} parent=0 // pred_region
    _
  $region33: #{mshgat_forward.26} parent=0 // pred_fallthru
    _
  // Predicated region
  $region34: #{mshgat_forward.26} parent=0 // pred_check
    _
  $region35: #{mshgat_forward.26} parent=0 // pred_check_branch
    %306 = sbr.rel (0) target = $region37
  $region36: #{mshgat_forward.26} parent=0 // pred_region
    _
  $region37: #{mshgat_forward.26} parent=0 // pred_fallthru
    _

// kernel: mshgat_forward.27
$region0: #{mshgat_forward.27}
  #allocation0 [shape = 'u32[]', space=smem, size = 0x4, offset = 0x4, fixed_abs, tag = 'smem constant byte address 0x4 - core index']
  #allocation1 [shape = 'u32[144,128]{1,0:T(1,128)}', space=vmem, size = 0x12000, scoped, tag = 'internal scratch']
  %s0 = inlined_call_operand.vmem [shape: f32[4,8,64], index: 0, kind: input, shape index: {}]
  %s1 = inlined_call_operand.vmem [shape: s32[4,8,1], index: 1, kind: input, shape index: {}]
  %s2 = inlined_call_operand.vmem [shape: f32[64,128], index: 2, kind: input, shape index: {}]
  %s3 = inlined_call_operand.vmem [shape: f32[1,128], index: 3, kind: input, shape index: {}]
  %s4 = inlined_call_operand.hbm [shape: f32[4,8,128], index: 4, kind: output, shape index: {}]
  %s5 = sld [smem:[#allocation0]]
  $region49: #{mshgat_forward.27} parent=0
    _
  %s7 = ssub.s32 1, %s5
  %s8 = scalar_select 0, %s7, %s5
  $region1: #{mshgat_forward.27} parent=0
    #allocation2 [shape = 'u8[8192]{0}', space=vmem, size = 0x2000, scoped, tag = 'output window, operand 0']
    #allocation3 [shape = 's32[2]{0}', space=sflag, size = 0x8, scoped, tag = 'scoped memory for mshgat_forward.27']
    %9 = vsyncpa [#allocation3], 0
    %s10 = scalar_lea.sflag [#allocation3], 1
    %11 = vsyncpa %s10, 0
    loop: start=0, step=1, limit=6
    $region2: #{mshgat_forward.27} parent=1 // loop_pre_header
      _
    $region3: #{mshgat_forward.27} parent=1 // loop_header
      %s13 = sphi 0, %s17
      %p14 = scmp.ge.s32.totalorder %s13, 6
      %s20 = sphi 0, %s32
      %s21 = sphi 0, %s28
      %s22 = sphi 0, %s20
      %s23 = sphi 0, %s21
      %s24 = sphi 0, %s22
      %s25 = sphi 0, %s23
      %s35 = sphi 0, %s37
      %s38 = sphi 0, %s35
      %s39 = sphi 0, %s38
      %s55 = sphi 0, %s39
      %s61 = sphi 0, %s63
      %s64 = sphi 0, %s61
      %s65 = sphi 0, %s64
      %s81 = sphi 0, %s65
      %s87 = sphi 0, %s89
      %s90 = sphi 0, %s87
      %s91 = sphi 0, %s90
      %s107 = sphi 0, %s91
      %s113 = sphi 0, %s115
      %s116 = sphi 0, %s113
      %s117 = sphi 0, %s116
      %s133 = sphi 0, %s117
      %s141 = sphi 0, %s143
      %s144 = sphi 0, %s141
      %s145 = sphi 0, %s144
      %s161 = sphi 0, %s145
    $region4: #{mshgat_forward.27} parent=1 // loop_header_branch
      %16 = sbr.rel (%p14) target = $region8
    $region5: #{mshgat_forward.27} parent=1 // loop_body
      %s18 = ssub.s32 %s13, 1
      %s19 = ssub.s32 %s13, 2
      %s26 = sadd.s32 1, %s21
      %p27 = scmp.ge.s32.totalorder %s26, 1
      %s28 = scalar_select %p27, 0, %s26
      %s29 = sadd.s32 1, %s20
      %s30 = scalar_select %p27, %s29, %s20
      %p31 = scmp.ge.s32.totalorder %s30, 4
      %s32 = scalar_select %p31, 0, %s30
      %s33 = ssub.s32 %s20, %s32
      %p34 = scmp.eq.s32.totalorder %s33, 0
      %s36 = sadd.s32 %s35, 1
      %s37 = scalar_select %p34, %s35, %s36
      %p40 = pneg %p34
      %p41 = scmp.eq.s32.totalorder %s13, 3
      %p42 = por %p40, %p41
      %p43 = scmp.ne.s32.totalorder %s35, %s38
      %p44 = scmp.eq.s32.totalorder %s13, 0
      %p45 = por %p43, %p44
      %p46 = scmp.ne.s32.totalorder %s35, %s38
      %p47 = scmp.eq.s32.totalorder %s18, 3
      %p48 = por %p46, %p47
      %p49 = scmp.ne.s32.totalorder %s38, %s39
      %p50 = scmp.eq.s32.totalorder %s18, 0
      %p51 = por %p49, %p50
      %p52 = scmp.ne.s32.totalorder %s38, %s39
      %p53 = scmp.eq.s32.totalorder %s19, 3
      %p54 = por %p52, %p53
      %p56 = scmp.ne.s32.totalorder %s39, %s55
      %p57 = scmp.eq.s32.totalorder %s19, 0
      %p58 = por %p56, %p57
      %s59 = ssub.s32 %s20, %s32
      %p60 = scmp.eq.s32.totalorder %s59, 0
      %s62 = sadd.s32 %s61, 1
      %s63 = scalar_select %p60, %s61, %s62
      %p66 = pneg %p60
      %p67 = scmp.eq.s32.totalorder %s13, 3
      %p68 = por %p66, %p67
      %p69 = scmp.ne.s32.totalorder %s61, %s64
      %p70 = scmp.eq.s32.totalorder %s13, 0
      %p71 = por %p69, %p70
      %p72 = scmp.ne.s32.totalorder %s61, %s64
      %p73 = scmp.eq.s32.totalorder %s18, 3
      %p74 = por %p72, %p73
      %p75 = scmp.ne.s32.totalorder %s64, %s65
      %p76 = scmp.eq.s32.totalorder %s18, 0
      %p77 = por %p75, %p76
      %p78 = scmp.ne.s32.totalorder %s64, %s65
      %p79 = scmp.eq.s32.totalorder %s19, 3
      %p80 = por %p78, %p79
      %p82 = scmp.ne.s32.totalorder %s65, %s81
      %p83 = scmp.eq.s32.totalorder %s19, 0
      %p84 = por %p82, %p83
      %s85 = ssub.s32 %s21, %s28
      %p86 = scmp.eq.s32.totalorder %s85, 0
      %s88 = sadd.s32 %s87, 1
      %s89 = scalar_select %p86, %s87, %s88
      %p92 = pneg %p86
      %p93 = scmp.eq.s32.totalorder %s13, 3
      %p94 = por %p92, %p93
      %p95 = scmp.ne.s32.totalorder %s87, %s90
      %p96 = scmp.eq.s32.totalorder %s13, 0
      %p97 = por %p95, %p96
      %p98 = scmp.ne.s32.totalorder %s87, %s90
      %p99 = scmp.eq.s32.totalorder %s18, 3
      %p100 = por %p98, %p99
      %p101 = scmp.ne.s32.totalorder %s90, %s91
      %p102 = scmp.eq.s32.totalorder %s18, 0
      %p103 = por %p101, %p102
      %p104 = scmp.ne.s32.totalorder %s90, %s91
      %p105 = scmp.eq.s32.totalorder %s19, 3
      %p106 = por %p104, %p105
      %p108 = scmp.ne.s32.totalorder %s91, %s107
      %p109 = scmp.eq.s32.totalorder %s19, 0
      %p110 = por %p108, %p109
      %s111 = ssub.s32 %s21, %s28
      %p112 = scmp.eq.s32.totalorder %s111, 0
      %s114 = sadd.s32 %s113, 1
      %s115 = scalar_select %p112, %s113, %s114
      %p118 = pneg %p112
      %p119 = scmp.eq.s32.totalorder %s13, 3
      %p120 = por %p118, %p119
      %p121 = scmp.ne.s32.totalorder %s113, %s116
      %p122 = scmp.eq.s32.totalorder %s13, 0
      %p123 = por %p121, %p122
      %p124 = scmp.ne.s32.totalorder %s113, %s116
      %p125 = scmp.eq.s32.totalorder %s18, 3
      %p126 = por %p124, %p125
      %p127 = scmp.ne.s32.totalorder %s116, %s117
      %p128 = scmp.eq.s32.totalorder %s18, 0
      %p129 = por %p127, %p128
      %p130 = scmp.ne.s32.totalorder %s116, %s117
      %p131 = scmp.eq.s32.totalorder %s19, 3
      %p132 = por %p130, %p131
      %p134 = scmp.ne.s32.totalorder %s117, %s133
      %p135 = scmp.eq.s32.totalorder %s19, 0
      %p136 = por %p134, %p135
      %s137 = ssub.s32 %s20, %s32
      %s138 = ssub.s32 %s21, %s28
      %s139 = sor.u32 %s137, %s138
      %p140 = scmp.eq.s32.totalorder %s139, 0
      %s142 = sadd.s32 %s141, 1
      %s143 = scalar_select %p140, %s141, %s142
      %p146 = pneg %p140
      %p147 = scmp.eq.s32.totalorder %s13, 3
      %p148 = por %p146, %p147
      %p149 = scmp.ne.s32.totalorder %s141, %s144
      %p150 = scmp.eq.s32.totalorder %s13, 0
      %p151 = por %p149, %p150
      %p152 = scmp.ne.s32.totalorder %s141, %s144
      %p153 = scmp.eq.s32.totalorder %s18, 3
      %p154 = por %p152, %p153
      %p155 = scmp.ne.s32.totalorder %s144, %s145
      %p156 = scmp.eq.s32.totalorder %s18, 0
      %p157 = por %p155, %p156
      %p158 = scmp.ne.s32.totalorder %s144, %s145
      %p159 = scmp.eq.s32.totalorder %s19, 3
      %p160 = por %p158, %p159
      %p162 = scmp.ne.s32.totalorder %s145, %s161
      %p163 = scmp.eq.s32.totalorder %s19, 0
      %p164 = por %p162, %p163
      %p165 = scmp.le.s32.totalorder 1, %s13
      %p166 = scmp.lt.s32.totalorder %s13, 5
      %p167 = pnand %p165, %p166
      %p168 = pneg %p167
      // Predicated region
      $region9: #{mshgat_forward.27} parent=5 // pred_check
        _
      $region10: #{mshgat_forward.27} parent=5 // pred_check_branch
        %170 = sbr.rel (%p167) target = $region12
      $region11: #{mshgat_forward.27} parent=5 // pred_region
        %s171 = ssub.s32 %s13, 1
        // Predicated region
        $region13: #{mshgat_forward.27} parent=11 // pred_check
          %p172 = pneg %p103
        $region14: #{mshgat_forward.27} parent=11 // pred_check_branch
          %174 = sbr.rel (%p172) target = $region16
        $region15: #{mshgat_forward.27} parent=11 // pred_region
          %p175 = scmp.lt.s32.totalorder %s23, 0
          %s176 = scalar_select %p175, %s23, 0
          %s177 = smul.addr %s176, 8
          %s178 = scalar_lea.vmem %s2, %s177
        $region16: #{mshgat_forward.27} parent=11 // pred_fallthru
          _
        // Predicated region
        $region17: #{mshgat_forward.27} parent=11 // pred_check
          %p179 = pneg %p129
        $region18: #{mshgat_forward.27} parent=11 // pred_check_branch
          %181 = sbr.rel (%p179) target = $region20
        $region19: #{mshgat_forward.27} parent=11 // pred_region
          %p182 = scmp.lt.s32.totalorder %s23, 0
          %s183 = scalar_select %p182, %s23, 0
          %s184 = scalar_lea.vmem %s3, %s183
        $region20: #{mshgat_forward.27} parent=11 // pred_fallthru
          _
      $region12: #{mshgat_forward.27} parent=5 // pred_fallthru
        _
      %p185 = scmp.lt.s32.totalorder %s13, 4
      // Predicated region
      $region21: #{mshgat_forward.27} parent=5 // pred_check
        %p186 = pneg %p185
      $region22: #{mshgat_forward.27} parent=5 // pred_check_branch
        %188 = sbr.rel (%p186) target = $region24
      $region23: #{mshgat_forward.27} parent=5 // pred_region
        // Predicated region
        $region25: #{mshgat_forward.27} parent=23 // pred_check
          %p189 = pneg %p45
        $region26: #{mshgat_forward.27} parent=23 // pred_check_branch
          %191 = sbr.rel (%p189) target = $region28
        $region27: #{mshgat_forward.27} parent=23 // pred_region
          %p192 = scmp.lt.s32.totalorder %s20, 3
          %s193 = scalar_select %p192, %s20, 3
          %s194 = smul.addr %s193, 8
          %s195 = scalar_lea.vmem %s0, %s194
        $region28: #{mshgat_forward.27} parent=23 // pred_fallthru
          _
        // Predicated region
        $region29: #{mshgat_forward.27} parent=23 // pred_check
          %p196 = pneg %p71
        $region30: #{mshgat_forward.27} parent=23 // pred_check_branch
          %198 = sbr.rel (%p196) target = $region32
        $region31: #{mshgat_forward.27} parent=23 // pred_region
          %p199 = scmp.lt.s32.totalorder %s20, 3
          %s200 = scalar_select %p199, %s20, 3
          %s201 = smul.addr %s200, 8
          %s202 = scalar_lea.vmem %s1, %s201
        $region32: #{mshgat_forward.27} parent=23 // pred_fallthru
          _
      $region24: #{mshgat_forward.27} parent=5 // pred_fallthru
        _
      %p203 = scmp.le.s32.totalorder 1, %s13
      %p204 = scmp.lt.s32.totalorder %s13, 5
      %p205 = pnand %p203, %p204
      %p206 = pneg %p205
      // Predicated region
      $region33: #{mshgat_forward.27} parent=5 // pred_check
        _
      $region34: #{mshgat_forward.27} parent=5 // pred_check_branch
        %208 = sbr.rel (%p205) target = $region36
      $region35: #{mshgat_forward.27} parent=5 // pred_region
        %s209 = ssub.s32 %s13, 1
        %p210 = scmp.lt.s32.totalorder %s22, 3
        %s211 = scalar_select %p210, %s22, 3
        %s212 = smul.addr %s211, 8
        %s213 = scalar_lea.vmem %s0, %s212
        %p214 = pneg %p51
        %p215 = pneg %p48
        %p216 = scmp.lt.s32.totalorder %s22, 3
        %s217 = scalar_select %p216, %s22, 3
        %s218 = smul.addr %s217, 8
        %s219 = scalar_lea.vmem %s1, %s218
        %p220 = pneg %p77
        %p221 = pneg %p74
        %p222 = scmp.lt.s32.totalorder %s23, 0
        %s223 = scalar_select %p222, %s23, 0
        %s224 = smul.addr %s223, 8
        %s225 = scalar_lea.vmem %s2, %s224
        %p226 = pneg %p103
        %p227 = pneg %p100
        %p228 = scmp.lt.s32.totalorder %s23, 0
        %s229 = scalar_select %p228, %s23, 0
        %s230 = scalar_lea.vmem %s3, %s229
        %p231 = pneg %p129
        %p232 = pneg %p126
        %p233 = pneg %p157
        %p234 = pneg %p154
        %s235 = sand.u32 %s144, 1
        %s236 = scalar_lea.sflag [#allocation3], %s235
        %s237 = sand.u32 %s144, 1
        %s238 = smul.addr %s237, 8
        %s239 = scalar_lea.vmem [#allocation2], %s238
        %p240 = scmp.lt.s32.totalorder %s22, 3
        %s241 = scalar_select %p240, %s22, 3
        %s242 = smul.addr %s241, 8
        %s243 = scalar_lea.vmem %s0, %s242
        %p244 = scmp.lt.s32.totalorder %s22, 3
        %s245 = scalar_select %p244, %s22, 3
        %s246 = smul.addr %s245, 8
        %s247 = scalar_lea.vmem %s1, %s246
        %p248 = scmp.lt.s32.totalorder %s23, 0
        %s249 = scalar_select %p248, %s23, 0
        %s250 = smul.addr %s249, 8
        %s251 = scalar_lea.vmem %s2, %s250
        %p252 = scmp.lt.s32.totalorder %s23, 0
        %s253 = scalar_select %p252, %s23, 0
        %s254 = scalar_lea.vmem %s3, %s253
        %v256 = vld [vmem:[%s243] sm:$0xff]
        %v257 = vld [vmem:[%s251] sm:$0xff]
        %v258 = vld [vmem:[%s251 + $0x8] sm:$0xff]
        %v259 = vld [vmem:[%s251 + $0x10] sm:$0xff]
        %v260 = vld [vmem:[%s251 + $0x18] sm:$0xff]
        %v261 = vld [vmem:[%s251 + $0x20] sm:$0xff]
        %v262 = vld [vmem:[%s251 + $0x28] sm:$0xff]
        %v263 = vld [vmem:[%s251 + $0x30] sm:$0xff]
        %v264 = vld [vmem:[%s251 + $0x38] sm:$0xff]
        %v265 = vpack.c.bf16 %v256, %v256
        %v266 = vpack.c.bf16 %v258, %v257
        %v267 = vpack.c.bf16 %v260, %v259
        %v268 = vpack.c.bf16 %v262, %v261
        %v269 = vpack.c.bf16 %v264, %v263
        %v270 = vld [vmem:[%s254] sm:$0x1]
        %v272 = vlaneseq
        %v273 = vshrl.u32 %v272, 7
        %v274 = vsub.s32 0, %v273
        %v275 = vrot.slane %v270, %v274
        %vm277 = vcmask 523264
        %v279 = vsel %vm277, %v265, 0
        %281 = vmatprep.subr.bf16.mxu0 0
        %282 = vmatpush1.bf16.msra.mxu0 %v266
        %283 = vmatprep.subr.bf16.mxu0 0
        %284 = vmatpush1.bf16.msra.mxu0 %v267
        %285 = vmatprep.subr.bf16.mxu0 0
        %286 = vmatpush1.bf16.msra.mxu0 %v268
        %287 = vmatprep.subr.bf16.mxu0 0
        %288 = vmatpush1.bf16.msra.mxu0 %v269
        %289 = vmatprep.subr.bf16.mxu0 0
        %290 = vmatpush1.bf16.msra.mxu0 0
        %291 = vmatprep.subr.bf16.mxu0 0
        %292 = vmatpush1.bf16.msra.mxu0 0
        %293 = vmatprep.subr.bf16.mxu0 0
        %294 = vmatpush1.bf16.msra.mxu0 0
        %295 = vmatprep.subr.bf16.mxu0 0
        %296 = vmatpush1.bf16.msra.mxu0 0
        %297 = vmatprep.subr.bf16.mxu0 0
        %298 = vmatpush1.bf16.msra.mxu0 0
        %299 = vmatprep.subr.bf16.mxu0 0
        %300 = vmatpush1.bf16.msra.mxu0 0
        %301 = vmatprep.subr.bf16.mxu0 0
        %302 = vmatpush1.bf16.msra.mxu0 0
        %303 = vmatprep.subr.bf16.mxu0 0
        %304 = vmatpush1.bf16.msra.mxu0 0
        %305 = vmatprep.subr.bf16.mxu0 0
        %306 = vmatpush1.bf16.msra.mxu0 0
        %307 = vmatprep.subr.bf16.mxu0 0
        %308 = vmatpush1.bf16.msra.mxu0 0
        %309 = vmatprep.subr.bf16.mxu0 0
        %310 = vmatpush1.bf16.msra.mxu0 0
        %311 = vmatprep.subr.bf16.mxu0 0
        %312 = vmatpush1.bf16.msra.mxu0 0
        %313 = vmatprep.mubr.bf16.mxu0 0
        %314 = vmatmul.mubr.bf16.gmra.mrb[0].mxu0 %v279
        %v315 = vpop.f32.mrb[0].mxu0
        %v316 = vadd.f32 %v275, %v315
        %v317 = vpop.f32.mrb[0].mxu0
        %v318 = vpop.f32.mrb[0].mxu0
        %v319 = vpop.f32.mrb[0].mxu0
        %320 = vdwg.mxu0
        %s321 = smul.u32 %s23, 128
        %v322 = vld [vmem:[%s247] sm:$0xff]
        %v323 = vlaneseq
        %v324 = vand.u32 %v323, 127
        %v325 = vstv %s321
        %v326 = vadd.s32 %v324, %v325
        %327 = vset.pattern.permute.xlu0 0
        %328 = vperm.xlu0 %327, %v322
        %v329 = vpop.permute.xlu0 %328
        %vm330 = vcmp.eq.s32.totalorder %v326, %v329
        %v331 = vsel %vm330, 1, 0
        %v332 = vcvt.s32.f32 %v331
        %v333 = vlaneseq
        %v334 = vshrl.u32 %v333, 7
        %vm335 = vcmp.ge.s32.totalorder %v334, %v324
        %v336 = vsel %vm335, 1, 0
        %v337 = vcvt.s32.f32 %v336
        %vm338 = vcmask 64512
        %v340 = vsel %vm338, %v337, 0
        %342 = vmatprep.subr.mxu0 0.0
        %343 = vmatpush1.msra.mxu0 %v332
        %344 = vmatprep.subr.mxu0 0.0
        %345 = vmatpush1.msra.mxu0 0.0
        %346 = vmatprep.subr.mxu0 0.0
        %347 = vmatpush1.msra.mxu0 0.0
        %348 = vmatprep.subr.mxu0 0.0
        %349 = vmatpush1.msra.mxu0 0.0
        %350 = vmatprep.subr.mxu0 0.0
        %351 = vmatpush1.msra.mxu0 0.0
        %352 = vmatprep.subr.mxu0 0.0
        %353 = vmatpush1.msra.mxu0 0.0
        %354 = vmatprep.subr.mxu0 0.0
        %355 = vmatpush1.msra.mxu0 0.0
        %356 = vmatprep.subr.mxu0 0.0
        %357 = vmatpush1.msra.mxu0 0.0
        %358 = vmatprep.subr.mxu0 0.0
        %359 = vmatpush1.msra.mxu0 0.0
        %360 = vmatprep.subr.mxu0 0.0
        %361 = vmatpush1.msra.mxu0 0.0
        %362 = vmatprep.subr.mxu0 0.0
        %363 = vmatpush1.msra.mxu0 0.0
        %364 = vmatprep.subr.mxu0 0.0
        %365 = vmatpush1.msra.mxu0 0.0
        %366 = vmatprep.subr.mxu0 0.0
        %367 = vmatpush1.msra.mxu0 0.0
        %368 = vmatprep.subr.mxu0 0.0
        %369 = vmatpush1.msra.mxu0 0.0
        %370 = vmatprep.subr.mxu0 0.0
        %371 = vmatpush1.msra.mxu0 0.0
        %372 = vmatprep.subr.mxu0 0.0
        %373 = vmatpush1.msra.mxu0 0.0
        %374 = vmatprep.subr.mxu0 0.0
        %375 = vmatpush1.msra.mxu0 0.0
        %376 = vmatprep.subr.mxu0 0.0
        %377 = vmatpush1.msra.mxu0 0.0
        %378 = vmatprep.subr.mxu0 0.0
        %379 = vmatpush1.msra.mxu0 0.0
        %380 = vmatprep.subr.mxu0 0.0
        %381 = vmatpush1.msra.mxu0 0.0
        %382 = vmatprep.subr.mxu0 0.0
        %383 = vmatpush1.msra.mxu0 0.0
        %384 = vmatprep.subr.mxu0 0.0
        %385 = vmatpush1.msra.mxu0 0.0
        %386 = vmatprep.subr.mxu0 0.0
        %387 = vmatpush1.msra.mxu0 0.0
        %388 = vmatprep.subr.mxu0 0.0
        %389 = vmatpush1.msra.mxu0 0.0
        %390 = vmatprep.subr.mxu0 0.0
        %391 = vmatpush1.msra.mxu0 0.0
        %392 = vmatprep.subr.mxu0 0.0
        %393 = vmatpush1.msra.mxu0 0.0
        %394 = vmatprep.subr.mxu0 0.0
        %395 = vmatpush1.msra.mxu0 0.0
        %396 = vmatprep.subr.mxu0 0.0
        %397 = vmatpush1.msra.mxu0 0.0
        %398 = vmatprep.subr.mxu0 0.0
        %399 = vmatpush1.msra.mxu0 0.0
        %400 = vmatprep.subr.mxu0 0.0
        %401 = vmatpush1.msra.mxu0 0.0
        %402 = vmatprep.subr.mxu0 0.0
        %403 = vmatpush1.msra.mxu0 0.0
        %404 = vmatprep.subr.mxu0 0.0
        %405 = vmatpush1.msra.mxu0 0.0
        %406 = vmatprep.mubr.f32.mxu0 0.0
        %407 = vmatmul.mubr.f32.gmra.mrb[0].mxu0 %v340
        %v408 = vpop.f32.mrb[0].mxu0
        %v409 = vadd.f32 0.0, %v408
        %v410 = vpop.f32.mrb[0].mxu0
        %411 = vdwg.mxu0
        %vm412 = vcmp.gt.f32.partialorder %v409, 0.0
        %vm413 = vcmp.eq.s32.totalorder %v326, 0
        %vm414 = vmor %vm412, %vm413
        %v415 = vsel %vm414, -1000.0, 0.0
        %v416 = vadd.f32 %v316, %v415
        %417 = vst [vmem:[%s239] sm:$0xff] %v416
        %s418 = sand.u32 %s144, 1
        %s419 = scalar_lea.sflag [#allocation3], %s418
        %s420 = sand.u32 %s144, 1
        %s421 = smul.addr %s420, 8
        %s422 = scalar_lea.vmem [#allocation2], %s421
        // Predicated region
        $region37: #{mshgat_forward.27} parent=35 // pred_check
          %p423 = pneg %p154
        $region38: #{mshgat_forward.27} parent=35 // pred_check_branch
          %425 = sbr.rel (%p423) target = $region40
        $region39: #{mshgat_forward.27} parent=35 // pred_region
          %s427 = ssub.s32 128, 128
          %428 = vsyncadd %s419, %s427
          %s429 = sadd.s32 %s23, %s22
          %s430 = smul.addr %s429, 128
          %s431 = scalar_lea.hbm %s4, %s430
          %s433 = sshll.u32 %s422, 4
          %s434 = int_to_ptr.vmem [resolvable:$true] %s433
          %436 = dma.vmem_to_hbm [thread:$0]  %s434, 128, %s431, %s419
        $region40: #{mshgat_forward.27} parent=35 // pred_fallthru
          _
      $region36: #{mshgat_forward.27} parent=5 // pred_fallthru
        _
      %p437 = scmp.le.s32.totalorder 2, %s13
      // Predicated region
      $region41: #{mshgat_forward.27} parent=5 // pred_check
        %p438 = pneg %p437
      $region42: #{mshgat_forward.27} parent=5 // pred_check_branch
        %440 = sbr.rel (%p438) target = $region44
      $region43: #{mshgat_forward.27} parent=5 // pred_region
        %s441 = ssub.s32 %s13, 2
        // Predicated region
        $region45: #{mshgat_forward.27} parent=43 // pred_check
          %p442 = pneg %p160
        $region46: #{mshgat_forward.27} parent=43 // pred_check_branch
          %444 = sbr.rel (%p442) target = $region48
        $region47: #{mshgat_forward.27} parent=43 // pred_region
          %s445 = sand.u32 %s145, 1
          %s446 = scalar_lea.sflag [#allocation3], %s445
          %s447 = sand.u32 %s145, 1
          %s448 = smul.addr %s447, 8
          %s449 = scalar_lea.vmem [#allocation2], %s448
          %450 = dma.done %s446, 128
        $region48: #{mshgat_forward.27} parent=43 // pred_fallthru
          _
      $region44: #{mshgat_forward.27} parent=5 // pred_fallthru
        _
    $region6: #{mshgat_forward.27} parent=1 // loop_footer
      %s17 = sadd.s32 1, %s13
    $region7: #{mshgat_forward.27} parent=1 // loop_footer_branch
      %12 = sbr.rel target = $region3
    $region8: #{mshgat_forward.27} parent=1 // loop_exit
      _
    %451 = vsyncpa [#allocation3], 1
    %s452 = scalar_lea.sflag [#allocation3], 1
    %453 = vsyncpa %s452, 1

</llo_original>
